<compile_context>
chip_gen: v7x
topology: tpu7x:2x2x1
jax: 0.10.0
libtpu: 0.0.40
codegen_flags: <defaults>
</compile_context>

<pallas_src>
import numpy as np

import jax
import jax.numpy as jnp
from jax.experimental import pallas as pl
from jax.experimental.pallas import tpu as pltpu


# ----------------------------- fused network kernel --------------------------

def _cnn_fused_kernel(x_ref, w1e_ref, w1o_ref, b1t_ref,
                      w2e_ref, w2o_ref, b2t_ref,
                      wf1_ref, bf1_ref, wf2_ref, bf2_ref,
                      o_ref, h1_s, a1_s, h2_s, a2_s):
    nb = x_ref.shape[0]              # images in this batch block
    cdt = w1e_ref.dtype              # bf16 compute dtype for MXU operands

    x = x_ref[...]                   # (nb, 28, 28) f32

    # ---- conv1 (5x5, 1->10) + bias + ReLU + 2x2 max-pool -------------------
    # Banded weights: w1e/w1o[kh] is (28, 120) mapping an input row to the
    # conv outputs of all even / odd output columns (lane = px*10 + cout).
    acc_e = jnp.zeros((nb * 24, 120), jnp.float32)
    acc_o = jnp.zeros((nb * 24, 120), jnp.float32)
    for kh in range(5):
        lhs = x[:, kh:kh + 24, :].reshape(nb * 24, 28).astype(cdt)
        acc_e = acc_e + jnp.dot(lhs, w1e_ref[kh],
                                preferred_element_type=jnp.float32)
        acc_o = acc_o + jnp.dot(lhs, w1o_ref[kh],
                                preferred_element_type=jnp.float32)
    # max over the two pool-x offsets, then bias + ReLU (commutes with max).
    h1 = jnp.maximum(jnp.maximum(acc_e, acc_o) + b1t_ref[...], 0.0)
    h1_s[...] = h1.reshape(nb, 24, 120)
    # max over the two pool-y offsets via stride-2 sublane reads.
    a1_s[...] = jnp.maximum(h1_s[:, pl.ds(0, 12, 2), :],
                            h1_s[:, pl.ds(1, 12, 2), :])   # (nb, 12, 120)

    # ---- conv2 (5x5, 10->20) + bias + ReLU + 2x2 max-pool ------------------
    # a1_s lane layout is px*10 + cin, so the (kh, kw) input patch is the
    # contiguous slice [:, kh:kh+8, kw*10:kw*10+80].  w2e/w2o[kh*5+kw] are
    # (80, 80) block-diagonal matrices producing the even / odd output columns
    # (lane = px2*20 + cout).
    acc2_e = jnp.zeros((nb * 8, 80), jnp.float32)
    acc2_o = jnp.zeros((nb * 8, 80), jnp.float32)
    for kh in range(5):
        for kw in range(5):
            lhs = a1_s[:, kh:kh + 8, kw * 10:kw * 10 + 80]
            lhs = lhs.reshape(nb * 8, 80).astype(cdt)
            idx = kh * 5 + kw
            acc2_e = acc2_e + jnp.dot(lhs, w2e_ref[idx],
                                      preferred_element_type=jnp.float32)
            acc2_o = acc2_o + jnp.dot(lhs, w2o_ref[idx],
                                      preferred_element_type=jnp.float32)
    h2 = jnp.maximum(jnp.maximum(acc2_e, acc2_o) + b2t_ref[...], 0.0)
    h2_s[...] = h2                                           # (nb*8, 80)
    a2_s[...] = jnp.maximum(h2_s[pl.ds(0, nb * 4, 2), :],    # pool over y2
                            h2_s[pl.ds(1, nb * 4, 2), :])    # (nb*4, 80)

    # ---- fc1 (320->50) + ReLU, fc2 (50->10, padded to 128 lanes) -----------
    # The PyTorch (c, h, w) flatten order is baked into wf1, so fc1 is just a
    # sum over the 4 pooled rows (py2) of (nb, 80) x (80, 50) matmuls.
    z1 = jnp.zeros((nb, 50), jnp.float32)
    for py in range(4):
        lhs = a2_s[pl.ds(py, nb, 4), :].astype(cdt)          # rows of image n
        z1 = z1 + jnp.dot(lhs, wf1_ref[py],
                          preferred_element_type=jnp.float32)
    z1 = jnp.maximum(z1 + bf1_ref[...], 0.0).astype(cdt)
    o_ref[...] = (jnp.dot(z1, wf2_ref[...],
                          preferred_element_type=jnp.float32) + bf2_ref[...])


def cnn_forward(x_nchw, kp, *, batch_block=8):
    """x_nchw: (N, 1, 28, 28) f32.  kp: dict from prepare_params()."""
    N = x_nchw.shape[0]
    assert x_nchw.shape[1:] == (1, 28, 28)
    nb = batch_block if N >= batch_block else N
    n_pad = -(-N // nb) * nb
    x = x_nchw.reshape(N, 28, 28).astype(jnp.float32)
    if n_pad != N:
        x = jnp.pad(x, ((0, n_pad - N), (0, 0), (0, 0)))

    out = pl.pallas_call(
        _cnn_fused_kernel,
        out_shape=jax.ShapeDtypeStruct((n_pad, 128), jnp.float32),
        grid=(n_pad // nb,),
        in_specs=[
            pl.BlockSpec((nb, 28, 28), lambda i: (i, 0, 0)),
            pl.BlockSpec((5, 28, 120), lambda i: (0, 0, 0)),
            pl.BlockSpec((5, 28, 120), lambda i: (0, 0, 0)),
            pl.BlockSpec((1, 120), lambda i: (0, 0)),
            pl.BlockSpec((25, 80, 80), lambda i: (0, 0, 0)),
            pl.BlockSpec((25, 80, 80), lambda i: (0, 0, 0)),
            pl.BlockSpec((1, 80), lambda i: (0, 0)),
            pl.BlockSpec((4, 80, 50), lambda i: (0, 0, 0)),
            pl.BlockSpec((1, 50), lambda i: (0, 0)),
            pl.BlockSpec((50, 128), lambda i: (0, 0)),
            pl.BlockSpec((1, 128), lambda i: (0, 0)),
        ],
        out_specs=pl.BlockSpec((nb, 128), lambda i: (i, 0)),
        scratch_shapes=[
            pltpu.VMEM((nb, 24, 120), jnp.float32),   # conv1 pre-pool-y
            pltpu.VMEM((nb, 12, 120), jnp.float32),   # conv1 pooled
            pltpu.VMEM((nb * 8, 80), jnp.float32),    # conv2 pre-pool-y
            pltpu.VMEM((nb * 4, 80), jnp.float32),    # conv2 pooled
        ],
        compiler_params=pltpu.CompilerParams(
            dimension_semantics=("parallel",)),
    )(x, kp["w1e"], kp["w1o"], kp["b1t"], kp["w2e"], kp["w2o"], kp["b2t"],
      kp["wf1"], kp["bf1"], kp["wf2"], kp["bf2"])
    return out[:N, :10]


# ------------------- weight restructuring (host, one-time) -------------------

def prepare_params(p, compute_dtype=jnp.bfloat16):
    """Converts PyTorch-layout params into the kernel's weight layouts."""
    w1 = np.asarray(p["conv1_w"], np.float32)     # (10, 1, 5, 5)  OIHW
    b1 = np.asarray(p["conv1_b"], np.float32)
    w2 = np.asarray(p["conv2_w"], np.float32)     # (20, 10, 5, 5) OIHW
    b2 = np.asarray(p["conv2_b"], np.float32)
    f1w = np.asarray(p["fc1_w"], np.float32)      # (50, 320)
    f1b = np.asarray(p["fc1_b"], np.float32)
    f2w = np.asarray(p["fc2_w"], np.float32)      # (10, 50)
    f2b = np.asarray(p["fc2_b"], np.float32)

    # conv1 as banded matrices: B1[par, kh][j, px*10 + c] = w1[c, 0, kh, kw]
    # with j = 2*px + par + kw  (par selects even/odd output column).
    B1 = np.zeros((2, 5, 28, 120), np.float32)
    for par in range(2):
        for kh in range(5):
            for kw in range(5):
                for px in range(12):
                    B1[par, kh, 2 * px + par + kw, px * 10:px * 10 + 10] = \
                        w1[:, 0, kh, kw]

    # conv2 as block-diagonal matrices over the lane layout px*10 + cin ->
    # px2*20 + cout:  BD[par, kh*5+kw][20*p + 10*par + ci, 20*p + co].
    BD = np.zeros((2, 25, 80, 80), np.float32)
    for par in range(2):
        for kh in range(5):
            for kw in range(5):
                for pp in range(4):
                    r0 = 20 * pp + 10 * par
                    BD[par, kh * 5 + kw, r0:r0 + 10, 20 * pp:20 * pp + 20] = \
                        w2[:, :, kh, kw].T
    # fc1 split over the 4 pooled rows, with PyTorch's (c, h, w) flatten order
    # folded into the weight layout (lane in = px2*20 + c).
    Wf1 = np.zeros((4, 80, 50), np.float32)
    for py2 in range(4):
        for px2 in range(4):
            for co in range(20):
                Wf1[py2, px2 * 20 + co, :] = f1w[:, co * 16 + py2 * 4 + px2]
    # fc2 padded to 128 output lanes (lane-dense final store).
    Wf2 = np.zeros((50, 128), np.float32)
    Wf2[:, :10] = f2w.T
    bf2 = np.zeros((1, 128), np.float32)
    bf2[0, :10] = f2b

    return {
        "w1e": jnp.asarray(B1[0], compute_dtype),
        "w1o": jnp.asarray(B1[1], compute_dtype),
        "b1t": jnp.asarray(np.tile(b1, 12)[None, :], jnp.float32),
        "w2e": jnp.asarray(BD[0], compute_dtype),
        "w2o": jnp.asarray(BD[1], compute_dtype),
        "b2t": jnp.asarray(np.tile(b2, 4)[None, :], jnp.float32),
        "wf1": jnp.asarray(Wf1, compute_dtype),
        "bf1": jnp.asarray(f1b[None, :], jnp.float32),
        "wf2": jnp.asarray(Wf2, compute_dtype),
        "bf2": jnp.asarray(bf2, jnp.float32),
    }


# ----------------------------- reference & init ------------------------------

def cnn_reference(x_nchw, p):
    """Pure-JAX f32 reference of the PyTorch module."""
    y = jax.lax.conv_general_dilated(
        x_nchw.astype(jnp.float32), p["conv1_w"], (1, 1), "VALID",
        dimension_numbers=("NCHW", "OIHW", "NCHW"))
    y = jnp.maximum(y + p["conv1_b"][None, :, None, None], 0.0)
    y = jax.lax.reduce_window(y, -jnp.inf, jax.lax.max,
                              (1, 1, 2, 2), (1, 1, 2, 2), "VALID")
    y = jax.lax.conv_general_dilated(
        y, p["conv2_w"], (1, 1), "VALID",
        dimension_numbers=("NCHW", "OIHW", "NCHW"))
    y = jnp.maximum(y + p["conv2_b"][None, :, None, None], 0.0)
    y = jax.lax.reduce_window(y, -jnp.inf, jax.lax.max,
                              (1, 1, 2, 2), (1, 1, 2, 2), "VALID")
    y = y.reshape(y.shape[0], -1)
    y = jnp.maximum(y @ p["fc1_w"].T + p["fc1_b"], 0.0)
    return y @ p["fc2_w"].T + p["fc2_b"]


def init_params(key):
    ks = jax.random.split(key, 8)

    def u(k, shape, fan_in):
        bound = 1.0 / float(np.sqrt(fan_in))
        return jax.random.uniform(k, shape, jnp.float32, -bound, bound)

    return {
        "conv1_w": u(ks[0], (10, 1, 5, 5), 25),
        "conv1_b": u(ks[1], (10,), 25),
        "conv2_w": u(ks[2], (20, 10, 5, 5), 250),
        "conv2_b": u(ks[3], (20,), 250),
        "fc1_w": u(ks[4], (50, 320), 320),
        "fc1_b": u(ks[5], (50,), 320),
        "fc2_w": u(ks[6], (10, 50), 50),
        "fc2_b": u(ks[7], (10,), 50),
    }


if __name__ == "__main__":
    key = jax.random.PRNGKey(0)
    kx, kp = jax.random.split(key)
    # Linear(320, 50) pins the MNIST geometry: 1x28x28 -> 20x4x4 = 320.
    x = jax.random.normal(kx, (2, 1, 28, 28), jnp.float32)
    params = init_params(kp)
    kparams = prepare_params(params)

    out = jax.jit(cnn_forward)(x, kparams)
    jax.block_until_ready(out)
    assert out.shape == (2, 10) and out.dtype == jnp.float32

    ref = cnn_reference(x, params)
    np.testing.assert_allclose(np.asarray(out), np.asarray(ref),
                               rtol=0.0, atol=4e-2)   # bf16 MXU tolerance
    print("KERNEL_OK")
</pallas_src>

<mosaic_0001>
module attributes {stable_mosaic.version = 11 : i64} {
  func.func @_cnn_fused_kernel(%arg0: i32, %arg1: memref<2x28x28xf32, #tpu.memory_space<vmem>>, %arg2: memref<5x28x120xbf16, #tpu.memory_space<vmem>>, %arg3: memref<5x28x120xbf16, #tpu.memory_space<vmem>>, %arg4: memref<1x120xf32, #tpu.memory_space<vmem>>, %arg5: memref<25x80x80xbf16, #tpu.memory_space<vmem>>, %arg6: memref<25x80x80xbf16, #tpu.memory_space<vmem>>, %arg7: memref<1x80xf32, #tpu.memory_space<vmem>>, %arg8: memref<4x80x50xbf16, #tpu.memory_space<vmem>>, %arg9: memref<1x50xf32, #tpu.memory_space<vmem>>, %arg10: memref<50x128xbf16, #tpu.memory_space<vmem>>, %arg11: memref<1x128xf32, #tpu.memory_space<vmem>>, %arg12: memref<2x128xf32, #tpu.memory_space<vmem>>, %arg13: memref<2x24x120xf32, #tpu.memory_space<vmem>>, %arg14: memref<2x12x120xf32, #tpu.memory_space<vmem>>, %arg15: memref<16x80xf32, #tpu.memory_space<vmem>>, %arg16: memref<8x80xf32, #tpu.memory_space<vmem>>) attributes {dimension_semantics = [#tpu.dimension_semantics<parallel>], iteration_bounds = array<i64: 1>, scalar_prefetch = 0 : i64, scratch_operands = 4 : i64, tpu.core_type = #tpu.core_type<tc>, window_params = [{transform_indices = @transform_0, window_bounds = array<i64: 2, 28, 28>}, {pipeline_mode = #tpu.pipeline_mode<synchronous>, transform_indices = @transform_1, window_bounds = array<i64: 5, 28, 120>}, {pipeline_mode = #tpu.pipeline_mode<synchronous>, transform_indices = @transform_2, window_bounds = array<i64: 5, 28, 120>}, {pipeline_mode = #tpu.pipeline_mode<synchronous>, transform_indices = @transform_3, window_bounds = array<i64: 1, 120>}, {pipeline_mode = #tpu.pipeline_mode<synchronous>, transform_indices = @transform_4, window_bounds = array<i64: 25, 80, 80>}, {pipeline_mode = #tpu.pipeline_mode<synchronous>, transform_indices = @transform_5, window_bounds = array<i64: 25, 80, 80>}, {pipeline_mode = #tpu.pipeline_mode<synchronous>, transform_indices = @transform_6, window_bounds = array<i64: 1, 80>}, {pipeline_mode = #tpu.pipeline_mode<synchronous>, transform_indices = @transform_7, window_bounds = array<i64: 4, 80, 50>}, {pipeline_mode = #tpu.pipeline_mode<synchronous>, transform_indices = @transform_8, window_bounds = array<i64: 1, 50>}, {pipeline_mode = #tpu.pipeline_mode<synchronous>, transform_indices = @transform_9, window_bounds = array<i64: 50, 128>}, {pipeline_mode = #tpu.pipeline_mode<synchronous>, transform_indices = @transform_10, window_bounds = array<i64: 1, 128>}, {transform_indices = @transform_11, window_bounds = array<i64: 2, 128>}]} {
    %c0 = arith.constant 0 : index
    %c0_0 = arith.constant 0 : index
    %c0_1 = arith.constant 0 : index
    %0 = vector.load %arg1[%c0, %c0_0, %c0_1] : memref<2x28x28xf32, #tpu.memory_space<vmem>>, vector<2x28x28xf32>
    %cst = arith.constant 0.000000e+00 : f32
    %1 = vector.broadcast %cst : f32 to vector<48x120xf32>
    %cst_2 = arith.constant 0.000000e+00 : f32
    %2 = vector.broadcast %cst_2 : f32 to vector<48x120xf32>
    %3 = vector.extract_strided_slice %0 {offsets = [0, 0, 0], sizes = [2, 24, 28], strides = [1, 1, 1]} : vector<2x28x28xf32> to vector<2x24x28xf32>
    %4 = vector.shape_cast %3 : vector<2x24x28xf32> to vector<48x28xf32>
    %5 = arith.truncf %4 : vector<48x28xf32> to vector<48x28xbf16>
    %c0_3 = arith.constant 0 : index
    %c0_4 = arith.constant 0 : index
    %c0_5 = arith.constant 0 : index
    %6 = vector.load %arg2[%c0_3, %c0_4, %c0_5] : memref<5x28x120xbf16, #tpu.memory_space<vmem>>, vector<1x28x120xbf16>
    %7 = vector.shape_cast %6 : vector<1x28x120xbf16> to vector<28x120xbf16>
    %cst_6 = arith.constant dense<0.000000e+00> : vector<48x120xf32>
    %8 = tpu.matmul %5, %7, %cst_6 {dimension_numbers = #tpu.dot_dimension_numbers<[1], [0], [0], [1], [0, 0, 1, 1], [], []>} : vector<48x28xbf16>, vector<28x120xbf16>, vector<48x120xf32> -> vector<48x120xf32>
    %9 = arith.addf %1, %8 : vector<48x120xf32>
    %c0_7 = arith.constant 0 : index
    %c0_8 = arith.constant 0 : index
    %c0_9 = arith.constant 0 : index
    %10 = vector.load %arg3[%c0_7, %c0_8, %c0_9] : memref<5x28x120xbf16, #tpu.memory_space<vmem>>, vector<1x28x120xbf16>
    %11 = vector.shape_cast %10 : vector<1x28x120xbf16> to vector<28x120xbf16>
    %cst_10 = arith.constant dense<0.000000e+00> : vector<48x120xf32>
    %12 = tpu.matmul %5, %11, %cst_10 {dimension_numbers = #tpu.dot_dimension_numbers<[1], [0], [0], [1], [0, 0, 1, 1], [], []>} : vector<48x28xbf16>, vector<28x120xbf16>, vector<48x120xf32> -> vector<48x120xf32>
    %13 = arith.addf %2, %12 : vector<48x120xf32>
    %14 = vector.extract_strided_slice %0 {offsets = [0, 1, 0], sizes = [2, 24, 28], strides = [1, 1, 1]} : vector<2x28x28xf32> to vector<2x24x28xf32>
    %15 = vector.shape_cast %14 : vector<2x24x28xf32> to vector<48x28xf32>
    %16 = arith.truncf %15 : vector<48x28xf32> to vector<48x28xbf16>
    %c1 = arith.constant 1 : index
    %c0_11 = arith.constant 0 : index
    %c0_12 = arith.constant 0 : index
    %17 = vector.load %arg2[%c1, %c0_11, %c0_12] : memref<5x28x120xbf16, #tpu.memory_space<vmem>>, vector<1x28x120xbf16>
    %18 = vector.shape_cast %17 : vector<1x28x120xbf16> to vector<28x120xbf16>
    %cst_13 = arith.constant dense<0.000000e+00> : vector<48x120xf32>
    %19 = tpu.matmul %16, %18, %cst_13 {dimension_numbers = #tpu.dot_dimension_numbers<[1], [0], [0], [1], [0, 0, 1, 1], [], []>} : vector<48x28xbf16>, vector<28x120xbf16>, vector<48x120xf32> -> vector<48x120xf32>
    %20 = arith.addf %9, %19 : vector<48x120xf32>
    %c1_14 = arith.constant 1 : index
    %c0_15 = arith.constant 0 : index
    %c0_16 = arith.constant 0 : index
    %21 = vector.load %arg3[%c1_14, %c0_15, %c0_16] : memref<5x28x120xbf16, #tpu.memory_space<vmem>>, vector<1x28x120xbf16>
    %22 = vector.shape_cast %21 : vector<1x28x120xbf16> to vector<28x120xbf16>
    %cst_17 = arith.constant dense<0.000000e+00> : vector<48x120xf32>
    %23 = tpu.matmul %16, %22, %cst_17 {dimension_numbers = #tpu.dot_dimension_numbers<[1], [0], [0], [1], [0, 0, 1, 1], [], []>} : vector<48x28xbf16>, vector<28x120xbf16>, vector<48x120xf32> -> vector<48x120xf32>
    %24 = arith.addf %13, %23 : vector<48x120xf32>
    %25 = vector.extract_strided_slice %0 {offsets = [0, 2, 0], sizes = [2, 24, 28], strides = [1, 1, 1]} : vector<2x28x28xf32> to vector<2x24x28xf32>
    %26 = vector.shape_cast %25 : vector<2x24x28xf32> to vector<48x28xf32>
    %27 = arith.truncf %26 : vector<48x28xf32> to vector<48x28xbf16>
    %c2 = arith.constant 2 : index
    %c0_18 = arith.constant 0 : index
    %c0_19 = arith.constant 0 : index
    %28 = vector.load %arg2[%c2, %c0_18, %c0_19] : memref<5x28x120xbf16, #tpu.memory_space<vmem>>, vector<1x28x120xbf16>
    %29 = vector.shape_cast %28 : vector<1x28x120xbf16> to vector<28x120xbf16>
    %cst_20 = arith.constant dense<0.000000e+00> : vector<48x120xf32>
    %30 = tpu.matmul %27, %29, %cst_20 {dimension_numbers = #tpu.dot_dimension_numbers<[1], [0], [0], [1], [0, 0, 1, 1], [], []>} : vector<48x28xbf16>, vector<28x120xbf16>, vector<48x120xf32> -> vector<48x120xf32>
    %31 = arith.addf %20, %30 : vector<48x120xf32>
    %c2_21 = arith.constant 2 : index
    %c0_22 = arith.constant 0 : index
    %c0_23 = arith.constant 0 : index
    %32 = vector.load %arg3[%c2_21, %c0_22, %c0_23] : memref<5x28x120xbf16, #tpu.memory_space<vmem>>, vector<1x28x120xbf16>
    %33 = vector.shape_cast %32 : vector<1x28x120xbf16> to vector<28x120xbf16>
    %cst_24 = arith.constant dense<0.000000e+00> : vector<48x120xf32>
    %34 = tpu.matmul %27, %33, %cst_24 {dimension_numbers = #tpu.dot_dimension_numbers<[1], [0], [0], [1], [0, 0, 1, 1], [], []>} : vector<48x28xbf16>, vector<28x120xbf16>, vector<48x120xf32> -> vector<48x120xf32>
    %35 = arith.addf %24, %34 : vector<48x120xf32>
    %36 = vector.extract_strided_slice %0 {offsets = [0, 3, 0], sizes = [2, 24, 28], strides = [1, 1, 1]} : vector<2x28x28xf32> to vector<2x24x28xf32>
    %37 = vector.shape_cast %36 : vector<2x24x28xf32> to vector<48x28xf32>
    %38 = arith.truncf %37 : vector<48x28xf32> to vector<48x28xbf16>
    %c3 = arith.constant 3 : index
    %c0_25 = arith.constant 0 : index
    %c0_26 = arith.constant 0 : index
    %39 = vector.load %arg2[%c3, %c0_25, %c0_26] : memref<5x28x120xbf16, #tpu.memory_space<vmem>>, vector<1x28x120xbf16>
    %40 = vector.shape_cast %39 : vector<1x28x120xbf16> to vector<28x120xbf16>
    %cst_27 = arith.constant dense<0.000000e+00> : vector<48x120xf32>
    %41 = tpu.matmul %38, %40, %cst_27 {dimension_numbers = #tpu.dot_dimension_numbers<[1], [0], [0], [1], [0, 0, 1, 1], [], []>} : vector<48x28xbf16>, vector<28x120xbf16>, vector<48x120xf32> -> vector<48x120xf32>
    %42 = arith.addf %31, %41 : vector<48x120xf32>
    %c3_28 = arith.constant 3 : index
    %c0_29 = arith.constant 0 : index
    %c0_30 = arith.constant 0 : index
    %43 = vector.load %arg3[%c3_28, %c0_29, %c0_30] : memref<5x28x120xbf16, #tpu.memory_space<vmem>>, vector<1x28x120xbf16>
    %44 = vector.shape_cast %43 : vector<1x28x120xbf16> to vector<28x120xbf16>
    %cst_31 = arith.constant dense<0.000000e+00> : vector<48x120xf32>
    %45 = tpu.matmul %38, %44, %cst_31 {dimension_numbers = #tpu.dot_dimension_numbers<[1], [0], [0], [1], [0, 0, 1, 1], [], []>} : vector<48x28xbf16>, vector<28x120xbf16>, vector<48x120xf32> -> vector<48x120xf32>
    %46 = arith.addf %35, %45 : vector<48x120xf32>
    %47 = vector.extract_strided_slice %0 {offsets = [0, 4, 0], sizes = [2, 24, 28], strides = [1, 1, 1]} : vector<2x28x28xf32> to vector<2x24x28xf32>
    %48 = vector.shape_cast %47 : vector<2x24x28xf32> to vector<48x28xf32>
    %49 = arith.truncf %48 : vector<48x28xf32> to vector<48x28xbf16>
    %c4 = arith.constant 4 : index
    %c0_32 = arith.constant 0 : index
    %c0_33 = arith.constant 0 : index
    %50 = vector.load %arg2[%c4, %c0_32, %c0_33] : memref<5x28x120xbf16, #tpu.memory_space<vmem>>, vector<1x28x120xbf16>
    %51 = vector.shape_cast %50 : vector<1x28x120xbf16> to vector<28x120xbf16>
    %cst_34 = arith.constant dense<0.000000e+00> : vector<48x120xf32>
    %52 = tpu.matmul %49, %51, %cst_34 {dimension_numbers = #tpu.dot_dimension_numbers<[1], [0], [0], [1], [0, 0, 1, 1], [], []>} : vector<48x28xbf16>, vector<28x120xbf16>, vector<48x120xf32> -> vector<48x120xf32>
    %53 = arith.addf %42, %52 : vector<48x120xf32>
    %c4_35 = arith.constant 4 : index
    %c0_36 = arith.constant 0 : index
    %c0_37 = arith.constant 0 : index
    %54 = vector.load %arg3[%c4_35, %c0_36, %c0_37] : memref<5x28x120xbf16, #tpu.memory_space<vmem>>, vector<1x28x120xbf16>
    %55 = vector.shape_cast %54 : vector<1x28x120xbf16> to vector<28x120xbf16>
    %cst_38 = arith.constant dense<0.000000e+00> : vector<48x120xf32>
    %56 = tpu.matmul %49, %55, %cst_38 {dimension_numbers = #tpu.dot_dimension_numbers<[1], [0], [0], [1], [0, 0, 1, 1], [], []>} : vector<48x28xbf16>, vector<28x120xbf16>, vector<48x120xf32> -> vector<48x120xf32>
    %57 = arith.addf %46, %56 : vector<48x120xf32>
    %58 = arith.maximumf %53, %57 : vector<48x120xf32>
    %c0_39 = arith.constant 0 : index
    %c0_40 = arith.constant 0 : index
    %59 = vector.load %arg4[%c0_39, %c0_40] : memref<1x120xf32, #tpu.memory_space<vmem>>, vector<1x120xf32>
    %60 = vector.broadcast %59 : vector<1x120xf32> to vector<48x120xf32>
    %61 = arith.addf %58, %60 : vector<48x120xf32>
    %cst_41 = arith.constant 0.000000e+00 : f32
    %62 = vector.broadcast %cst_41 : f32 to vector<48x120xf32>
    %63 = arith.maximumf %61, %62 : vector<48x120xf32>
    %64 = vector.shape_cast %63 : vector<48x120xf32> to vector<2x24x120xf32>
    %c0_42 = arith.constant 0 : index
    %c0_43 = arith.constant 0 : index
    %c0_44 = arith.constant 0 : index
    %65 = vector.load %arg13[%c0_42, %c0_43, %c0_44] : memref<2x24x120xf32, #tpu.memory_space<vmem>>, vector<2x24x120xf32>
    tpu.vector_store %arg13[%c0_42, %c0_43, %c0_44], %64 {strides = array<i32>} : memref<2x24x120xf32, #tpu.memory_space<vmem>>, vector<2x24x120xf32>,
    %c0_45 = arith.constant 0 : index
    %c0_46 = arith.constant 0 : index
    %c0_47 = arith.constant 0 : index
    %66 = tpu.strided_load %arg13[%c0_45, %c0_46, %c0_47] {strides = array<i32: 1, 2, 1>} : memref<2x24x120xf32, #tpu.memory_space<vmem>>, vector<2x12x120xf32>
    %c0_48 = arith.constant 0 : index
    %c1_49 = arith.constant 1 : index
    %c0_50 = arith.constant 0 : index
    %67 = tpu.strided_load %arg13[%c0_48, %c1_49, %c0_50] {strides = array<i32: 1, 2, 1>} : memref<2x24x120xf32, #tpu.memory_space<vmem>>, vector<2x12x120xf32>
    %68 = arith.maximumf %66, %67 : vector<2x12x120xf32>
    %c0_51 = arith.constant 0 : index
    %c0_52 = arith.constant 0 : index
    %c0_53 = arith.constant 0 : index
    %69 = vector.load %arg14[%c0_51, %c0_52, %c0_53] : memref<2x12x120xf32, #tpu.memory_space<vmem>>, vector<2x12x120xf32>
    tpu.vector_store %arg14[%c0_51, %c0_52, %c0_53], %68 {strides = array<i32>} : memref<2x12x120xf32, #tpu.memory_space<vmem>>, vector<2x12x120xf32>,
    %cst_54 = arith.constant 0.000000e+00 : f32
    %70 = vector.broadcast %cst_54 : f32 to vector<16x80xf32>
    %cst_55 = arith.constant 0.000000e+00 : f32
    %71 = vector.broadcast %cst_55 : f32 to vector<16x80xf32>
    %c0_56 = arith.constant 0 : index
    %c0_57 = arith.constant 0 : index
    %c0_58 = arith.constant 0 : index
    %72 = vector.load %arg14[%c0_56, %c0_57, %c0_58] : memref<2x12x120xf32, #tpu.memory_space<vmem>>, vector<2x8x80xf32>
    %73 = vector.shape_cast %72 : vector<2x8x80xf32> to vector<16x80xf32>
    %74 = arith.truncf %73 : vector<16x80xf32> to vector<16x80xbf16>
    %c0_59 = arith.constant 0 : index
    %c0_60 = arith.constant 0 : index
    %c0_61 = arith.constant 0 : index
    %75 = vector.load %arg5[%c0_59, %c0_60, %c0_61] : memref<25x80x80xbf16, #tpu.memory_space<vmem>>, vector<1x80x80xbf16>
    %76 = vector.shape_cast %75 : vector<1x80x80xbf16> to vector<80x80xbf16>
    %cst_62 = arith.constant dense<0.000000e+00> : vector<16x80xf32>
    %77 = tpu.matmul %74, %76, %cst_62 {dimension_numbers = #tpu.dot_dimension_numbers<[1], [0], [0], [1], [0, 0, 1, 1], [], []>} : vector<16x80xbf16>, vector<80x80xbf16>, vector<16x80xf32> -> vector<16x80xf32>
    %78 = arith.addf %70, %77 : vector<16x80xf32>
    %c0_63 = arith.constant 0 : index
    %c0_64 = arith.constant 0 : index
    %c0_65 = arith.constant 0 : index
    %79 = vector.load %arg6[%c0_63, %c0_64, %c0_65] : memref<25x80x80xbf16, #tpu.memory_space<vmem>>, vector<1x80x80xbf16>
    %80 = vector.shape_cast %79 : vector<1x80x80xbf16> to vector<80x80xbf16>
    %cst_66 = arith.constant dense<0.000000e+00> : vector<16x80xf32>
    %81 = tpu.matmul %74, %80, %cst_66 {dimension_numbers = #tpu.dot_dimension_numbers<[1], [0], [0], [1], [0, 0, 1, 1], [], []>} : vector<16x80xbf16>, vector<80x80xbf16>, vector<16x80xf32> -> vector<16x80xf32>
    %82 = arith.addf %71, %81 : vector<16x80xf32>
    %c0_67 = arith.constant 0 : index
    %c0_68 = arith.constant 0 : index
    %c10 = arith.constant 10 : index
    %83 = vector.load %arg14[%c0_67, %c0_68, %c10] : memref<2x12x120xf32, #tpu.memory_space<vmem>>, vector<2x8x80xf32>
    %84 = vector.shape_cast %83 : vector<2x8x80xf32> to vector<16x80xf32>
    %85 = arith.truncf %84 : vector<16x80xf32> to vector<16x80xbf16>
    %c1_69 = arith.constant 1 : index
    %c0_70 = arith.constant 0 : index
    %c0_71 = arith.constant 0 : index
    %86 = vector.load %arg5[%c1_69, %c0_70, %c0_71] : memref<25x80x80xbf16, #tpu.memory_space<vmem>>, vector<1x80x80xbf16>
    %87 = vector.shape_cast %86 : vector<1x80x80xbf16> to vector<80x80xbf16>
    %cst_72 = arith.constant dense<0.000000e+00> : vector<16x80xf32>
    %88 = tpu.matmul %85, %87, %cst_72 {dimension_numbers = #tpu.dot_dimension_numbers<[1], [0], [0], [1], [0, 0, 1, 1], [], []>} : vector<16x80xbf16>, vector<80x80xbf16>, vector<16x80xf32> -> vector<16x80xf32>
    %89 = arith.addf %78, %88 : vector<16x80xf32>
    %c1_73 = arith.constant 1 : index
    %c0_74 = arith.constant 0 : index
    %c0_75 = arith.constant 0 : index
    %90 = vector.load %arg6[%c1_73, %c0_74, %c0_75] : memref<25x80x80xbf16, #tpu.memory_space<vmem>>, vector<1x80x80xbf16>
    %91 = vector.shape_cast %90 : vector<1x80x80xbf16> to vector<80x80xbf16>
    %cst_76 = arith.constant dense<0.000000e+00> : vector<16x80xf32>
    %92 = tpu.matmul %85, %91, %cst_76 {dimension_numbers = #tpu.dot_dimension_numbers<[1], [0], [0], [1], [0, 0, 1, 1], [], []>} : vector<16x80xbf16>, vector<80x80xbf16>, vector<16x80xf32> -> vector<16x80xf32>
    %93 = arith.addf %82, %92 : vector<16x80xf32>
    %c0_77 = arith.constant 0 : index
    %c0_78 = arith.constant 0 : index
    %c20 = arith.constant 20 : index
    %94 = vector.load %arg14[%c0_77, %c0_78, %c20] : memref<2x12x120xf32, #tpu.memory_space<vmem>>, vector<2x8x80xf32>
    %95 = vector.shape_cast %94 : vector<2x8x80xf32> to vector<16x80xf32>
    %96 = arith.truncf %95 : vector<16x80xf32> to vector<16x80xbf16>
    %c2_79 = arith.constant 2 : index
    %c0_80 = arith.constant 0 : index
    %c0_81 = arith.constant 0 : index
    %97 = vector.load %arg5[%c2_79, %c0_80, %c0_81] : memref<25x80x80xbf16, #tpu.memory_space<vmem>>, vector<1x80x80xbf16>
    %98 = vector.shape_cast %97 : vector<1x80x80xbf16> to vector<80x80xbf16>
    %cst_82 = arith.constant dense<0.000000e+00> : vector<16x80xf32>
    %99 = tpu.matmul %96, %98, %cst_82 {dimension_numbers = #tpu.dot_dimension_numbers<[1], [0], [0], [1], [0, 0, 1, 1], [], []>} : vector<16x80xbf16>, vector<80x80xbf16>, vector<16x80xf32> -> vector<16x80xf32>
    %100 = arith.addf %89, %99 : vector<16x80xf32>
    %c2_83 = arith.constant 2 : index
    %c0_84 = arith.constant 0 : index
    %c0_85 = arith.constant 0 : index
    %101 = vector.load %arg6[%c2_83, %c0_84, %c0_85] : memref<25x80x80xbf16, #tpu.memory_space<vmem>>, vector<1x80x80xbf16>
    %102 = vector.shape_cast %101 : vector<1x80x80xbf16> to vector<80x80xbf16>
    %cst_86 = arith.constant dense<0.000000e+00> : vector<16x80xf32>
    %103 = tpu.matmul %96, %102, %cst_86 {dimension_numbers = #tpu.dot_dimension_numbers<[1], [0], [0], [1], [0, 0, 1, 1], [], []>} : vector<16x80xbf16>, vector<80x80xbf16>, vector<16x80xf32> -> vector<16x80xf32>
    %104 = arith.addf %93, %103 : vector<16x80xf32>
    %c0_87 = arith.constant 0 : index
    %c0_88 = arith.constant 0 : index
    %c30 = arith.constant 30 : index
    %105 = vector.load %arg14[%c0_87, %c0_88, %c30] : memref<2x12x120xf32, #tpu.memory_space<vmem>>, vector<2x8x80xf32>
    %106 = vector.shape_cast %105 : vector<2x8x80xf32> to vector<16x80xf32>
    %107 = arith.truncf %106 : vector<16x80xf32> to vector<16x80xbf16>
    %c3_89 = arith.constant 3 : index
    %c0_90 = arith.constant 0 : index
    %c0_91 = arith.constant 0 : index
    %108 = vector.load %arg5[%c3_89, %c0_90, %c0_91] : memref<25x80x80xbf16, #tpu.memory_space<vmem>>, vector<1x80x80xbf16>
    %109 = vector.shape_cast %108 : vector<1x80x80xbf16> to vector<80x80xbf16>
    %cst_92 = arith.constant dense<0.000000e+00> : vector<16x80xf32>
    %110 = tpu.matmul %107, %109, %cst_92 {dimension_numbers = #tpu.dot_dimension_numbers<[1], [0], [0], [1], [0, 0, 1, 1], [], []>} : vector<16x80xbf16>, vector<80x80xbf16>, vector<16x80xf32> -> vector<16x80xf32>
    %111 = arith.addf %100, %110 : vector<16x80xf32>
    %c3_93 = arith.constant 3 : index
    %c0_94 = arith.constant 0 : index
    %c0_95 = arith.constant 0 : index
    %112 = vector.load %arg6[%c3_93, %c0_94, %c0_95] : memref<25x80x80xbf16, #tpu.memory_space<vmem>>, vector<1x80x80xbf16>
    %113 = vector.shape_cast %112 : vector<1x80x80xbf16> to vector<80x80xbf16>
    %cst_96 = arith.constant dense<0.000000e+00> : vector<16x80xf32>
    %114 = tpu.matmul %107, %113, %cst_96 {dimension_numbers = #tpu.dot_dimension_numbers<[1], [0], [0], [1], [0, 0, 1, 1], [], []>} : vector<16x80xbf16>, vector<80x80xbf16>, vector<16x80xf32> -> vector<16x80xf32>
    %115 = arith.addf %104, %114 : vector<16x80xf32>
    %c0_97 = arith.constant 0 : index
    %c0_98 = arith.constant 0 : index
    %c40 = arith.constant 40 : index
    %116 = vector.load %arg14[%c0_97, %c0_98, %c40] : memref<2x12x120xf32, #tpu.memory_space<vmem>>, vector<2x8x80xf32>
    %117 = vector.shape_cast %116 : vector<2x8x80xf32> to vector<16x80xf32>
    %118 = arith.truncf %117 : vector<16x80xf32> to vector<16x80xbf16>
    %c4_99 = arith.constant 4 : index
    %c0_100 = arith.constant 0 : index
    %c0_101 = arith.constant 0 : index
    %119 = vector.load %arg5[%c4_99, %c0_100, %c0_101] : memref<25x80x80xbf16, #tpu.memory_space<vmem>>, vector<1x80x80xbf16>
    %120 = vector.shape_cast %119 : vector<1x80x80xbf16> to vector<80x80xbf16>
    %cst_102 = arith.constant dense<0.000000e+00> : vector<16x80xf32>
    %121 = tpu.matmul %118, %120, %cst_102 {dimension_numbers = #tpu.dot_dimension_numbers<[1], [0], [0], [1], [0, 0, 1, 1], [], []>} : vector<16x80xbf16>, vector<80x80xbf16>, vector<16x80xf32> -> vector<16x80xf32>
    %122 = arith.addf %111, %121 : vector<16x80xf32>
    %c4_103 = arith.constant 4 : index
    %c0_104 = arith.constant 0 : index
    %c0_105 = arith.constant 0 : index
    %123 = vector.load %arg6[%c4_103, %c0_104, %c0_105] : memref<25x80x80xbf16, #tpu.memory_space<vmem>>, vector<1x80x80xbf16>
    %124 = vector.shape_cast %123 : vector<1x80x80xbf16> to vector<80x80xbf16>
    %cst_106 = arith.constant dense<0.000000e+00> : vector<16x80xf32>
    %125 = tpu.matmul %118, %124, %cst_106 {dimension_numbers = #tpu.dot_dimension_numbers<[1], [0], [0], [1], [0, 0, 1, 1], [], []>} : vector<16x80xbf16>, vector<80x80xbf16>, vector<16x80xf32> -> vector<16x80xf32>
    %126 = arith.addf %115, %125 : vector<16x80xf32>
    %c0_107 = arith.constant 0 : index
    %c1_108 = arith.constant 1 : index
    %c0_109 = arith.constant 0 : index
    %127 = vector.load %arg14[%c0_107, %c1_108, %c0_109] : memref<2x12x120xf32, #tpu.memory_space<vmem>>, vector<2x8x80xf32>
    %128 = vector.shape_cast %127 : vector<2x8x80xf32> to vector<16x80xf32>
    %129 = arith.truncf %128 : vector<16x80xf32> to vector<16x80xbf16>
    %c5 = arith.constant 5 : index
    %c0_110 = arith.constant 0 : index
    %c0_111 = arith.constant 0 : index
    %130 = vector.load %arg5[%c5, %c0_110, %c0_111] : memref<25x80x80xbf16, #tpu.memory_space<vmem>>, vector<1x80x80xbf16>
    %131 = vector.shape_cast %130 : vector<1x80x80xbf16> to vector<80x80xbf16>
    %cst_112 = arith.constant dense<0.000000e+00> : vector<16x80xf32>
    %132 = tpu.matmul %129, %131, %cst_112 {dimension_numbers = #tpu.dot_dimension_numbers<[1], [0], [0], [1], [0, 0, 1, 1], [], []>} : vector<16x80xbf16>, vector<80x80xbf16>, vector<16x80xf32> -> vector<16x80xf32>
    %133 = arith.addf %122, %132 : vector<16x80xf32>
    %c5_113 = arith.constant 5 : index
    %c0_114 = arith.constant 0 : index
    %c0_115 = arith.constant 0 : index
    %134 = vector.load %arg6[%c5_113, %c0_114, %c0_115] : memref<25x80x80xbf16, #tpu.memory_space<vmem>>, vector<1x80x80xbf16>
    %135 = vector.shape_cast %134 : vector<1x80x80xbf16> to vector<80x80xbf16>
    %cst_116 = arith.constant dense<0.000000e+00> : vector<16x80xf32>
    %136 = tpu.matmul %129, %135, %cst_116 {dimension_numbers = #tpu.dot_dimension_numbers<[1], [0], [0], [1], [0, 0, 1, 1], [], []>} : vector<16x80xbf16>, vector<80x80xbf16>, vector<16x80xf32> -> vector<16x80xf32>
    %137 = arith.addf %126, %136 : vector<16x80xf32>
    %c0_117 = arith.constant 0 : index
    %c1_118 = arith.constant 1 : index
    %c10_119 = arith.constant 10 : index
    %138 = vector.load %arg14[%c0_117, %c1_118, %c10_119] : memref<2x12x120xf32, #tpu.memory_space<vmem>>, vector<2x8x80xf32>
    %139 = vector.shape_cast %138 : vector<2x8x80xf32> to vector<16x80xf32>
    %140 = arith.truncf %139 : vector<16x80xf32> to vector<16x80xbf16>
    %c6 = arith.constant 6 : index
    %c0_120 = arith.constant 0 : index
    %c0_121 = arith.constant 0 : index
    %141 = vector.load %arg5[%c6, %c0_120, %c0_121] : memref<25x80x80xbf16, #tpu.memory_space<vmem>>, vector<1x80x80xbf16>
    %142 = vector.shape_cast %141 : vector<1x80x80xbf16> to vector<80x80xbf16>
    %cst_122 = arith.constant dense<0.000000e+00> : vector<16x80xf32>
    %143 = tpu.matmul %140, %142, %cst_122 {dimension_numbers = #tpu.dot_dimension_numbers<[1], [0], [0], [1], [0, 0, 1, 1], [], []>} : vector<16x80xbf16>, vector<80x80xbf16>, vector<16x80xf32> -> vector<16x80xf32>
    %144 = arith.addf %133, %143 : vector<16x80xf32>
    %c6_123 = arith.constant 6 : index
    %c0_124 = arith.constant 0 : index
    %c0_125 = arith.constant 0 : index
    %145 = vector.load %arg6[%c6_123, %c0_124, %c0_125] : memref<25x80x80xbf16, #tpu.memory_space<vmem>>, vector<1x80x80xbf16>
    %146 = vector.shape_cast %145 : vector<1x80x80xbf16> to vector<80x80xbf16>
    %cst_126 = arith.constant dense<0.000000e+00> : vector<16x80xf32>
    %147 = tpu.matmul %140, %146, %cst_126 {dimension_numbers = #tpu.dot_dimension_numbers<[1], [0], [0], [1], [0, 0, 1, 1], [], []>} : vector<16x80xbf16>, vector<80x80xbf16>, vector<16x80xf32> -> vector<16x80xf32>
    %148 = arith.addf %137, %147 : vector<16x80xf32>
    %c0_127 = arith.constant 0 : index
    %c1_128 = arith.constant 1 : index
    %c20_129 = arith.constant 20 : index
    %149 = vector.load %arg14[%c0_127, %c1_128, %c20_129] : memref<2x12x120xf32, #tpu.memory_space<vmem>>, vector<2x8x80xf32>
    %150 = vector.shape_cast %149 : vector<2x8x80xf32> to vector<16x80xf32>
    %151 = arith.truncf %150 : vector<16x80xf32> to vector<16x80xbf16>
    %c7 = arith.constant 7 : index
    %c0_130 = arith.constant 0 : index
    %c0_131 = arith.constant 0 : index
    %152 = vector.load %arg5[%c7, %c0_130, %c0_131] : memref<25x80x80xbf16, #tpu.memory_space<vmem>>, vector<1x80x80xbf16>
    %153 = vector.shape_cast %152 : vector<1x80x80xbf16> to vector<80x80xbf16>
    %cst_132 = arith.constant dense<0.000000e+00> : vector<16x80xf32>
    %154 = tpu.matmul %151, %153, %cst_132 {dimension_numbers = #tpu.dot_dimension_numbers<[1], [0], [0], [1], [0, 0, 1, 1], [], []>} : vector<16x80xbf16>, vector<80x80xbf16>, vector<16x80xf32> -> vector<16x80xf32>
    %155 = arith.addf %144, %154 : vector<16x80xf32>
    %c7_133 = arith.constant 7 : index
    %c0_134 = arith.constant 0 : index
    %c0_135 = arith.constant 0 : index
    %156 = vector.load %arg6[%c7_133, %c0_134, %c0_135] : memref<25x80x80xbf16, #tpu.memory_space<vmem>>, vector<1x80x80xbf16>
    %157 = vector.shape_cast %156 : vector<1x80x80xbf16> to vector<80x80xbf16>
    %cst_136 = arith.constant dense<0.000000e+00> : vector<16x80xf32>
    %158 = tpu.matmul %151, %157, %cst_136 {dimension_numbers = #tpu.dot_dimension_numbers<[1], [0], [0], [1], [0, 0, 1, 1], [], []>} : vector<16x80xbf16>, vector<80x80xbf16>, vector<16x80xf32> -> vector<16x80xf32>
    %159 = arith.addf %148, %158 : vector<16x80xf32>
    %c0_137 = arith.constant 0 : index
    %c1_138 = arith.constant 1 : index
    %c30_139 = arith.constant 30 : index
    %160 = vector.load %arg14[%c0_137, %c1_138, %c30_139] : memref<2x12x120xf32, #tpu.memory_space<vmem>>, vector<2x8x80xf32>
    %161 = vector.shape_cast %160 : vector<2x8x80xf32> to vector<16x80xf32>
    %162 = arith.truncf %161 : vector<16x80xf32> to vector<16x80xbf16>
    %c8 = arith.constant 8 : index
    %c0_140 = arith.constant 0 : index
    %c0_141 = arith.constant 0 : index
    %163 = vector.load %arg5[%c8, %c0_140, %c0_141] : memref<25x80x80xbf16, #tpu.memory_space<vmem>>, vector<1x80x80xbf16>
    %164 = vector.shape_cast %163 : vector<1x80x80xbf16> to vector<80x80xbf16>
    %cst_142 = arith.constant dense<0.000000e+00> : vector<16x80xf32>
    %165 = tpu.matmul %162, %164, %cst_142 {dimension_numbers = #tpu.dot_dimension_numbers<[1], [0], [0], [1], [0, 0, 1, 1], [], []>} : vector<16x80xbf16>, vector<80x80xbf16>, vector<16x80xf32> -> vector<16x80xf32>
    %166 = arith.addf %155, %165 : vector<16x80xf32>
    %c8_143 = arith.constant 8 : index
    %c0_144 = arith.constant 0 : index
    %c0_145 = arith.constant 0 : index
    %167 = vector.load %arg6[%c8_143, %c0_144, %c0_145] : memref<25x80x80xbf16, #tpu.memory_space<vmem>>, vector<1x80x80xbf16>
    %168 = vector.shape_cast %167 : vector<1x80x80xbf16> to vector<80x80xbf16>
    %cst_146 = arith.constant dense<0.000000e+00> : vector<16x80xf32>
    %169 = tpu.matmul %162, %168, %cst_146 {dimension_numbers = #tpu.dot_dimension_numbers<[1], [0], [0], [1], [0, 0, 1, 1], [], []>} : vector<16x80xbf16>, vector<80x80xbf16>, vector<16x80xf32> -> vector<16x80xf32>
    %170 = arith.addf %159, %169 : vector<16x80xf32>
    %c0_147 = arith.constant 0 : index
    %c1_148 = arith.constant 1 : index
    %c40_149 = arith.constant 40 : index
    %171 = vector.load %arg14[%c0_147, %c1_148, %c40_149] : memref<2x12x120xf32, #tpu.memory_space<vmem>>, vector<2x8x80xf32>
    %172 = vector.shape_cast %171 : vector<2x8x80xf32> to vector<16x80xf32>
    %173 = arith.truncf %172 : vector<16x80xf32> to vector<16x80xbf16>
    %c9 = arith.constant 9 : index
    %c0_150 = arith.constant 0 : index
    %c0_151 = arith.constant 0 : index
    %174 = vector.load %arg5[%c9, %c0_150, %c0_151] : memref<25x80x80xbf16, #tpu.memory_space<vmem>>, vector<1x80x80xbf16>
    %175 = vector.shape_cast %174 : vector<1x80x80xbf16> to vector<80x80xbf16>
    %cst_152 = arith.constant dense<0.000000e+00> : vector<16x80xf32>
    %176 = tpu.matmul %173, %175, %cst_152 {dimension_numbers = #tpu.dot_dimension_numbers<[1], [0], [0], [1], [0, 0, 1, 1], [], []>} : vector<16x80xbf16>, vector<80x80xbf16>, vector<16x80xf32> -> vector<16x80xf32>
    %177 = arith.addf %166, %176 : vector<16x80xf32>
    %c9_153 = arith.constant 9 : index
    %c0_154 = arith.constant 0 : index
    %c0_155 = arith.constant 0 : index
    %178 = vector.load %arg6[%c9_153, %c0_154, %c0_155] : memref<25x80x80xbf16, #tpu.memory_space<vmem>>, vector<1x80x80xbf16>
    %179 = vector.shape_cast %178 : vector<1x80x80xbf16> to vector<80x80xbf16>
    %cst_156 = arith.constant dense<0.000000e+00> : vector<16x80xf32>
    %180 = tpu.matmul %173, %179, %cst_156 {dimension_numbers = #tpu.dot_dimension_numbers<[1], [0], [0], [1], [0, 0, 1, 1], [], []>} : vector<16x80xbf16>, vector<80x80xbf16>, vector<16x80xf32> -> vector<16x80xf32>
    %181 = arith.addf %170, %180 : vector<16x80xf32>
    %c0_157 = arith.constant 0 : index
    %c2_158 = arith.constant 2 : index
    %c0_159 = arith.constant 0 : index
    %182 = vector.load %arg14[%c0_157, %c2_158, %c0_159] : memref<2x12x120xf32, #tpu.memory_space<vmem>>, vector<2x8x80xf32>
    %183 = vector.shape_cast %182 : vector<2x8x80xf32> to vector<16x80xf32>
    %184 = arith.truncf %183 : vector<16x80xf32> to vector<16x80xbf16>
    %c10_160 = arith.constant 10 : index
    %c0_161 = arith.constant 0 : index
    %c0_162 = arith.constant 0 : index
    %185 = vector.load %arg5[%c10_160, %c0_161, %c0_162] : memref<25x80x80xbf16, #tpu.memory_space<vmem>>, vector<1x80x80xbf16>
    %186 = vector.shape_cast %185 : vector<1x80x80xbf16> to vector<80x80xbf16>
    %cst_163 = arith.constant dense<0.000000e+00> : vector<16x80xf32>
    %187 = tpu.matmul %184, %186, %cst_163 {dimension_numbers = #tpu.dot_dimension_numbers<[1], [0], [0], [1], [0, 0, 1, 1], [], []>} : vector<16x80xbf16>, vector<80x80xbf16>, vector<16x80xf32> -> vector<16x80xf32>
    %188 = arith.addf %177, %187 : vector<16x80xf32>
    %c10_164 = arith.constant 10 : index
    %c0_165 = arith.constant 0 : index
    %c0_166 = arith.constant 0 : index
    %189 = vector.load %arg6[%c10_164, %c0_165, %c0_166] : memref<25x80x80xbf16, #tpu.memory_space<vmem>>, vector<1x80x80xbf16>
    %190 = vector.shape_cast %189 : vector<1x80x80xbf16> to vector<80x80xbf16>
    %cst_167 = arith.constant dense<0.000000e+00> : vector<16x80xf32>
    %191 = tpu.matmul %184, %190, %cst_167 {dimension_numbers = #tpu.dot_dimension_numbers<[1], [0], [0], [1], [0, 0, 1, 1], [], []>} : vector<16x80xbf16>, vector<80x80xbf16>, vector<16x80xf32> -> vector<16x80xf32>
    %192 = arith.addf %181, %191 : vector<16x80xf32>
    %c0_168 = arith.constant 0 : index
    %c2_169 = arith.constant 2 : index
    %c10_170 = arith.constant 10 : index
    %193 = vector.load %arg14[%c0_168, %c2_169, %c10_170] : memref<2x12x120xf32, #tpu.memory_space<vmem>>, vector<2x8x80xf32>
    %194 = vector.shape_cast %193 : vector<2x8x80xf32> to vector<16x80xf32>
    %195 = arith.truncf %194 : vector<16x80xf32> to vector<16x80xbf16>
    %c11 = arith.constant 11 : index
    %c0_171 = arith.constant 0 : index
    %c0_172 = arith.constant 0 : index
    %196 = vector.load %arg5[%c11, %c0_171, %c0_172] : memref<25x80x80xbf16, #tpu.memory_space<vmem>>, vector<1x80x80xbf16>
    %197 = vector.shape_cast %196 : vector<1x80x80xbf16> to vector<80x80xbf16>
    %cst_173 = arith.constant dense<0.000000e+00> : vector<16x80xf32>
    %198 = tpu.matmul %195, %197, %cst_173 {dimension_numbers = #tpu.dot_dimension_numbers<[1], [0], [0], [1], [0, 0, 1, 1], [], []>} : vector<16x80xbf16>, vector<80x80xbf16>, vector<16x80xf32> -> vector<16x80xf32>
    %199 = arith.addf %188, %198 : vector<16x80xf32>
    %c11_174 = arith.constant 11 : index
    %c0_175 = arith.constant 0 : index
    %c0_176 = arith.constant 0 : index
    %200 = vector.load %arg6[%c11_174, %c0_175, %c0_176] : memref<25x80x80xbf16, #tpu.memory_space<vmem>>, vector<1x80x80xbf16>
    %201 = vector.shape_cast %200 : vector<1x80x80xbf16> to vector<80x80xbf16>
    %cst_177 = arith.constant dense<0.000000e+00> : vector<16x80xf32>
    %202 = tpu.matmul %195, %201, %cst_177 {dimension_numbers = #tpu.dot_dimension_numbers<[1], [0], [0], [1], [0, 0, 1, 1], [], []>} : vector<16x80xbf16>, vector<80x80xbf16>, vector<16x80xf32> -> vector<16x80xf32>
    %203 = arith.addf %192, %202 : vector<16x80xf32>
    %c0_178 = arith.constant 0 : index
    %c2_179 = arith.constant 2 : index
    %c20_180 = arith.constant 20 : index
    %204 = vector.load %arg14[%c0_178, %c2_179, %c20_180] : memref<2x12x120xf32, #tpu.memory_space<vmem>>, vector<2x8x80xf32>
    %205 = vector.shape_cast %204 : vector<2x8x80xf32> to vector<16x80xf32>
    %206 = arith.truncf %205 : vector<16x80xf32> to vector<16x80xbf16>
    %c12 = arith.constant 12 : index
    %c0_181 = arith.constant 0 : index
    %c0_182 = arith.constant 0 : index
    %207 = vector.load %arg5[%c12, %c0_181, %c0_182] : memref<25x80x80xbf16, #tpu.memory_space<vmem>>, vector<1x80x80xbf16>
    %208 = vector.shape_cast %207 : vector<1x80x80xbf16> to vector<80x80xbf16>
    %cst_183 = arith.constant dense<0.000000e+00> : vector<16x80xf32>
    %209 = tpu.matmul %206, %208, %cst_183 {dimension_numbers = #tpu.dot_dimension_numbers<[1], [0], [0], [1], [0, 0, 1, 1], [], []>} : vector<16x80xbf16>, vector<80x80xbf16>, vector<16x80xf32> -> vector<16x80xf32>
    %210 = arith.addf %199, %209 : vector<16x80xf32>
    %c12_184 = arith.constant 12 : index
    %c0_185 = arith.constant 0 : index
    %c0_186 = arith.constant 0 : index
    %211 = vector.load %arg6[%c12_184, %c0_185, %c0_186] : memref<25x80x80xbf16, #tpu.memory_space<vmem>>, vector<1x80x80xbf16>
    %212 = vector.shape_cast %211 : vector<1x80x80xbf16> to vector<80x80xbf16>
    %cst_187 = arith.constant dense<0.000000e+00> : vector<16x80xf32>
    %213 = tpu.matmul %206, %212, %cst_187 {dimension_numbers = #tpu.dot_dimension_numbers<[1], [0], [0], [1], [0, 0, 1, 1], [], []>} : vector<16x80xbf16>, vector<80x80xbf16>, vector<16x80xf32> -> vector<16x80xf32>
    %214 = arith.addf %203, %213 : vector<16x80xf32>
    %c0_188 = arith.constant 0 : index
    %c2_189 = arith.constant 2 : index
    %c30_190 = arith.constant 30 : index
    %215 = vector.load %arg14[%c0_188, %c2_189, %c30_190] : memref<2x12x120xf32, #tpu.memory_space<vmem>>, vector<2x8x80xf32>
    %216 = vector.shape_cast %215 : vector<2x8x80xf32> to vector<16x80xf32>
    %217 = arith.truncf %216 : vector<16x80xf32> to vector<16x80xbf16>
    %c13 = arith.constant 13 : index
    %c0_191 = arith.constant 0 : index
    %c0_192 = arith.constant 0 : index
    %218 = vector.load %arg5[%c13, %c0_191, %c0_192] : memref<25x80x80xbf16, #tpu.memory_space<vmem>>, vector<1x80x80xbf16>
    %219 = vector.shape_cast %218 : vector<1x80x80xbf16> to vector<80x80xbf16>
    %cst_193 = arith.constant dense<0.000000e+00> : vector<16x80xf32>
    %220 = tpu.matmul %217, %219, %cst_193 {dimension_numbers = #tpu.dot_dimension_numbers<[1], [0], [0], [1], [0, 0, 1, 1], [], []>} : vector<16x80xbf16>, vector<80x80xbf16>, vector<16x80xf32> -> vector<16x80xf32>
    %221 = arith.addf %210, %220 : vector<16x80xf32>
    %c13_194 = arith.constant 13 : index
    %c0_195 = arith.constant 0 : index
    %c0_196 = arith.constant 0 : index
    %222 = vector.load %arg6[%c13_194, %c0_195, %c0_196] : memref<25x80x80xbf16, #tpu.memory_space<vmem>>, vector<1x80x80xbf16>
    %223 = vector.shape_cast %222 : vector<1x80x80xbf16> to vector<80x80xbf16>
    %cst_197 = arith.constant dense<0.000000e+00> : vector<16x80xf32>
    %224 = tpu.matmul %217, %223, %cst_197 {dimension_numbers = #tpu.dot_dimension_numbers<[1], [0], [0], [1], [0, 0, 1, 1], [], []>} : vector<16x80xbf16>, vector<80x80xbf16>, vector<16x80xf32> -> vector<16x80xf32>
    %225 = arith.addf %214, %224 : vector<16x80xf32>
    %c0_198 = arith.constant 0 : index
    %c2_199 = arith.constant 2 : index
    %c40_200 = arith.constant 40 : index
    %226 = vector.load %arg14[%c0_198, %c2_199, %c40_200] : memref<2x12x120xf32, #tpu.memory_space<vmem>>, vector<2x8x80xf32>
    %227 = vector.shape_cast %226 : vector<2x8x80xf32> to vector<16x80xf32>
    %228 = arith.truncf %227 : vector<16x80xf32> to vector<16x80xbf16>
    %c14 = arith.constant 14 : index
    %c0_201 = arith.constant 0 : index
    %c0_202 = arith.constant 0 : index
    %229 = vector.load %arg5[%c14, %c0_201, %c0_202] : memref<25x80x80xbf16, #tpu.memory_space<vmem>>, vector<1x80x80xbf16>
    %230 = vector.shape_cast %229 : vector<1x80x80xbf16> to vector<80x80xbf16>
    %cst_203 = arith.constant dense<0.000000e+00> : vector<16x80xf32>
    %231 = tpu.matmul %228, %230, %cst_203 {dimension_numbers = #tpu.dot_dimension_numbers<[1], [0], [0], [1], [0, 0, 1, 1], [], []>} : vector<16x80xbf16>, vector<80x80xbf16>, vector<16x80xf32> -> vector<16x80xf32>
    %232 = arith.addf %221, %231 : vector<16x80xf32>
    %c14_204 = arith.constant 14 : index
    %c0_205 = arith.constant 0 : index
    %c0_206 = arith.constant 0 : index
    %233 = vector.load %arg6[%c14_204, %c0_205, %c0_206] : memref<25x80x80xbf16, #tpu.memory_space<vmem>>, vector<1x80x80xbf16>
    %234 = vector.shape_cast %233 : vector<1x80x80xbf16> to vector<80x80xbf16>
    %cst_207 = arith.constant dense<0.000000e+00> : vector<16x80xf32>
    %235 = tpu.matmul %228, %234, %cst_207 {dimension_numbers = #tpu.dot_dimension_numbers<[1], [0], [0], [1], [0, 0, 1, 1], [], []>} : vector<16x80xbf16>, vector<80x80xbf16>, vector<16x80xf32> -> vector<16x80xf32>
    %236 = arith.addf %225, %235 : vector<16x80xf32>
    %c0_208 = arith.constant 0 : index
    %c3_209 = arith.constant 3 : index
    %c0_210 = arith.constant 0 : index
    %237 = vector.load %arg14[%c0_208, %c3_209, %c0_210] : memref<2x12x120xf32, #tpu.memory_space<vmem>>, vector<2x8x80xf32>
    %238 = vector.shape_cast %237 : vector<2x8x80xf32> to vector<16x80xf32>
    %239 = arith.truncf %238 : vector<16x80xf32> to vector<16x80xbf16>
    %c15 = arith.constant 15 : index
    %c0_211 = arith.constant 0 : index
    %c0_212 = arith.constant 0 : index
    %240 = vector.load %arg5[%c15, %c0_211, %c0_212] : memref<25x80x80xbf16, #tpu.memory_space<vmem>>, vector<1x80x80xbf16>
    %241 = vector.shape_cast %240 : vector<1x80x80xbf16> to vector<80x80xbf16>
    %cst_213 = arith.constant dense<0.000000e+00> : vector<16x80xf32>
    %242 = tpu.matmul %239, %241, %cst_213 {dimension_numbers = #tpu.dot_dimension_numbers<[1], [0], [0], [1], [0, 0, 1, 1], [], []>} : vector<16x80xbf16>, vector<80x80xbf16>, vector<16x80xf32> -> vector<16x80xf32>
    %243 = arith.addf %232, %242 : vector<16x80xf32>
    %c15_214 = arith.constant 15 : index
    %c0_215 = arith.constant 0 : index
    %c0_216 = arith.constant 0 : index
    %244 = vector.load %arg6[%c15_214, %c0_215, %c0_216] : memref<25x80x80xbf16, #tpu.memory_space<vmem>>, vector<1x80x80xbf16>
    %245 = vector.shape_cast %244 : vector<1x80x80xbf16> to vector<80x80xbf16>
    %cst_217 = arith.constant dense<0.000000e+00> : vector<16x80xf32>
    %246 = tpu.matmul %239, %245, %cst_217 {dimension_numbers = #tpu.dot_dimension_numbers<[1], [0], [0], [1], [0, 0, 1, 1], [], []>} : vector<16x80xbf16>, vector<80x80xbf16>, vector<16x80xf32> -> vector<16x80xf32>
    %247 = arith.addf %236, %246 : vector<16x80xf32>
    %c0_218 = arith.constant 0 : index
    %c3_219 = arith.constant 3 : index
    %c10_220 = arith.constant 10 : index
    %248 = vector.load %arg14[%c0_218, %c3_219, %c10_220] : memref<2x12x120xf32, #tpu.memory_space<vmem>>, vector<2x8x80xf32>
    %249 = vector.shape_cast %248 : vector<2x8x80xf32> to vector<16x80xf32>
    %250 = arith.truncf %249 : vector<16x80xf32> to vector<16x80xbf16>
    %c16 = arith.constant 16 : index
    %c0_221 = arith.constant 0 : index
    %c0_222 = arith.constant 0 : index
    %251 = vector.load %arg5[%c16, %c0_221, %c0_222] : memref<25x80x80xbf16, #tpu.memory_space<vmem>>, vector<1x80x80xbf16>
    %252 = vector.shape_cast %251 : vector<1x80x80xbf16> to vector<80x80xbf16>
    %cst_223 = arith.constant dense<0.000000e+00> : vector<16x80xf32>
    %253 = tpu.matmul %250, %252, %cst_223 {dimension_numbers = #tpu.dot_dimension_numbers<[1], [0], [0], [1], [0, 0, 1, 1], [], []>} : vector<16x80xbf16>, vector<80x80xbf16>, vector<16x80xf32> -> vector<16x80xf32>
    %254 = arith.addf %243, %253 : vector<16x80xf32>
    %c16_224 = arith.constant 16 : index
    %c0_225 = arith.constant 0 : index
    %c0_226 = arith.constant 0 : index
    %255 = vector.load %arg6[%c16_224, %c0_225, %c0_226] : memref<25x80x80xbf16, #tpu.memory_space<vmem>>, vector<1x80x80xbf16>
    %256 = vector.shape_cast %255 : vector<1x80x80xbf16> to vector<80x80xbf16>
    %cst_227 = arith.constant dense<0.000000e+00> : vector<16x80xf32>
    %257 = tpu.matmul %250, %256, %cst_227 {dimension_numbers = #tpu.dot_dimension_numbers<[1], [0], [0], [1], [0, 0, 1, 1], [], []>} : vector<16x80xbf16>, vector<80x80xbf16>, vector<16x80xf32> -> vector<16x80xf32>
    %258 = arith.addf %247, %257 : vector<16x80xf32>
    %c0_228 = arith.constant 0 : index
    %c3_229 = arith.constant 3 : index
    %c20_230 = arith.constant 20 : index
    %259 = vector.load %arg14[%c0_228, %c3_229, %c20_230] : memref<2x12x120xf32, #tpu.memory_space<vmem>>, vector<2x8x80xf32>
    %260 = vector.shape_cast %259 : vector<2x8x80xf32> to vector<16x80xf32>
    %261 = arith.truncf %260 : vector<16x80xf32> to vector<16x80xbf16>
    %c17 = arith.constant 17 : index
    %c0_231 = arith.constant 0 : index
    %c0_232 = arith.constant 0 : index
    %262 = vector.load %arg5[%c17, %c0_231, %c0_232] : memref<25x80x80xbf16, #tpu.memory_space<vmem>>, vector<1x80x80xbf16>
    %263 = vector.shape_cast %262 : vector<1x80x80xbf16> to vector<80x80xbf16>
    %cst_233 = arith.constant dense<0.000000e+00> : vector<16x80xf32>
    %264 = tpu.matmul %261, %263, %cst_233 {dimension_numbers = #tpu.dot_dimension_numbers<[1], [0], [0], [1], [0, 0, 1, 1], [], []>} : vector<16x80xbf16>, vector<80x80xbf16>, vector<16x80xf32> -> vector<16x80xf32>
    %265 = arith.addf %254, %264 : vector<16x80xf32>
    %c17_234 = arith.constant 17 : index
    %c0_235 = arith.constant 0 : index
    %c0_236 = arith.constant 0 : index
    %266 = vector.load %arg6[%c17_234, %c0_235, %c0_236] : memref<25x80x80xbf16, #tpu.memory_space<vmem>>, vector<1x80x80xbf16>
    %267 = vector.shape_cast %266 : vector<1x80x80xbf16> to vector<80x80xbf16>
    %cst_237 = arith.constant dense<0.000000e+00> : vector<16x80xf32>
    %268 = tpu.matmul %261, %267, %cst_237 {dimension_numbers = #tpu.dot_dimension_numbers<[1], [0], [0], [1], [0, 0, 1, 1], [], []>} : vector<16x80xbf16>, vector<80x80xbf16>, vector<16x80xf32> -> vector<16x80xf32>
    %269 = arith.addf %258, %268 : vector<16x80xf32>
    %c0_238 = arith.constant 0 : index
    %c3_239 = arith.constant 3 : index
    %c30_240 = arith.constant 30 : index
    %270 = vector.load %arg14[%c0_238, %c3_239, %c30_240] : memref<2x12x120xf32, #tpu.memory_space<vmem>>, vector<2x8x80xf32>
    %271 = vector.shape_cast %270 : vector<2x8x80xf32> to vector<16x80xf32>
    %272 = arith.truncf %271 : vector<16x80xf32> to vector<16x80xbf16>
    %c18 = arith.constant 18 : index
    %c0_241 = arith.constant 0 : index
    %c0_242 = arith.constant 0 : index
    %273 = vector.load %arg5[%c18, %c0_241, %c0_242] : memref<25x80x80xbf16, #tpu.memory_space<vmem>>, vector<1x80x80xbf16>
    %274 = vector.shape_cast %273 : vector<1x80x80xbf16> to vector<80x80xbf16>
    %cst_243 = arith.constant dense<0.000000e+00> : vector<16x80xf32>
    %275 = tpu.matmul %272, %274, %cst_243 {dimension_numbers = #tpu.dot_dimension_numbers<[1], [0], [0], [1], [0, 0, 1, 1], [], []>} : vector<16x80xbf16>, vector<80x80xbf16>, vector<16x80xf32> -> vector<16x80xf32>
    %276 = arith.addf %265, %275 : vector<16x80xf32>
    %c18_244 = arith.constant 18 : index
    %c0_245 = arith.constant 0 : index
    %c0_246 = arith.constant 0 : index
    %277 = vector.load %arg6[%c18_244, %c0_245, %c0_246] : memref<25x80x80xbf16, #tpu.memory_space<vmem>>, vector<1x80x80xbf16>
    %278 = vector.shape_cast %277 : vector<1x80x80xbf16> to vector<80x80xbf16>
    %cst_247 = arith.constant dense<0.000000e+00> : vector<16x80xf32>
    %279 = tpu.matmul %272, %278, %cst_247 {dimension_numbers = #tpu.dot_dimension_numbers<[1], [0], [0], [1], [0, 0, 1, 1], [], []>} : vector<16x80xbf16>, vector<80x80xbf16>, vector<16x80xf32> -> vector<16x80xf32>
    %280 = arith.addf %269, %279 : vector<16x80xf32>
    %c0_248 = arith.constant 0 : index
    %c3_249 = arith.constant 3 : index
    %c40_250 = arith.constant 40 : index
    %281 = vector.load %arg14[%c0_248, %c3_249, %c40_250] : memref<2x12x120xf32, #tpu.memory_space<vmem>>, vector<2x8x80xf32>
    %282 = vector.shape_cast %281 : vector<2x8x80xf32> to vector<16x80xf32>
    %283 = arith.truncf %282 : vector<16x80xf32> to vector<16x80xbf16>
    %c19 = arith.constant 19 : index
    %c0_251 = arith.constant 0 : index
    %c0_252 = arith.constant 0 : index
    %284 = vector.load %arg5[%c19, %c0_251, %c0_252] : memref<25x80x80xbf16, #tpu.memory_space<vmem>>, vector<1x80x80xbf16>
    %285 = vector.shape_cast %284 : vector<1x80x80xbf16> to vector<80x80xbf16>
    %cst_253 = arith.constant dense<0.000000e+00> : vector<16x80xf32>
    %286 = tpu.matmul %283, %285, %cst_253 {dimension_numbers = #tpu.dot_dimension_numbers<[1], [0], [0], [1], [0, 0, 1, 1], [], []>} : vector<16x80xbf16>, vector<80x80xbf16>, vector<16x80xf32> -> vector<16x80xf32>
    %287 = arith.addf %276, %286 : vector<16x80xf32>
    %c19_254 = arith.constant 19 : index
    %c0_255 = arith.constant 0 : index
    %c0_256 = arith.constant 0 : index
    %288 = vector.load %arg6[%c19_254, %c0_255, %c0_256] : memref<25x80x80xbf16, #tpu.memory_space<vmem>>, vector<1x80x80xbf16>
    %289 = vector.shape_cast %288 : vector<1x80x80xbf16> to vector<80x80xbf16>
    %cst_257 = arith.constant dense<0.000000e+00> : vector<16x80xf32>
    %290 = tpu.matmul %283, %289, %cst_257 {dimension_numbers = #tpu.dot_dimension_numbers<[1], [0], [0], [1], [0, 0, 1, 1], [], []>} : vector<16x80xbf16>, vector<80x80xbf16>, vector<16x80xf32> -> vector<16x80xf32>
    %291 = arith.addf %280, %290 : vector<16x80xf32>
    %c0_258 = arith.constant 0 : index
    %c4_259 = arith.constant 4 : index
    %c0_260 = arith.constant 0 : index
    %292 = vector.load %arg14[%c0_258, %c4_259, %c0_260] : memref<2x12x120xf32, #tpu.memory_space<vmem>>, vector<2x8x80xf32>
    %293 = vector.shape_cast %292 : vector<2x8x80xf32> to vector<16x80xf32>
    %294 = arith.truncf %293 : vector<16x80xf32> to vector<16x80xbf16>
    %c20_261 = arith.constant 20 : index
    %c0_262 = arith.constant 0 : index
    %c0_263 = arith.constant 0 : index
    %295 = vector.load %arg5[%c20_261, %c0_262, %c0_263] : memref<25x80x80xbf16, #tpu.memory_space<vmem>>, vector<1x80x80xbf16>
    %296 = vector.shape_cast %295 : vector<1x80x80xbf16> to vector<80x80xbf16>
    %cst_264 = arith.constant dense<0.000000e+00> : vector<16x80xf32>
    %297 = tpu.matmul %294, %296, %cst_264 {dimension_numbers = #tpu.dot_dimension_numbers<[1], [0], [0], [1], [0, 0, 1, 1], [], []>} : vector<16x80xbf16>, vector<80x80xbf16>, vector<16x80xf32> -> vector<16x80xf32>
    %298 = arith.addf %287, %297 : vector<16x80xf32>
    %c20_265 = arith.constant 20 : index
    %c0_266 = arith.constant 0 : index
    %c0_267 = arith.constant 0 : index
    %299 = vector.load %arg6[%c20_265, %c0_266, %c0_267] : memref<25x80x80xbf16, #tpu.memory_space<vmem>>, vector<1x80x80xbf16>
    %300 = vector.shape_cast %299 : vector<1x80x80xbf16> to vector<80x80xbf16>
    %cst_268 = arith.constant dense<0.000000e+00> : vector<16x80xf32>
    %301 = tpu.matmul %294, %300, %cst_268 {dimension_numbers = #tpu.dot_dimension_numbers<[1], [0], [0], [1], [0, 0, 1, 1], [], []>} : vector<16x80xbf16>, vector<80x80xbf16>, vector<16x80xf32> -> vector<16x80xf32>
    %302 = arith.addf %291, %301 : vector<16x80xf32>
    %c0_269 = arith.constant 0 : index
    %c4_270 = arith.constant 4 : index
    %c10_271 = arith.constant 10 : index
    %303 = vector.load %arg14[%c0_269, %c4_270, %c10_271] : memref<2x12x120xf32, #tpu.memory_space<vmem>>, vector<2x8x80xf32>
    %304 = vector.shape_cast %303 : vector<2x8x80xf32> to vector<16x80xf32>
    %305 = arith.truncf %304 : vector<16x80xf32> to vector<16x80xbf16>
    %c21 = arith.constant 21 : index
    %c0_272 = arith.constant 0 : index
    %c0_273 = arith.constant 0 : index
    %306 = vector.load %arg5[%c21, %c0_272, %c0_273] : memref<25x80x80xbf16, #tpu.memory_space<vmem>>, vector<1x80x80xbf16>
    %307 = vector.shape_cast %306 : vector<1x80x80xbf16> to vector<80x80xbf16>
    %cst_274 = arith.constant dense<0.000000e+00> : vector<16x80xf32>
    %308 = tpu.matmul %305, %307, %cst_274 {dimension_numbers = #tpu.dot_dimension_numbers<[1], [0], [0], [1], [0, 0, 1, 1], [], []>} : vector<16x80xbf16>, vector<80x80xbf16>, vector<16x80xf32> -> vector<16x80xf32>
    %309 = arith.addf %298, %308 : vector<16x80xf32>
    %c21_275 = arith.constant 21 : index
    %c0_276 = arith.constant 0 : index
    %c0_277 = arith.constant 0 : index
    %310 = vector.load %arg6[%c21_275, %c0_276, %c0_277] : memref<25x80x80xbf16, #tpu.memory_space<vmem>>, vector<1x80x80xbf16>
    %311 = vector.shape_cast %310 : vector<1x80x80xbf16> to vector<80x80xbf16>
    %cst_278 = arith.constant dense<0.000000e+00> : vector<16x80xf32>
    %312 = tpu.matmul %305, %311, %cst_278 {dimension_numbers = #tpu.dot_dimension_numbers<[1], [0], [0], [1], [0, 0, 1, 1], [], []>} : vector<16x80xbf16>, vector<80x80xbf16>, vector<16x80xf32> -> vector<16x80xf32>
    %313 = arith.addf %302, %312 : vector<16x80xf32>
    %c0_279 = arith.constant 0 : index
    %c4_280 = arith.constant 4 : index
    %c20_281 = arith.constant 20 : index
    %314 = vector.load %arg14[%c0_279, %c4_280, %c20_281] : memref<2x12x120xf32, #tpu.memory_space<vmem>>, vector<2x8x80xf32>
    %315 = vector.shape_cast %314 : vector<2x8x80xf32> to vector<16x80xf32>
    %316 = arith.truncf %315 : vector<16x80xf32> to vector<16x80xbf16>
    %c22 = arith.constant 22 : index
    %c0_282 = arith.constant 0 : index
    %c0_283 = arith.constant 0 : index
    %317 = vector.load %arg5[%c22, %c0_282, %c0_283] : memref<25x80x80xbf16, #tpu.memory_space<vmem>>, vector<1x80x80xbf16>
    %318 = vector.shape_cast %317 : vector<1x80x80xbf16> to vector<80x80xbf16>
    %cst_284 = arith.constant dense<0.000000e+00> : vector<16x80xf32>
    %319 = tpu.matmul %316, %318, %cst_284 {dimension_numbers = #tpu.dot_dimension_numbers<[1], [0], [0], [1], [0, 0, 1, 1], [], []>} : vector<16x80xbf16>, vector<80x80xbf16>, vector<16x80xf32> -> vector<16x80xf32>
    %320 = arith.addf %309, %319 : vector<16x80xf32>
    %c22_285 = arith.constant 22 : index
    %c0_286 = arith.constant 0 : index
    %c0_287 = arith.constant 0 : index
    %321 = vector.load %arg6[%c22_285, %c0_286, %c0_287] : memref<25x80x80xbf16, #tpu.memory_space<vmem>>, vector<1x80x80xbf16>
    %322 = vector.shape_cast %321 : vector<1x80x80xbf16> to vector<80x80xbf16>
    %cst_288 = arith.constant dense<0.000000e+00> : vector<16x80xf32>
    %323 = tpu.matmul %316, %322, %cst_288 {dimension_numbers = #tpu.dot_dimension_numbers<[1], [0], [0], [1], [0, 0, 1, 1], [], []>} : vector<16x80xbf16>, vector<80x80xbf16>, vector<16x80xf32> -> vector<16x80xf32>
    %324 = arith.addf %313, %323 : vector<16x80xf32>
    %c0_289 = arith.constant 0 : index
    %c4_290 = arith.constant 4 : index
    %c30_291 = arith.constant 30 : index
    %325 = vector.load %arg14[%c0_289, %c4_290, %c30_291] : memref<2x12x120xf32, #tpu.memory_space<vmem>>, vector<2x8x80xf32>
    %326 = vector.shape_cast %325 : vector<2x8x80xf32> to vector<16x80xf32>
    %327 = arith.truncf %326 : vector<16x80xf32> to vector<16x80xbf16>
    %c23 = arith.constant 23 : index
    %c0_292 = arith.constant 0 : index
    %c0_293 = arith.constant 0 : index
    %328 = vector.load %arg5[%c23, %c0_292, %c0_293] : memref<25x80x80xbf16, #tpu.memory_space<vmem>>, vector<1x80x80xbf16>
    %329 = vector.shape_cast %328 : vector<1x80x80xbf16> to vector<80x80xbf16>
    %cst_294 = arith.constant dense<0.000000e+00> : vector<16x80xf32>
    %330 = tpu.matmul %327, %329, %cst_294 {dimension_numbers = #tpu.dot_dimension_numbers<[1], [0], [0], [1], [0, 0, 1, 1], [], []>} : vector<16x80xbf16>, vector<80x80xbf16>, vector<16x80xf32> -> vector<16x80xf32>
    %331 = arith.addf %320, %330 : vector<16x80xf32>
    %c23_295 = arith.constant 23 : index
    %c0_296 = arith.constant 0 : index
    %c0_297 = arith.constant 0 : index
    %332 = vector.load %arg6[%c23_295, %c0_296, %c0_297] : memref<25x80x80xbf16, #tpu.memory_space<vmem>>, vector<1x80x80xbf16>
    %333 = vector.shape_cast %332 : vector<1x80x80xbf16> to vector<80x80xbf16>
    %cst_298 = arith.constant dense<0.000000e+00> : vector<16x80xf32>
    %334 = tpu.matmul %327, %333, %cst_298 {dimension_numbers = #tpu.dot_dimension_numbers<[1], [0], [0], [1], [0, 0, 1, 1], [], []>} : vector<16x80xbf16>, vector<80x80xbf16>, vector<16x80xf32> -> vector<16x80xf32>
    %335 = arith.addf %324, %334 : vector<16x80xf32>
    %c0_299 = arith.constant 0 : index
    %c4_300 = arith.constant 4 : index
    %c40_301 = arith.constant 40 : index
    %336 = vector.load %arg14[%c0_299, %c4_300, %c40_301] : memref<2x12x120xf32, #tpu.memory_space<vmem>>, vector<2x8x80xf32>
    %337 = vector.shape_cast %336 : vector<2x8x80xf32> to vector<16x80xf32>
    %338 = arith.truncf %337 : vector<16x80xf32> to vector<16x80xbf16>
    %c24 = arith.constant 24 : index
    %c0_302 = arith.constant 0 : index
    %c0_303 = arith.constant 0 : index
    %339 = vector.load %arg5[%c24, %c0_302, %c0_303] : memref<25x80x80xbf16, #tpu.memory_space<vmem>>, vector<1x80x80xbf16>
    %340 = vector.shape_cast %339 : vector<1x80x80xbf16> to vector<80x80xbf16>
    %cst_304 = arith.constant dense<0.000000e+00> : vector<16x80xf32>
    %341 = tpu.matmul %338, %340, %cst_304 {dimension_numbers = #tpu.dot_dimension_numbers<[1], [0], [0], [1], [0, 0, 1, 1], [], []>} : vector<16x80xbf16>, vector<80x80xbf16>, vector<16x80xf32> -> vector<16x80xf32>
    %342 = arith.addf %331, %341 : vector<16x80xf32>
    %c24_305 = arith.constant 24 : index
    %c0_306 = arith.constant 0 : index
    %c0_307 = arith.constant 0 : index
    %343 = vector.load %arg6[%c24_305, %c0_306, %c0_307] : memref<25x80x80xbf16, #tpu.memory_space<vmem>>, vector<1x80x80xbf16>
    %344 = vector.shape_cast %343 : vector<1x80x80xbf16> to vector<80x80xbf16>
    %cst_308 = arith.constant dense<0.000000e+00> : vector<16x80xf32>
    %345 = tpu.matmul %338, %344, %cst_308 {dimension_numbers = #tpu.dot_dimension_numbers<[1], [0], [0], [1], [0, 0, 1, 1], [], []>} : vector<16x80xbf16>, vector<80x80xbf16>, vector<16x80xf32> -> vector<16x80xf32>
    %346 = arith.addf %335, %345 : vector<16x80xf32>
    %347 = arith.maximumf %342, %346 : vector<16x80xf32>
    %c0_309 = arith.constant 0 : index
    %c0_310 = arith.constant 0 : index
    %348 = vector.load %arg7[%c0_309, %c0_310] : memref<1x80xf32, #tpu.memory_space<vmem>>, vector<1x80xf32>
    %349 = vector.broadcast %348 : vector<1x80xf32> to vector<16x80xf32>
    %350 = arith.addf %347, %349 : vector<16x80xf32>
    %cst_311 = arith.constant 0.000000e+00 : f32
    %351 = vector.broadcast %cst_311 : f32 to vector<16x80xf32>
    %352 = arith.maximumf %350, %351 : vector<16x80xf32>
    %c0_312 = arith.constant 0 : index
    %c0_313 = arith.constant 0 : index
    %353 = vector.load %arg15[%c0_312, %c0_313] : memref<16x80xf32, #tpu.memory_space<vmem>>, vector<16x80xf32>
    tpu.vector_store %arg15[%c0_312, %c0_313], %352 {strides = array<i32>} : memref<16x80xf32, #tpu.memory_space<vmem>>, vector<16x80xf32>,
    %c0_314 = arith.constant 0 : index
    %c0_315 = arith.constant 0 : index
    %354 = tpu.strided_load %arg15[%c0_314, %c0_315] {strides = array<i32: 2, 1>} : memref<16x80xf32, #tpu.memory_space<vmem>>, vector<8x80xf32>
    %c1_316 = arith.constant 1 : index
    %c0_317 = arith.constant 0 : index
    %355 = tpu.strided_load %arg15[%c1_316, %c0_317] {strides = array<i32: 2, 1>} : memref<16x80xf32, #tpu.memory_space<vmem>>, vector<8x80xf32>
    %356 = arith.maximumf %354, %355 : vector<8x80xf32>
    %c0_318 = arith.constant 0 : index
    %c0_319 = arith.constant 0 : index
    %357 = vector.load %arg16[%c0_318, %c0_319] : memref<8x80xf32, #tpu.memory_space<vmem>>, vector<8x80xf32>
    tpu.vector_store %arg16[%c0_318, %c0_319], %356 {strides = array<i32>} : memref<8x80xf32, #tpu.memory_space<vmem>>, vector<8x80xf32>,
    %cst_320 = arith.constant 0.000000e+00 : f32
    %358 = vector.broadcast %cst_320 : f32 to vector<2x50xf32>
    %c0_321 = arith.constant 0 : index
    %c0_322 = arith.constant 0 : index
    %359 = tpu.strided_load %arg16[%c0_321, %c0_322] {strides = array<i32: 4, 1>} : memref<8x80xf32, #tpu.memory_space<vmem>>, vector<2x80xf32>
    %360 = arith.truncf %359 : vector<2x80xf32> to vector<2x80xbf16>
    %c0_323 = arith.constant 0 : index
    %c0_324 = arith.constant 0 : index
    %c0_325 = arith.constant 0 : index
    %361 = vector.load %arg8[%c0_323, %c0_324, %c0_325] : memref<4x80x50xbf16, #tpu.memory_space<vmem>>, vector<1x80x50xbf16>
    %362 = vector.shape_cast %361 : vector<1x80x50xbf16> to vector<80x50xbf16>
    %cst_326 = arith.constant dense<0.000000e+00> : vector<2x50xf32>
    %363 = tpu.matmul %360, %362, %cst_326 {dimension_numbers = #tpu.dot_dimension_numbers<[1], [0], [0], [1], [0, 0, 1, 1], [], []>} : vector<2x80xbf16>, vector<80x50xbf16>, vector<2x50xf32> -> vector<2x50xf32>
    %364 = arith.addf %358, %363 : vector<2x50xf32>
    %c1_327 = arith.constant 1 : index
    %c0_328 = arith.constant 0 : index
    %365 = tpu.strided_load %arg16[%c1_327, %c0_328] {strides = array<i32: 4, 1>} : memref<8x80xf32, #tpu.memory_space<vmem>>, vector<2x80xf32>
    %366 = arith.truncf %365 : vector<2x80xf32> to vector<2x80xbf16>
    %c1_329 = arith.constant 1 : index
    %c0_330 = arith.constant 0 : index
    %c0_331 = arith.constant 0 : index
    %367 = vector.load %arg8[%c1_329, %c0_330, %c0_331] : memref<4x80x50xbf16, #tpu.memory_space<vmem>>, vector<1x80x50xbf16>
    %368 = vector.shape_cast %367 : vector<1x80x50xbf16> to vector<80x50xbf16>
    %cst_332 = arith.constant dense<0.000000e+00> : vector<2x50xf32>
    %369 = tpu.matmul %366, %368, %cst_332 {dimension_numbers = #tpu.dot_dimension_numbers<[1], [0], [0], [1], [0, 0, 1, 1], [], []>} : vector<2x80xbf16>, vector<80x50xbf16>, vector<2x50xf32> -> vector<2x50xf32>
    %370 = arith.addf %364, %369 : vector<2x50xf32>
    %c2_333 = arith.constant 2 : index
    %c0_334 = arith.constant 0 : index
    %371 = tpu.strided_load %arg16[%c2_333, %c0_334] {strides = array<i32: 4, 1>} : memref<8x80xf32, #tpu.memory_space<vmem>>, vector<2x80xf32>
    %372 = arith.truncf %371 : vector<2x80xf32> to vector<2x80xbf16>
    %c2_335 = arith.constant 2 : index
    %c0_336 = arith.constant 0 : index
    %c0_337 = arith.constant 0 : index
    %373 = vector.load %arg8[%c2_335, %c0_336, %c0_337] : memref<4x80x50xbf16, #tpu.memory_space<vmem>>, vector<1x80x50xbf16>
    %374 = vector.shape_cast %373 : vector<1x80x50xbf16> to vector<80x50xbf16>
    %cst_338 = arith.constant dense<0.000000e+00> : vector<2x50xf32>
    %375 = tpu.matmul %372, %374, %cst_338 {dimension_numbers = #tpu.dot_dimension_numbers<[1], [0], [0], [1], [0, 0, 1, 1], [], []>} : vector<2x80xbf16>, vector<80x50xbf16>, vector<2x50xf32> -> vector<2x50xf32>
    %376 = arith.addf %370, %375 : vector<2x50xf32>
    %c3_339 = arith.constant 3 : index
    %c0_340 = arith.constant 0 : index
    %377 = tpu.strided_load %arg16[%c3_339, %c0_340] {strides = array<i32: 4, 1>} : memref<8x80xf32, #tpu.memory_space<vmem>>, vector<2x80xf32>
    %378 = arith.truncf %377 : vector<2x80xf32> to vector<2x80xbf16>
    %c3_341 = arith.constant 3 : index
    %c0_342 = arith.constant 0 : index
    %c0_343 = arith.constant 0 : index
    %379 = vector.load %arg8[%c3_341, %c0_342, %c0_343] : memref<4x80x50xbf16, #tpu.memory_space<vmem>>, vector<1x80x50xbf16>
    %380 = vector.shape_cast %379 : vector<1x80x50xbf16> to vector<80x50xbf16>
    %cst_344 = arith.constant dense<0.000000e+00> : vector<2x50xf32>
    %381 = tpu.matmul %378, %380, %cst_344 {dimension_numbers = #tpu.dot_dimension_numbers<[1], [0], [0], [1], [0, 0, 1, 1], [], []>} : vector<2x80xbf16>, vector<80x50xbf16>, vector<2x50xf32> -> vector<2x50xf32>
    %382 = arith.addf %376, %381 : vector<2x50xf32>
    %c0_345 = arith.constant 0 : index
    %c0_346 = arith.constant 0 : index
    %383 = vector.load %arg9[%c0_345, %c0_346] : memref<1x50xf32, #tpu.memory_space<vmem>>, vector<1x50xf32>
    %384 = vector.broadcast %383 : vector<1x50xf32> to vector<2x50xf32>
    %385 = arith.addf %382, %384 : vector<2x50xf32>
    %cst_347 = arith.constant 0.000000e+00 : f32
    %386 = vector.broadcast %cst_347 : f32 to vector<2x50xf32>
    %387 = arith.maximumf %385, %386 : vector<2x50xf32>
    %388 = arith.truncf %387 : vector<2x50xf32> to vector<2x50xbf16>
    %c0_348 = arith.constant 0 : index
    %c0_349 = arith.constant 0 : index
    %389 = vector.load %arg10[%c0_348, %c0_349] : memref<50x128xbf16, #tpu.memory_space<vmem>>, vector<50x128xbf16>
    %cst_350 = arith.constant dense<0.000000e+00> : vector<2x128xf32>
    %390 = tpu.matmul %388, %389, %cst_350 {dimension_numbers = #tpu.dot_dimension_numbers<[1], [0], [0], [1], [0, 0, 1, 1], [], []>} : vector<2x50xbf16>, vector<50x128xbf16>, vector<2x128xf32> -> vector<2x128xf32>
    %c0_351 = arith.constant 0 : index
    %c0_352 = arith.constant 0 : index
    %391 = vector.load %arg11[%c0_351, %c0_352] : memref<1x128xf32, #tpu.memory_space<vmem>>, vector<1x128xf32>
    %392 = vector.broadcast %391 : vector<1x128xf32> to vector<2x128xf32>
    %393 = arith.addf %390, %392 : vector<2x128xf32>
    %c0_353 = arith.constant 0 : index
    %c0_354 = arith.constant 0 : index
    %394 = vector.load %arg12[%c0_353, %c0_354] : memref<2x128xf32, #tpu.memory_space<vmem>>, vector<2x128xf32>
    tpu.vector_store %arg12[%c0_353, %c0_354], %393 {strides = array<i32>} : memref<2x128xf32, #tpu.memory_space<vmem>>, vector<2x128xf32>,
    return
  }
  func.func @transform_0(%arg0: i32) -> (i32, i32, i32) {
    %c0_i32 = arith.constant 0 : i32
    %c0_i32_0 = arith.constant 0 : i32
    %c0_i32_1 = arith.constant 0 : i32
    return %arg0, %c0_i32, %c0_i32_0 : i32, i32, i32
  }
  func.func @transform_1(%arg0: i32) -> (i32, i32, i32) {
    %c0_i32 = arith.constant 0 : i32
    %c0_i32_0 = arith.constant 0 : i32
    %c0_i32_1 = arith.constant 0 : i32
    %c0_i32_2 = arith.constant 0 : i32
    return %c0_i32, %c0_i32_0, %c0_i32_1 : i32, i32, i32
  }
  func.func @transform_2(%arg0: i32) -> (i32, i32, i32) {
    %c0_i32 = arith.constant 0 : i32
    %c0_i32_0 = arith.constant 0 : i32
    %c0_i32_1 = arith.constant 0 : i32
    %c0_i32_2 = arith.constant 0 : i32
    return %c0_i32, %c0_i32_0, %c0_i32_1 : i32, i32, i32
  }
  func.func @transform_3(%arg0: i32) -> (i32, i32) {
    %c0_i32 = arith.constant 0 : i32
    %c0_i32_0 = arith.constant 0 : i32
    %c0_i32_1 = arith.constant 0 : i32
    return %c0_i32, %c0_i32_0 : i32, i32
  }
  func.func @transform_4(%arg0: i32) -> (i32, i32, i32) {
    %c0_i32 = arith.constant 0 : i32
    %c0_i32_0 = arith.constant 0 : i32
    %c0_i32_1 = arith.constant 0 : i32
    %c0_i32_2 = arith.constant 0 : i32
    return %c0_i32, %c0_i32_0, %c0_i32_1 : i32, i32, i32
  }
  func.func @transform_5(%arg0: i32) -> (i32, i32, i32) {
    %c0_i32 = arith.constant 0 : i32
    %c0_i32_0 = arith.constant 0 : i32
    %c0_i32_1 = arith.constant 0 : i32
    %c0_i32_2 = arith.constant 0 : i32
    return %c0_i32, %c0_i32_0, %c0_i32_1 : i32, i32, i32
  }
  func.func @transform_6(%arg0: i32) -> (i32, i32) {
    %c0_i32 = arith.constant 0 : i32
    %c0_i32_0 = arith.constant 0 : i32
    %c0_i32_1 = arith.constant 0 : i32
    return %c0_i32, %c0_i32_0 : i32, i32
  }
  func.func @transform_7(%arg0: i32) -> (i32, i32, i32) {
    %c0_i32 = arith.constant 0 : i32
    %c0_i32_0 = arith.constant 0 : i32
    %c0_i32_1 = arith.constant 0 : i32
    %c0_i32_2 = arith.constant 0 : i32
    return %c0_i32, %c0_i32_0, %c0_i32_1 : i32, i32, i32
  }
  func.func @transform_8(%arg0: i32) -> (i32, i32) {
    %c0_i32 = arith.constant 0 : i32
    %c0_i32_0 = arith.constant 0 : i32
    %c0_i32_1 = arith.constant 0 : i32
    return %c0_i32, %c0_i32_0 : i32, i32
  }
  func.func @transform_9(%arg0: i32) -> (i32, i32) {
    %c0_i32 = arith.constant 0 : i32
    %c0_i32_0 = arith.constant 0 : i32
    %c0_i32_1 = arith.constant 0 : i32
    return %c0_i32, %c0_i32_0 : i32, i32
  }
  func.func @transform_10(%arg0: i32) -> (i32, i32) {
    %c0_i32 = arith.constant 0 : i32
    %c0_i32_0 = arith.constant 0 : i32
    %c0_i32_1 = arith.constant 0 : i32
    return %c0_i32, %c0_i32_0 : i32, i32
  }
  func.func @transform_11(%arg0: i32) -> (i32, i32) {
    %c0_i32 = arith.constant 0 : i32
    %c0_i32_0 = arith.constant 0 : i32
    return %arg0, %c0_i32 : i32, i32
  }
}

</mosaic_0001>

<llo_original>
// kernel: cnn_forward.1
$region0: #{cnn_forward.1}
  #allocation0 [shape = 'u32[]', space=smem, size = 0x4, offset = 0x4, fixed_abs, tag = 'smem constant byte address 0x4 - core index']
  #allocation1 [shape = 'u32[144,128]{1,0:T(1,128)}', space=vmem, size = 0x12000, scoped, tag = 'internal scratch']
  #allocation2 [shape = 'f32[2,24,120]{2,1,0:T(8,128)}', space=vmem, size = 0x6000, scoped, tag = 'scratch operand']
  #allocation3 [shape = 'f32[2,12,120]{2,1,0:T(8,128)}', space=vmem, size = 0x4000, scoped, tag = 'scratch operand']
  #allocation4 [shape = 'f32[16,80]{1,0:T(8,128)}', space=vmem, size = 0x2000, scoped, tag = 'scratch operand']
  #allocation5 [shape = 'f32[8,80]{1,0:T(8,128)}', space=vmem, size = 0x1000, scoped, tag = 'scratch operand']
  %s0 = inlined_call_operand.vmem [shape: f32[2,28,28], index: 0, kind: input, shape index: {}]
  %s1 = inlined_call_operand.vmem [shape: bf16[5,28,120], index: 1, kind: input, shape index: {}]
  %s2 = inlined_call_operand.vmem [shape: bf16[5,28,120], index: 2, kind: input, shape index: {}]
  %s3 = inlined_call_operand.vmem [shape: f32[1,120], index: 3, kind: input, shape index: {}]
  %s4 = inlined_call_operand.hbm [shape: bf16[25,80,80], index: 4, kind: input, shape index: {}]
  %s5 = inlined_call_operand.hbm [shape: bf16[25,80,80], index: 5, kind: input, shape index: {}]
  %s6 = inlined_call_operand.vmem [shape: f32[1,80], index: 6, kind: input, shape index: {}]
  %s7 = inlined_call_operand.vmem [shape: bf16[4,80,50], index: 7, kind: input, shape index: {}]
  %s8 = inlined_call_operand.vmem [shape: f32[1,50], index: 8, kind: input, shape index: {}]
  %s9 = inlined_call_operand.vmem [shape: bf16[50,128], index: 9, kind: input, shape index: {}]
  %s10 = inlined_call_operand.vmem [shape: f32[1,128], index: 10, kind: input, shape index: {}]
  %s11 = inlined_call_operand.hbm [shape: f32[2,128], index: 11, kind: output, shape index: {}]
  %s12 = sld [smem:[#allocation0]]
  $region62: #{cnn_forward.1} parent=0
    _
  %s14 = ssub.s32 1, %s12
  %s15 = scalar_select 0, %s14, %s12
  $region1: #{cnn_forward.1} parent=0
    #allocation6 [shape = 'u8[512000]{0}', space=vmem, size = 0x7d000, scoped, tag = 'input window, operand 4, single buffered']
    #allocation7 [shape = 's32[1]{0}', space=sflag, size = 0x4, scoped, tag = 'scoped memory for cnn_forward.1']
    #allocation8 [shape = 's32[1]{0}', space=sflag, size = 0x4, scoped, tag = 'scoped memory for cnn_forward.1']
    #allocation9 [shape = 'u8[512000]{0}', space=vmem, size = 0x7d000, scoped, tag = 'input window, operand 5, single buffered']
    #allocation10 [shape = 's32[1]{0}', space=sflag, size = 0x4, scoped, tag = 'scoped memory for cnn_forward.1']
    #allocation11 [shape = 'u8[1024]{0}', space=vmem, size = 0x400, scoped, tag = 'output window, operand 0, single buffered']
    %16 = vsyncpa [#allocation7], 0
    %17 = vsyncpa [#allocation10], 0
    %18 = vsyncpa [#allocation8], 0
    // Predicated region
    $region2: #{cnn_forward.1} parent=1 // pred_check
      _
    $region3: #{cnn_forward.1} parent=1 // pred_check_branch
      %20 = sbr.rel (0) target = $region5
    $region4: #{cnn_forward.1} parent=1 // pred_region
      _
    $region5: #{cnn_forward.1} parent=1 // pred_fallthru
      _
    // Predicated region
    $region6: #{cnn_forward.1} parent=1 // pred_check
      _
    $region7: #{cnn_forward.1} parent=1 // pred_check_branch
      %22 = sbr.rel (0) target = $region9
    $region8: #{cnn_forward.1} parent=1 // pred_region
      _
    $region9: #{cnn_forward.1} parent=1 // pred_fallthru
      _
    // Predicated region
    $region10: #{cnn_forward.1} parent=1 // pred_check
      _
    $region11: #{cnn_forward.1} parent=1 // pred_check_branch
      %24 = sbr.rel (0) target = $region13
    $region12: #{cnn_forward.1} parent=1 // pred_region
      _
    $region13: #{cnn_forward.1} parent=1 // pred_fallthru
      _
    // Predicated region
    $region14: #{cnn_forward.1} parent=1 // pred_check
      _
    $region15: #{cnn_forward.1} parent=1 // pred_check_branch
      %26 = sbr.rel (0) target = $region17
    $region16: #{cnn_forward.1} parent=1 // pred_region
      _
    $region17: #{cnn_forward.1} parent=1 // pred_fallthru
      _
    // Predicated region
    $region18: #{cnn_forward.1} parent=1 // pred_check
      _
    $region19: #{cnn_forward.1} parent=1 // pred_check_branch
      %28 = sbr.rel (0) target = $region21
    $region20: #{cnn_forward.1} parent=1 // pred_region
      %s30 = ssub.s32 16000, 16000
      %31 = vsyncadd [#allocation7], %s30
      %s32 = sshll.u32 [#allocation6], 4
      %s33 = int_to_ptr.vmem [resolvable:$true] %s32
      %38 = dma.hbm_to_vmem [thread:$0]  %s4, 16000, %s33, [#allocation7], 64, 64, 4
    $region21: #{cnn_forward.1} parent=1 // pred_fallthru
      _
    // Predicated region
    $region22: #{cnn_forward.1} parent=1 // pred_check
      _
    $region23: #{cnn_forward.1} parent=1 // pred_check_branch
      %40 = sbr.rel (0) target = $region25
    $region24: #{cnn_forward.1} parent=1 // pred_region
      %s42 = ssub.s32 16000, 16000
      %43 = vsyncadd [#allocation10], %s42
      %s44 = sshll.u32 [#allocation9], 4
      %s45 = int_to_ptr.vmem [resolvable:$true] %s44
      %50 = dma.hbm_to_vmem [thread:$0]  %s5, 16000, %s45, [#allocation10], 64, 64, 4
    $region25: #{cnn_forward.1} parent=1 // pred_fallthru
      _
    // Predicated region
    $region26: #{cnn_forward.1} parent=1 // pred_check
      _
    $region27: #{cnn_forward.1} parent=1 // pred_check_branch
      %52 = sbr.rel (0) target = $region29
    $region28: #{cnn_forward.1} parent=1 // pred_region
      _
    $region29: #{cnn_forward.1} parent=1 // pred_fallthru
      _
    // Predicated region
    $region30: #{cnn_forward.1} parent=1 // pred_check
      _
    $region31: #{cnn_forward.1} parent=1 // pred_check_branch
      %54 = sbr.rel (0) target = $region33
    $region32: #{cnn_forward.1} parent=1 // pred_region
      _
    $region33: #{cnn_forward.1} parent=1 // pred_fallthru
      _
    // Predicated region
    $region34: #{cnn_forward.1} parent=1 // pred_check
      _
    $region35: #{cnn_forward.1} parent=1 // pred_check_branch
      %56 = sbr.rel (0) target = $region37
    $region36: #{cnn_forward.1} parent=1 // pred_region
      _
    $region37: #{cnn_forward.1} parent=1 // pred_fallthru
      _
    // Predicated region
    $region38: #{cnn_forward.1} parent=1 // pred_check
      _
    $region39: #{cnn_forward.1} parent=1 // pred_check_branch
      %58 = sbr.rel (0) target = $region41
    $region40: #{cnn_forward.1} parent=1 // pred_region
      _
    $region41: #{cnn_forward.1} parent=1 // pred_fallthru
      _
    // Predicated region
    $region42: #{cnn_forward.1} parent=1 // pred_check
      _
    $region43: #{cnn_forward.1} parent=1 // pred_check_branch
      %60 = sbr.rel (0) target = $region45
    $region44: #{cnn_forward.1} parent=1 // pred_region
      _
    $region45: #{cnn_forward.1} parent=1 // pred_fallthru
      _
    // Predicated region
    $region46: #{cnn_forward.1} parent=1 // pred_check
      _
    $region47: #{cnn_forward.1} parent=1 // pred_check_branch
      %62 = sbr.rel (0) target = $region49
    $region48: #{cnn_forward.1} parent=1 // pred_region
      %63 = dma.done [#allocation7], 16000
    $region49: #{cnn_forward.1} parent=1 // pred_fallthru
      _
    // Predicated region
    $region50: #{cnn_forward.1} parent=1 // pred_check
      _
    $region51: #{cnn_forward.1} parent=1 // pred_check_branch
      %65 = sbr.rel (0) target = $region53
    $region52: #{cnn_forward.1} parent=1 // pred_region
      %66 = dma.done [#allocation10], 16000
    $region53: #{cnn_forward.1} parent=1 // pred_fallthru
      _
    %v68 = vld [vmem:[%s0] sm:$0xff]
    %v69 = vld [vmem:[%s0 + $0x8] sm:$0xff]
    %v70 = vld [vmem:[%s0 + $0x10] sm:$0xff]
    %v71 = vld [vmem:[%s0 + $0x18] sm:$0xf]
    %v72 = vld [vmem:[%s0 + $0x20] sm:$0xff]
    %v73 = vld [vmem:[%s0 + $0x28] sm:$0xff]
    %v74 = vld [vmem:[%s0 + $0x30] sm:$0xff]
    %v75 = vld [vmem:[%s0 + $0x38] sm:$0xf]
    %v76 = vpack.c.bf16 %v69, %v68
    %v77 = vpack.c.bf16 %v72, %v70
    %v78 = vpack.c.bf16 %v74, %v73
    %v79 = vld [vmem:[%s1] sm:$0xf]
    %v80 = vld [vmem:[%s1 + $0x4] sm:$0xf]
    %v81 = vld [vmem:[%s1 + $0x8] sm:$0xf]
    %v82 = vld [vmem:[%s1 + $0xc] sm:$0x3]
    %v83 = vld [vmem:[%s2] sm:$0xf]
    %v84 = vld [vmem:[%s2 + $0x4] sm:$0xf]
    %v85 = vld [vmem:[%s2 + $0x8] sm:$0xf]
    %v86 = vld [vmem:[%s2 + $0xc] sm:$0x3]
    %vm95 = vcmask 1046528
    %v96 = vrot.slane %v68, 1
    %v97 = vrot.slane %v69, 1
    %v98 = vsel %vm95, %v96, %v97
    %v99 = vrot.slane %v70, 1
    %v100 = vsel %vm95, %v97, %v99
    %v101 = vrot.slane %v71, 1
    %v102 = vsel %vm95, %v99, %v101
    %v103 = vrot.slane %v72, 1
    %v104 = vrot.slane %v73, 1
    %v105 = vsel %vm95, %v103, %v104
    %v106 = vrot.slane %v74, 1
    %v107 = vsel %vm95, %v104, %v106
    %v108 = vrot.slane %v75, 1
    %v109 = vsel %vm95, %v106, %v108
    %v116 = vpack.c.bf16 %v100, %v98
    %v117 = vpack.c.bf16 %v105, %v102
    %v118 = vpack.c.bf16 %v109, %v107
    %s119 = scalar_lea.vmem %s1, 16
    %v120 = vld [vmem:[%s119] sm:$0xf]
    %v121 = vld [vmem:[%s119 + $0x4] sm:$0xf]
    %v122 = vld [vmem:[%s119 + $0x8] sm:$0xf]
    %v123 = vld [vmem:[%s119 + $0xc] sm:$0x3]
    %v128 = vunpack.c.l.b16 %v120
    %v129 = vunpack.c.l.b16 %v121
    %v130 = vunpack.c.l.b16 %v122
    %v131 = vunpack.c.l.b16 %v123
    %v132 = vpack.c.b16 %v129, %v128
    %v133 = vpack.c.b16 %v131, %v130
    %vm135 = vcmask 228352
    %v137 = vsel %vm135, %v116, 0
    %v140 = vsel %vm135, %v117, 0
    %v143 = vsel %vm135, %v118, 0
    %vm145 = vcmask 1045504
    %v147 = vsel %vm145, %v133, 0
    %149 = vmatprep.subr.bf16.mxu0 0
    %150 = vmatpush1.bf16.msra.mxu0 %v132
    %151 = vmatprep.subr.bf16.mxu0 0
    %152 = vmatpush1.bf16.msra.mxu0 %v147
    %153 = vmatprep.subr.bf16.mxu0 0
    %154 = vmatpush1.bf16.msra.mxu0 0
    %155 = vmatprep.subr.bf16.mxu0 0
    %156 = vmatpush1.bf16.msra.mxu0 0
    %157 = vmatprep.subr.bf16.mxu0 0
    %158 = vmatpush1.bf16.msra.mxu0 0
    %159 = vmatprep.subr.bf16.mxu0 0
    %160 = vmatpush1.bf16.msra.mxu0 0
    %161 = vmatprep.subr.bf16.mxu0 0
    %162 = vmatpush1.bf16.msra.mxu0 0
    %163 = vmatprep.subr.bf16.mxu0 0
    %164 = vmatpush1.bf16.msra.mxu0 0
    %165 = vmatprep.subr.bf16.mxu0 0
    %166 = vmatpush1.bf16.msra.mxu0 0
    %167 = vmatprep.subr.bf16.mxu0 0
    %168 = vmatpush1.bf16.msra.mxu0 0
    %169 = vmatprep.subr.bf16.mxu0 0
    %170 = vmatpush1.bf16.msra.mxu0 0
    %171 = vmatprep.subr.bf16.mxu0 0
    %172 = vmatpush1.bf16.msra.mxu0 0
    %173 = vmatprep.subr.bf16.mxu0 0
    %174 = vmatpush1.bf16.msra.mxu0 0
    %175 = vmatprep.subr.bf16.mxu0 0
    %176 = vmatpush1.bf16.msra.mxu0 0
    %177 = vmatprep.subr.bf16.mxu0 0
    %178 = vmatpush1.bf16.msra.mxu0 0
    %179 = vmatprep.subr.bf16.mxu0 0
    %180 = vmatpush1.bf16.msra.mxu0 0
    %181 = vmatprep.mubr.bf16.mxu0 0
    %182 = vmatmul.mubr.bf16.gmra.mrb[0].mxu0 %v137
    %v183 = vpop.f32.mrb[0].mxu0
    %v184 = vadd.f32 0.0, %v183
    %v185 = vpop.f32.mrb[0].mxu0
    %v186 = vpop.f32.mrb[0].mxu0
    %v187 = vadd.f32 0.0, %v186
    %v188 = vpop.f32.mrb[0].mxu0
    %189 = vmatprep.mubr.bf16.mxu0 0
    %190 = vmatmul.mubr.bf16.gmra.mrb[0].mxu0 %v140
    %v191 = vpop.f32.mrb[0].mxu0
    %v192 = vadd.f32 0.0, %v191
    %v193 = vpop.f32.mrb[0].mxu0
    %v194 = vpop.f32.mrb[0].mxu0
    %v195 = vadd.f32 0.0, %v194
    %v196 = vpop.f32.mrb[0].mxu0
    %197 = vmatprep.mubr.bf16.mxu0 0
    %198 = vmatmul.mubr.bf16.gmra.mrb[0].mxu0 %v143
    %v199 = vpop.f32.mrb[0].mxu0
    %v200 = vadd.f32 0.0, %v199
    %v201 = vpop.f32.mrb[0].mxu0
    %v202 = vpop.f32.mrb[0].mxu0
    %v203 = vadd.f32 0.0, %v202
    %v204 = vpop.f32.mrb[0].mxu0
    %205 = vdwg.mxu0
    %v210 = vunpack.c.l.b16 %v79
    %v211 = vunpack.c.l.b16 %v80
    %v212 = vunpack.c.l.b16 %v81
    %v213 = vunpack.c.l.b16 %v82
    %v214 = vpack.c.b16 %v211, %v210
    %v215 = vpack.c.b16 %v213, %v212
    %v218 = vsel %vm135, %v76, 0
    %v221 = vsel %vm135, %v77, 0
    %v224 = vsel %vm135, %v78, 0
    %v227 = vsel %vm145, %v215, 0
    %229 = vmatprep.subr.bf16.mxu0 0
    %230 = vmatpush1.bf16.msra.mxu0 %v214
    %231 = vmatprep.subr.bf16.mxu0 0
    %232 = vmatpush1.bf16.msra.mxu0 %v227
    %233 = vmatprep.subr.bf16.mxu0 0
    %234 = vmatpush1.bf16.msra.mxu0 0
    %235 = vmatprep.subr.bf16.mxu0 0
    %236 = vmatpush1.bf16.msra.mxu0 0
    %237 = vmatprep.subr.bf16.mxu0 0
    %238 = vmatpush1.bf16.msra.mxu0 0
    %239 = vmatprep.subr.bf16.mxu0 0
    %240 = vmatpush1.bf16.msra.mxu0 0
    %241 = vmatprep.subr.bf16.mxu0 0
    %242 = vmatpush1.bf16.msra.mxu0 0
    %243 = vmatprep.subr.bf16.mxu0 0
    %244 = vmatpush1.bf16.msra.mxu0 0
    %245 = vmatprep.subr.bf16.mxu0 0
    %246 = vmatpush1.bf16.msra.mxu0 0
    %247 = vmatprep.subr.bf16.mxu0 0
    %248 = vmatpush1.bf16.msra.mxu0 0
    %249 = vmatprep.subr.bf16.mxu0 0
    %250 = vmatpush1.bf16.msra.mxu0 0
    %251 = vmatprep.subr.bf16.mxu0 0
    %252 = vmatpush1.bf16.msra.mxu0 0
    %253 = vmatprep.subr.bf16.mxu0 0
    %254 = vmatpush1.bf16.msra.mxu0 0
    %255 = vmatprep.subr.bf16.mxu0 0
    %256 = vmatpush1.bf16.msra.mxu0 0
    %257 = vmatprep.subr.bf16.mxu0 0
    %258 = vmatpush1.bf16.msra.mxu0 0
    %259 = vmatprep.subr.bf16.mxu0 0
    %260 = vmatpush1.bf16.msra.mxu0 0
    %261 = vmatprep.mubr.bf16.mxu0 0
    %262 = vmatmul.mubr.bf16.gmra.mrb[0].mxu0 %v218
    %v263 = vpop.f32.mrb[0].mxu0
    %v264 = vadd.f32 %v184, %v263
    %v265 = vpop.f32.mrb[0].mxu0
    %v266 = vpop.f32.mrb[0].mxu0
    %v267 = vadd.f32 %v187, %v266
    %v268 = vpop.f32.mrb[0].mxu0
    %269 = vmatprep.mubr.bf16.mxu0 0
    %270 = vmatmul.mubr.bf16.gmra.mrb[0].mxu0 %v221
    %v271 = vpop.f32.mrb[0].mxu0
    %v272 = vadd.f32 %v192, %v271
    %v273 = vpop.f32.mrb[0].mxu0
    %v274 = vpop.f32.mrb[0].mxu0
    %v275 = vadd.f32 %v195, %v274
    %v276 = vpop.f32.mrb[0].mxu0
    %277 = vmatprep.mubr.bf16.mxu0 0
    %278 = vmatmul.mubr.bf16.gmra.mrb[0].mxu0 %v224
    %v279 = vpop.f32.mrb[0].mxu0
    %v280 = vadd.f32 %v200, %v279
    %v281 = vpop.f32.mrb[0].mxu0
    %v282 = vpop.f32.mrb[0].mxu0
    %v283 = vadd.f32 %v203, %v282
    %v284 = vpop.f32.mrb[0].mxu0
    %285 = vdwg.mxu0
    %s286 = scalar_lea.vmem %s2, 16
    %v287 = vld [vmem:[%s286] sm:$0xf]
    %v288 = vld [vmem:[%s286 + $0x4] sm:$0xf]
    %v289 = vld [vmem:[%s286 + $0x8] sm:$0xf]
    %v290 = vld [vmem:[%s286 + $0xc] sm:$0x3]
    %v295 = vunpack.c.l.b16 %v287
    %v296 = vunpack.c.l.b16 %v288
    %v297 = vunpack.c.l.b16 %v289
    %v298 = vunpack.c.l.b16 %v290
    %v299 = vpack.c.b16 %v296, %v295
    %v300 = vpack.c.b16 %v298, %v297
    %v303 = vsel %vm145, %v300, 0
    %305 = vmatprep.subr.bf16.mxu0 0
    %306 = vmatpush1.bf16.msra.mxu0 %v299
    %307 = vmatprep.subr.bf16.mxu0 0
    %308 = vmatpush1.bf16.msra.mxu0 %v303
    %309 = vmatprep.subr.bf16.mxu0 0
    %310 = vmatpush1.bf16.msra.mxu0 0
    %311 = vmatprep.subr.bf16.mxu0 0
    %312 = vmatpush1.bf16.msra.mxu0 0
    %313 = vmatprep.subr.bf16.mxu0 0
    %314 = vmatpush1.bf16.msra.mxu0 0
    %315 = vmatprep.subr.bf16.mxu0 0
    %316 = vmatpush1.bf16.msra.mxu0 0
    %317 = vmatprep.subr.bf16.mxu0 0
    %318 = vmatpush1.bf16.msra.mxu0 0
    %319 = vmatprep.subr.bf16.mxu0 0
    %320 = vmatpush1.bf16.msra.mxu0 0
    %321 = vmatprep.subr.bf16.mxu0 0
    %322 = vmatpush1.bf16.msra.mxu0 0
    %323 = vmatprep.subr.bf16.mxu0 0
    %324 = vmatpush1.bf16.msra.mxu0 0
    %325 = vmatprep.subr.bf16.mxu0 0
    %326 = vmatpush1.bf16.msra.mxu0 0
    %327 = vmatprep.subr.bf16.mxu0 0
    %328 = vmatpush1.bf16.msra.mxu0 0
    %329 = vmatprep.subr.bf16.mxu0 0
    %330 = vmatpush1.bf16.msra.mxu0 0
    %331 = vmatprep.subr.bf16.mxu0 0
    %332 = vmatpush1.bf16.msra.mxu0 0
    %333 = vmatprep.subr.bf16.mxu0 0
    %334 = vmatpush1.bf16.msra.mxu0 0
    %335 = vmatprep.subr.bf16.mxu0 0
    %336 = vmatpush1.bf16.msra.mxu0 0
    %337 = vmatprep.mubr.bf16.mxu0 0
    %338 = vmatmul.mubr.bf16.gmra.mrb[0].mxu0 %v137
    %v339 = vpop.f32.mrb[0].mxu0
    %v340 = vadd.f32 0.0, %v339
    %v341 = vpop.f32.mrb[0].mxu0
    %v342 = vpop.f32.mrb[0].mxu0
    %v343 = vadd.f32 0.0, %v342
    %v344 = vpop.f32.mrb[0].mxu0
    %345 = vmatprep.mubr.bf16.mxu0 0
    %346 = vmatmul.mubr.bf16.gmra.mrb[0].mxu0 %v140
    %v347 = vpop.f32.mrb[0].mxu0
    %v348 = vadd.f32 0.0, %v347
    %v349 = vpop.f32.mrb[0].mxu0
    %v350 = vpop.f32.mrb[0].mxu0
    %v351 = vadd.f32 0.0, %v350
    %v352 = vpop.f32.mrb[0].mxu0
    %353 = vmatprep.mubr.bf16.mxu0 0
    %354 = vmatmul.mubr.bf16.gmra.mrb[0].mxu0 %v143
    %v355 = vpop.f32.mrb[0].mxu0
    %v356 = vadd.f32 0.0, %v355
    %v357 = vpop.f32.mrb[0].mxu0
    %v358 = vpop.f32.mrb[0].mxu0
    %v359 = vadd.f32 0.0, %v358
    %v360 = vpop.f32.mrb[0].mxu0
    %361 = vdwg.mxu0
    %v366 = vunpack.c.l.b16 %v83
    %v367 = vunpack.c.l.b16 %v84
    %v368 = vunpack.c.l.b16 %v85
    %v369 = vunpack.c.l.b16 %v86
    %v370 = vpack.c.b16 %v367, %v366
    %v371 = vpack.c.b16 %v369, %v368
    %v374 = vsel %vm145, %v371, 0
    %376 = vmatprep.subr.bf16.mxu0 0
    %377 = vmatpush1.bf16.msra.mxu0 %v370
    %378 = vmatprep.subr.bf16.mxu0 0
    %379 = vmatpush1.bf16.msra.mxu0 %v374
    %380 = vmatprep.subr.bf16.mxu0 0
    %381 = vmatpush1.bf16.msra.mxu0 0
    %382 = vmatprep.subr.bf16.mxu0 0
    %383 = vmatpush1.bf16.msra.mxu0 0
    %384 = vmatprep.subr.bf16.mxu0 0
    %385 = vmatpush1.bf16.msra.mxu0 0
    %386 = vmatprep.subr.bf16.mxu0 0
    %387 = vmatpush1.bf16.msra.mxu0 0
    %388 = vmatprep.subr.bf16.mxu0 0
    %389 = vmatpush1.bf16.msra.mxu0 0
    %390 = vmatprep.subr.bf16.mxu0 0
    %391 = vmatpush1.bf16.msra.mxu0 0
    %392 = vmatprep.subr.bf16.mxu0 0
    %393 = vmatpush1.bf16.msra.mxu0 0
    %394 = vmatprep.subr.bf16.mxu0 0
    %395 = vmatpush1.bf16.msra.mxu0 0
    %396 = vmatprep.subr.bf16.mxu0 0
    %397 = vmatpush1.bf16.msra.mxu0 0
    %398 = vmatprep.subr.bf16.mxu0 0
    %399 = vmatpush1.bf16.msra.mxu0 0
    %400 = vmatprep.subr.bf16.mxu0 0
    %401 = vmatpush1.bf16.msra.mxu0 0
    %402 = vmatprep.subr.bf16.mxu0 0
    %403 = vmatpush1.bf16.msra.mxu0 0
    %404 = vmatprep.subr.bf16.mxu0 0
    %405 = vmatpush1.bf16.msra.mxu0 0
    %406 = vmatprep.subr.bf16.mxu0 0
    %407 = vmatpush1.bf16.msra.mxu0 0
    %408 = vmatprep.mubr.bf16.mxu0 0
    %409 = vmatmul.mubr.bf16.gmra.mrb[0].mxu0 %v218
    %v410 = vpop.f32.mrb[0].mxu0
    %v411 = vadd.f32 %v340, %v410
    %v412 = vpop.f32.mrb[0].mxu0
    %v413 = vpop.f32.mrb[0].mxu0
    %v414 = vadd.f32 %v343, %v413
    %v415 = vpop.f32.mrb[0].mxu0
    %416 = vmatprep.mubr.bf16.mxu0 0
    %417 = vmatmul.mubr.bf16.gmra.mrb[0].mxu0 %v221
    %v418 = vpop.f32.mrb[0].mxu0
    %v419 = vadd.f32 %v348, %v418
    %v420 = vpop.f32.mrb[0].mxu0
    %v421 = vpop.f32.mrb[0].mxu0
    %v422 = vadd.f32 %v351, %v421
    %v423 = vpop.f32.mrb[0].mxu0
    %424 = vmatprep.mubr.bf16.mxu0 0
    %425 = vmatmul.mubr.bf16.gmra.mrb[0].mxu0 %v224
    %v426 = vpop.f32.mrb[0].mxu0
    %v427 = vadd.f32 %v356, %v426
    %v428 = vpop.f32.mrb[0].mxu0
    %v429 = vpop.f32.mrb[0].mxu0
    %v430 = vadd.f32 %v359, %v429
    %v431 = vpop.f32.mrb[0].mxu0
    %432 = vdwg.mxu0
    %v433 = vrot.slane %v68, 2
    %v434 = vrot.slane %v69, 2
    %v435 = vsel %vm145, %v433, %v434
    %v436 = vrot.slane %v70, 2
    %v437 = vsel %vm145, %v434, %v436
    %v438 = vrot.slane %v71, 2
    %v439 = vsel %vm145, %v436, %v438
    %v440 = vrot.slane %v72, 2
    %v441 = vrot.slane %v73, 2
    %v442 = vsel %vm145, %v440, %v441
    %v443 = vrot.slane %v74, 2
    %v444 = vsel %vm145, %v441, %v443
    %v445 = vrot.slane %v75, 2
    %v446 = vsel %vm145, %v443, %v445
    %v453 = vpack.c.bf16 %v437, %v435
    %v454 = vpack.c.bf16 %v442, %v439
    %v455 = vpack.c.bf16 %v446, %v444
    %s456 = scalar_lea.vmem %s1, 32
    %v457 = vld [vmem:[%s456] sm:$0xf]
    %v458 = vld [vmem:[%s456 + $0x4] sm:$0xf]
    %v459 = vld [vmem:[%s456 + $0x8] sm:$0xf]
    %v460 = vld [vmem:[%s456 + $0xc] sm:$0x3]
    %v465 = vunpack.c.l.b16 %v457
    %v466 = vunpack.c.l.b16 %v458
    %v467 = vunpack.c.l.b16 %v459
    %v468 = vunpack.c.l.b16 %v460
    %v469 = vpack.c.b16 %v466, %v465
    %v470 = vpack.c.b16 %v468, %v467
    %v473 = vsel %vm135, %v453, 0
    %v476 = vsel %vm135, %v454, 0
    %v479 = vsel %vm135, %v455, 0
    %v482 = vsel %vm145, %v470, 0
    %484 = vmatprep.subr.bf16.mxu0 0
    %485 = vmatpush1.bf16.msra.mxu0 %v469
    %486 = vmatprep.subr.bf16.mxu0 0
    %487 = vmatpush1.bf16.msra.mxu0 %v482
    %488 = vmatprep.subr.bf16.mxu0 0
    %489 = vmatpush1.bf16.msra.mxu0 0
    %490 = vmatprep.subr.bf16.mxu0 0
    %491 = vmatpush1.bf16.msra.mxu0 0
    %492 = vmatprep.subr.bf16.mxu0 0
    %493 = vmatpush1.bf16.msra.mxu0 0
    %494 = vmatprep.subr.bf16.mxu0 0
    %495 = vmatpush1.bf16.msra.mxu0 0
    %496 = vmatprep.subr.bf16.mxu0 0
    %497 = vmatpush1.bf16.msra.mxu0 0
    %498 = vmatprep.subr.bf16.mxu0 0
    %499 = vmatpush1.bf16.msra.mxu0 0
    %500 = vmatprep.subr.bf16.mxu0 0
    %501 = vmatpush1.bf16.msra.mxu0 0
    %502 = vmatprep.subr.bf16.mxu0 0
    %503 = vmatpush1.bf16.msra.mxu0 0
    %504 = vmatprep.subr.bf16.mxu0 0
    %505 = vmatpush1.bf16.msra.mxu0 0
    %506 = vmatprep.subr.bf16.mxu0 0
    %507 = vmatpush1.bf16.msra.mxu0 0
    %508 = vmatprep.subr.bf16.mxu0 0
    %509 = vmatpush1.bf16.msra.mxu0 0
    %510 = vmatprep.subr.bf16.mxu0 0
    %511 = vmatpush1.bf16.msra.mxu0 0
    %512 = vmatprep.subr.bf16.mxu0 0
    %513 = vmatpush1.bf16.msra.mxu0 0
    %514 = vmatprep.subr.bf16.mxu0 0
    %515 = vmatpush1.bf16.msra.mxu0 0
    %516 = vmatprep.mubr.bf16.mxu0 0
    %517 = vmatmul.mubr.bf16.gmra.mrb[0].mxu0 %v473
    %v518 = vpop.f32.mrb[0].mxu0
    %v519 = vadd.f32 0.0, %v518
    %v520 = vpop.f32.mrb[0].mxu0
    %v521 = vpop.f32.mrb[0].mxu0
    %v522 = vadd.f32 0.0, %v521
    %v523 = vpop.f32.mrb[0].mxu0
    %524 = vmatprep.mubr.bf16.mxu0 0
    %525 = vmatmul.mubr.bf16.gmra.mrb[0].mxu0 %v476
    %v526 = vpop.f32.mrb[0].mxu0
    %v527 = vadd.f32 0.0, %v526
    %v528 = vpop.f32.mrb[0].mxu0
    %v529 = vpop.f32.mrb[0].mxu0
    %v530 = vadd.f32 0.0, %v529
    %v531 = vpop.f32.mrb[0].mxu0
    %532 = vmatprep.mubr.bf16.mxu0 0
    %533 = vmatmul.mubr.bf16.gmra.mrb[0].mxu0 %v479
    %v534 = vpop.f32.mrb[0].mxu0
    %v535 = vadd.f32 0.0, %v534
    %v536 = vpop.f32.mrb[0].mxu0
    %v537 = vpop.f32.mrb[0].mxu0
    %v538 = vadd.f32 0.0, %v537
    %v539 = vpop.f32.mrb[0].mxu0
    %540 = vdwg.mxu0
    %v541 = vadd.f32 %v264, %v519
    %v542 = vadd.f32 %v267, %v522
    %v543 = vadd.f32 %v272, %v527
    %v544 = vadd.f32 %v275, %v530
    %v545 = vadd.f32 %v280, %v535
    %v546 = vadd.f32 %v283, %v538
    %s547 = scalar_lea.vmem %s2, 32
    %v548 = vld [vmem:[%s547] sm:$0xf]
    %v549 = vld [vmem:[%s547 + $0x4] sm:$0xf]
    %v550 = vld [vmem:[%s547 + $0x8] sm:$0xf]
    %v551 = vld [vmem:[%s547 + $0xc] sm:$0x3]
    %v556 = vunpack.c.l.b16 %v548
    %v557 = vunpack.c.l.b16 %v549
    %v558 = vunpack.c.l.b16 %v550
    %v559 = vunpack.c.l.b16 %v551
    %v560 = vpack.c.b16 %v557, %v556
    %v561 = vpack.c.b16 %v559, %v558
    %v564 = vsel %vm145, %v561, 0
    %566 = vmatprep.subr.bf16.mxu0 0
    %567 = vmatpush1.bf16.msra.mxu0 %v560
    %568 = vmatprep.subr.bf16.mxu0 0
    %569 = vmatpush1.bf16.msra.mxu0 %v564
    %570 = vmatprep.subr.bf16.mxu0 0
    %571 = vmatpush1.bf16.msra.mxu0 0
    %572 = vmatprep.subr.bf16.mxu0 0
    %573 = vmatpush1.bf16.msra.mxu0 0
    %574 = vmatprep.subr.bf16.mxu0 0
    %575 = vmatpush1.bf16.msra.mxu0 0
    %576 = vmatprep.subr.bf16.mxu0 0
    %577 = vmatpush1.bf16.msra.mxu0 0
    %578 = vmatprep.subr.bf16.mxu0 0
    %579 = vmatpush1.bf16.msra.mxu0 0
    %580 = vmatprep.subr.bf16.mxu0 0
    %581 = vmatpush1.bf16.msra.mxu0 0
    %582 = vmatprep.subr.bf16.mxu0 0
    %583 = vmatpush1.bf16.msra.mxu0 0
    %584 = vmatprep.subr.bf16.mxu0 0
    %585 = vmatpush1.bf16.msra.mxu0 0
    %586 = vmatprep.subr.bf16.mxu0 0
    %587 = vmatpush1.bf16.msra.mxu0 0
    %588 = vmatprep.subr.bf16.mxu0 0
    %589 = vmatpush1.bf16.msra.mxu0 0
    %590 = vmatprep.subr.bf16.mxu0 0
    %591 = vmatpush1.bf16.msra.mxu0 0
    %592 = vmatprep.subr.bf16.mxu0 0
    %593 = vmatpush1.bf16.msra.mxu0 0
    %594 = vmatprep.subr.bf16.mxu0 0
    %595 = vmatpush1.bf16.msra.mxu0 0
    %596 = vmatprep.subr.bf16.mxu0 0
    %597 = vmatpush1.bf16.msra.mxu0 0
    %598 = vmatprep.mubr.bf16.mxu0 0
    %599 = vmatmul.mubr.bf16.gmra.mrb[0].mxu0 %v473
    %v600 = vpop.f32.mrb[0].mxu0
    %v601 = vadd.f32 0.0, %v600
    %v602 = vpop.f32.mrb[0].mxu0
    %v603 = vpop.f32.mrb[0].mxu0
    %v604 = vadd.f32 0.0, %v603
    %v605 = vpop.f32.mrb[0].mxu0
    %606 = vmatprep.mubr.bf16.mxu0 0
    %607 = vmatmul.mubr.bf16.gmra.mrb[0].mxu0 %v476
    %v608 = vpop.f32.mrb[0].mxu0
    %v609 = vadd.f32 0.0, %v608
    %v610 = vpop.f32.mrb[0].mxu0
    %v611 = vpop.f32.mrb[0].mxu0
    %v612 = vadd.f32 0.0, %v611
    %v613 = vpop.f32.mrb[0].mxu0
    %614 = vmatprep.mubr.bf16.mxu0 0
    %615 = vmatmul.mubr.bf16.gmra.mrb[0].mxu0 %v479
    %v616 = vpop.f32.mrb[0].mxu0
    %v617 = vadd.f32 0.0, %v616
    %v618 = vpop.f32.mrb[0].mxu0
    %v619 = vpop.f32.mrb[0].mxu0
    %v620 = vadd.f32 0.0, %v619
    %v621 = vpop.f32.mrb[0].mxu0
    %622 = vdwg.mxu0
    %v623 = vadd.f32 %v411, %v601
    %v624 = vadd.f32 %v414, %v604
    %v625 = vadd.f32 %v419, %v609
    %v626 = vadd.f32 %v422, %v612
    %v627 = vadd.f32 %v427, %v617
    %v628 = vadd.f32 %v430, %v620
    %vm629 = vcmask 1044480
    %v630 = vrot.slane %v68, 3
    %v631 = vrot.slane %v69, 3
    %v632 = vsel %vm629, %v630, %v631
    %v633 = vrot.slane %v70, 3
    %v634 = vsel %vm629, %v631, %v633
    %v635 = vrot.slane %v71, 3
    %v636 = vsel %vm629, %v633, %v635
    %v637 = vrot.slane %v72, 3
    %v638 = vrot.slane %v73, 3
    %v639 = vsel %vm629, %v637, %v638
    %v640 = vrot.slane %v74, 3
    %v641 = vsel %vm629, %v638, %v640
    %v642 = vrot.slane %v75, 3
    %v643 = vsel %vm629, %v640, %v642
    %v650 = vpack.c.bf16 %v634, %v632
    %v651 = vpack.c.bf16 %v639, %v636
    %v652 = vpack.c.bf16 %v643, %v641
    %s653 = scalar_lea.vmem %s1, 48
    %v654 = vld [vmem:[%s653] sm:$0xf]
    %v655 = vld [vmem:[%s653 + $0x4] sm:$0xf]
    %v656 = vld [vmem:[%s653 + $0x8] sm:$0xf]
    %v657 = vld [vmem:[%s653 + $0xc] sm:$0x3]
    %v662 = vunpack.c.l.b16 %v654
    %v663 = vunpack.c.l.b16 %v655
    %v664 = vunpack.c.l.b16 %v656
    %v665 = vunpack.c.l.b16 %v657
    %v666 = vpack.c.b16 %v663, %v662
    %v667 = vpack.c.b16 %v665, %v664
    %v670 = vsel %vm135, %v650, 0
    %v673 = vsel %vm135, %v651, 0
    %v676 = vsel %vm135, %v652, 0
    %v679 = vsel %vm145, %v667, 0
    %681 = vmatprep.subr.bf16.mxu0 0
    %682 = vmatpush1.bf16.msra.mxu0 %v666
    %683 = vmatprep.subr.bf16.mxu0 0
    %684 = vmatpush1.bf16.msra.mxu0 %v679
    %685 = vmatprep.subr.bf16.mxu0 0
    %686 = vmatpush1.bf16.msra.mxu0 0
    %687 = vmatprep.subr.bf16.mxu0 0
    %688 = vmatpush1.bf16.msra.mxu0 0
    %689 = vmatprep.subr.bf16.mxu0 0
    %690 = vmatpush1.bf16.msra.mxu0 0
    %691 = vmatprep.subr.bf16.mxu0 0
    %692 = vmatpush1.bf16.msra.mxu0 0
    %693 = vmatprep.subr.bf16.mxu0 0
    %694 = vmatpush1.bf16.msra.mxu0 0
    %695 = vmatprep.subr.bf16.mxu0 0
    %696 = vmatpush1.bf16.msra.mxu0 0
    %697 = vmatprep.subr.bf16.mxu0 0
    %698 = vmatpush1.bf16.msra.mxu0 0
    %699 = vmatprep.subr.bf16.mxu0 0
    %700 = vmatpush1.bf16.msra.mxu0 0
    %701 = vmatprep.subr.bf16.mxu0 0
    %702 = vmatpush1.bf16.msra.mxu0 0
    %703 = vmatprep.subr.bf16.mxu0 0
    %704 = vmatpush1.bf16.msra.mxu0 0
    %705 = vmatprep.subr.bf16.mxu0 0
    %706 = vmatpush1.bf16.msra.mxu0 0
    %707 = vmatprep.subr.bf16.mxu0 0
    %708 = vmatpush1.bf16.msra.mxu0 0
    %709 = vmatprep.subr.bf16.mxu0 0
    %710 = vmatpush1.bf16.msra.mxu0 0
    %711 = vmatprep.subr.bf16.mxu0 0
    %712 = vmatpush1.bf16.msra.mxu0 0
    %713 = vmatprep.mubr.bf16.mxu0 0
    %714 = vmatmul.mubr.bf16.gmra.mrb[0].mxu0 %v670
    %v715 = vpop.f32.mrb[0].mxu0
    %v716 = vadd.f32 0.0, %v715
    %v717 = vpop.f32.mrb[0].mxu0
    %v718 = vpop.f32.mrb[0].mxu0
    %v719 = vadd.f32 0.0, %v718
    %v720 = vpop.f32.mrb[0].mxu0
    %721 = vmatprep.mubr.bf16.mxu0 0
    %722 = vmatmul.mubr.bf16.gmra.mrb[0].mxu0 %v673
    %v723 = vpop.f32.mrb[0].mxu0
    %v724 = vadd.f32 0.0, %v723
    %v725 = vpop.f32.mrb[0].mxu0
    %v726 = vpop.f32.mrb[0].mxu0
    %v727 = vadd.f32 0.0, %v726
    %v728 = vpop.f32.mrb[0].mxu0
    %729 = vmatprep.mubr.bf16.mxu0 0
    %730 = vmatmul.mubr.bf16.gmra.mrb[0].mxu0 %v676
    %v731 = vpop.f32.mrb[0].mxu0
    %v732 = vadd.f32 0.0, %v731
    %v733 = vpop.f32.mrb[0].mxu0
    %v734 = vpop.f32.mrb[0].mxu0
    %v735 = vadd.f32 0.0, %v734
    %v736 = vpop.f32.mrb[0].mxu0
    %737 = vdwg.mxu0
    %v738 = vadd.f32 %v541, %v716
    %v739 = vadd.f32 %v542, %v719
    %v740 = vadd.f32 %v543, %v724
    %v741 = vadd.f32 %v544, %v727
    %v742 = vadd.f32 %v545, %v732
    %v743 = vadd.f32 %v546, %v735
    %s744 = scalar_lea.vmem %s2, 48
    %v745 = vld [vmem:[%s744] sm:$0xf]
    %v746 = vld [vmem:[%s744 + $0x4] sm:$0xf]
    %v747 = vld [vmem:[%s744 + $0x8] sm:$0xf]
    %v748 = vld [vmem:[%s744 + $0xc] sm:$0x3]
    %v753 = vunpack.c.l.b16 %v745
    %v754 = vunpack.c.l.b16 %v746
    %v755 = vunpack.c.l.b16 %v747
    %v756 = vunpack.c.l.b16 %v748
    %v757 = vpack.c.b16 %v754, %v753
    %v758 = vpack.c.b16 %v756, %v755
    %v761 = vsel %vm145, %v758, 0
    %763 = vmatprep.subr.bf16.mxu0 0
    %764 = vmatpush1.bf16.msra.mxu0 %v757
    %765 = vmatprep.subr.bf16.mxu0 0
    %766 = vmatpush1.bf16.msra.mxu0 %v761
    %767 = vmatprep.subr.bf16.mxu0 0
    %768 = vmatpush1.bf16.msra.mxu0 0
    %769 = vmatprep.subr.bf16.mxu0 0
    %770 = vmatpush1.bf16.msra.mxu0 0
    %771 = vmatprep.subr.bf16.mxu0 0
    %772 = vmatpush1.bf16.msra.mxu0 0
    %773 = vmatprep.subr.bf16.mxu0 0
    %774 = vmatpush1.bf16.msra.mxu0 0
    %775 = vmatprep.subr.bf16.mxu0 0
    %776 = vmatpush1.bf16.msra.mxu0 0
    %777 = vmatprep.subr.bf16.mxu0 0
    %778 = vmatpush1.bf16.msra.mxu0 0
    %779 = vmatprep.subr.bf16.mxu0 0
    %780 = vmatpush1.bf16.msra.mxu0 0
    %781 = vmatprep.subr.bf16.mxu0 0
    %782 = vmatpush1.bf16.msra.mxu0 0
    %783 = vmatprep.subr.bf16.mxu0 0
    %784 = vmatpush1.bf16.msra.mxu0 0
    %785 = vmatprep.subr.bf16.mxu0 0
    %786 = vmatpush1.bf16.msra.mxu0 0
    %787 = vmatprep.subr.bf16.mxu0 0
    %788 = vmatpush1.bf16.msra.mxu0 0
    %789 = vmatprep.subr.bf16.mxu0 0
    %790 = vmatpush1.bf16.msra.mxu0 0
    %791 = vmatprep.subr.bf16.mxu0 0
    %792 = vmatpush1.bf16.msra.mxu0 0
    %793 = vmatprep.subr.bf16.mxu0 0
    %794 = vmatpush1.bf16.msra.mxu0 0
    %795 = vmatprep.mubr.bf16.mxu0 0
    %796 = vmatmul.mubr.bf16.gmra.mrb[0].mxu0 %v670
    %v797 = vpop.f32.mrb[0].mxu0
    %v798 = vadd.f32 0.0, %v797
    %v799 = vpop.f32.mrb[0].mxu0
    %v800 = vpop.f32.mrb[0].mxu0
    %v801 = vadd.f32 0.0, %v800
    %v802 = vpop.f32.mrb[0].mxu0
    %803 = vmatprep.mubr.bf16.mxu0 0
    %804 = vmatmul.mubr.bf16.gmra.mrb[0].mxu0 %v673
    %v805 = vpop.f32.mrb[0].mxu0
    %v806 = vadd.f32 0.0, %v805
    %v807 = vpop.f32.mrb[0].mxu0
    %v808 = vpop.f32.mrb[0].mxu0
    %v809 = vadd.f32 0.0, %v808
    %v810 = vpop.f32.mrb[0].mxu0
    %811 = vmatprep.mubr.bf16.mxu0 0
    %812 = vmatmul.mubr.bf16.gmra.mrb[0].mxu0 %v676
    %v813 = vpop.f32.mrb[0].mxu0
    %v814 = vadd.f32 0.0, %v813
    %v815 = vpop.f32.mrb[0].mxu0
    %v816 = vpop.f32.mrb[0].mxu0
    %v817 = vadd.f32 0.0, %v816
    %v818 = vpop.f32.mrb[0].mxu0
    %819 = vdwg.mxu0
    %v820 = vadd.f32 %v623, %v798
    %v821 = vadd.f32 %v624, %v801
    %v822 = vadd.f32 %v625, %v806
    %v823 = vadd.f32 %v626, %v809
    %v824 = vadd.f32 %v627, %v814
    %v825 = vadd.f32 %v628, %v817
    %vm826 = vcmask 1043456
    %v827 = vrot.slane %v68, 4
    %v828 = vrot.slane %v69, 4
    %v829 = vsel %vm826, %v827, %v828
    %v830 = vrot.slane %v70, 4
    %v831 = vsel %vm826, %v828, %v830
    %v832 = vrot.slane %v71, 4
    %v833 = vsel %vm826, %v830, %v832
    %v834 = vrot.slane %v72, 4
    %v835 = vrot.slane %v73, 4
    %v836 = vsel %vm826, %v834, %v835
    %v837 = vrot.slane %v74, 4
    %v838 = vsel %vm826, %v835, %v837
    %v839 = vrot.slane %v75, 4
    %v840 = vsel %vm826, %v837, %v839
    %v847 = vpack.c.bf16 %v831, %v829
    %v848 = vpack.c.bf16 %v836, %v833
    %v849 = vpack.c.bf16 %v840, %v838
    %s850 = scalar_lea.vmem %s1, 64
    %v851 = vld [vmem:[%s850] sm:$0xf]
    %v852 = vld [vmem:[%s850 + $0x4] sm:$0xf]
    %v853 = vld [vmem:[%s850 + $0x8] sm:$0xf]
    %v854 = vld [vmem:[%s850 + $0xc] sm:$0x3]
    %v859 = vunpack.c.l.b16 %v851
    %v860 = vunpack.c.l.b16 %v852
    %v861 = vunpack.c.l.b16 %v853
    %v862 = vunpack.c.l.b16 %v854
    %v863 = vpack.c.b16 %v860, %v859
    %v864 = vpack.c.b16 %v862, %v861
    %v867 = vsel %vm135, %v847, 0
    %v870 = vsel %vm135, %v848, 0
    %v873 = vsel %vm135, %v849, 0
    %v876 = vsel %vm145, %v864, 0
    %878 = vmatprep.subr.bf16.mxu0 0
    %879 = vmatpush1.bf16.msra.mxu0 %v863
    %880 = vmatprep.subr.bf16.mxu0 0
    %881 = vmatpush1.bf16.msra.mxu0 %v876
    %882 = vmatprep.subr.bf16.mxu0 0
    %883 = vmatpush1.bf16.msra.mxu0 0
    %884 = vmatprep.subr.bf16.mxu0 0
    %885 = vmatpush1.bf16.msra.mxu0 0
    %886 = vmatprep.subr.bf16.mxu0 0
    %887 = vmatpush1.bf16.msra.mxu0 0
    %888 = vmatprep.subr.bf16.mxu0 0
    %889 = vmatpush1.bf16.msra.mxu0 0
    %890 = vmatprep.subr.bf16.mxu0 0
    %891 = vmatpush1.bf16.msra.mxu0 0
    %892 = vmatprep.subr.bf16.mxu0 0
    %893 = vmatpush1.bf16.msra.mxu0 0
    %894 = vmatprep.subr.bf16.mxu0 0
    %895 = vmatpush1.bf16.msra.mxu0 0
    %896 = vmatprep.subr.bf16.mxu0 0
    %897 = vmatpush1.bf16.msra.mxu0 0
    %898 = vmatprep.subr.bf16.mxu0 0
    %899 = vmatpush1.bf16.msra.mxu0 0
    %900 = vmatprep.subr.bf16.mxu0 0
    %901 = vmatpush1.bf16.msra.mxu0 0
    %902 = vmatprep.subr.bf16.mxu0 0
    %903 = vmatpush1.bf16.msra.mxu0 0
    %904 = vmatprep.subr.bf16.mxu0 0
    %905 = vmatpush1.bf16.msra.mxu0 0
    %906 = vmatprep.subr.bf16.mxu0 0
    %907 = vmatpush1.bf16.msra.mxu0 0
    %908 = vmatprep.subr.bf16.mxu0 0
    %909 = vmatpush1.bf16.msra.mxu0 0
    %910 = vmatprep.mubr.bf16.mxu0 0
    %911 = vmatmul.mubr.bf16.gmra.mrb[0].mxu0 %v867
    %v912 = vpop.f32.mrb[0].mxu0
    %v913 = vadd.f32 0.0, %v912
    %v914 = vpop.f32.mrb[0].mxu0
    %v915 = vpop.f32.mrb[0].mxu0
    %v916 = vadd.f32 0.0, %v915
    %v917 = vpop.f32.mrb[0].mxu0
    %918 = vmatprep.mubr.bf16.mxu0 0
    %919 = vmatmul.mubr.bf16.gmra.mrb[0].mxu0 %v870
    %v920 = vpop.f32.mrb[0].mxu0
    %v921 = vadd.f32 0.0, %v920
    %v922 = vpop.f32.mrb[0].mxu0
    %v923 = vpop.f32.mrb[0].mxu0
    %v924 = vadd.f32 0.0, %v923
    %v925 = vpop.f32.mrb[0].mxu0
    %926 = vmatprep.mubr.bf16.mxu0 0
    %927 = vmatmul.mubr.bf16.gmra.mrb[0].mxu0 %v873
    %v928 = vpop.f32.mrb[0].mxu0
    %v929 = vadd.f32 0.0, %v928
    %v930 = vpop.f32.mrb[0].mxu0
    %v931 = vpop.f32.mrb[0].mxu0
    %v932 = vadd.f32 0.0, %v931
    %v933 = vpop.f32.mrb[0].mxu0
    %934 = vdwg.mxu0
    %v935 = vadd.f32 %v738, %v913
    %v936 = vadd.f32 %v739, %v916
    %v937 = vadd.f32 %v740, %v921
    %v938 = vadd.f32 %v741, %v924
    %v939 = vadd.f32 %v742, %v929
    %v940 = vadd.f32 %v743, %v932
    %s941 = scalar_lea.vmem %s2, 64
    %v942 = vld [vmem:[%s941] sm:$0xf]
    %v943 = vld [vmem:[%s941 + $0x4] sm:$0xf]
    %v944 = vld [vmem:[%s941 + $0x8] sm:$0xf]
    %v945 = vld [vmem:[%s941 + $0xc] sm:$0x3]
    %v950 = vunpack.c.l.b16 %v942
    %v951 = vunpack.c.l.b16 %v943
    %v952 = vunpack.c.l.b16 %v944
    %v953 = vunpack.c.l.b16 %v945
    %v954 = vpack.c.b16 %v951, %v950
    %v955 = vpack.c.b16 %v953, %v952
    %v958 = vsel %vm145, %v955, 0
    %960 = vmatprep.subr.bf16.mxu0 0
    %961 = vmatpush1.bf16.msra.mxu0 %v954
    %962 = vmatprep.subr.bf16.mxu0 0
    %963 = vmatpush1.bf16.msra.mxu0 %v958
    %964 = vmatprep.subr.bf16.mxu0 0
    %965 = vmatpush1.bf16.msra.mxu0 0
    %966 = vmatprep.subr.bf16.mxu0 0
    %967 = vmatpush1.bf16.msra.mxu0 0
    %968 = vmatprep.subr.bf16.mxu0 0
    %969 = vmatpush1.bf16.msra.mxu0 0
    %970 = vmatprep.subr.bf16.mxu0 0
    %971 = vmatpush1.bf16.msra.mxu0 0
    %972 = vmatprep.subr.bf16.mxu0 0
    %973 = vmatpush1.bf16.msra.mxu0 0
    %974 = vmatprep.subr.bf16.mxu0 0
    %975 = vmatpush1.bf16.msra.mxu0 0
    %976 = vmatprep.subr.bf16.mxu0 0
    %977 = vmatpush1.bf16.msra.mxu0 0
    %978 = vmatprep.subr.bf16.mxu0 0
    %979 = vmatpush1.bf16.msra.mxu0 0
    %980 = vmatprep.subr.bf16.mxu0 0
    %981 = vmatpush1.bf16.msra.mxu0 0
    %982 = vmatprep.subr.bf16.mxu0 0
    %983 = vmatpush1.bf16.msra.mxu0 0
    %984 = vmatprep.subr.bf16.mxu0 0
    %985 = vmatpush1.bf16.msra.mxu0 0
    %986 = vmatprep.subr.bf16.mxu0 0
    %987 = vmatpush1.bf16.msra.mxu0 0
    %988 = vmatprep.subr.bf16.mxu0 0
    %989 = vmatpush1.bf16.msra.mxu0 0
    %990 = vmatprep.subr.bf16.mxu0 0
    %991 = vmatpush1.bf16.msra.mxu0 0
    %992 = vmatprep.mubr.bf16.mxu0 0
    %993 = vmatmul.mubr.bf16.gmra.mrb[0].mxu0 %v867
    %v994 = vpop.f32.mrb[0].mxu0
    %v995 = vadd.f32 0.0, %v994
    %v996 = vpop.f32.mrb[0].mxu0
    %v997 = vpop.f32.mrb[0].mxu0
    %v998 = vadd.f32 0.0, %v997
    %v999 = vpop.f32.mrb[0].mxu0
    %1000 = vmatprep.mubr.bf16.mxu0 0
    %1001 = vmatmul.mubr.bf16.gmra.mrb[0].mxu0 %v870
    %v1002 = vpop.f32.mrb[0].mxu0
    %v1003 = vadd.f32 0.0, %v1002
    %v1004 = vpop.f32.mrb[0].mxu0
    %v1005 = vpop.f32.mrb[0].mxu0
    %v1006 = vadd.f32 0.0, %v1005
    %v1007 = vpop.f32.mrb[0].mxu0
    %1008 = vmatprep.mubr.bf16.mxu0 0
    %1009 = vmatmul.mubr.bf16.gmra.mrb[0].mxu0 %v873
    %v1010 = vpop.f32.mrb[0].mxu0
    %v1011 = vadd.f32 0.0, %v1010
    %v1012 = vpop.f32.mrb[0].mxu0
    %v1013 = vpop.f32.mrb[0].mxu0
    %v1014 = vadd.f32 0.0, %v1013
    %v1015 = vpop.f32.mrb[0].mxu0
    %1016 = vdwg.mxu0
    %v1017 = vadd.f32 %v820, %v995
    %v1018 = vadd.f32 %v821, %v998
    %v1019 = vadd.f32 %v822, %v1003
    %v1020 = vadd.f32 %v823, %v1006
    %v1021 = vadd.f32 %v824, %v1011
    %v1022 = vadd.f32 %v825, %v1014
    %v1023 = vmax.f32 %v935, %v1017
    %v1024 = vmax.f32 %v936, %v1018
    %v1025 = vmax.f32 %v937, %v1019
    %v1026 = vmax.f32 %v938, %v1020
    %v1027 = vmax.f32 %v939, %v1021
    %v1028 = vmax.f32 %v940, %v1022
    %v1029 = vld [vmem:[%s3] sm:$0x1]
    %v1031 = vlaneseq
    %v1032 = vshrl.u32 %v1031, 7
    %v1033 = vsub.s32 0, %v1032
    %v1034 = vrot.slane %v1029, %v1033
    %v1036 = vadd.f32 %v1023, %v1034
    %v1037 = vadd.f32 %v1024, %v1034
    %v1038 = vadd.f32 %v1025, %v1034
    %v1039 = vadd.f32 %v1026, %v1034
    %v1040 = vadd.f32 %v1027, %v1034
    %v1041 = vadd.f32 %v1028, %v1034
    %v1042 = vmax.f32 %v1036, 0.0
    %v1043 = vmax.f32 %v1037, 0.0
    %v1044 = vmax.f32 %v1038, 0.0
    %v1045 = vmax.f32 %v1039, 0.0
    %v1046 = vmax.f32 %v1040, 0.0
    %v1047 = vmax.f32 %v1041, 0.0
    %vm1048 = vcmask 982016
    %1049 = vst.msk [vmem:[#allocation2] sm:$0xff] %vm1048, %v1042
    %1050 = vst.msk [vmem:[#allocation2 + $0x8] sm:$0xff] %vm1048, %v1043
    %1051 = vst.msk [vmem:[#allocation2 + $0x10] sm:$0xff] %vm1048, %v1044
    %1052 = vst.msk [vmem:[#allocation2 + $0x18] sm:$0xff] %vm1048, %v1045
    %1053 = vst.msk [vmem:[#allocation2 + $0x20] sm:$0xff] %vm1048, %v1046
    %1054 = vst.msk [vmem:[#allocation2 + $0x28] sm:$0xff] %vm1048, %v1047
    %v1055 = vld [vmem:[#allocation2] ss:$2 sm:$0xff]
    %s1056 = scalar_lea.vmem [#allocation2], 16
    %v1057 = vld [vmem:[%s1056] ss:$2 sm:$0xf]
    %s1058 = scalar_lea.vmem [#allocation2], 24
    %v1059 = vld [vmem:[%s1058] ss:$2 sm:$0xff]
    %s1060 = scalar_lea.vmem [#allocation2], 40
    %v1061 = vld [vmem:[%s1060] ss:$2 sm:$0xf]
    %s1062 = scalar_lea.vmem [#allocation2], 1
    %v1063 = vld [vmem:[%s1062] ss:$2 sm:$0xff]
    %s1064 = scalar_lea.vmem [#allocation2], 17
    %v1065 = vld [vmem:[%s1064] ss:$2 sm:$0xf]
    %s1066 = scalar_lea.vmem [#allocation2], 25
    %v1067 = vld [vmem:[%s1066] ss:$2 sm:$0xff]
    %s1068 = scalar_lea.vmem [#allocation2], 41
    %v1069 = vld [vmem:[%s1068] ss:$2 sm:$0xf]
    %v1070 = vmax.f32 %v1055, %v1063
    %v1071 = vmax.f32 %v1057, %v1065
    %v1072 = vmax.f32 %v1059, %v1067
    %v1073 = vmax.f32 %v1061, %v1069
    %1074 = vst.msk [vmem:[#allocation3] sm:$0xff] %vm1048, %v1070
    %vm1075 = vcmask 977920
    %1076 = vst.msk [vmem:[#allocation3 + $0x8] sm:$0xf] %vm1075, %v1071
    %1077 = vst.msk [vmem:[#allocation3 + $0x10] sm:$0xff] %vm1048, %v1072
    %1078 = vst.msk [vmem:[#allocation3 + $0x18] sm:$0xf] %vm1075, %v1073
    %v1079 = vld [vmem:[#allocation3] sm:$0xff]
    %v1080 = vld [vmem:[#allocation3 + $0x10] sm:$0xff]
    %v1081 = vpack.c.bf16 %v1080, %v1079
    %v1082 = vld [vmem:[#allocation6] sm:$0xf]
    %v1083 = vld [vmem:[#allocation6 + $0x4] sm:$0xf]
    %v1084 = vld [vmem:[#allocation6 + $0x8] sm:$0xf]
    %v1085 = vld [vmem:[#allocation6 + $0xc] sm:$0xf]
    %v1086 = vld [vmem:[#allocation6 + $0x10] sm:$0xf]
    %v1087 = vld [vmem:[#allocation6 + $0x14] sm:$0xf]
    %v1088 = vld [vmem:[#allocation6 + $0x18] sm:$0xf]
    %v1089 = vld [vmem:[#allocation6 + $0x1c] sm:$0xf]
    %v1090 = vld [vmem:[#allocation6 + $0x20] sm:$0xf]
    %v1091 = vld [vmem:[#allocation6 + $0x24] sm:$0xf]
    %v1092 = vld [vmem:[#allocation9] sm:$0xf]
    %v1093 = vld [vmem:[#allocation9 + $0x4] sm:$0xf]
    %v1094 = vld [vmem:[#allocation9 + $0x8] sm:$0xf]
    %v1095 = vld [vmem:[#allocation9 + $0xc] sm:$0xf]
    %v1096 = vld [vmem:[#allocation9 + $0x10] sm:$0xf]
    %v1097 = vld [vmem:[#allocation9 + $0x14] sm:$0xf]
    %v1098 = vld [vmem:[#allocation9 + $0x18] sm:$0xf]
    %v1099 = vld [vmem:[#allocation9 + $0x1c] sm:$0xf]
    %v1100 = vld [vmem:[#allocation9 + $0x20] sm:$0xf]
    %v1101 = vld [vmem:[#allocation9 + $0x24] sm:$0xf]
    %s1102 = scalar_lea.vmem [#allocation6], 40
    %v1103 = vld [vmem:[%s1102] sm:$0xf]
    %v1104 = vld [vmem:[%s1102 + $0x4] sm:$0xf]
    %v1105 = vld [vmem:[%s1102 + $0x8] sm:$0xf]
    %v1106 = vld [vmem:[%s1102 + $0xc] sm:$0xf]
    %v1107 = vld [vmem:[%s1102 + $0x10] sm:$0xf]
    %v1108 = vld [vmem:[%s1102 + $0x14] sm:$0xf]
    %v1109 = vld [vmem:[%s1102 + $0x18] sm:$0xf]
    %v1110 = vld [vmem:[%s1102 + $0x1c] sm:$0xf]
    %v1111 = vld [vmem:[%s1102 + $0x20] sm:$0xf]
    %v1112 = vld [vmem:[%s1102 + $0x24] sm:$0xf]
    %1114 = vrot.lane.b32.xlu0 %v1081, 118
    %v1115 = vpop.permute.xlu0 %1114
    %v1126 = vunpack.c.l.b16 %v1103
    %v1127 = vunpack.c.l.b16 %v1104
    %v1128 = vunpack.c.l.b16 %v1105
    %v1129 = vunpack.c.l.b16 %v1106
    %v1130 = vunpack.c.l.b16 %v1107
    %v1131 = vunpack.c.l.b16 %v1108
    %v1132 = vunpack.c.l.b16 %v1109
    %v1133 = vunpack.c.l.b16 %v1110
    %v1134 = vunpack.c.l.b16 %v1111
    %v1135 = vunpack.c.l.b16 %v1112
    %v1136 = vpack.c.b16 %v1127, %v1126
    %v1137 = vpack.c.b16 %v1129, %v1128
    %v1138 = vpack.c.b16 %v1131, %v1130
    %v1139 = vpack.c.b16 %v1133, %v1132
    %v1140 = vpack.c.b16 %v1135, %v1134
    %vm1146 = vcmask 654336
    %v1148 = vsel %vm1146, %v1115, 0
    %1150 = vmatprep.subr.bf16.mxu0 0
    %1151 = vmatpush1.bf16.msra.mxu0 %v1136
    %1152 = vmatprep.subr.bf16.mxu0 0
    %1153 = vmatpush1.bf16.msra.mxu0 %v1137
    %1154 = vmatprep.subr.bf16.mxu0 0
    %1155 = vmatpush1.bf16.msra.mxu0 %v1138
    %1156 = vmatprep.subr.bf16.mxu0 0
    %1157 = vmatpush1.bf16.msra.mxu0 %v1139
    %1158 = vmatprep.subr.bf16.mxu0 0
    %1159 = vmatpush1.bf16.msra.mxu0 %v1140
    %1160 = vmatprep.subr.bf16.mxu0 0
    %1161 = vmatpush1.bf16.msra.mxu0 0
    %1162 = vmatprep.subr.bf16.mxu0 0
    %1163 = vmatpush1.bf16.msra.mxu0 0
    %1164 = vmatprep.subr.bf16.mxu0 0
    %1165 = vmatpush1.bf16.msra.mxu0 0
    %1166 = vmatprep.subr.bf16.mxu0 0
    %1167 = vmatpush1.bf16.msra.mxu0 0
    %1168 = vmatprep.subr.bf16.mxu0 0
    %1169 = vmatpush1.bf16.msra.mxu0 0
    %1170 = vmatprep.subr.bf16.mxu0 0
    %1171 = vmatpush1.bf16.msra.mxu0 0
    %1172 = vmatprep.subr.bf16.mxu0 0
    %1173 = vmatpush1.bf16.msra.mxu0 0
    %1174 = vmatprep.subr.bf16.mxu0 0
    %1175 = vmatpush1.bf16.msra.mxu0 0
    %1176 = vmatprep.subr.bf16.mxu0 0
    %1177 = vmatpush1.bf16.msra.mxu0 0
    %1178 = vmatprep.subr.bf16.mxu0 0
    %1179 = vmatpush1.bf16.msra.mxu0 0
    %1180 = vmatprep.subr.bf16.mxu0 0
    %1181 = vmatpush1.bf16.msra.mxu0 0
    %1182 = vmatprep.mubr.bf16.mxu0 0
    %1183 = vmatmul.mubr.bf16.gmra.mrb[0].mxu0 %v1148
    %v1184 = vpop.f32.mrb[0].mxu0
    %v1185 = vadd.f32 0.0, %v1184
    %v1186 = vpop.f32.mrb[0].mxu0
    %v1187 = vpop.f32.mrb[0].mxu0
    %v1188 = vadd.f32 0.0, %v1187
    %v1189 = vpop.f32.mrb[0].mxu0
    %1190 = vdwg.mxu0
    %v1201 = vunpack.c.l.b16 %v1082
    %v1202 = vunpack.c.l.b16 %v1083
    %v1203 = vunpack.c.l.b16 %v1084
    %v1204 = vunpack.c.l.b16 %v1085
    %v1205 = vunpack.c.l.b16 %v1086
    %v1206 = vunpack.c.l.b16 %v1087
    %v1207 = vunpack.c.l.b16 %v1088
    %v1208 = vunpack.c.l.b16 %v1089
    %v1209 = vunpack.c.l.b16 %v1090
    %v1210 = vunpack.c.l.b16 %v1091
    %v1211 = vpack.c.b16 %v1202, %v1201
    %v1212 = vpack.c.b16 %v1204, %v1203
    %v1213 = vpack.c.b16 %v1206, %v1205
    %v1214 = vpack.c.b16 %v1208, %v1207
    %v1215 = vpack.c.b16 %v1210, %v1209
    %v1222 = vsel %vm1146, %v1081, 0
    %1224 = vmatprep.subr.bf16.mxu0 0
    %1225 = vmatpush1.bf16.msra.mxu0 %v1211
    %1226 = vmatprep.subr.bf16.mxu0 0
    %1227 = vmatpush1.bf16.msra.mxu0 %v1212
    %1228 = vmatprep.subr.bf16.mxu0 0
    %1229 = vmatpush1.bf16.msra.mxu0 %v1213
    %1230 = vmatprep.subr.bf16.mxu0 0
    %1231 = vmatpush1.bf16.msra.mxu0 %v1214
    %1232 = vmatprep.subr.bf16.mxu0 0
    %1233 = vmatpush1.bf16.msra.mxu0 %v1215
    %1234 = vmatprep.subr.bf16.mxu0 0
    %1235 = vmatpush1.bf16.msra.mxu0 0
    %1236 = vmatprep.subr.bf16.mxu0 0
    %1237 = vmatpush1.bf16.msra.mxu0 0
    %1238 = vmatprep.subr.bf16.mxu0 0
    %1239 = vmatpush1.bf16.msra.mxu0 0
    %1240 = vmatprep.subr.bf16.mxu0 0
    %1241 = vmatpush1.bf16.msra.mxu0 0
    %1242 = vmatprep.subr.bf16.mxu0 0
    %1243 = vmatpush1.bf16.msra.mxu0 0
    %1244 = vmatprep.subr.bf16.mxu0 0
    %1245 = vmatpush1.bf16.msra.mxu0 0
    %1246 = vmatprep.subr.bf16.mxu0 0
    %1247 = vmatpush1.bf16.msra.mxu0 0
    %1248 = vmatprep.subr.bf16.mxu0 0
    %1249 = vmatpush1.bf16.msra.mxu0 0
    %1250 = vmatprep.subr.bf16.mxu0 0
    %1251 = vmatpush1.bf16.msra.mxu0 0
    %1252 = vmatprep.subr.bf16.mxu0 0
    %1253 = vmatpush1.bf16.msra.mxu0 0
    %1254 = vmatprep.subr.bf16.mxu0 0
    %1255 = vmatpush1.bf16.msra.mxu0 0
    %1256 = vmatprep.mubr.bf16.mxu0 0
    %1257 = vmatmul.mubr.bf16.gmra.mrb[0].mxu0 %v1222
    %v1258 = vpop.f32.mrb[0].mxu0
    %v1259 = vadd.f32 %v1185, %v1258
    %v1260 = vpop.f32.mrb[0].mxu0
    %v1261 = vpop.f32.mrb[0].mxu0
    %v1262 = vadd.f32 %v1188, %v1261
    %v1263 = vpop.f32.mrb[0].mxu0
    %1264 = vdwg.mxu0
    %s1265 = scalar_lea.vmem [#allocation9], 40
    %v1266 = vld [vmem:[%s1265] sm:$0xf]
    %v1267 = vld [vmem:[%s1265 + $0x4] sm:$0xf]
    %v1268 = vld [vmem:[%s1265 + $0x8] sm:$0xf]
    %v1269 = vld [vmem:[%s1265 + $0xc] sm:$0xf]
    %v1270 = vld [vmem:[%s1265 + $0x10] sm:$0xf]
    %v1271 = vld [vmem:[%s1265 + $0x14] sm:$0xf]
    %v1272 = vld [vmem:[%s1265 + $0x18] sm:$0xf]
    %v1273 = vld [vmem:[%s1265 + $0x1c] sm:$0xf]
    %v1274 = vld [vmem:[%s1265 + $0x20] sm:$0xf]
    %v1275 = vld [vmem:[%s1265 + $0x24] sm:$0xf]
    %v1286 = vunpack.c.l.b16 %v1266
    %v1287 = vunpack.c.l.b16 %v1267
    %v1288 = vunpack.c.l.b16 %v1268
    %v1289 = vunpack.c.l.b16 %v1269
    %v1290 = vunpack.c.l.b16 %v1270
    %v1291 = vunpack.c.l.b16 %v1271
    %v1292 = vunpack.c.l.b16 %v1272
    %v1293 = vunpack.c.l.b16 %v1273
    %v1294 = vunpack.c.l.b16 %v1274
    %v1295 = vunpack.c.l.b16 %v1275
    %v1296 = vpack.c.b16 %v1287, %v1286
    %v1297 = vpack.c.b16 %v1289, %v1288
    %v1298 = vpack.c.b16 %v1291, %v1290
    %v1299 = vpack.c.b16 %v1293, %v1292
    %v1300 = vpack.c.b16 %v1295, %v1294
    %1306 = vmatprep.subr.bf16.mxu0 0
    %1307 = vmatpush1.bf16.msra.mxu0 %v1296
    %1308 = vmatprep.subr.bf16.mxu0 0
    %1309 = vmatpush1.bf16.msra.mxu0 %v1297
    %1310 = vmatprep.subr.bf16.mxu0 0
    %1311 = vmatpush1.bf16.msra.mxu0 %v1298
    %1312 = vmatprep.subr.bf16.mxu0 0
    %1313 = vmatpush1.bf16.msra.mxu0 %v1299
    %1314 = vmatprep.subr.bf16.mxu0 0
    %1315 = vmatpush1.bf16.msra.mxu0 %v1300
    %1316 = vmatprep.subr.bf16.mxu0 0
    %1317 = vmatpush1.bf16.msra.mxu0 0
    %1318 = vmatprep.subr.bf16.mxu0 0
    %1319 = vmatpush1.bf16.msra.mxu0 0
    %1320 = vmatprep.subr.bf16.mxu0 0
    %1321 = vmatpush1.bf16.msra.mxu0 0
    %1322 = vmatprep.subr.bf16.mxu0 0
    %1323 = vmatpush1.bf16.msra.mxu0 0
    %1324 = vmatprep.subr.bf16.mxu0 0
    %1325 = vmatpush1.bf16.msra.mxu0 0
    %1326 = vmatprep.subr.bf16.mxu0 0
    %1327 = vmatpush1.bf16.msra.mxu0 0
    %1328 = vmatprep.subr.bf16.mxu0 0
    %1329 = vmatpush1.bf16.msra.mxu0 0
    %1330 = vmatprep.subr.bf16.mxu0 0
    %1331 = vmatpush1.bf16.msra.mxu0 0
    %1332 = vmatprep.subr.bf16.mxu0 0
    %1333 = vmatpush1.bf16.msra.mxu0 0
    %1334 = vmatprep.subr.bf16.mxu0 0
    %1335 = vmatpush1.bf16.msra.mxu0 0
    %1336 = vmatprep.subr.bf16.mxu0 0
    %1337 = vmatpush1.bf16.msra.mxu0 0
    %1338 = vmatprep.mubr.bf16.mxu0 0
    %1339 = vmatmul.mubr.bf16.gmra.mrb[0].mxu0 %v1148
    %v1340 = vpop.f32.mrb[0].mxu0
    %v1341 = vadd.f32 0.0, %v1340
    %v1342 = vpop.f32.mrb[0].mxu0
    %v1343 = vpop.f32.mrb[0].mxu0
    %v1344 = vadd.f32 0.0, %v1343
    %v1345 = vpop.f32.mrb[0].mxu0
    %1346 = vdwg.mxu0
    %v1357 = vunpack.c.l.b16 %v1092
    %v1358 = vunpack.c.l.b16 %v1093
    %v1359 = vunpack.c.l.b16 %v1094
    %v1360 = vunpack.c.l.b16 %v1095
    %v1361 = vunpack.c.l.b16 %v1096
    %v1362 = vunpack.c.l.b16 %v1097
    %v1363 = vunpack.c.l.b16 %v1098
    %v1364 = vunpack.c.l.b16 %v1099
    %v1365 = vunpack.c.l.b16 %v1100
    %v1366 = vunpack.c.l.b16 %v1101
    %v1367 = vpack.c.b16 %v1358, %v1357
    %v1368 = vpack.c.b16 %v1360, %v1359
    %v1369 = vpack.c.b16 %v1362, %v1361
    %v1370 = vpack.c.b16 %v1364, %v1363
    %v1371 = vpack.c.b16 %v1366, %v1365
    %1377 = vmatprep.subr.bf16.mxu0 0
    %1378 = vmatpush1.bf16.msra.mxu0 %v1367
    %1379 = vmatprep.subr.bf16.mxu0 0
    %1380 = vmatpush1.bf16.msra.mxu0 %v1368
    %1381 = vmatprep.subr.bf16.mxu0 0
    %1382 = vmatpush1.bf16.msra.mxu0 %v1369
    %1383 = vmatprep.subr.bf16.mxu0 0
    %1384 = vmatpush1.bf16.msra.mxu0 %v1370
    %1385 = vmatprep.subr.bf16.mxu0 0
    %1386 = vmatpush1.bf16.msra.mxu0 %v1371
    %1387 = vmatprep.subr.bf16.mxu0 0
    %1388 = vmatpush1.bf16.msra.mxu0 0
    %1389 = vmatprep.subr.bf16.mxu0 0
    %1390 = vmatpush1.bf16.msra.mxu0 0
    %1391 = vmatprep.subr.bf16.mxu0 0
    %1392 = vmatpush1.bf16.msra.mxu0 0
    %1393 = vmatprep.subr.bf16.mxu0 0
    %1394 = vmatpush1.bf16.msra.mxu0 0
    %1395 = vmatprep.subr.bf16.mxu0 0
    %1396 = vmatpush1.bf16.msra.mxu0 0
    %1397 = vmatprep.subr.bf16.mxu0 0
    %1398 = vmatpush1.bf16.msra.mxu0 0
    %1399 = vmatprep.subr.bf16.mxu0 0
    %1400 = vmatpush1.bf16.msra.mxu0 0
    %1401 = vmatprep.subr.bf16.mxu0 0
    %1402 = vmatpush1.bf16.msra.mxu0 0
    %1403 = vmatprep.subr.bf16.mxu0 0
    %1404 = vmatpush1.bf16.msra.mxu0 0
    %1405 = vmatprep.subr.bf16.mxu0 0
    %1406 = vmatpush1.bf16.msra.mxu0 0
    %1407 = vmatprep.subr.bf16.mxu0 0
    %1408 = vmatpush1.bf16.msra.mxu0 0
    %1409 = vmatprep.mubr.bf16.mxu0 0
    %1410 = vmatmul.mubr.bf16.gmra.mrb[0].mxu0 %v1222
    %v1411 = vpop.f32.mrb[0].mxu0
    %v1412 = vadd.f32 %v1341, %v1411
    %v1413 = vpop.f32.mrb[0].mxu0
    %v1414 = vpop.f32.mrb[0].mxu0
    %v1415 = vadd.f32 %v1344, %v1414
    %v1416 = vpop.f32.mrb[0].mxu0
    %1417 = vdwg.mxu0
    %s1418 = scalar_lea.vmem [#allocation6], 80
    %v1419 = vld [vmem:[%s1418] sm:$0xf]
    %v1420 = vld [vmem:[%s1418 + $0x4] sm:$0xf]
    %v1421 = vld [vmem:[%s1418 + $0x8] sm:$0xf]
    %v1422 = vld [vmem:[%s1418 + $0xc] sm:$0xf]
    %v1423 = vld [vmem:[%s1418 + $0x10] sm:$0xf]
    %v1424 = vld [vmem:[%s1418 + $0x14] sm:$0xf]
    %v1425 = vld [vmem:[%s1418 + $0x18] sm:$0xf]
    %v1426 = vld [vmem:[%s1418 + $0x1c] sm:$0xf]
    %v1427 = vld [vmem:[%s1418 + $0x20] sm:$0xf]
    %v1428 = vld [vmem:[%s1418 + $0x24] sm:$0xf]
    %1429 = vrot.lane.b32.xlu0 %v1081, 108
    %v1430 = vpop.permute.xlu0 %1429
    %v1441 = vunpack.c.l.b16 %v1419
    %v1442 = vunpack.c.l.b16 %v1420
    %v1443 = vunpack.c.l.b16 %v1421
    %v1444 = vunpack.c.l.b16 %v1422
    %v1445 = vunpack.c.l.b16 %v1423
    %v1446 = vunpack.c.l.b16 %v1424
    %v1447 = vunpack.c.l.b16 %v1425
    %v1448 = vunpack.c.l.b16 %v1426
    %v1449 = vunpack.c.l.b16 %v1427
    %v1450 = vunpack.c.l.b16 %v1428
    %v1451 = vpack.c.b16 %v1442, %v1441
    %v1452 = vpack.c.b16 %v1444, %v1443
    %v1453 = vpack.c.b16 %v1446, %v1445
    %v1454 = vpack.c.b16 %v1448, %v1447
    %v1455 = vpack.c.b16 %v1450, %v1449
    %v1462 = vsel %vm1146, %v1430, 0
    %1464 = vmatprep.subr.bf16.mxu0 0
    %1465 = vmatpush1.bf16.msra.mxu0 %v1451
    %1466 = vmatprep.subr.bf16.mxu0 0
    %1467 = vmatpush1.bf16.msra.mxu0 %v1452
    %1468 = vmatprep.subr.bf16.mxu0 0
    %1469 = vmatpush1.bf16.msra.mxu0 %v1453
    %1470 = vmatprep.subr.bf16.mxu0 0
    %1471 = vmatpush1.bf16.msra.mxu0 %v1454
    %1472 = vmatprep.subr.bf16.mxu0 0
    %1473 = vmatpush1.bf16.msra.mxu0 %v1455
    %1474 = vmatprep.subr.bf16.mxu0 0
    %1475 = vmatpush1.bf16.msra.mxu0 0
    %1476 = vmatprep.subr.bf16.mxu0 0
    %1477 = vmatpush1.bf16.msra.mxu0 0
    %1478 = vmatprep.subr.bf16.mxu0 0
    %1479 = vmatpush1.bf16.msra.mxu0 0
    %1480 = vmatprep.subr.bf16.mxu0 0
    %1481 = vmatpush1.bf16.msra.mxu0 0
    %1482 = vmatprep.subr.bf16.mxu0 0
    %1483 = vmatpush1.bf16.msra.mxu0 0
    %1484 = vmatprep.subr.bf16.mxu0 0
    %1485 = vmatpush1.bf16.msra.mxu0 0
    %1486 = vmatprep.subr.bf16.mxu0 0
    %1487 = vmatpush1.bf16.msra.mxu0 0
    %1488 = vmatprep.subr.bf16.mxu0 0
    %1489 = vmatpush1.bf16.msra.mxu0 0
    %1490 = vmatprep.subr.bf16.mxu0 0
    %1491 = vmatpush1.bf16.msra.mxu0 0
    %1492 = vmatprep.subr.bf16.mxu0 0
    %1493 = vmatpush1.bf16.msra.mxu0 0
    %1494 = vmatprep.subr.bf16.mxu0 0
    %1495 = vmatpush1.bf16.msra.mxu0 0
    %1496 = vmatprep.mubr.bf16.mxu0 0
    %1497 = vmatmul.mubr.bf16.gmra.mrb[0].mxu0 %v1462
    %v1498 = vpop.f32.mrb[0].mxu0
    %v1499 = vadd.f32 0.0, %v1498
    %v1500 = vpop.f32.mrb[0].mxu0
    %v1501 = vpop.f32.mrb[0].mxu0
    %v1502 = vadd.f32 0.0, %v1501
    %v1503 = vpop.f32.mrb[0].mxu0
    %1504 = vdwg.mxu0
    %v1505 = vadd.f32 %v1259, %v1499
    %v1506 = vadd.f32 %v1262, %v1502
    %s1507 = scalar_lea.vmem [#allocation9], 80
    %v1508 = vld [vmem:[%s1507] sm:$0xf]
    %v1509 = vld [vmem:[%s1507 + $0x4] sm:$0xf]
    %v1510 = vld [vmem:[%s1507 + $0x8] sm:$0xf]
    %v1511 = vld [vmem:[%s1507 + $0xc] sm:$0xf]
    %v1512 = vld [vmem:[%s1507 + $0x10] sm:$0xf]
    %v1513 = vld [vmem:[%s1507 + $0x14] sm:$0xf]
    %v1514 = vld [vmem:[%s1507 + $0x18] sm:$0xf]
    %v1515 = vld [vmem:[%s1507 + $0x1c] sm:$0xf]
    %v1516 = vld [vmem:[%s1507 + $0x20] sm:$0xf]
    %v1517 = vld [vmem:[%s1507 + $0x24] sm:$0xf]
    %v1528 = vunpack.c.l.b16 %v1508
    %v1529 = vunpack.c.l.b16 %v1509
    %v1530 = vunpack.c.l.b16 %v1510
    %v1531 = vunpack.c.l.b16 %v1511
    %v1532 = vunpack.c.l.b16 %v1512
    %v1533 = vunpack.c.l.b16 %v1513
    %v1534 = vunpack.c.l.b16 %v1514
    %v1535 = vunpack.c.l.b16 %v1515
    %v1536 = vunpack.c.l.b16 %v1516
    %v1537 = vunpack.c.l.b16 %v1517
    %v1538 = vpack.c.b16 %v1529, %v1528
    %v1539 = vpack.c.b16 %v1531, %v1530
    %v1540 = vpack.c.b16 %v1533, %v1532
    %v1541 = vpack.c.b16 %v1535, %v1534
    %v1542 = vpack.c.b16 %v1537, %v1536
    %1548 = vmatprep.subr.bf16.mxu0 0
    %1549 = vmatpush1.bf16.msra.mxu0 %v1538
    %1550 = vmatprep.subr.bf16.mxu0 0
    %1551 = vmatpush1.bf16.msra.mxu0 %v1539
    %1552 = vmatprep.subr.bf16.mxu0 0
    %1553 = vmatpush1.bf16.msra.mxu0 %v1540
    %1554 = vmatprep.subr.bf16.mxu0 0
    %1555 = vmatpush1.bf16.msra.mxu0 %v1541
    %1556 = vmatprep.subr.bf16.mxu0 0
    %1557 = vmatpush1.bf16.msra.mxu0 %v1542
    %1558 = vmatprep.subr.bf16.mxu0 0
    %1559 = vmatpush1.bf16.msra.mxu0 0
    %1560 = vmatprep.subr.bf16.mxu0 0
    %1561 = vmatpush1.bf16.msra.mxu0 0
    %1562 = vmatprep.subr.bf16.mxu0 0
    %1563 = vmatpush1.bf16.msra.mxu0 0
    %1564 = vmatprep.subr.bf16.mxu0 0
    %1565 = vmatpush1.bf16.msra.mxu0 0
    %1566 = vmatprep.subr.bf16.mxu0 0
    %1567 = vmatpush1.bf16.msra.mxu0 0
    %1568 = vmatprep.subr.bf16.mxu0 0
    %1569 = vmatpush1.bf16.msra.mxu0 0
    %1570 = vmatprep.subr.bf16.mxu0 0
    %1571 = vmatpush1.bf16.msra.mxu0 0
    %1572 = vmatprep.subr.bf16.mxu0 0
    %1573 = vmatpush1.bf16.msra.mxu0 0
    %1574 = vmatprep.subr.bf16.mxu0 0
    %1575 = vmatpush1.bf16.msra.mxu0 0
    %1576 = vmatprep.subr.bf16.mxu0 0
    %1577 = vmatpush1.bf16.msra.mxu0 0
    %1578 = vmatprep.subr.bf16.mxu0 0
    %1579 = vmatpush1.bf16.msra.mxu0 0
    %1580 = vmatprep.mubr.bf16.mxu0 0
    %1581 = vmatmul.mubr.bf16.gmra.mrb[0].mxu0 %v1462
    %v1582 = vpop.f32.mrb[0].mxu0
    %v1583 = vadd.f32 0.0, %v1582
    %v1584 = vpop.f32.mrb[0].mxu0
    %v1585 = vpop.f32.mrb[0].mxu0
    %v1586 = vadd.f32 0.0, %v1585
    %v1587 = vpop.f32.mrb[0].mxu0
    %1588 = vdwg.mxu0
    %v1589 = vadd.f32 %v1412, %v1583
    %v1590 = vadd.f32 %v1415, %v1586
    %s1591 = scalar_lea.vmem [#allocation6], 120
    %v1592 = vld [vmem:[%s1591] sm:$0xf]
    %v1593 = vld [vmem:[%s1591 + $0x4] sm:$0xf]
    %v1594 = vld [vmem:[%s1591 + $0x8] sm:$0xf]
    %v1595 = vld [vmem:[%s1591 + $0xc] sm:$0xf]
    %v1596 = vld [vmem:[%s1591 + $0x10] sm:$0xf]
    %v1597 = vld [vmem:[%s1591 + $0x14] sm:$0xf]
    %v1598 = vld [vmem:[%s1591 + $0x18] sm:$0xf]
    %v1599 = vld [vmem:[%s1591 + $0x1c] sm:$0xf]
    %v1600 = vld [vmem:[%s1591 + $0x20] sm:$0xf]
    %v1601 = vld [vmem:[%s1591 + $0x24] sm:$0xf]
    %1602 = vrot.lane.b32.xlu0 %v1081, 98
    %v1603 = vpop.permute.xlu0 %1602
    %v1614 = vunpack.c.l.b16 %v1592
    %v1615 = vunpack.c.l.b16 %v1593
    %v1616 = vunpack.c.l.b16 %v1594
    %v1617 = vunpack.c.l.b16 %v1595
    %v1618 = vunpack.c.l.b16 %v1596
    %v1619 = vunpack.c.l.b16 %v1597
    %v1620 = vunpack.c.l.b16 %v1598
    %v1621 = vunpack.c.l.b16 %v1599
    %v1622 = vunpack.c.l.b16 %v1600
    %v1623 = vunpack.c.l.b16 %v1601
    %v1624 = vpack.c.b16 %v1615, %v1614
    %v1625 = vpack.c.b16 %v1617, %v1616
    %v1626 = vpack.c.b16 %v1619, %v1618
    %v1627 = vpack.c.b16 %v1621, %v1620
    %v1628 = vpack.c.b16 %v1623, %v1622
    %v1635 = vsel %vm1146, %v1603, 0
    %1637 = vmatprep.subr.bf16.mxu0 0
    %1638 = vmatpush1.bf16.msra.mxu0 %v1624
    %1639 = vmatprep.subr.bf16.mxu0 0
    %1640 = vmatpush1.bf16.msra.mxu0 %v1625
    %1641 = vmatprep.subr.bf16.mxu0 0
    %1642 = vmatpush1.bf16.msra.mxu0 %v1626
    %1643 = vmatprep.subr.bf16.mxu0 0
    %1644 = vmatpush1.bf16.msra.mxu0 %v1627
    %1645 = vmatprep.subr.bf16.mxu0 0
    %1646 = vmatpush1.bf16.msra.mxu0 %v1628
    %1647 = vmatprep.subr.bf16.mxu0 0
    %1648 = vmatpush1.bf16.msra.mxu0 0
    %1649 = vmatprep.subr.bf16.mxu0 0
    %1650 = vmatpush1.bf16.msra.mxu0 0
    %1651 = vmatprep.subr.bf16.mxu0 0
    %1652 = vmatpush1.bf16.msra.mxu0 0
    %1653 = vmatprep.subr.bf16.mxu0 0
    %1654 = vmatpush1.bf16.msra.mxu0 0
    %1655 = vmatprep.subr.bf16.mxu0 0
    %1656 = vmatpush1.bf16.msra.mxu0 0
    %1657 = vmatprep.subr.bf16.mxu0 0
    %1658 = vmatpush1.bf16.msra.mxu0 0
    %1659 = vmatprep.subr.bf16.mxu0 0
    %1660 = vmatpush1.bf16.msra.mxu0 0
    %1661 = vmatprep.subr.bf16.mxu0 0
    %1662 = vmatpush1.bf16.msra.mxu0 0
    %1663 = vmatprep.subr.bf16.mxu0 0
    %1664 = vmatpush1.bf16.msra.mxu0 0
    %1665 = vmatprep.subr.bf16.mxu0 0
    %1666 = vmatpush1.bf16.msra.mxu0 0
    %1667 = vmatprep.subr.bf16.mxu0 0
    %1668 = vmatpush1.bf16.msra.mxu0 0
    %1669 = vmatprep.mubr.bf16.mxu0 0
    %1670 = vmatmul.mubr.bf16.gmra.mrb[0].mxu0 %v1635
    %v1671 = vpop.f32.mrb[0].mxu0
    %v1672 = vadd.f32 0.0, %v1671
    %v1673 = vpop.f32.mrb[0].mxu0
    %v1674 = vpop.f32.mrb[0].mxu0
    %v1675 = vadd.f32 0.0, %v1674
    %v1676 = vpop.f32.mrb[0].mxu0
    %1677 = vdwg.mxu0
    %v1678 = vadd.f32 %v1505, %v1672
    %v1679 = vadd.f32 %v1506, %v1675
    %s1680 = scalar_lea.vmem [#allocation9], 120
    %v1681 = vld [vmem:[%s1680] sm:$0xf]
    %v1682 = vld [vmem:[%s1680 + $0x4] sm:$0xf]
    %v1683 = vld [vmem:[%s1680 + $0x8] sm:$0xf]
    %v1684 = vld [vmem:[%s1680 + $0xc] sm:$0xf]
    %v1685 = vld [vmem:[%s1680 + $0x10] sm:$0xf]
    %v1686 = vld [vmem:[%s1680 + $0x14] sm:$0xf]
    %v1687 = vld [vmem:[%s1680 + $0x18] sm:$0xf]
    %v1688 = vld [vmem:[%s1680 + $0x1c] sm:$0xf]
    %v1689 = vld [vmem:[%s1680 + $0x20] sm:$0xf]
    %v1690 = vld [vmem:[%s1680 + $0x24] sm:$0xf]
    %v1701 = vunpack.c.l.b16 %v1681
    %v1702 = vunpack.c.l.b16 %v1682
    %v1703 = vunpack.c.l.b16 %v1683
    %v1704 = vunpack.c.l.b16 %v1684
    %v1705 = vunpack.c.l.b16 %v1685
    %v1706 = vunpack.c.l.b16 %v1686
    %v1707 = vunpack.c.l.b16 %v1687
    %v1708 = vunpack.c.l.b16 %v1688
    %v1709 = vunpack.c.l.b16 %v1689
    %v1710 = vunpack.c.l.b16 %v1690
    %v1711 = vpack.c.b16 %v1702, %v1701
    %v1712 = vpack.c.b16 %v1704, %v1703
    %v1713 = vpack.c.b16 %v1706, %v1705
    %v1714 = vpack.c.b16 %v1708, %v1707
    %v1715 = vpack.c.b16 %v1710, %v1709
    %1721 = vmatprep.subr.bf16.mxu0 0
    %1722 = vmatpush1.bf16.msra.mxu0 %v1711
    %1723 = vmatprep.subr.bf16.mxu0 0
    %1724 = vmatpush1.bf16.msra.mxu0 %v1712
    %1725 = vmatprep.subr.bf16.mxu0 0
    %1726 = vmatpush1.bf16.msra.mxu0 %v1713
    %1727 = vmatprep.subr.bf16.mxu0 0
    %1728 = vmatpush1.bf16.msra.mxu0 %v1714
    %1729 = vmatprep.subr.bf16.mxu0 0
    %1730 = vmatpush1.bf16.msra.mxu0 %v1715
    %1731 = vmatprep.subr.bf16.mxu0 0
    %1732 = vmatpush1.bf16.msra.mxu0 0
    %1733 = vmatprep.subr.bf16.mxu0 0
    %1734 = vmatpush1.bf16.msra.mxu0 0
    %1735 = vmatprep.subr.bf16.mxu0 0
    %1736 = vmatpush1.bf16.msra.mxu0 0
    %1737 = vmatprep.subr.bf16.mxu0 0
    %1738 = vmatpush1.bf16.msra.mxu0 0
    %1739 = vmatprep.subr.bf16.mxu0 0
    %1740 = vmatpush1.bf16.msra.mxu0 0
    %1741 = vmatprep.subr.bf16.mxu0 0
    %1742 = vmatpush1.bf16.msra.mxu0 0
    %1743 = vmatprep.subr.bf16.mxu0 0
    %1744 = vmatpush1.bf16.msra.mxu0 0
    %1745 = vmatprep.subr.bf16.mxu0 0
    %1746 = vmatpush1.bf16.msra.mxu0 0
    %1747 = vmatprep.subr.bf16.mxu0 0
    %1748 = vmatpush1.bf16.msra.mxu0 0
    %1749 = vmatprep.subr.bf16.mxu0 0
    %1750 = vmatpush1.bf16.msra.mxu0 0
    %1751 = vmatprep.subr.bf16.mxu0 0
    %1752 = vmatpush1.bf16.msra.mxu0 0
    %1753 = vmatprep.mubr.bf16.mxu0 0
    %1754 = vmatmul.mubr.bf16.gmra.mrb[0].mxu0 %v1635
    %v1755 = vpop.f32.mrb[0].mxu0
    %v1756 = vadd.f32 0.0, %v1755
    %v1757 = vpop.f32.mrb[0].mxu0
    %v1758 = vpop.f32.mrb[0].mxu0
    %v1759 = vadd.f32 0.0, %v1758
    %v1760 = vpop.f32.mrb[0].mxu0
    %1761 = vdwg.mxu0
    %v1762 = vadd.f32 %v1589, %v1756
    %v1763 = vadd.f32 %v1590, %v1759
    %s1764 = scalar_lea.vmem [#allocation6], 160
    %v1765 = vld [vmem:[%s1764] sm:$0xf]
    %v1766 = vld [vmem:[%s1764 + $0x4] sm:$0xf]
    %v1767 = vld [vmem:[%s1764 + $0x8] sm:$0xf]
    %v1768 = vld [vmem:[%s1764 + $0xc] sm:$0xf]
    %v1769 = vld [vmem:[%s1764 + $0x10] sm:$0xf]
    %v1770 = vld [vmem:[%s1764 + $0x14] sm:$0xf]
    %v1771 = vld [vmem:[%s1764 + $0x18] sm:$0xf]
    %v1772 = vld [vmem:[%s1764 + $0x1c] sm:$0xf]
    %v1773 = vld [vmem:[%s1764 + $0x20] sm:$0xf]
    %v1774 = vld [vmem:[%s1764 + $0x24] sm:$0xf]
    %1775 = vrot.lane.b32.xlu0 %v1081, 88
    %v1776 = vpop.permute.xlu0 %1775
    %v1787 = vunpack.c.l.b16 %v1765
    %v1788 = vunpack.c.l.b16 %v1766
    %v1789 = vunpack.c.l.b16 %v1767
    %v1790 = vunpack.c.l.b16 %v1768
    %v1791 = vunpack.c.l.b16 %v1769
    %v1792 = vunpack.c.l.b16 %v1770
    %v1793 = vunpack.c.l.b16 %v1771
    %v1794 = vunpack.c.l.b16 %v1772
    %v1795 = vunpack.c.l.b16 %v1773
    %v1796 = vunpack.c.l.b16 %v1774
    %v1797 = vpack.c.b16 %v1788, %v1787
    %v1798 = vpack.c.b16 %v1790, %v1789
    %v1799 = vpack.c.b16 %v1792, %v1791
    %v1800 = vpack.c.b16 %v1794, %v1793
    %v1801 = vpack.c.b16 %v1796, %v1795
    %v1808 = vsel %vm1146, %v1776, 0
    %1810 = vmatprep.subr.bf16.mxu0 0
    %1811 = vmatpush1.bf16.msra.mxu0 %v1797
    %1812 = vmatprep.subr.bf16.mxu0 0
    %1813 = vmatpush1.bf16.msra.mxu0 %v1798
    %1814 = vmatprep.subr.bf16.mxu0 0
    %1815 = vmatpush1.bf16.msra.mxu0 %v1799
    %1816 = vmatprep.subr.bf16.mxu0 0
    %1817 = vmatpush1.bf16.msra.mxu0 %v1800
    %1818 = vmatprep.subr.bf16.mxu0 0
    %1819 = vmatpush1.bf16.msra.mxu0 %v1801
    %1820 = vmatprep.subr.bf16.mxu0 0
    %1821 = vmatpush1.bf16.msra.mxu0 0
    %1822 = vmatprep.subr.bf16.mxu0 0
    %1823 = vmatpush1.bf16.msra.mxu0 0
    %1824 = vmatprep.subr.bf16.mxu0 0
    %1825 = vmatpush1.bf16.msra.mxu0 0
    %1826 = vmatprep.subr.bf16.mxu0 0
    %1827 = vmatpush1.bf16.msra.mxu0 0
    %1828 = vmatprep.subr.bf16.mxu0 0
    %1829 = vmatpush1.bf16.msra.mxu0 0
    %1830 = vmatprep.subr.bf16.mxu0 0
    %1831 = vmatpush1.bf16.msra.mxu0 0
    %1832 = vmatprep.subr.bf16.mxu0 0
    %1833 = vmatpush1.bf16.msra.mxu0 0
    %1834 = vmatprep.subr.bf16.mxu0 0
    %1835 = vmatpush1.bf16.msra.mxu0 0
    %1836 = vmatprep.subr.bf16.mxu0 0
    %1837 = vmatpush1.bf16.msra.mxu0 0
    %1838 = vmatprep.subr.bf16.mxu0 0
    %1839 = vmatpush1.bf16.msra.mxu0 0
    %1840 = vmatprep.subr.bf16.mxu0 0
    %1841 = vmatpush1.bf16.msra.mxu0 0
    %1842 = vmatprep.mubr.bf16.mxu0 0
    %1843 = vmatmul.mubr.bf16.gmra.mrb[0].mxu0 %v1808
    %v1844 = vpop.f32.mrb[0].mxu0
    %v1845 = vadd.f32 0.0, %v1844
    %v1846 = vpop.f32.mrb[0].mxu0
    %v1847 = vpop.f32.mrb[0].mxu0
    %v1848 = vadd.f32 0.0, %v1847
    %v1849 = vpop.f32.mrb[0].mxu0
    %1850 = vdwg.mxu0
    %v1851 = vadd.f32 %v1678, %v1845
    %v1852 = vadd.f32 %v1679, %v1848
    %s1853 = scalar_lea.vmem [#allocation9], 160
    %v1854 = vld [vmem:[%s1853] sm:$0xf]
    %v1855 = vld [vmem:[%s1853 + $0x4] sm:$0xf]
    %v1856 = vld [vmem:[%s1853 + $0x8] sm:$0xf]
    %v1857 = vld [vmem:[%s1853 + $0xc] sm:$0xf]
    %v1858 = vld [vmem:[%s1853 + $0x10] sm:$0xf]
    %v1859 = vld [vmem:[%s1853 + $0x14] sm:$0xf]
    %v1860 = vld [vmem:[%s1853 + $0x18] sm:$0xf]
    %v1861 = vld [vmem:[%s1853 + $0x1c] sm:$0xf]
    %v1862 = vld [vmem:[%s1853 + $0x20] sm:$0xf]
    %v1863 = vld [vmem:[%s1853 + $0x24] sm:$0xf]
    %v1874 = vunpack.c.l.b16 %v1854
    %v1875 = vunpack.c.l.b16 %v1855
    %v1876 = vunpack.c.l.b16 %v1856
    %v1877 = vunpack.c.l.b16 %v1857
    %v1878 = vunpack.c.l.b16 %v1858
    %v1879 = vunpack.c.l.b16 %v1859
    %v1880 = vunpack.c.l.b16 %v1860
    %v1881 = vunpack.c.l.b16 %v1861
    %v1882 = vunpack.c.l.b16 %v1862
    %v1883 = vunpack.c.l.b16 %v1863
    %v1884 = vpack.c.b16 %v1875, %v1874
    %v1885 = vpack.c.b16 %v1877, %v1876
    %v1886 = vpack.c.b16 %v1879, %v1878
    %v1887 = vpack.c.b16 %v1881, %v1880
    %v1888 = vpack.c.b16 %v1883, %v1882
    %1894 = vmatprep.subr.bf16.mxu0 0
    %1895 = vmatpush1.bf16.msra.mxu0 %v1884
    %1896 = vmatprep.subr.bf16.mxu0 0
    %1897 = vmatpush1.bf16.msra.mxu0 %v1885
    %1898 = vmatprep.subr.bf16.mxu0 0
    %1899 = vmatpush1.bf16.msra.mxu0 %v1886
    %1900 = vmatprep.subr.bf16.mxu0 0
    %1901 = vmatpush1.bf16.msra.mxu0 %v1887
    %1902 = vmatprep.subr.bf16.mxu0 0
    %1903 = vmatpush1.bf16.msra.mxu0 %v1888
    %1904 = vmatprep.subr.bf16.mxu0 0
    %1905 = vmatpush1.bf16.msra.mxu0 0
    %1906 = vmatprep.subr.bf16.mxu0 0
    %1907 = vmatpush1.bf16.msra.mxu0 0
    %1908 = vmatprep.subr.bf16.mxu0 0
    %1909 = vmatpush1.bf16.msra.mxu0 0
    %1910 = vmatprep.subr.bf16.mxu0 0
    %1911 = vmatpush1.bf16.msra.mxu0 0
    %1912 = vmatprep.subr.bf16.mxu0 0
    %1913 = vmatpush1.bf16.msra.mxu0 0
    %1914 = vmatprep.subr.bf16.mxu0 0
    %1915 = vmatpush1.bf16.msra.mxu0 0
    %1916 = vmatprep.subr.bf16.mxu0 0
    %1917 = vmatpush1.bf16.msra.mxu0 0
    %1918 = vmatprep.subr.bf16.mxu0 0
    %1919 = vmatpush1.bf16.msra.mxu0 0
    %1920 = vmatprep.subr.bf16.mxu0 0
    %1921 = vmatpush1.bf16.msra.mxu0 0
    %1922 = vmatprep.subr.bf16.mxu0 0
    %1923 = vmatpush1.bf16.msra.mxu0 0
    %1924 = vmatprep.subr.bf16.mxu0 0
    %1925 = vmatpush1.bf16.msra.mxu0 0
    %1926 = vmatprep.mubr.bf16.mxu0 0
    %1927 = vmatmul.mubr.bf16.gmra.mrb[0].mxu0 %v1808
    %v1928 = vpop.f32.mrb[0].mxu0
    %v1929 = vadd.f32 0.0, %v1928
    %v1930 = vpop.f32.mrb[0].mxu0
    %v1931 = vpop.f32.mrb[0].mxu0
    %v1932 = vadd.f32 0.0, %v1931
    %v1933 = vpop.f32.mrb[0].mxu0
    %1934 = vdwg.mxu0
    %v1935 = vadd.f32 %v1762, %v1929
    %v1936 = vadd.f32 %v1763, %v1932
    %v1937 = vld [vmem:[#allocation3 + $0x1] sm:$0xff]
    %v1938 = vld [vmem:[#allocation3 + $0x11] sm:$0xff]
    %v1939 = vpack.c.bf16 %v1938, %v1937
    %s1940 = scalar_lea.vmem [#allocation6], 200
    %v1941 = vld [vmem:[%s1940] sm:$0xf]
    %v1942 = vld [vmem:[%s1940 + $0x4] sm:$0xf]
    %v1943 = vld [vmem:[%s1940 + $0x8] sm:$0xf]
    %v1944 = vld [vmem:[%s1940 + $0xc] sm:$0xf]
    %v1945 = vld [vmem:[%s1940 + $0x10] sm:$0xf]
    %v1946 = vld [vmem:[%s1940 + $0x14] sm:$0xf]
    %v1947 = vld [vmem:[%s1940 + $0x18] sm:$0xf]
    %v1948 = vld [vmem:[%s1940 + $0x1c] sm:$0xf]
    %v1949 = vld [vmem:[%s1940 + $0x20] sm:$0xf]
    %v1950 = vld [vmem:[%s1940 + $0x24] sm:$0xf]
    %v1961 = vunpack.c.l.b16 %v1941
    %v1962 = vunpack.c.l.b16 %v1942
    %v1963 = vunpack.c.l.b16 %v1943
    %v1964 = vunpack.c.l.b16 %v1944
    %v1965 = vunpack.c.l.b16 %v1945
    %v1966 = vunpack.c.l.b16 %v1946
    %v1967 = vunpack.c.l.b16 %v1947
    %v1968 = vunpack.c.l.b16 %v1948
    %v1969 = vunpack.c.l.b16 %v1949
    %v1970 = vunpack.c.l.b16 %v1950
    %v1971 = vpack.c.b16 %v1962, %v1961
    %v1972 = vpack.c.b16 %v1964, %v1963
    %v1973 = vpack.c.b16 %v1966, %v1965
    %v1974 = vpack.c.b16 %v1968, %v1967
    %v1975 = vpack.c.b16 %v1970, %v1969
    %v1982 = vsel %vm1146, %v1939, 0
    %1984 = vmatprep.subr.bf16.mxu0 0
    %1985 = vmatpush1.bf16.msra.mxu0 %v1971
    %1986 = vmatprep.subr.bf16.mxu0 0
    %1987 = vmatpush1.bf16.msra.mxu0 %v1972
    %1988 = vmatprep.subr.bf16.mxu0 0
    %1989 = vmatpush1.bf16.msra.mxu0 %v1973
    %1990 = vmatprep.subr.bf16.mxu0 0
    %1991 = vmatpush1.bf16.msra.mxu0 %v1974
    %1992 = vmatprep.subr.bf16.mxu0 0
    %1993 = vmatpush1.bf16.msra.mxu0 %v1975
    %1994 = vmatprep.subr.bf16.mxu0 0
    %1995 = vmatpush1.bf16.msra.mxu0 0
    %1996 = vmatprep.subr.bf16.mxu0 0
    %1997 = vmatpush1.bf16.msra.mxu0 0
    %1998 = vmatprep.subr.bf16.mxu0 0
    %1999 = vmatpush1.bf16.msra.mxu0 0
    %2000 = vmatprep.subr.bf16.mxu0 0
    %2001 = vmatpush1.bf16.msra.mxu0 0
    %2002 = vmatprep.subr.bf16.mxu0 0
    %2003 = vmatpush1.bf16.msra.mxu0 0
    %2004 = vmatprep.subr.bf16.mxu0 0
    %2005 = vmatpush1.bf16.msra.mxu0 0
    %2006 = vmatprep.subr.bf16.mxu0 0
    %2007 = vmatpush1.bf16.msra.mxu0 0
    %2008 = vmatprep.subr.bf16.mxu0 0
    %2009 = vmatpush1.bf16.msra.mxu0 0
    %2010 = vmatprep.subr.bf16.mxu0 0
    %2011 = vmatpush1.bf16.msra.mxu0 0
    %2012 = vmatprep.subr.bf16.mxu0 0
    %2013 = vmatpush1.bf16.msra.mxu0 0
    %2014 = vmatprep.subr.bf16.mxu0 0
    %2015 = vmatpush1.bf16.msra.mxu0 0
    %2016 = vmatprep.mubr.bf16.mxu0 0
    %2017 = vmatmul.mubr.bf16.gmra.mrb[0].mxu0 %v1982
    %v2018 = vpop.f32.mrb[0].mxu0
    %v2019 = vadd.f32 0.0, %v2018
    %v2020 = vpop.f32.mrb[0].mxu0
    %v2021 = vpop.f32.mrb[0].mxu0
    %v2022 = vadd.f32 0.0, %v2021
    %v2023 = vpop.f32.mrb[0].mxu0
    %2024 = vdwg.mxu0
    %v2025 = vadd.f32 %v1851, %v2019
    %v2026 = vadd.f32 %v1852, %v2022
    %s2027 = scalar_lea.vmem [#allocation9], 200
    %v2028 = vld [vmem:[%s2027] sm:$0xf]
    %v2029 = vld [vmem:[%s2027 + $0x4] sm:$0xf]
    %v2030 = vld [vmem:[%s2027 + $0x8] sm:$0xf]
    %v2031 = vld [vmem:[%s2027 + $0xc] sm:$0xf]
    %v2032 = vld [vmem:[%s2027 + $0x10] sm:$0xf]
    %v2033 = vld [vmem:[%s2027 + $0x14] sm:$0xf]
    %v2034 = vld [vmem:[%s2027 + $0x18] sm:$0xf]
    %v2035 = vld [vmem:[%s2027 + $0x1c] sm:$0xf]
    %v2036 = vld [vmem:[%s2027 + $0x20] sm:$0xf]
    %v2037 = vld [vmem:[%s2027 + $0x24] sm:$0xf]
    %v2048 = vunpack.c.l.b16 %v2028
    %v2049 = vunpack.c.l.b16 %v2029
    %v2050 = vunpack.c.l.b16 %v2030
    %v2051 = vunpack.c.l.b16 %v2031
    %v2052 = vunpack.c.l.b16 %v2032
    %v2053 = vunpack.c.l.b16 %v2033
    %v2054 = vunpack.c.l.b16 %v2034
    %v2055 = vunpack.c.l.b16 %v2035
    %v2056 = vunpack.c.l.b16 %v2036
    %v2057 = vunpack.c.l.b16 %v2037
    %v2058 = vpack.c.b16 %v2049, %v2048
    %v2059 = vpack.c.b16 %v2051, %v2050
    %v2060 = vpack.c.b16 %v2053, %v2052
    %v2061 = vpack.c.b16 %v2055, %v2054
    %v2062 = vpack.c.b16 %v2057, %v2056
    %2068 = vmatprep.subr.bf16.mxu0 0
    %2069 = vmatpush1.bf16.msra.mxu0 %v2058
    %2070 = vmatprep.subr.bf16.mxu0 0
    %2071 = vmatpush1.bf16.msra.mxu0 %v2059
    %2072 = vmatprep.subr.bf16.mxu0 0
    %2073 = vmatpush1.bf16.msra.mxu0 %v2060
    %2074 = vmatprep.subr.bf16.mxu0 0
    %2075 = vmatpush1.bf16.msra.mxu0 %v2061
    %2076 = vmatprep.subr.bf16.mxu0 0
    %2077 = vmatpush1.bf16.msra.mxu0 %v2062
    %2078 = vmatprep.subr.bf16.mxu0 0
    %2079 = vmatpush1.bf16.msra.mxu0 0
    %2080 = vmatprep.subr.bf16.mxu0 0
    %2081 = vmatpush1.bf16.msra.mxu0 0
    %2082 = vmatprep.subr.bf16.mxu0 0
    %2083 = vmatpush1.bf16.msra.mxu0 0
    %2084 = vmatprep.subr.bf16.mxu0 0
    %2085 = vmatpush1.bf16.msra.mxu0 0
    %2086 = vmatprep.subr.bf16.mxu0 0
    %2087 = vmatpush1.bf16.msra.mxu0 0
    %2088 = vmatprep.subr.bf16.mxu0 0
    %2089 = vmatpush1.bf16.msra.mxu0 0
    %2090 = vmatprep.subr.bf16.mxu0 0
    %2091 = vmatpush1.bf16.msra.mxu0 0
    %2092 = vmatprep.subr.bf16.mxu0 0
    %2093 = vmatpush1.bf16.msra.mxu0 0
    %2094 = vmatprep.subr.bf16.mxu0 0
    %2095 = vmatpush1.bf16.msra.mxu0 0
    %2096 = vmatprep.subr.bf16.mxu0 0
    %2097 = vmatpush1.bf16.msra.mxu0 0
    %2098 = vmatprep.subr.bf16.mxu0 0
    %2099 = vmatpush1.bf16.msra.mxu0 0
    %2100 = vmatprep.mubr.bf16.mxu0 0
    %2101 = vmatmul.mubr.bf16.gmra.mrb[0].mxu0 %v1982
    %v2102 = vpop.f32.mrb[0].mxu0
    %v2103 = vadd.f32 0.0, %v2102
    %v2104 = vpop.f32.mrb[0].mxu0
    %v2105 = vpop.f32.mrb[0].mxu0
    %v2106 = vadd.f32 0.0, %v2105
    %v2107 = vpop.f32.mrb[0].mxu0
    %2108 = vdwg.mxu0
    %v2109 = vadd.f32 %v1935, %v2103
    %v2110 = vadd.f32 %v1936, %v2106
    %s2111 = scalar_lea.vmem [#allocation6], 240
    %v2112 = vld [vmem:[%s2111] sm:$0xf]
    %v2113 = vld [vmem:[%s2111 + $0x4] sm:$0xf]
    %v2114 = vld [vmem:[%s2111 + $0x8] sm:$0xf]
    %v2115 = vld [vmem:[%s2111 + $0xc] sm:$0xf]
    %v2116 = vld [vmem:[%s2111 + $0x10] sm:$0xf]
    %v2117 = vld [vmem:[%s2111 + $0x14] sm:$0xf]
    %v2118 = vld [vmem:[%s2111 + $0x18] sm:$0xf]
    %v2119 = vld [vmem:[%s2111 + $0x1c] sm:$0xf]
    %v2120 = vld [vmem:[%s2111 + $0x20] sm:$0xf]
    %v2121 = vld [vmem:[%s2111 + $0x24] sm:$0xf]
    %2123 = vrot.lane.b32.xlu0 %v1939, 118
    %v2124 = vpop.permute.xlu0 %2123
    %v2135 = vunpack.c.l.b16 %v2112
    %v2136 = vunpack.c.l.b16 %v2113
    %v2137 = vunpack.c.l.b16 %v2114
    %v2138 = vunpack.c.l.b16 %v2115
    %v2139 = vunpack.c.l.b16 %v2116
    %v2140 = vunpack.c.l.b16 %v2117
    %v2141 = vunpack.c.l.b16 %v2118
    %v2142 = vunpack.c.l.b16 %v2119
    %v2143 = vunpack.c.l.b16 %v2120
    %v2144 = vunpack.c.l.b16 %v2121
    %v2145 = vpack.c.b16 %v2136, %v2135
    %v2146 = vpack.c.b16 %v2138, %v2137
    %v2147 = vpack.c.b16 %v2140, %v2139
    %v2148 = vpack.c.b16 %v2142, %v2141
    %v2149 = vpack.c.b16 %v2144, %v2143
    %v2156 = vsel %vm1146, %v2124, 0
    %2158 = vmatprep.subr.bf16.mxu0 0
    %2159 = vmatpush1.bf16.msra.mxu0 %v2145
    %2160 = vmatprep.subr.bf16.mxu0 0
    %2161 = vmatpush1.bf16.msra.mxu0 %v2146
    %2162 = vmatprep.subr.bf16.mxu0 0
    %2163 = vmatpush1.bf16.msra.mxu0 %v2147
    %2164 = vmatprep.subr.bf16.mxu0 0
    %2165 = vmatpush1.bf16.msra.mxu0 %v2148
    %2166 = vmatprep.subr.bf16.mxu0 0
    %2167 = vmatpush1.bf16.msra.mxu0 %v2149
    %2168 = vmatprep.subr.bf16.mxu0 0
    %2169 = vmatpush1.bf16.msra.mxu0 0
    %2170 = vmatprep.subr.bf16.mxu0 0
    %2171 = vmatpush1.bf16.msra.mxu0 0
    %2172 = vmatprep.subr.bf16.mxu0 0
    %2173 = vmatpush1.bf16.msra.mxu0 0
    %2174 = vmatprep.subr.bf16.mxu0 0
    %2175 = vmatpush1.bf16.msra.mxu0 0
    %2176 = vmatprep.subr.bf16.mxu0 0
    %2177 = vmatpush1.bf16.msra.mxu0 0
    %2178 = vmatprep.subr.bf16.mxu0 0
    %2179 = vmatpush1.bf16.msra.mxu0 0
    %2180 = vmatprep.subr.bf16.mxu0 0
    %2181 = vmatpush1.bf16.msra.mxu0 0
    %2182 = vmatprep.subr.bf16.mxu0 0
    %2183 = vmatpush1.bf16.msra.mxu0 0
    %2184 = vmatprep.subr.bf16.mxu0 0
    %2185 = vmatpush1.bf16.msra.mxu0 0
    %2186 = vmatprep.subr.bf16.mxu0 0
    %2187 = vmatpush1.bf16.msra.mxu0 0
    %2188 = vmatprep.subr.bf16.mxu0 0
    %2189 = vmatpush1.bf16.msra.mxu0 0
    %2190 = vmatprep.mubr.bf16.mxu0 0
    %2191 = vmatmul.mubr.bf16.gmra.mrb[0].mxu0 %v2156
    %v2192 = vpop.f32.mrb[0].mxu0
    %v2193 = vadd.f32 0.0, %v2192
    %v2194 = vpop.f32.mrb[0].mxu0
    %v2195 = vpop.f32.mrb[0].mxu0
    %v2196 = vadd.f32 0.0, %v2195
    %v2197 = vpop.f32.mrb[0].mxu0
    %2198 = vdwg.mxu0
    %v2199 = vadd.f32 %v2025, %v2193
    %v2200 = vadd.f32 %v2026, %v2196
    %s2201 = scalar_lea.vmem [#allocation9], 240
    %v2202 = vld [vmem:[%s2201] sm:$0xf]
    %v2203 = vld [vmem:[%s2201 + $0x4] sm:$0xf]
    %v2204 = vld [vmem:[%s2201 + $0x8] sm:$0xf]
    %v2205 = vld [vmem:[%s2201 + $0xc] sm:$0xf]
    %v2206 = vld [vmem:[%s2201 + $0x10] sm:$0xf]
    %v2207 = vld [vmem:[%s2201 + $0x14] sm:$0xf]
    %v2208 = vld [vmem:[%s2201 + $0x18] sm:$0xf]
    %v2209 = vld [vmem:[%s2201 + $0x1c] sm:$0xf]
    %v2210 = vld [vmem:[%s2201 + $0x20] sm:$0xf]
    %v2211 = vld [vmem:[%s2201 + $0x24] sm:$0xf]
    %v2222 = vunpack.c.l.b16 %v2202
    %v2223 = vunpack.c.l.b16 %v2203
    %v2224 = vunpack.c.l.b16 %v2204
    %v2225 = vunpack.c.l.b16 %v2205
    %v2226 = vunpack.c.l.b16 %v2206
    %v2227 = vunpack.c.l.b16 %v2207
    %v2228 = vunpack.c.l.b16 %v2208
    %v2229 = vunpack.c.l.b16 %v2209
    %v2230 = vunpack.c.l.b16 %v2210
    %v2231 = vunpack.c.l.b16 %v2211
    %v2232 = vpack.c.b16 %v2223, %v2222
    %v2233 = vpack.c.b16 %v2225, %v2224
    %v2234 = vpack.c.b16 %v2227, %v2226
    %v2235 = vpack.c.b16 %v2229, %v2228
    %v2236 = vpack.c.b16 %v2231, %v2230
    %2242 = vmatprep.subr.bf16.mxu0 0
    %2243 = vmatpush1.bf16.msra.mxu0 %v2232
    %2244 = vmatprep.subr.bf16.mxu0 0
    %2245 = vmatpush1.bf16.msra.mxu0 %v2233
    %2246 = vmatprep.subr.bf16.mxu0 0
    %2247 = vmatpush1.bf16.msra.mxu0 %v2234
    %2248 = vmatprep.subr.bf16.mxu0 0
    %2249 = vmatpush1.bf16.msra.mxu0 %v2235
    %2250 = vmatprep.subr.bf16.mxu0 0
    %2251 = vmatpush1.bf16.msra.mxu0 %v2236
    %2252 = vmatprep.subr.bf16.mxu0 0
    %2253 = vmatpush1.bf16.msra.mxu0 0
    %2254 = vmatprep.subr.bf16.mxu0 0
    %2255 = vmatpush1.bf16.msra.mxu0 0
    %2256 = vmatprep.subr.bf16.mxu0 0
    %2257 = vmatpush1.bf16.msra.mxu0 0
    %2258 = vmatprep.subr.bf16.mxu0 0
    %2259 = vmatpush1.bf16.msra.mxu0 0
    %2260 = vmatprep.subr.bf16.mxu0 0
    %2261 = vmatpush1.bf16.msra.mxu0 0
    %2262 = vmatprep.subr.bf16.mxu0 0
    %2263 = vmatpush1.bf16.msra.mxu0 0
    %2264 = vmatprep.subr.bf16.mxu0 0
    %2265 = vmatpush1.bf16.msra.mxu0 0
    %2266 = vmatprep.subr.bf16.mxu0 0
    %2267 = vmatpush1.bf16.msra.mxu0 0
    %2268 = vmatprep.subr.bf16.mxu0 0
    %2269 = vmatpush1.bf16.msra.mxu0 0
    %2270 = vmatprep.subr.bf16.mxu0 0
    %2271 = vmatpush1.bf16.msra.mxu0 0
    %2272 = vmatprep.subr.bf16.mxu0 0
    %2273 = vmatpush1.bf16.msra.mxu0 0
    %2274 = vmatprep.mubr.bf16.mxu0 0
    %2275 = vmatmul.mubr.bf16.gmra.mrb[0].mxu0 %v2156
    %v2276 = vpop.f32.mrb[0].mxu0
    %v2277 = vadd.f32 0.0, %v2276
    %v2278 = vpop.f32.mrb[0].mxu0
    %v2279 = vpop.f32.mrb[0].mxu0
    %v2280 = vadd.f32 0.0, %v2279
    %v2281 = vpop.f32.mrb[0].mxu0
    %2282 = vdwg.mxu0
    %v2283 = vadd.f32 %v2109, %v2277
    %v2284 = vadd.f32 %v2110, %v2280
    %s2285 = scalar_lea.vmem [#allocation6], 280
    %v2286 = vld [vmem:[%s2285] sm:$0xf]
    %v2287 = vld [vmem:[%s2285 + $0x4] sm:$0xf]
    %v2288 = vld [vmem:[%s2285 + $0x8] sm:$0xf]
    %v2289 = vld [vmem:[%s2285 + $0xc] sm:$0xf]
    %v2290 = vld [vmem:[%s2285 + $0x10] sm:$0xf]
    %v2291 = vld [vmem:[%s2285 + $0x14] sm:$0xf]
    %v2292 = vld [vmem:[%s2285 + $0x18] sm:$0xf]
    %v2293 = vld [vmem:[%s2285 + $0x1c] sm:$0xf]
    %v2294 = vld [vmem:[%s2285 + $0x20] sm:$0xf]
    %v2295 = vld [vmem:[%s2285 + $0x24] sm:$0xf]
    %2296 = vrot.lane.b32.xlu0 %v1939, 108
    %v2297 = vpop.permute.xlu0 %2296
    %v2308 = vunpack.c.l.b16 %v2286
    %v2309 = vunpack.c.l.b16 %v2287
    %v2310 = vunpack.c.l.b16 %v2288
    %v2311 = vunpack.c.l.b16 %v2289
    %v2312 = vunpack.c.l.b16 %v2290
    %v2313 = vunpack.c.l.b16 %v2291
    %v2314 = vunpack.c.l.b16 %v2292
    %v2315 = vunpack.c.l.b16 %v2293
    %v2316 = vunpack.c.l.b16 %v2294
    %v2317 = vunpack.c.l.b16 %v2295
    %v2318 = vpack.c.b16 %v2309, %v2308
    %v2319 = vpack.c.b16 %v2311, %v2310
    %v2320 = vpack.c.b16 %v2313, %v2312
    %v2321 = vpack.c.b16 %v2315, %v2314
    %v2322 = vpack.c.b16 %v2317, %v2316
    %v2329 = vsel %vm1146, %v2297, 0
    %2331 = vmatprep.subr.bf16.mxu0 0
    %2332 = vmatpush1.bf16.msra.mxu0 %v2318
    %2333 = vmatprep.subr.bf16.mxu0 0
    %2334 = vmatpush1.bf16.msra.mxu0 %v2319
    %2335 = vmatprep.subr.bf16.mxu0 0
    %2336 = vmatpush1.bf16.msra.mxu0 %v2320
    %2337 = vmatprep.subr.bf16.mxu0 0
    %2338 = vmatpush1.bf16.msra.mxu0 %v2321
    %2339 = vmatprep.subr.bf16.mxu0 0
    %2340 = vmatpush1.bf16.msra.mxu0 %v2322
    %2341 = vmatprep.subr.bf16.mxu0 0
    %2342 = vmatpush1.bf16.msra.mxu0 0
    %2343 = vmatprep.subr.bf16.mxu0 0
    %2344 = vmatpush1.bf16.msra.mxu0 0
    %2345 = vmatprep.subr.bf16.mxu0 0
    %2346 = vmatpush1.bf16.msra.mxu0 0
    %2347 = vmatprep.subr.bf16.mxu0 0
    %2348 = vmatpush1.bf16.msra.mxu0 0
    %2349 = vmatprep.subr.bf16.mxu0 0
    %2350 = vmatpush1.bf16.msra.mxu0 0
    %2351 = vmatprep.subr.bf16.mxu0 0
    %2352 = vmatpush1.bf16.msra.mxu0 0
    %2353 = vmatprep.subr.bf16.mxu0 0
    %2354 = vmatpush1.bf16.msra.mxu0 0
    %2355 = vmatprep.subr.bf16.mxu0 0
    %2356 = vmatpush1.bf16.msra.mxu0 0
    %2357 = vmatprep.subr.bf16.mxu0 0
    %2358 = vmatpush1.bf16.msra.mxu0 0
    %2359 = vmatprep.subr.bf16.mxu0 0
    %2360 = vmatpush1.bf16.msra.mxu0 0
    %2361 = vmatprep.subr.bf16.mxu0 0
    %2362 = vmatpush1.bf16.msra.mxu0 0
    %2363 = vmatprep.mubr.bf16.mxu0 0
    %2364 = vmatmul.mubr.bf16.gmra.mrb[0].mxu0 %v2329
    %v2365 = vpop.f32.mrb[0].mxu0
    %v2366 = vadd.f32 0.0, %v2365
    %v2367 = vpop.f32.mrb[0].mxu0
    %v2368 = vpop.f32.mrb[0].mxu0
    %v2369 = vadd.f32 0.0, %v2368
    %v2370 = vpop.f32.mrb[0].mxu0
    %2371 = vdwg.mxu0
    %v2372 = vadd.f32 %v2199, %v2366
    %v2373 = vadd.f32 %v2200, %v2369
    %s2374 = scalar_lea.vmem [#allocation9], 280
    %v2375 = vld [vmem:[%s2374] sm:$0xf]
    %v2376 = vld [vmem:[%s2374 + $0x4] sm:$0xf]
    %v2377 = vld [vmem:[%s2374 + $0x8] sm:$0xf]
    %v2378 = vld [vmem:[%s2374 + $0xc] sm:$0xf]
    %v2379 = vld [vmem:[%s2374 + $0x10] sm:$0xf]
    %v2380 = vld [vmem:[%s2374 + $0x14] sm:$0xf]
    %v2381 = vld [vmem:[%s2374 + $0x18] sm:$0xf]
    %v2382 = vld [vmem:[%s2374 + $0x1c] sm:$0xf]
    %v2383 = vld [vmem:[%s2374 + $0x20] sm:$0xf]
    %v2384 = vld [vmem:[%s2374 + $0x24] sm:$0xf]
    %v2395 = vunpack.c.l.b16 %v2375
    %v2396 = vunpack.c.l.b16 %v2376
    %v2397 = vunpack.c.l.b16 %v2377
    %v2398 = vunpack.c.l.b16 %v2378
    %v2399 = vunpack.c.l.b16 %v2379
    %v2400 = vunpack.c.l.b16 %v2380
    %v2401 = vunpack.c.l.b16 %v2381
    %v2402 = vunpack.c.l.b16 %v2382
    %v2403 = vunpack.c.l.b16 %v2383
    %v2404 = vunpack.c.l.b16 %v2384
    %v2405 = vpack.c.b16 %v2396, %v2395
    %v2406 = vpack.c.b16 %v2398, %v2397
    %v2407 = vpack.c.b16 %v2400, %v2399
    %v2408 = vpack.c.b16 %v2402, %v2401
    %v2409 = vpack.c.b16 %v2404, %v2403
    %2415 = vmatprep.subr.bf16.mxu0 0
    %2416 = vmatpush1.bf16.msra.mxu0 %v2405
    %2417 = vmatprep.subr.bf16.mxu0 0
    %2418 = vmatpush1.bf16.msra.mxu0 %v2406
    %2419 = vmatprep.subr.bf16.mxu0 0
    %2420 = vmatpush1.bf16.msra.mxu0 %v2407
    %2421 = vmatprep.subr.bf16.mxu0 0
    %2422 = vmatpush1.bf16.msra.mxu0 %v2408
    %2423 = vmatprep.subr.bf16.mxu0 0
    %2424 = vmatpush1.bf16.msra.mxu0 %v2409
    %2425 = vmatprep.subr.bf16.mxu0 0
    %2426 = vmatpush1.bf16.msra.mxu0 0
    %2427 = vmatprep.subr.bf16.mxu0 0
    %2428 = vmatpush1.bf16.msra.mxu0 0
    %2429 = vmatprep.subr.bf16.mxu0 0
    %2430 = vmatpush1.bf16.msra.mxu0 0
    %2431 = vmatprep.subr.bf16.mxu0 0
    %2432 = vmatpush1.bf16.msra.mxu0 0
    %2433 = vmatprep.subr.bf16.mxu0 0
    %2434 = vmatpush1.bf16.msra.mxu0 0
    %2435 = vmatprep.subr.bf16.mxu0 0
    %2436 = vmatpush1.bf16.msra.mxu0 0
    %2437 = vmatprep.subr.bf16.mxu0 0
    %2438 = vmatpush1.bf16.msra.mxu0 0
    %2439 = vmatprep.subr.bf16.mxu0 0
    %2440 = vmatpush1.bf16.msra.mxu0 0
    %2441 = vmatprep.subr.bf16.mxu0 0
    %2442 = vmatpush1.bf16.msra.mxu0 0
    %2443 = vmatprep.subr.bf16.mxu0 0
    %2444 = vmatpush1.bf16.msra.mxu0 0
    %2445 = vmatprep.subr.bf16.mxu0 0
    %2446 = vmatpush1.bf16.msra.mxu0 0
    %2447 = vmatprep.mubr.bf16.mxu0 0
    %2448 = vmatmul.mubr.bf16.gmra.mrb[0].mxu0 %v2329
    %v2449 = vpop.f32.mrb[0].mxu0
    %v2450 = vadd.f32 0.0, %v2449
    %v2451 = vpop.f32.mrb[0].mxu0
    %v2452 = vpop.f32.mrb[0].mxu0
    %v2453 = vadd.f32 0.0, %v2452
    %v2454 = vpop.f32.mrb[0].mxu0
    %2455 = vdwg.mxu0
    %v2456 = vadd.f32 %v2283, %v2450
    %v2457 = vadd.f32 %v2284, %v2453
    %s2458 = scalar_lea.vmem [#allocation6], 320
    %v2459 = vld [vmem:[%s2458] sm:$0xf]
    %v2460 = vld [vmem:[%s2458 + $0x4] sm:$0xf]
    %v2461 = vld [vmem:[%s2458 + $0x8] sm:$0xf]
    %v2462 = vld [vmem:[%s2458 + $0xc] sm:$0xf]
    %v2463 = vld [vmem:[%s2458 + $0x10] sm:$0xf]
    %v2464 = vld [vmem:[%s2458 + $0x14] sm:$0xf]
    %v2465 = vld [vmem:[%s2458 + $0x18] sm:$0xf]
    %v2466 = vld [vmem:[%s2458 + $0x1c] sm:$0xf]
    %v2467 = vld [vmem:[%s2458 + $0x20] sm:$0xf]
    %v2468 = vld [vmem:[%s2458 + $0x24] sm:$0xf]
    %2469 = vrot.lane.b32.xlu0 %v1939, 98
    %v2470 = vpop.permute.xlu0 %2469
    %v2481 = vunpack.c.l.b16 %v2459
    %v2482 = vunpack.c.l.b16 %v2460
    %v2483 = vunpack.c.l.b16 %v2461
    %v2484 = vunpack.c.l.b16 %v2462
    %v2485 = vunpack.c.l.b16 %v2463
    %v2486 = vunpack.c.l.b16 %v2464
    %v2487 = vunpack.c.l.b16 %v2465
    %v2488 = vunpack.c.l.b16 %v2466
    %v2489 = vunpack.c.l.b16 %v2467
    %v2490 = vunpack.c.l.b16 %v2468
    %v2491 = vpack.c.b16 %v2482, %v2481
    %v2492 = vpack.c.b16 %v2484, %v2483
    %v2493 = vpack.c.b16 %v2486, %v2485
    %v2494 = vpack.c.b16 %v2488, %v2487
    %v2495 = vpack.c.b16 %v2490, %v2489
    %v2502 = vsel %vm1146, %v2470, 0
    %2504 = vmatprep.subr.bf16.mxu0 0
    %2505 = vmatpush1.bf16.msra.mxu0 %v2491
    %2506 = vmatprep.subr.bf16.mxu0 0
    %2507 = vmatpush1.bf16.msra.mxu0 %v2492
    %2508 = vmatprep.subr.bf16.mxu0 0
    %2509 = vmatpush1.bf16.msra.mxu0 %v2493
    %2510 = vmatprep.subr.bf16.mxu0 0
    %2511 = vmatpush1.bf16.msra.mxu0 %v2494
    %2512 = vmatprep.subr.bf16.mxu0 0
    %2513 = vmatpush1.bf16.msra.mxu0 %v2495
    %2514 = vmatprep.subr.bf16.mxu0 0
    %2515 = vmatpush1.bf16.msra.mxu0 0
    %2516 = vmatprep.subr.bf16.mxu0 0
    %2517 = vmatpush1.bf16.msra.mxu0 0
    %2518 = vmatprep.subr.bf16.mxu0 0
    %2519 = vmatpush1.bf16.msra.mxu0 0
    %2520 = vmatprep.subr.bf16.mxu0 0
    %2521 = vmatpush1.bf16.msra.mxu0 0
    %2522 = vmatprep.subr.bf16.mxu0 0
    %2523 = vmatpush1.bf16.msra.mxu0 0
    %2524 = vmatprep.subr.bf16.mxu0 0
    %2525 = vmatpush1.bf16.msra.mxu0 0
    %2526 = vmatprep.subr.bf16.mxu0 0
    %2527 = vmatpush1.bf16.msra.mxu0 0
    %2528 = vmatprep.subr.bf16.mxu0 0
    %2529 = vmatpush1.bf16.msra.mxu0 0
    %2530 = vmatprep.subr.bf16.mxu0 0
    %2531 = vmatpush1.bf16.msra.mxu0 0
    %2532 = vmatprep.subr.bf16.mxu0 0
    %2533 = vmatpush1.bf16.msra.mxu0 0
    %2534 = vmatprep.subr.bf16.mxu0 0
    %2535 = vmatpush1.bf16.msra.mxu0 0
    %2536 = vmatprep.mubr.bf16.mxu0 0
    %2537 = vmatmul.mubr.bf16.gmra.mrb[0].mxu0 %v2502
    %v2538 = vpop.f32.mrb[0].mxu0
    %v2539 = vadd.f32 0.0, %v2538
    %v2540 = vpop.f32.mrb[0].mxu0
    %v2541 = vpop.f32.mrb[0].mxu0
    %v2542 = vadd.f32 0.0, %v2541
    %v2543 = vpop.f32.mrb[0].mxu0
    %2544 = vdwg.mxu0
    %v2545 = vadd.f32 %v2372, %v2539
    %v2546 = vadd.f32 %v2373, %v2542
    %s2547 = scalar_lea.vmem [#allocation9], 320
    %v2548 = vld [vmem:[%s2547] sm:$0xf]
    %v2549 = vld [vmem:[%s2547 + $0x4] sm:$0xf]
    %v2550 = vld [vmem:[%s2547 + $0x8] sm:$0xf]
    %v2551 = vld [vmem:[%s2547 + $0xc] sm:$0xf]
    %v2552 = vld [vmem:[%s2547 + $0x10] sm:$0xf]
    %v2553 = vld [vmem:[%s2547 + $0x14] sm:$0xf]
    %v2554 = vld [vmem:[%s2547 + $0x18] sm:$0xf]
    %v2555 = vld [vmem:[%s2547 + $0x1c] sm:$0xf]
    %v2556 = vld [vmem:[%s2547 + $0x20] sm:$0xf]
    %v2557 = vld [vmem:[%s2547 + $0x24] sm:$0xf]
    %v2568 = vunpack.c.l.b16 %v2548
    %v2569 = vunpack.c.l.b16 %v2549
    %v2570 = vunpack.c.l.b16 %v2550
    %v2571 = vunpack.c.l.b16 %v2551
    %v2572 = vunpack.c.l.b16 %v2552
    %v2573 = vunpack.c.l.b16 %v2553
    %v2574 = vunpack.c.l.b16 %v2554
    %v2575 = vunpack.c.l.b16 %v2555
    %v2576 = vunpack.c.l.b16 %v2556
    %v2577 = vunpack.c.l.b16 %v2557
    %v2578 = vpack.c.b16 %v2569, %v2568
    %v2579 = vpack.c.b16 %v2571, %v2570
    %v2580 = vpack.c.b16 %v2573, %v2572
    %v2581 = vpack.c.b16 %v2575, %v2574
    %v2582 = vpack.c.b16 %v2577, %v2576
    %2588 = vmatprep.subr.bf16.mxu0 0
    %2589 = vmatpush1.bf16.msra.mxu0 %v2578
    %2590 = vmatprep.subr.bf16.mxu0 0
    %2591 = vmatpush1.bf16.msra.mxu0 %v2579
    %2592 = vmatprep.subr.bf16.mxu0 0
    %2593 = vmatpush1.bf16.msra.mxu0 %v2580
    %2594 = vmatprep.subr.bf16.mxu0 0
    %2595 = vmatpush1.bf16.msra.mxu0 %v2581
    %2596 = vmatprep.subr.bf16.mxu0 0
    %2597 = vmatpush1.bf16.msra.mxu0 %v2582
    %2598 = vmatprep.subr.bf16.mxu0 0
    %2599 = vmatpush1.bf16.msra.mxu0 0
    %2600 = vmatprep.subr.bf16.mxu0 0
    %2601 = vmatpush1.bf16.msra.mxu0 0
    %2602 = vmatprep.subr.bf16.mxu0 0
    %2603 = vmatpush1.bf16.msra.mxu0 0
    %2604 = vmatprep.subr.bf16.mxu0 0
    %2605 = vmatpush1.bf16.msra.mxu0 0
    %2606 = vmatprep.subr.bf16.mxu0 0
    %2607 = vmatpush1.bf16.msra.mxu0 0
    %2608 = vmatprep.subr.bf16.mxu0 0
    %2609 = vmatpush1.bf16.msra.mxu0 0
    %2610 = vmatprep.subr.bf16.mxu0 0
    %2611 = vmatpush1.bf16.msra.mxu0 0
    %2612 = vmatprep.subr.bf16.mxu0 0
    %2613 = vmatpush1.bf16.msra.mxu0 0
    %2614 = vmatprep.subr.bf16.mxu0 0
    %2615 = vmatpush1.bf16.msra.mxu0 0
    %2616 = vmatprep.subr.bf16.mxu0 0
    %2617 = vmatpush1.bf16.msra.mxu0 0
    %2618 = vmatprep.subr.bf16.mxu0 0
    %2619 = vmatpush1.bf16.msra.mxu0 0
    %2620 = vmatprep.mubr.bf16.mxu0 0
    %2621 = vmatmul.mubr.bf16.gmra.mrb[0].mxu0 %v2502
    %v2622 = vpop.f32.mrb[0].mxu0
    %v2623 = vadd.f32 0.0, %v2622
    %v2624 = vpop.f32.mrb[0].mxu0
    %v2625 = vpop.f32.mrb[0].mxu0
    %v2626 = vadd.f32 0.0, %v2625
    %v2627 = vpop.f32.mrb[0].mxu0
    %2628 = vdwg.mxu0
    %v2629 = vadd.f32 %v2456, %v2623
    %v2630 = vadd.f32 %v2457, %v2626
    %s2631 = scalar_lea.vmem [#allocation6], 360
    %v2632 = vld [vmem:[%s2631] sm:$0xf]
    %v2633 = vld [vmem:[%s2631 + $0x4] sm:$0xf]
    %v2634 = vld [vmem:[%s2631 + $0x8] sm:$0xf]
    %v2635 = vld [vmem:[%s2631 + $0xc] sm:$0xf]
    %v2636 = vld [vmem:[%s2631 + $0x10] sm:$0xf]
    %v2637 = vld [vmem:[%s2631 + $0x14] sm:$0xf]
    %v2638 = vld [vmem:[%s2631 + $0x18] sm:$0xf]
    %v2639 = vld [vmem:[%s2631 + $0x1c] sm:$0xf]
    %v2640 = vld [vmem:[%s2631 + $0x20] sm:$0xf]
    %v2641 = vld [vmem:[%s2631 + $0x24] sm:$0xf]
    %2642 = vrot.lane.b32.xlu0 %v1939, 88
    %v2643 = vpop.permute.xlu0 %2642
    %v2654 = vunpack.c.l.b16 %v2632
    %v2655 = vunpack.c.l.b16 %v2633
    %v2656 = vunpack.c.l.b16 %v2634
    %v2657 = vunpack.c.l.b16 %v2635
    %v2658 = vunpack.c.l.b16 %v2636
    %v2659 = vunpack.c.l.b16 %v2637
    %v2660 = vunpack.c.l.b16 %v2638
    %v2661 = vunpack.c.l.b16 %v2639
    %v2662 = vunpack.c.l.b16 %v2640
    %v2663 = vunpack.c.l.b16 %v2641
    %v2664 = vpack.c.b16 %v2655, %v2654
    %v2665 = vpack.c.b16 %v2657, %v2656
    %v2666 = vpack.c.b16 %v2659, %v2658
    %v2667 = vpack.c.b16 %v2661, %v2660
    %v2668 = vpack.c.b16 %v2663, %v2662
    %v2675 = vsel %vm1146, %v2643, 0
    %2677 = vmatprep.subr.bf16.mxu0 0
    %2678 = vmatpush1.bf16.msra.mxu0 %v2664
    %2679 = vmatprep.subr.bf16.mxu0 0
    %2680 = vmatpush1.bf16.msra.mxu0 %v2665
    %2681 = vmatprep.subr.bf16.mxu0 0
    %2682 = vmatpush1.bf16.msra.mxu0 %v2666
    %2683 = vmatprep.subr.bf16.mxu0 0
    %2684 = vmatpush1.bf16.msra.mxu0 %v2667
    %2685 = vmatprep.subr.bf16.mxu0 0
    %2686 = vmatpush1.bf16.msra.mxu0 %v2668
    %2687 = vmatprep.subr.bf16.mxu0 0
    %2688 = vmatpush1.bf16.msra.mxu0 0
    %2689 = vmatprep.subr.bf16.mxu0 0
    %2690 = vmatpush1.bf16.msra.mxu0 0
    %2691 = vmatprep.subr.bf16.mxu0 0
    %2692 = vmatpush1.bf16.msra.mxu0 0
    %2693 = vmatprep.subr.bf16.mxu0 0
    %2694 = vmatpush1.bf16.msra.mxu0 0
    %2695 = vmatprep.subr.bf16.mxu0 0
    %2696 = vmatpush1.bf16.msra.mxu0 0
    %2697 = vmatprep.subr.bf16.mxu0 0
    %2698 = vmatpush1.bf16.msra.mxu0 0
    %2699 = vmatprep.subr.bf16.mxu0 0
    %2700 = vmatpush1.bf16.msra.mxu0 0
    %2701 = vmatprep.subr.bf16.mxu0 0
    %2702 = vmatpush1.bf16.msra.mxu0 0
    %2703 = vmatprep.subr.bf16.mxu0 0
    %2704 = vmatpush1.bf16.msra.mxu0 0
    %2705 = vmatprep.subr.bf16.mxu0 0
    %2706 = vmatpush1.bf16.msra.mxu0 0
    %2707 = vmatprep.subr.bf16.mxu0 0
    %2708 = vmatpush1.bf16.msra.mxu0 0
    %2709 = vmatprep.mubr.bf16.mxu0 0
    %2710 = vmatmul.mubr.bf16.gmra.mrb[0].mxu0 %v2675
    %v2711 = vpop.f32.mrb[0].mxu0
    %v2712 = vadd.f32 0.0, %v2711
    %v2713 = vpop.f32.mrb[0].mxu0
    %v2714 = vpop.f32.mrb[0].mxu0
    %v2715 = vadd.f32 0.0, %v2714
    %v2716 = vpop.f32.mrb[0].mxu0
    %2717 = vdwg.mxu0
    %v2718 = vadd.f32 %v2545, %v2712
    %v2719 = vadd.f32 %v2546, %v2715
    %s2720 = scalar_lea.vmem [#allocation9], 360
    %v2721 = vld [vmem:[%s2720] sm:$0xf]
    %v2722 = vld [vmem:[%s2720 + $0x4] sm:$0xf]
    %v2723 = vld [vmem:[%s2720 + $0x8] sm:$0xf]
    %v2724 = vld [vmem:[%s2720 + $0xc] sm:$0xf]
    %v2725 = vld [vmem:[%s2720 + $0x10] sm:$0xf]
    %v2726 = vld [vmem:[%s2720 + $0x14] sm:$0xf]
    %v2727 = vld [vmem:[%s2720 + $0x18] sm:$0xf]
    %v2728 = vld [vmem:[%s2720 + $0x1c] sm:$0xf]
    %v2729 = vld [vmem:[%s2720 + $0x20] sm:$0xf]
    %v2730 = vld [vmem:[%s2720 + $0x24] sm:$0xf]
    %v2741 = vunpack.c.l.b16 %v2721
    %v2742 = vunpack.c.l.b16 %v2722
    %v2743 = vunpack.c.l.b16 %v2723
    %v2744 = vunpack.c.l.b16 %v2724
    %v2745 = vunpack.c.l.b16 %v2725
    %v2746 = vunpack.c.l.b16 %v2726
    %v2747 = vunpack.c.l.b16 %v2727
    %v2748 = vunpack.c.l.b16 %v2728
    %v2749 = vunpack.c.l.b16 %v2729
    %v2750 = vunpack.c.l.b16 %v2730
    %v2751 = vpack.c.b16 %v2742, %v2741
    %v2752 = vpack.c.b16 %v2744, %v2743
    %v2753 = vpack.c.b16 %v2746, %v2745
    %v2754 = vpack.c.b16 %v2748, %v2747
    %v2755 = vpack.c.b16 %v2750, %v2749
    %2761 = vmatprep.subr.bf16.mxu0 0
    %2762 = vmatpush1.bf16.msra.mxu0 %v2751
    %2763 = vmatprep.subr.bf16.mxu0 0
    %2764 = vmatpush1.bf16.msra.mxu0 %v2752
    %2765 = vmatprep.subr.bf16.mxu0 0
    %2766 = vmatpush1.bf16.msra.mxu0 %v2753
    %2767 = vmatprep.subr.bf16.mxu0 0
    %2768 = vmatpush1.bf16.msra.mxu0 %v2754
    %2769 = vmatprep.subr.bf16.mxu0 0
    %2770 = vmatpush1.bf16.msra.mxu0 %v2755
    %2771 = vmatprep.subr.bf16.mxu0 0
    %2772 = vmatpush1.bf16.msra.mxu0 0
    %2773 = vmatprep.subr.bf16.mxu0 0
    %2774 = vmatpush1.bf16.msra.mxu0 0
    %2775 = vmatprep.subr.bf16.mxu0 0
    %2776 = vmatpush1.bf16.msra.mxu0 0
    %2777 = vmatprep.subr.bf16.mxu0 0
    %2778 = vmatpush1.bf16.msra.mxu0 0
    %2779 = vmatprep.subr.bf16.mxu0 0
    %2780 = vmatpush1.bf16.msra.mxu0 0
    %2781 = vmatprep.subr.bf16.mxu0 0
    %2782 = vmatpush1.bf16.msra.mxu0 0
    %2783 = vmatprep.subr.bf16.mxu0 0
    %2784 = vmatpush1.bf16.msra.mxu0 0
    %2785 = vmatprep.subr.bf16.mxu0 0
    %2786 = vmatpush1.bf16.msra.mxu0 0
    %2787 = vmatprep.subr.bf16.mxu0 0
    %2788 = vmatpush1.bf16.msra.mxu0 0
    %2789 = vmatprep.subr.bf16.mxu0 0
    %2790 = vmatpush1.bf16.msra.mxu0 0
    %2791 = vmatprep.subr.bf16.mxu0 0
    %2792 = vmatpush1.bf16.msra.mxu0 0
    %2793 = vmatprep.mubr.bf16.mxu0 0
    %2794 = vmatmul.mubr.bf16.gmra.mrb[0].mxu0 %v2675
    %v2795 = vpop.f32.mrb[0].mxu0
    %v2796 = vadd.f32 0.0, %v2795
    %v2797 = vpop.f32.mrb[0].mxu0
    %v2798 = vpop.f32.mrb[0].mxu0
    %v2799 = vadd.f32 0.0, %v2798
    %v2800 = vpop.f32.mrb[0].mxu0
    %2801 = vdwg.mxu0
    %v2802 = vadd.f32 %v2629, %v2796
    %v2803 = vadd.f32 %v2630, %v2799
    %v2804 = vld [vmem:[#allocation3 + $0x2] sm:$0xff]
    %v2805 = vld [vmem:[#allocation3 + $0x12] sm:$0xff]
    %v2806 = vpack.c.bf16 %v2805, %v2804
    %s2807 = scalar_lea.vmem [#allocation6], 400
    %v2808 = vld [vmem:[%s2807] sm:$0xf]
    %v2809 = vld [vmem:[%s2807 + $0x4] sm:$0xf]
    %v2810 = vld [vmem:[%s2807 + $0x8] sm:$0xf]
    %v2811 = vld [vmem:[%s2807 + $0xc] sm:$0xf]
    %v2812 = vld [vmem:[%s2807 + $0x10] sm:$0xf]
    %v2813 = vld [vmem:[%s2807 + $0x14] sm:$0xf]
    %v2814 = vld [vmem:[%s2807 + $0x18] sm:$0xf]
    %v2815 = vld [vmem:[%s2807 + $0x1c] sm:$0xf]
    %v2816 = vld [vmem:[%s2807 + $0x20] sm:$0xf]
    %v2817 = vld [vmem:[%s2807 + $0x24] sm:$0xf]
    %v2828 = vunpack.c.l.b16 %v2808
    %v2829 = vunpack.c.l.b16 %v2809
    %v2830 = vunpack.c.l.b16 %v2810
    %v2831 = vunpack.c.l.b16 %v2811
    %v2832 = vunpack.c.l.b16 %v2812
    %v2833 = vunpack.c.l.b16 %v2813
    %v2834 = vunpack.c.l.b16 %v2814
    %v2835 = vunpack.c.l.b16 %v2815
    %v2836 = vunpack.c.l.b16 %v2816
    %v2837 = vunpack.c.l.b16 %v2817
    %v2838 = vpack.c.b16 %v2829, %v2828
    %v2839 = vpack.c.b16 %v2831, %v2830
    %v2840 = vpack.c.b16 %v2833, %v2832
    %v2841 = vpack.c.b16 %v2835, %v2834
    %v2842 = vpack.c.b16 %v2837, %v2836
    %v2849 = vsel %vm1146, %v2806, 0
    %2851 = vmatprep.subr.bf16.mxu0 0
    %2852 = vmatpush1.bf16.msra.mxu0 %v2838
    %2853 = vmatprep.subr.bf16.mxu0 0
    %2854 = vmatpush1.bf16.msra.mxu0 %v2839
    %2855 = vmatprep.subr.bf16.mxu0 0
    %2856 = vmatpush1.bf16.msra.mxu0 %v2840
    %2857 = vmatprep.subr.bf16.mxu0 0
    %2858 = vmatpush1.bf16.msra.mxu0 %v2841
    %2859 = vmatprep.subr.bf16.mxu0 0
    %2860 = vmatpush1.bf16.msra.mxu0 %v2842
    %2861 = vmatprep.subr.bf16.mxu0 0
    %2862 = vmatpush1.bf16.msra.mxu0 0
    %2863 = vmatprep.subr.bf16.mxu0 0
    %2864 = vmatpush1.bf16.msra.mxu0 0
    %2865 = vmatprep.subr.bf16.mxu0 0
    %2866 = vmatpush1.bf16.msra.mxu0 0
    %2867 = vmatprep.subr.bf16.mxu0 0
    %2868 = vmatpush1.bf16.msra.mxu0 0
    %2869 = vmatprep.subr.bf16.mxu0 0
    %2870 = vmatpush1.bf16.msra.mxu0 0
    %2871 = vmatprep.subr.bf16.mxu0 0
    %2872 = vmatpush1.bf16.msra.mxu0 0
    %2873 = vmatprep.subr.bf16.mxu0 0
    %2874 = vmatpush1.bf16.msra.mxu0 0
    %2875 = vmatprep.subr.bf16.mxu0 0
    %2876 = vmatpush1.bf16.msra.mxu0 0
    %2877 = vmatprep.subr.bf16.mxu0 0
    %2878 = vmatpush1.bf16.msra.mxu0 0
    %2879 = vmatprep.subr.bf16.mxu0 0
    %2880 = vmatpush1.bf16.msra.mxu0 0
    %2881 = vmatprep.subr.bf16.mxu0 0
    %2882 = vmatpush1.bf16.msra.mxu0 0
    %2883 = vmatprep.mubr.bf16.mxu0 0
    %2884 = vmatmul.mubr.bf16.gmra.mrb[0].mxu0 %v2849
    %v2885 = vpop.f32.mrb[0].mxu0
    %v2886 = vadd.f32 0.0, %v2885
    %v2887 = vpop.f32.mrb[0].mxu0
    %v2888 = vpop.f32.mrb[0].mxu0
    %v2889 = vadd.f32 0.0, %v2888
    %v2890 = vpop.f32.mrb[0].mxu0
    %2891 = vdwg.mxu0
    %v2892 = vadd.f32 %v2718, %v2886
    %v2893 = vadd.f32 %v2719, %v2889
    %s2894 = scalar_lea.vmem [#allocation9], 400
    %v2895 = vld [vmem:[%s2894] sm:$0xf]
    %v2896 = vld [vmem:[%s2894 + $0x4] sm:$0xf]
    %v2897 = vld [vmem:[%s2894 + $0x8] sm:$0xf]
    %v2898 = vld [vmem:[%s2894 + $0xc] sm:$0xf]
    %v2899 = vld [vmem:[%s2894 + $0x10] sm:$0xf]
    %v2900 = vld [vmem:[%s2894 + $0x14] sm:$0xf]
    %v2901 = vld [vmem:[%s2894 + $0x18] sm:$0xf]
    %v2902 = vld [vmem:[%s2894 + $0x1c] sm:$0xf]
    %v2903 = vld [vmem:[%s2894 + $0x20] sm:$0xf]
    %v2904 = vld [vmem:[%s2894 + $0x24] sm:$0xf]
    %v2915 = vunpack.c.l.b16 %v2895
    %v2916 = vunpack.c.l.b16 %v2896
    %v2917 = vunpack.c.l.b16 %v2897
    %v2918 = vunpack.c.l.b16 %v2898
    %v2919 = vunpack.c.l.b16 %v2899
    %v2920 = vunpack.c.l.b16 %v2900
    %v2921 = vunpack.c.l.b16 %v2901
    %v2922 = vunpack.c.l.b16 %v2902
    %v2923 = vunpack.c.l.b16 %v2903
    %v2924 = vunpack.c.l.b16 %v2904
    %v2925 = vpack.c.b16 %v2916, %v2915
    %v2926 = vpack.c.b16 %v2918, %v2917
    %v2927 = vpack.c.b16 %v2920, %v2919
    %v2928 = vpack.c.b16 %v2922, %v2921
    %v2929 = vpack.c.b16 %v2924, %v2923
    %2935 = vmatprep.subr.bf16.mxu0 0
    %2936 = vmatpush1.bf16.msra.mxu0 %v2925
    %2937 = vmatprep.subr.bf16.mxu0 0
    %2938 = vmatpush1.bf16.msra.mxu0 %v2926
    %2939 = vmatprep.subr.bf16.mxu0 0
    %2940 = vmatpush1.bf16.msra.mxu0 %v2927
    %2941 = vmatprep.subr.bf16.mxu0 0
    %2942 = vmatpush1.bf16.msra.mxu0 %v2928
    %2943 = vmatprep.subr.bf16.mxu0 0
    %2944 = vmatpush1.bf16.msra.mxu0 %v2929
    %2945 = vmatprep.subr.bf16.mxu0 0
    %2946 = vmatpush1.bf16.msra.mxu0 0
    %2947 = vmatprep.subr.bf16.mxu0 0
    %2948 = vmatpush1.bf16.msra.mxu0 0
    %2949 = vmatprep.subr.bf16.mxu0 0
    %2950 = vmatpush1.bf16.msra.mxu0 0
    %2951 = vmatprep.subr.bf16.mxu0 0
    %2952 = vmatpush1.bf16.msra.mxu0 0
    %2953 = vmatprep.subr.bf16.mxu0 0
    %2954 = vmatpush1.bf16.msra.mxu0 0
    %2955 = vmatprep.subr.bf16.mxu0 0
    %2956 = vmatpush1.bf16.msra.mxu0 0
    %2957 = vmatprep.subr.bf16.mxu0 0
    %2958 = vmatpush1.bf16.msra.mxu0 0
    %2959 = vmatprep.subr.bf16.mxu0 0
    %2960 = vmatpush1.bf16.msra.mxu0 0
    %2961 = vmatprep.subr.bf16.mxu0 0
    %2962 = vmatpush1.bf16.msra.mxu0 0
    %2963 = vmatprep.subr.bf16.mxu0 0
    %2964 = vmatpush1.bf16.msra.mxu0 0
    %2965 = vmatprep.subr.bf16.mxu0 0
    %2966 = vmatpush1.bf16.msra.mxu0 0
    %2967 = vmatprep.mubr.bf16.mxu0 0
    %2968 = vmatmul.mubr.bf16.gmra.mrb[0].mxu0 %v2849
    %v2969 = vpop.f32.mrb[0].mxu0
    %v2970 = vadd.f32 0.0, %v2969
    %v2971 = vpop.f32.mrb[0].mxu0
    %v2972 = vpop.f32.mrb[0].mxu0
    %v2973 = vadd.f32 0.0, %v2972
    %v2974 = vpop.f32.mrb[0].mxu0
    %2975 = vdwg.mxu0
    %v2976 = vadd.f32 %v2802, %v2970
    %v2977 = vadd.f32 %v2803, %v2973
    %s2978 = scalar_lea.vmem [#allocation6], 440
    %v2979 = vld [vmem:[%s2978] sm:$0xf]
    %v2980 = vld [vmem:[%s2978 + $0x4] sm:$0xf]
    %v2981 = vld [vmem:[%s2978 + $0x8] sm:$0xf]
    %v2982 = vld [vmem:[%s2978 + $0xc] sm:$0xf]
    %v2983 = vld [vmem:[%s2978 + $0x10] sm:$0xf]
    %v2984 = vld [vmem:[%s2978 + $0x14] sm:$0xf]
    %v2985 = vld [vmem:[%s2978 + $0x18] sm:$0xf]
    %v2986 = vld [vmem:[%s2978 + $0x1c] sm:$0xf]
    %v2987 = vld [vmem:[%s2978 + $0x20] sm:$0xf]
    %v2988 = vld [vmem:[%s2978 + $0x24] sm:$0xf]
    %2990 = vrot.lane.b32.xlu0 %v2806, 118
    %v2991 = vpop.permute.xlu0 %2990
    %v3002 = vunpack.c.l.b16 %v2979
    %v3003 = vunpack.c.l.b16 %v2980
    %v3004 = vunpack.c.l.b16 %v2981
    %v3005 = vunpack.c.l.b16 %v2982
    %v3006 = vunpack.c.l.b16 %v2983
    %v3007 = vunpack.c.l.b16 %v2984
    %v3008 = vunpack.c.l.b16 %v2985
    %v3009 = vunpack.c.l.b16 %v2986
    %v3010 = vunpack.c.l.b16 %v2987
    %v3011 = vunpack.c.l.b16 %v2988
    %v3012 = vpack.c.b16 %v3003, %v3002
    %v3013 = vpack.c.b16 %v3005, %v3004
    %v3014 = vpack.c.b16 %v3007, %v3006
    %v3015 = vpack.c.b16 %v3009, %v3008
    %v3016 = vpack.c.b16 %v3011, %v3010
    %v3023 = vsel %vm1146, %v2991, 0
    %3025 = vmatprep.subr.bf16.mxu0 0
    %3026 = vmatpush1.bf16.msra.mxu0 %v3012
    %3027 = vmatprep.subr.bf16.mxu0 0
    %3028 = vmatpush1.bf16.msra.mxu0 %v3013
    %3029 = vmatprep.subr.bf16.mxu0 0
    %3030 = vmatpush1.bf16.msra.mxu0 %v3014
    %3031 = vmatprep.subr.bf16.mxu0 0
    %3032 = vmatpush1.bf16.msra.mxu0 %v3015
    %3033 = vmatprep.subr.bf16.mxu0 0
    %3034 = vmatpush1.bf16.msra.mxu0 %v3016
    %3035 = vmatprep.subr.bf16.mxu0 0
    %3036 = vmatpush1.bf16.msra.mxu0 0
    %3037 = vmatprep.subr.bf16.mxu0 0
    %3038 = vmatpush1.bf16.msra.mxu0 0
    %3039 = vmatprep.subr.bf16.mxu0 0
    %3040 = vmatpush1.bf16.msra.mxu0 0
    %3041 = vmatprep.subr.bf16.mxu0 0
    %3042 = vmatpush1.bf16.msra.mxu0 0
    %3043 = vmatprep.subr.bf16.mxu0 0
    %3044 = vmatpush1.bf16.msra.mxu0 0
    %3045 = vmatprep.subr.bf16.mxu0 0
    %3046 = vmatpush1.bf16.msra.mxu0 0
    %3047 = vmatprep.subr.bf16.mxu0 0
    %3048 = vmatpush1.bf16.msra.mxu0 0
    %3049 = vmatprep.subr.bf16.mxu0 0
    %3050 = vmatpush1.bf16.msra.mxu0 0
    %3051 = vmatprep.subr.bf16.mxu0 0
    %3052 = vmatpush1.bf16.msra.mxu0 0
    %3053 = vmatprep.subr.bf16.mxu0 0
    %3054 = vmatpush1.bf16.msra.mxu0 0
    %3055 = vmatprep.subr.bf16.mxu0 0
    %3056 = vmatpush1.bf16.msra.mxu0 0
    %3057 = vmatprep.mubr.bf16.mxu0 0
    %3058 = vmatmul.mubr.bf16.gmra.mrb[0].mxu0 %v3023
    %v3059 = vpop.f32.mrb[0].mxu0
    %v3060 = vadd.f32 0.0, %v3059
    %v3061 = vpop.f32.mrb[0].mxu0
    %v3062 = vpop.f32.mrb[0].mxu0
    %v3063 = vadd.f32 0.0, %v3062
    %v3064 = vpop.f32.mrb[0].mxu0
    %3065 = vdwg.mxu0
    %v3066 = vadd.f32 %v2892, %v3060
    %v3067 = vadd.f32 %v2893, %v3063
    %s3068 = scalar_lea.vmem [#allocation9], 440
    %v3069 = vld [vmem:[%s3068] sm:$0xf]
    %v3070 = vld [vmem:[%s3068 + $0x4] sm:$0xf]
    %v3071 = vld [vmem:[%s3068 + $0x8] sm:$0xf]
    %v3072 = vld [vmem:[%s3068 + $0xc] sm:$0xf]
    %v3073 = vld [vmem:[%s3068 + $0x10] sm:$0xf]
    %v3074 = vld [vmem:[%s3068 + $0x14] sm:$0xf]
    %v3075 = vld [vmem:[%s3068 + $0x18] sm:$0xf]
    %v3076 = vld [vmem:[%s3068 + $0x1c] sm:$0xf]
    %v3077 = vld [vmem:[%s3068 + $0x20] sm:$0xf]
    %v3078 = vld [vmem:[%s3068 + $0x24] sm:$0xf]
    %v3089 = vunpack.c.l.b16 %v3069
    %v3090 = vunpack.c.l.b16 %v3070
    %v3091 = vunpack.c.l.b16 %v3071
    %v3092 = vunpack.c.l.b16 %v3072
    %v3093 = vunpack.c.l.b16 %v3073
    %v3094 = vunpack.c.l.b16 %v3074
    %v3095 = vunpack.c.l.b16 %v3075
    %v3096 = vunpack.c.l.b16 %v3076
    %v3097 = vunpack.c.l.b16 %v3077
    %v3098 = vunpack.c.l.b16 %v3078
    %v3099 = vpack.c.b16 %v3090, %v3089
    %v3100 = vpack.c.b16 %v3092, %v3091
    %v3101 = vpack.c.b16 %v3094, %v3093
    %v3102 = vpack.c.b16 %v3096, %v3095
    %v3103 = vpack.c.b16 %v3098, %v3097
    %3109 = vmatprep.subr.bf16.mxu0 0
    %3110 = vmatpush1.bf16.msra.mxu0 %v3099
    %3111 = vmatprep.subr.bf16.mxu0 0
    %3112 = vmatpush1.bf16.msra.mxu0 %v3100
    %3113 = vmatprep.subr.bf16.mxu0 0
    %3114 = vmatpush1.bf16.msra.mxu0 %v3101
    %3115 = vmatprep.subr.bf16.mxu0 0
    %3116 = vmatpush1.bf16.msra.mxu0 %v3102
    %3117 = vmatprep.subr.bf16.mxu0 0
    %3118 = vmatpush1.bf16.msra.mxu0 %v3103
    %3119 = vmatprep.subr.bf16.mxu0 0
    %3120 = vmatpush1.bf16.msra.mxu0 0
    %3121 = vmatprep.subr.bf16.mxu0 0
    %3122 = vmatpush1.bf16.msra.mxu0 0
    %3123 = vmatprep.subr.bf16.mxu0 0
    %3124 = vmatpush1.bf16.msra.mxu0 0
    %3125 = vmatprep.subr.bf16.mxu0 0
    %3126 = vmatpush1.bf16.msra.mxu0 0
    %3127 = vmatprep.subr.bf16.mxu0 0
    %3128 = vmatpush1.bf16.msra.mxu0 0
    %3129 = vmatprep.subr.bf16.mxu0 0
    %3130 = vmatpush1.bf16.msra.mxu0 0
    %3131 = vmatprep.subr.bf16.mxu0 0
    %3132 = vmatpush1.bf16.msra.mxu0 0
    %3133 = vmatprep.subr.bf16.mxu0 0
    %3134 = vmatpush1.bf16.msra.mxu0 0
    %3135 = vmatprep.subr.bf16.mxu0 0
    %3136 = vmatpush1.bf16.msra.mxu0 0
    %3137 = vmatprep.subr.bf16.mxu0 0
    %3138 = vmatpush1.bf16.msra.mxu0 0
    %3139 = vmatprep.subr.bf16.mxu0 0
    %3140 = vmatpush1.bf16.msra.mxu0 0
    %3141 = vmatprep.mubr.bf16.mxu0 0
    %3142 = vmatmul.mubr.bf16.gmra.mrb[0].mxu0 %v3023
    %v3143 = vpop.f32.mrb[0].mxu0
    %v3144 = vadd.f32 0.0, %v3143
    %v3145 = vpop.f32.mrb[0].mxu0
    %v3146 = vpop.f32.mrb[0].mxu0
    %v3147 = vadd.f32 0.0, %v3146
    %v3148 = vpop.f32.mrb[0].mxu0
    %3149 = vdwg.mxu0
    %v3150 = vadd.f32 %v2976, %v3144
    %v3151 = vadd.f32 %v2977, %v3147
    %s3152 = scalar_lea.vmem [#allocation6], 480
    %v3153 = vld [vmem:[%s3152] sm:$0xf]
    %v3154 = vld [vmem:[%s3152 + $0x4] sm:$0xf]
    %v3155 = vld [vmem:[%s3152 + $0x8] sm:$0xf]
    %v3156 = vld [vmem:[%s3152 + $0xc] sm:$0xf]
    %v3157 = vld [vmem:[%s3152 + $0x10] sm:$0xf]
    %v3158 = vld [vmem:[%s3152 + $0x14] sm:$0xf]
    %v3159 = vld [vmem:[%s3152 + $0x18] sm:$0xf]
    %v3160 = vld [vmem:[%s3152 + $0x1c] sm:$0xf]
    %v3161 = vld [vmem:[%s3152 + $0x20] sm:$0xf]
    %v3162 = vld [vmem:[%s3152 + $0x24] sm:$0xf]
    %3163 = vrot.lane.b32.xlu0 %v2806, 108
    %v3164 = vpop.permute.xlu0 %3163
    %v3175 = vunpack.c.l.b16 %v3153
    %v3176 = vunpack.c.l.b16 %v3154
    %v3177 = vunpack.c.l.b16 %v3155
    %v3178 = vunpack.c.l.b16 %v3156
    %v3179 = vunpack.c.l.b16 %v3157
    %v3180 = vunpack.c.l.b16 %v3158
    %v3181 = vunpack.c.l.b16 %v3159
    %v3182 = vunpack.c.l.b16 %v3160
    %v3183 = vunpack.c.l.b16 %v3161
    %v3184 = vunpack.c.l.b16 %v3162
    %v3185 = vpack.c.b16 %v3176, %v3175
    %v3186 = vpack.c.b16 %v3178, %v3177
    %v3187 = vpack.c.b16 %v3180, %v3179
    %v3188 = vpack.c.b16 %v3182, %v3181
    %v3189 = vpack.c.b16 %v3184, %v3183
    %v3196 = vsel %vm1146, %v3164, 0
    %3198 = vmatprep.subr.bf16.mxu0 0
    %3199 = vmatpush1.bf16.msra.mxu0 %v3185
    %3200 = vmatprep.subr.bf16.mxu0 0
    %3201 = vmatpush1.bf16.msra.mxu0 %v3186
    %3202 = vmatprep.subr.bf16.mxu0 0
    %3203 = vmatpush1.bf16.msra.mxu0 %v3187
    %3204 = vmatprep.subr.bf16.mxu0 0
    %3205 = vmatpush1.bf16.msra.mxu0 %v3188
    %3206 = vmatprep.subr.bf16.mxu0 0
    %3207 = vmatpush1.bf16.msra.mxu0 %v3189
    %3208 = vmatprep.subr.bf16.mxu0 0
    %3209 = vmatpush1.bf16.msra.mxu0 0
    %3210 = vmatprep.subr.bf16.mxu0 0
    %3211 = vmatpush1.bf16.msra.mxu0 0
    %3212 = vmatprep.subr.bf16.mxu0 0
    %3213 = vmatpush1.bf16.msra.mxu0 0
    %3214 = vmatprep.subr.bf16.mxu0 0
    %3215 = vmatpush1.bf16.msra.mxu0 0
    %3216 = vmatprep.subr.bf16.mxu0 0
    %3217 = vmatpush1.bf16.msra.mxu0 0
    %3218 = vmatprep.subr.bf16.mxu0 0
    %3219 = vmatpush1.bf16.msra.mxu0 0
    %3220 = vmatprep.subr.bf16.mxu0 0
    %3221 = vmatpush1.bf16.msra.mxu0 0
    %3222 = vmatprep.subr.bf16.mxu0 0
    %3223 = vmatpush1.bf16.msra.mxu0 0
    %3224 = vmatprep.subr.bf16.mxu0 0
    %3225 = vmatpush1.bf16.msra.mxu0 0
    %3226 = vmatprep.subr.bf16.mxu0 0
    %3227 = vmatpush1.bf16.msra.mxu0 0
    %3228 = vmatprep.subr.bf16.mxu0 0
    %3229 = vmatpush1.bf16.msra.mxu0 0
    %3230 = vmatprep.mubr.bf16.mxu0 0
    %3231 = vmatmul.mubr.bf16.gmra.mrb[0].mxu0 %v3196
    %v3232 = vpop.f32.mrb[0].mxu0
    %v3233 = vadd.f32 0.0, %v3232
    %v3234 = vpop.f32.mrb[0].mxu0
    %v3235 = vpop.f32.mrb[0].mxu0
    %v3236 = vadd.f32 0.0, %v3235
    %v3237 = vpop.f32.mrb[0].mxu0
    %3238 = vdwg.mxu0
    %v3239 = vadd.f32 %v3066, %v3233
    %v3240 = vadd.f32 %v3067, %v3236
    %s3241 = scalar_lea.vmem [#allocation9], 480
    %v3242 = vld [vmem:[%s3241] sm:$0xf]
    %v3243 = vld [vmem:[%s3241 + $0x4] sm:$0xf]
    %v3244 = vld [vmem:[%s3241 + $0x8] sm:$0xf]
    %v3245 = vld [vmem:[%s3241 + $0xc] sm:$0xf]
    %v3246 = vld [vmem:[%s3241 + $0x10] sm:$0xf]
    %v3247 = vld [vmem:[%s3241 + $0x14] sm:$0xf]
    %v3248 = vld [vmem:[%s3241 + $0x18] sm:$0xf]
    %v3249 = vld [vmem:[%s3241 + $0x1c] sm:$0xf]
    %v3250 = vld [vmem:[%s3241 + $0x20] sm:$0xf]
    %v3251 = vld [vmem:[%s3241 + $0x24] sm:$0xf]
    %v3262 = vunpack.c.l.b16 %v3242
    %v3263 = vunpack.c.l.b16 %v3243
    %v3264 = vunpack.c.l.b16 %v3244
    %v3265 = vunpack.c.l.b16 %v3245
    %v3266 = vunpack.c.l.b16 %v3246
    %v3267 = vunpack.c.l.b16 %v3247
    %v3268 = vunpack.c.l.b16 %v3248
    %v3269 = vunpack.c.l.b16 %v3249
    %v3270 = vunpack.c.l.b16 %v3250
    %v3271 = vunpack.c.l.b16 %v3251
    %v3272 = vpack.c.b16 %v3263, %v3262
    %v3273 = vpack.c.b16 %v3265, %v3264
    %v3274 = vpack.c.b16 %v3267, %v3266
    %v3275 = vpack.c.b16 %v3269, %v3268
    %v3276 = vpack.c.b16 %v3271, %v3270
    %3282 = vmatprep.subr.bf16.mxu0 0
    %3283 = vmatpush1.bf16.msra.mxu0 %v3272
    %3284 = vmatprep.subr.bf16.mxu0 0
    %3285 = vmatpush1.bf16.msra.mxu0 %v3273
    %3286 = vmatprep.subr.bf16.mxu0 0
    %3287 = vmatpush1.bf16.msra.mxu0 %v3274
    %3288 = vmatprep.subr.bf16.mxu0 0
    %3289 = vmatpush1.bf16.msra.mxu0 %v3275
    %3290 = vmatprep.subr.bf16.mxu0 0
    %3291 = vmatpush1.bf16.msra.mxu0 %v3276
    %3292 = vmatprep.subr.bf16.mxu0 0
    %3293 = vmatpush1.bf16.msra.mxu0 0
    %3294 = vmatprep.subr.bf16.mxu0 0
    %3295 = vmatpush1.bf16.msra.mxu0 0
    %3296 = vmatprep.subr.bf16.mxu0 0
    %3297 = vmatpush1.bf16.msra.mxu0 0
    %3298 = vmatprep.subr.bf16.mxu0 0
    %3299 = vmatpush1.bf16.msra.mxu0 0
    %3300 = vmatprep.subr.bf16.mxu0 0
    %3301 = vmatpush1.bf16.msra.mxu0 0
    %3302 = vmatprep.subr.bf16.mxu0 0
    %3303 = vmatpush1.bf16.msra.mxu0 0
    %3304 = vmatprep.subr.bf16.mxu0 0
    %3305 = vmatpush1.bf16.msra.mxu0 0
    %3306 = vmatprep.subr.bf16.mxu0 0
    %3307 = vmatpush1.bf16.msra.mxu0 0
    %3308 = vmatprep.subr.bf16.mxu0 0
    %3309 = vmatpush1.bf16.msra.mxu0 0
    %3310 = vmatprep.subr.bf16.mxu0 0
    %3311 = vmatpush1.bf16.msra.mxu0 0
    %3312 = vmatprep.subr.bf16.mxu0 0
    %3313 = vmatpush1.bf16.msra.mxu0 0
    %3314 = vmatprep.mubr.bf16.mxu0 0
    %3315 = vmatmul.mubr.bf16.gmra.mrb[0].mxu0 %v3196
    %v3316 = vpop.f32.mrb[0].mxu0
    %v3317 = vadd.f32 0.0, %v3316
    %v3318 = vpop.f32.mrb[0].mxu0
    %v3319 = vpop.f32.mrb[0].mxu0
    %v3320 = vadd.f32 0.0, %v3319
    %v3321 = vpop.f32.mrb[0].mxu0
    %3322 = vdwg.mxu0
    %v3323 = vadd.f32 %v3150, %v3317
    %v3324 = vadd.f32 %v3151, %v3320
    %s3325 = scalar_lea.vmem [#allocation6], 520
    %v3326 = vld [vmem:[%s3325] sm:$0xf]
    %v3327 = vld [vmem:[%s3325 + $0x4] sm:$0xf]
    %v3328 = vld [vmem:[%s3325 + $0x8] sm:$0xf]
    %v3329 = vld [vmem:[%s3325 + $0xc] sm:$0xf]
    %v3330 = vld [vmem:[%s3325 + $0x10] sm:$0xf]
    %v3331 = vld [vmem:[%s3325 + $0x14] sm:$0xf]
    %v3332 = vld [vmem:[%s3325 + $0x18] sm:$0xf]
    %v3333 = vld [vmem:[%s3325 + $0x1c] sm:$0xf]
    %v3334 = vld [vmem:[%s3325 + $0x20] sm:$0xf]
    %v3335 = vld [vmem:[%s3325 + $0x24] sm:$0xf]
    %3336 = vrot.lane.b32.xlu0 %v2806, 98
    %v3337 = vpop.permute.xlu0 %3336
    %v3348 = vunpack.c.l.b16 %v3326
    %v3349 = vunpack.c.l.b16 %v3327
    %v3350 = vunpack.c.l.b16 %v3328
    %v3351 = vunpack.c.l.b16 %v3329
    %v3352 = vunpack.c.l.b16 %v3330
    %v3353 = vunpack.c.l.b16 %v3331
    %v3354 = vunpack.c.l.b16 %v3332
    %v3355 = vunpack.c.l.b16 %v3333
    %v3356 = vunpack.c.l.b16 %v3334
    %v3357 = vunpack.c.l.b16 %v3335
    %v3358 = vpack.c.b16 %v3349, %v3348
    %v3359 = vpack.c.b16 %v3351, %v3350
    %v3360 = vpack.c.b16 %v3353, %v3352
    %v3361 = vpack.c.b16 %v3355, %v3354
    %v3362 = vpack.c.b16 %v3357, %v3356
    %v3369 = vsel %vm1146, %v3337, 0
    %3371 = vmatprep.subr.bf16.mxu0 0
    %3372 = vmatpush1.bf16.msra.mxu0 %v3358
    %3373 = vmatprep.subr.bf16.mxu0 0
    %3374 = vmatpush1.bf16.msra.mxu0 %v3359
    %3375 = vmatprep.subr.bf16.mxu0 0
    %3376 = vmatpush1.bf16.msra.mxu0 %v3360
    %3377 = vmatprep.subr.bf16.mxu0 0
    %3378 = vmatpush1.bf16.msra.mxu0 %v3361
    %3379 = vmatprep.subr.bf16.mxu0 0
    %3380 = vmatpush1.bf16.msra.mxu0 %v3362
    %3381 = vmatprep.subr.bf16.mxu0 0
    %3382 = vmatpush1.bf16.msra.mxu0 0
    %3383 = vmatprep.subr.bf16.mxu0 0
    %3384 = vmatpush1.bf16.msra.mxu0 0
    %3385 = vmatprep.subr.bf16.mxu0 0
    %3386 = vmatpush1.bf16.msra.mxu0 0
    %3387 = vmatprep.subr.bf16.mxu0 0
    %3388 = vmatpush1.bf16.msra.mxu0 0
    %3389 = vmatprep.subr.bf16.mxu0 0
    %3390 = vmatpush1.bf16.msra.mxu0 0
    %3391 = vmatprep.subr.bf16.mxu0 0
    %3392 = vmatpush1.bf16.msra.mxu0 0
    %3393 = vmatprep.subr.bf16.mxu0 0
    %3394 = vmatpush1.bf16.msra.mxu0 0
    %3395 = vmatprep.subr.bf16.mxu0 0
    %3396 = vmatpush1.bf16.msra.mxu0 0
    %3397 = vmatprep.subr.bf16.mxu0 0
    %3398 = vmatpush1.bf16.msra.mxu0 0
    %3399 = vmatprep.subr.bf16.mxu0 0
    %3400 = vmatpush1.bf16.msra.mxu0 0
    %3401 = vmatprep.subr.bf16.mxu0 0
    %3402 = vmatpush1.bf16.msra.mxu0 0
    %3403 = vmatprep.mubr.bf16.mxu0 0
    %3404 = vmatmul.mubr.bf16.gmra.mrb[0].mxu0 %v3369
    %v3405 = vpop.f32.mrb[0].mxu0
    %v3406 = vadd.f32 0.0, %v3405
    %v3407 = vpop.f32.mrb[0].mxu0
    %v3408 = vpop.f32.mrb[0].mxu0
    %v3409 = vadd.f32 0.0, %v3408
    %v3410 = vpop.f32.mrb[0].mxu0
    %3411 = vdwg.mxu0
    %v3412 = vadd.f32 %v3239, %v3406
    %v3413 = vadd.f32 %v3240, %v3409
    %s3414 = scalar_lea.vmem [#allocation9], 520
    %v3415 = vld [vmem:[%s3414] sm:$0xf]
    %v3416 = vld [vmem:[%s3414 + $0x4] sm:$0xf]
    %v3417 = vld [vmem:[%s3414 + $0x8] sm:$0xf]
    %v3418 = vld [vmem:[%s3414 + $0xc] sm:$0xf]
    %v3419 = vld [vmem:[%s3414 + $0x10] sm:$0xf]
    %v3420 = vld [vmem:[%s3414 + $0x14] sm:$0xf]
    %v3421 = vld [vmem:[%s3414 + $0x18] sm:$0xf]
    %v3422 = vld [vmem:[%s3414 + $0x1c] sm:$0xf]
    %v3423 = vld [vmem:[%s3414 + $0x20] sm:$0xf]
    %v3424 = vld [vmem:[%s3414 + $0x24] sm:$0xf]
    %v3435 = vunpack.c.l.b16 %v3415
    %v3436 = vunpack.c.l.b16 %v3416
    %v3437 = vunpack.c.l.b16 %v3417
    %v3438 = vunpack.c.l.b16 %v3418
    %v3439 = vunpack.c.l.b16 %v3419
    %v3440 = vunpack.c.l.b16 %v3420
    %v3441 = vunpack.c.l.b16 %v3421
    %v3442 = vunpack.c.l.b16 %v3422
    %v3443 = vunpack.c.l.b16 %v3423
    %v3444 = vunpack.c.l.b16 %v3424
    %v3445 = vpack.c.b16 %v3436, %v3435
    %v3446 = vpack.c.b16 %v3438, %v3437
    %v3447 = vpack.c.b16 %v3440, %v3439
    %v3448 = vpack.c.b16 %v3442, %v3441
    %v3449 = vpack.c.b16 %v3444, %v3443
    %3455 = vmatprep.subr.bf16.mxu0 0
    %3456 = vmatpush1.bf16.msra.mxu0 %v3445
    %3457 = vmatprep.subr.bf16.mxu0 0
    %3458 = vmatpush1.bf16.msra.mxu0 %v3446
    %3459 = vmatprep.subr.bf16.mxu0 0
    %3460 = vmatpush1.bf16.msra.mxu0 %v3447
    %3461 = vmatprep.subr.bf16.mxu0 0
    %3462 = vmatpush1.bf16.msra.mxu0 %v3448
    %3463 = vmatprep.subr.bf16.mxu0 0
    %3464 = vmatpush1.bf16.msra.mxu0 %v3449
    %3465 = vmatprep.subr.bf16.mxu0 0
    %3466 = vmatpush1.bf16.msra.mxu0 0
    %3467 = vmatprep.subr.bf16.mxu0 0
    %3468 = vmatpush1.bf16.msra.mxu0 0
    %3469 = vmatprep.subr.bf16.mxu0 0
    %3470 = vmatpush1.bf16.msra.mxu0 0
    %3471 = vmatprep.subr.bf16.mxu0 0
    %3472 = vmatpush1.bf16.msra.mxu0 0
    %3473 = vmatprep.subr.bf16.mxu0 0
    %3474 = vmatpush1.bf16.msra.mxu0 0
    %3475 = vmatprep.subr.bf16.mxu0 0
    %3476 = vmatpush1.bf16.msra.mxu0 0
    %3477 = vmatprep.subr.bf16.mxu0 0
    %3478 = vmatpush1.bf16.msra.mxu0 0
    %3479 = vmatprep.subr.bf16.mxu0 0
    %3480 = vmatpush1.bf16.msra.mxu0 0
    %3481 = vmatprep.subr.bf16.mxu0 0
    %3482 = vmatpush1.bf16.msra.mxu0 0
    %3483 = vmatprep.subr.bf16.mxu0 0
    %3484 = vmatpush1.bf16.msra.mxu0 0
    %3485 = vmatprep.subr.bf16.mxu0 0
    %3486 = vmatpush1.bf16.msra.mxu0 0
    %3487 = vmatprep.mubr.bf16.mxu0 0
    %3488 = vmatmul.mubr.bf16.gmra.mrb[0].mxu0 %v3369
    %v3489 = vpop.f32.mrb[0].mxu0
    %v3490 = vadd.f32 0.0, %v3489
    %v3491 = vpop.f32.mrb[0].mxu0
    %v3492 = vpop.f32.mrb[0].mxu0
    %v3493 = vadd.f32 0.0, %v3492
    %v3494 = vpop.f32.mrb[0].mxu0
    %3495 = vdwg.mxu0
    %v3496 = vadd.f32 %v3323, %v3490
    %v3497 = vadd.f32 %v3324, %v3493
    %s3498 = scalar_lea.vmem [#allocation6], 560
    %v3499 = vld [vmem:[%s3498] sm:$0xf]
    %v3500 = vld [vmem:[%s3498 + $0x4] sm:$0xf]
    %v3501 = vld [vmem:[%s3498 + $0x8] sm:$0xf]
    %v3502 = vld [vmem:[%s3498 + $0xc] sm:$0xf]
    %v3503 = vld [vmem:[%s3498 + $0x10] sm:$0xf]
    %v3504 = vld [vmem:[%s3498 + $0x14] sm:$0xf]
    %v3505 = vld [vmem:[%s3498 + $0x18] sm:$0xf]
    %v3506 = vld [vmem:[%s3498 + $0x1c] sm:$0xf]
    %v3507 = vld [vmem:[%s3498 + $0x20] sm:$0xf]
    %v3508 = vld [vmem:[%s3498 + $0x24] sm:$0xf]
    %3509 = vrot.lane.b32.xlu0 %v2806, 88
    %v3510 = vpop.permute.xlu0 %3509
    %v3521 = vunpack.c.l.b16 %v3499
    %v3522 = vunpack.c.l.b16 %v3500
    %v3523 = vunpack.c.l.b16 %v3501
    %v3524 = vunpack.c.l.b16 %v3502
    %v3525 = vunpack.c.l.b16 %v3503
    %v3526 = vunpack.c.l.b16 %v3504
    %v3527 = vunpack.c.l.b16 %v3505
    %v3528 = vunpack.c.l.b16 %v3506
    %v3529 = vunpack.c.l.b16 %v3507
    %v3530 = vunpack.c.l.b16 %v3508
    %v3531 = vpack.c.b16 %v3522, %v3521
    %v3532 = vpack.c.b16 %v3524, %v3523
    %v3533 = vpack.c.b16 %v3526, %v3525
    %v3534 = vpack.c.b16 %v3528, %v3527
    %v3535 = vpack.c.b16 %v3530, %v3529
    %v3542 = vsel %vm1146, %v3510, 0
    %3544 = vmatprep.subr.bf16.mxu0 0
    %3545 = vmatpush1.bf16.msra.mxu0 %v3531
    %3546 = vmatprep.subr.bf16.mxu0 0
    %3547 = vmatpush1.bf16.msra.mxu0 %v3532
    %3548 = vmatprep.subr.bf16.mxu0 0
    %3549 = vmatpush1.bf16.msra.mxu0 %v3533
    %3550 = vmatprep.subr.bf16.mxu0 0
    %3551 = vmatpush1.bf16.msra.mxu0 %v3534
    %3552 = vmatprep.subr.bf16.mxu0 0
    %3553 = vmatpush1.bf16.msra.mxu0 %v3535
    %3554 = vmatprep.subr.bf16.mxu0 0
    %3555 = vmatpush1.bf16.msra.mxu0 0
    %3556 = vmatprep.subr.bf16.mxu0 0
    %3557 = vmatpush1.bf16.msra.mxu0 0
    %3558 = vmatprep.subr.bf16.mxu0 0
    %3559 = vmatpush1.bf16.msra.mxu0 0
    %3560 = vmatprep.subr.bf16.mxu0 0
    %3561 = vmatpush1.bf16.msra.mxu0 0
    %3562 = vmatprep.subr.bf16.mxu0 0
    %3563 = vmatpush1.bf16.msra.mxu0 0
    %3564 = vmatprep.subr.bf16.mxu0 0
    %3565 = vmatpush1.bf16.msra.mxu0 0
    %3566 = vmatprep.subr.bf16.mxu0 0
    %3567 = vmatpush1.bf16.msra.mxu0 0
    %3568 = vmatprep.subr.bf16.mxu0 0
    %3569 = vmatpush1.bf16.msra.mxu0 0
    %3570 = vmatprep.subr.bf16.mxu0 0
    %3571 = vmatpush1.bf16.msra.mxu0 0
    %3572 = vmatprep.subr.bf16.mxu0 0
    %3573 = vmatpush1.bf16.msra.mxu0 0
    %3574 = vmatprep.subr.bf16.mxu0 0
    %3575 = vmatpush1.bf16.msra.mxu0 0
    %3576 = vmatprep.mubr.bf16.mxu0 0
    %3577 = vmatmul.mubr.bf16.gmra.mrb[0].mxu0 %v3542
    %v3578 = vpop.f32.mrb[0].mxu0
    %v3579 = vadd.f32 0.0, %v3578
    %v3580 = vpop.f32.mrb[0].mxu0
    %v3581 = vpop.f32.mrb[0].mxu0
    %v3582 = vadd.f32 0.0, %v3581
    %v3583 = vpop.f32.mrb[0].mxu0
    %3584 = vdwg.mxu0
    %v3585 = vadd.f32 %v3412, %v3579
    %v3586 = vadd.f32 %v3413, %v3582
    %s3587 = scalar_lea.vmem [#allocation9], 560
    %v3588 = vld [vmem:[%s3587] sm:$0xf]
    %v3589 = vld [vmem:[%s3587 + $0x4] sm:$0xf]
    %v3590 = vld [vmem:[%s3587 + $0x8] sm:$0xf]
    %v3591 = vld [vmem:[%s3587 + $0xc] sm:$0xf]
    %v3592 = vld [vmem:[%s3587 + $0x10] sm:$0xf]
    %v3593 = vld [vmem:[%s3587 + $0x14] sm:$0xf]
    %v3594 = vld [vmem:[%s3587 + $0x18] sm:$0xf]
    %v3595 = vld [vmem:[%s3587 + $0x1c] sm:$0xf]
    %v3596 = vld [vmem:[%s3587 + $0x20] sm:$0xf]
    %v3597 = vld [vmem:[%s3587 + $0x24] sm:$0xf]
    %v3608 = vunpack.c.l.b16 %v3588
    %v3609 = vunpack.c.l.b16 %v3589
    %v3610 = vunpack.c.l.b16 %v3590
    %v3611 = vunpack.c.l.b16 %v3591
    %v3612 = vunpack.c.l.b16 %v3592
    %v3613 = vunpack.c.l.b16 %v3593
    %v3614 = vunpack.c.l.b16 %v3594
    %v3615 = vunpack.c.l.b16 %v3595
    %v3616 = vunpack.c.l.b16 %v3596
    %v3617 = vunpack.c.l.b16 %v3597
    %v3618 = vpack.c.b16 %v3609, %v3608
    %v3619 = vpack.c.b16 %v3611, %v3610
    %v3620 = vpack.c.b16 %v3613, %v3612
    %v3621 = vpack.c.b16 %v3615, %v3614
    %v3622 = vpack.c.b16 %v3617, %v3616
    %3628 = vmatprep.subr.bf16.mxu0 0
    %3629 = vmatpush1.bf16.msra.mxu0 %v3618
    %3630 = vmatprep.subr.bf16.mxu0 0
    %3631 = vmatpush1.bf16.msra.mxu0 %v3619
    %3632 = vmatprep.subr.bf16.mxu0 0
    %3633 = vmatpush1.bf16.msra.mxu0 %v3620
    %3634 = vmatprep.subr.bf16.mxu0 0
    %3635 = vmatpush1.bf16.msra.mxu0 %v3621
    %3636 = vmatprep.subr.bf16.mxu0 0
    %3637 = vmatpush1.bf16.msra.mxu0 %v3622
    %3638 = vmatprep.subr.bf16.mxu0 0
    %3639 = vmatpush1.bf16.msra.mxu0 0
    %3640 = vmatprep.subr.bf16.mxu0 0
    %3641 = vmatpush1.bf16.msra.mxu0 0
    %3642 = vmatprep.subr.bf16.mxu0 0
    %3643 = vmatpush1.bf16.msra.mxu0 0
    %3644 = vmatprep.subr.bf16.mxu0 0
    %3645 = vmatpush1.bf16.msra.mxu0 0
    %3646 = vmatprep.subr.bf16.mxu0 0
    %3647 = vmatpush1.bf16.msra.mxu0 0
    %3648 = vmatprep.subr.bf16.mxu0 0
    %3649 = vmatpush1.bf16.msra.mxu0 0
    %3650 = vmatprep.subr.bf16.mxu0 0
    %3651 = vmatpush1.bf16.msra.mxu0 0
    %3652 = vmatprep.subr.bf16.mxu0 0
    %3653 = vmatpush1.bf16.msra.mxu0 0
    %3654 = vmatprep.subr.bf16.mxu0 0
    %3655 = vmatpush1.bf16.msra.mxu0 0
    %3656 = vmatprep.subr.bf16.mxu0 0
    %3657 = vmatpush1.bf16.msra.mxu0 0
    %3658 = vmatprep.subr.bf16.mxu0 0
    %3659 = vmatpush1.bf16.msra.mxu0 0
    %3660 = vmatprep.mubr.bf16.mxu0 0
    %3661 = vmatmul.mubr.bf16.gmra.mrb[0].mxu0 %v3542
    %v3662 = vpop.f32.mrb[0].mxu0
    %v3663 = vadd.f32 0.0, %v3662
    %v3664 = vpop.f32.mrb[0].mxu0
    %v3665 = vpop.f32.mrb[0].mxu0
    %v3666 = vadd.f32 0.0, %v3665
    %v3667 = vpop.f32.mrb[0].mxu0
    %3668 = vdwg.mxu0
    %v3669 = vadd.f32 %v3496, %v3663
    %v3670 = vadd.f32 %v3497, %v3666
    %v3671 = vld [vmem:[#allocation3 + $0x3] sm:$0xff]
    %v3672 = vld [vmem:[#allocation3 + $0x13] sm:$0xff]
    %v3673 = vpack.c.bf16 %v3672, %v3671
    %s3674 = scalar_lea.vmem [#allocation6], 600
    %v3675 = vld [vmem:[%s3674] sm:$0xf]
    %v3676 = vld [vmem:[%s3674 + $0x4] sm:$0xf]
    %v3677 = vld [vmem:[%s3674 + $0x8] sm:$0xf]
    %v3678 = vld [vmem:[%s3674 + $0xc] sm:$0xf]
    %v3679 = vld [vmem:[%s3674 + $0x10] sm:$0xf]
    %v3680 = vld [vmem:[%s3674 + $0x14] sm:$0xf]
    %v3681 = vld [vmem:[%s3674 + $0x18] sm:$0xf]
    %v3682 = vld [vmem:[%s3674 + $0x1c] sm:$0xf]
    %v3683 = vld [vmem:[%s3674 + $0x20] sm:$0xf]
    %v3684 = vld [vmem:[%s3674 + $0x24] sm:$0xf]
    %v3695 = vunpack.c.l.b16 %v3675
    %v3696 = vunpack.c.l.b16 %v3676
    %v3697 = vunpack.c.l.b16 %v3677
    %v3698 = vunpack.c.l.b16 %v3678
    %v3699 = vunpack.c.l.b16 %v3679
    %v3700 = vunpack.c.l.b16 %v3680
    %v3701 = vunpack.c.l.b16 %v3681
    %v3702 = vunpack.c.l.b16 %v3682
    %v3703 = vunpack.c.l.b16 %v3683
    %v3704 = vunpack.c.l.b16 %v3684
    %v3705 = vpack.c.b16 %v3696, %v3695
    %v3706 = vpack.c.b16 %v3698, %v3697
    %v3707 = vpack.c.b16 %v3700, %v3699
    %v3708 = vpack.c.b16 %v3702, %v3701
    %v3709 = vpack.c.b16 %v3704, %v3703
    %v3716 = vsel %vm1146, %v3673, 0
    %3718 = vmatprep.subr.bf16.mxu0 0
    %3719 = vmatpush1.bf16.msra.mxu0 %v3705
    %3720 = vmatprep.subr.bf16.mxu0 0
    %3721 = vmatpush1.bf16.msra.mxu0 %v3706
    %3722 = vmatprep.subr.bf16.mxu0 0
    %3723 = vmatpush1.bf16.msra.mxu0 %v3707
    %3724 = vmatprep.subr.bf16.mxu0 0
    %3725 = vmatpush1.bf16.msra.mxu0 %v3708
    %3726 = vmatprep.subr.bf16.mxu0 0
    %3727 = vmatpush1.bf16.msra.mxu0 %v3709
    %3728 = vmatprep.subr.bf16.mxu0 0
    %3729 = vmatpush1.bf16.msra.mxu0 0
    %3730 = vmatprep.subr.bf16.mxu0 0
    %3731 = vmatpush1.bf16.msra.mxu0 0
    %3732 = vmatprep.subr.bf16.mxu0 0
    %3733 = vmatpush1.bf16.msra.mxu0 0
    %3734 = vmatprep.subr.bf16.mxu0 0
    %3735 = vmatpush1.bf16.msra.mxu0 0
    %3736 = vmatprep.subr.bf16.mxu0 0
    %3737 = vmatpush1.bf16.msra.mxu0 0
    %3738 = vmatprep.subr.bf16.mxu0 0
    %3739 = vmatpush1.bf16.msra.mxu0 0
    %3740 = vmatprep.subr.bf16.mxu0 0
    %3741 = vmatpush1.bf16.msra.mxu0 0
    %3742 = vmatprep.subr.bf16.mxu0 0
    %3743 = vmatpush1.bf16.msra.mxu0 0
    %3744 = vmatprep.subr.bf16.mxu0 0
    %3745 = vmatpush1.bf16.msra.mxu0 0
    %3746 = vmatprep.subr.bf16.mxu0 0
    %3747 = vmatpush1.bf16.msra.mxu0 0
    %3748 = vmatprep.subr.bf16.mxu0 0
    %3749 = vmatpush1.bf16.msra.mxu0 0
    %3750 = vmatprep.mubr.bf16.mxu0 0
    %3751 = vmatmul.mubr.bf16.gmra.mrb[0].mxu0 %v3716
    %v3752 = vpop.f32.mrb[0].mxu0
    %v3753 = vadd.f32 0.0, %v3752
    %v3754 = vpop.f32.mrb[0].mxu0
    %v3755 = vpop.f32.mrb[0].mxu0
    %v3756 = vadd.f32 0.0, %v3755
    %v3757 = vpop.f32.mrb[0].mxu0
    %3758 = vdwg.mxu0
    %v3759 = vadd.f32 %v3585, %v3753
    %v3760 = vadd.f32 %v3586, %v3756
    %s3761 = scalar_lea.vmem [#allocation9], 600
    %v3762 = vld [vmem:[%s3761] sm:$0xf]
    %v3763 = vld [vmem:[%s3761 + $0x4] sm:$0xf]
    %v3764 = vld [vmem:[%s3761 + $0x8] sm:$0xf]
    %v3765 = vld [vmem:[%s3761 + $0xc] sm:$0xf]
    %v3766 = vld [vmem:[%s3761 + $0x10] sm:$0xf]
    %v3767 = vld [vmem:[%s3761 + $0x14] sm:$0xf]
    %v3768 = vld [vmem:[%s3761 + $0x18] sm:$0xf]
    %v3769 = vld [vmem:[%s3761 + $0x1c] sm:$0xf]
    %v3770 = vld [vmem:[%s3761 + $0x20] sm:$0xf]
    %v3771 = vld [vmem:[%s3761 + $0x24] sm:$0xf]
    %v3782 = vunpack.c.l.b16 %v3762
    %v3783 = vunpack.c.l.b16 %v3763
    %v3784 = vunpack.c.l.b16 %v3764
    %v3785 = vunpack.c.l.b16 %v3765
    %v3786 = vunpack.c.l.b16 %v3766
    %v3787 = vunpack.c.l.b16 %v3767
    %v3788 = vunpack.c.l.b16 %v3768
    %v3789 = vunpack.c.l.b16 %v3769
    %v3790 = vunpack.c.l.b16 %v3770
    %v3791 = vunpack.c.l.b16 %v3771
    %v3792 = vpack.c.b16 %v3783, %v3782
    %v3793 = vpack.c.b16 %v3785, %v3784
    %v3794 = vpack.c.b16 %v3787, %v3786
    %v3795 = vpack.c.b16 %v3789, %v3788
    %v3796 = vpack.c.b16 %v3791, %v3790
    %3802 = vmatprep.subr.bf16.mxu0 0
    %3803 = vmatpush1.bf16.msra.mxu0 %v3792
    %3804 = vmatprep.subr.bf16.mxu0 0
    %3805 = vmatpush1.bf16.msra.mxu0 %v3793
    %3806 = vmatprep.subr.bf16.mxu0 0
    %3807 = vmatpush1.bf16.msra.mxu0 %v3794
    %3808 = vmatprep.subr.bf16.mxu0 0
    %3809 = vmatpush1.bf16.msra.mxu0 %v3795
    %3810 = vmatprep.subr.bf16.mxu0 0
    %3811 = vmatpush1.bf16.msra.mxu0 %v3796
    %3812 = vmatprep.subr.bf16.mxu0 0
    %3813 = vmatpush1.bf16.msra.mxu0 0
    %3814 = vmatprep.subr.bf16.mxu0 0
    %3815 = vmatpush1.bf16.msra.mxu0 0
    %3816 = vmatprep.subr.bf16.mxu0 0
    %3817 = vmatpush1.bf16.msra.mxu0 0
    %3818 = vmatprep.subr.bf16.mxu0 0
    %3819 = vmatpush1.bf16.msra.mxu0 0
    %3820 = vmatprep.subr.bf16.mxu0 0
    %3821 = vmatpush1.bf16.msra.mxu0 0
    %3822 = vmatprep.subr.bf16.mxu0 0
    %3823 = vmatpush1.bf16.msra.mxu0 0
    %3824 = vmatprep.subr.bf16.mxu0 0
    %3825 = vmatpush1.bf16.msra.mxu0 0
    %3826 = vmatprep.subr.bf16.mxu0 0
    %3827 = vmatpush1.bf16.msra.mxu0 0
    %3828 = vmatprep.subr.bf16.mxu0 0
    %3829 = vmatpush1.bf16.msra.mxu0 0
    %3830 = vmatprep.subr.bf16.mxu0 0
    %3831 = vmatpush1.bf16.msra.mxu0 0
    %3832 = vmatprep.subr.bf16.mxu0 0
    %3833 = vmatpush1.bf16.msra.mxu0 0
    %3834 = vmatprep.mubr.bf16.mxu0 0
    %3835 = vmatmul.mubr.bf16.gmra.mrb[0].mxu0 %v3716
    %v3836 = vpop.f32.mrb[0].mxu0
    %v3837 = vadd.f32 0.0, %v3836
    %v3838 = vpop.f32.mrb[0].mxu0
    %v3839 = vpop.f32.mrb[0].mxu0
    %v3840 = vadd.f32 0.0, %v3839
    %v3841 = vpop.f32.mrb[0].mxu0
    %3842 = vdwg.mxu0
    %v3843 = vadd.f32 %v3669, %v3837
    %v3844 = vadd.f32 %v3670, %v3840
    %s3845 = scalar_lea.vmem [#allocation6], 640
    %v3846 = vld [vmem:[%s3845] sm:$0xf]
    %v3847 = vld [vmem:[%s3845 + $0x4] sm:$0xf]
    %v3848 = vld [vmem:[%s3845 + $0x8] sm:$0xf]
    %v3849 = vld [vmem:[%s3845 + $0xc] sm:$0xf]
    %v3850 = vld [vmem:[%s3845 + $0x10] sm:$0xf]
    %v3851 = vld [vmem:[%s3845 + $0x14] sm:$0xf]
    %v3852 = vld [vmem:[%s3845 + $0x18] sm:$0xf]
    %v3853 = vld [vmem:[%s3845 + $0x1c] sm:$0xf]
    %v3854 = vld [vmem:[%s3845 + $0x20] sm:$0xf]
    %v3855 = vld [vmem:[%s3845 + $0x24] sm:$0xf]
    %3857 = vrot.lane.b32.xlu0 %v3673, 118
    %v3858 = vpop.permute.xlu0 %3857
    %v3869 = vunpack.c.l.b16 %v3846
    %v3870 = vunpack.c.l.b16 %v3847
    %v3871 = vunpack.c.l.b16 %v3848
    %v3872 = vunpack.c.l.b16 %v3849
    %v3873 = vunpack.c.l.b16 %v3850
    %v3874 = vunpack.c.l.b16 %v3851
    %v3875 = vunpack.c.l.b16 %v3852
    %v3876 = vunpack.c.l.b16 %v3853
    %v3877 = vunpack.c.l.b16 %v3854
    %v3878 = vunpack.c.l.b16 %v3855
    %v3879 = vpack.c.b16 %v3870, %v3869
    %v3880 = vpack.c.b16 %v3872, %v3871
    %v3881 = vpack.c.b16 %v3874, %v3873
    %v3882 = vpack.c.b16 %v3876, %v3875
    %v3883 = vpack.c.b16 %v3878, %v3877
    %v3890 = vsel %vm1146, %v3858, 0
    %3892 = vmatprep.subr.bf16.mxu0 0
    %3893 = vmatpush1.bf16.msra.mxu0 %v3879
    %3894 = vmatprep.subr.bf16.mxu0 0
    %3895 = vmatpush1.bf16.msra.mxu0 %v3880
    %3896 = vmatprep.subr.bf16.mxu0 0
    %3897 = vmatpush1.bf16.msra.mxu0 %v3881
    %3898 = vmatprep.subr.bf16.mxu0 0
    %3899 = vmatpush1.bf16.msra.mxu0 %v3882
    %3900 = vmatprep.subr.bf16.mxu0 0
    %3901 = vmatpush1.bf16.msra.mxu0 %v3883
    %3902 = vmatprep.subr.bf16.mxu0 0
    %3903 = vmatpush1.bf16.msra.mxu0 0
    %3904 = vmatprep.subr.bf16.mxu0 0
    %3905 = vmatpush1.bf16.msra.mxu0 0
    %3906 = vmatprep.subr.bf16.mxu0 0
    %3907 = vmatpush1.bf16.msra.mxu0 0
    %3908 = vmatprep.subr.bf16.mxu0 0
    %3909 = vmatpush1.bf16.msra.mxu0 0
    %3910 = vmatprep.subr.bf16.mxu0 0
    %3911 = vmatpush1.bf16.msra.mxu0 0
    %3912 = vmatprep.subr.bf16.mxu0 0
    %3913 = vmatpush1.bf16.msra.mxu0 0
    %3914 = vmatprep.subr.bf16.mxu0 0
    %3915 = vmatpush1.bf16.msra.mxu0 0
    %3916 = vmatprep.subr.bf16.mxu0 0
    %3917 = vmatpush1.bf16.msra.mxu0 0
    %3918 = vmatprep.subr.bf16.mxu0 0
    %3919 = vmatpush1.bf16.msra.mxu0 0
    %3920 = vmatprep.subr.bf16.mxu0 0
    %3921 = vmatpush1.bf16.msra.mxu0 0
    %3922 = vmatprep.subr.bf16.mxu0 0
    %3923 = vmatpush1.bf16.msra.mxu0 0
    %3924 = vmatprep.mubr.bf16.mxu0 0
    %3925 = vmatmul.mubr.bf16.gmra.mrb[0].mxu0 %v3890
    %v3926 = vpop.f32.mrb[0].mxu0
    %v3927 = vadd.f32 0.0, %v3926
    %v3928 = vpop.f32.mrb[0].mxu0
    %v3929 = vpop.f32.mrb[0].mxu0
    %v3930 = vadd.f32 0.0, %v3929
    %v3931 = vpop.f32.mrb[0].mxu0
    %3932 = vdwg.mxu0
    %v3933 = vadd.f32 %v3759, %v3927
    %v3934 = vadd.f32 %v3760, %v3930
    %s3935 = scalar_lea.vmem [#allocation9], 640
    %v3936 = vld [vmem:[%s3935] sm:$0xf]
    %v3937 = vld [vmem:[%s3935 + $0x4] sm:$0xf]
    %v3938 = vld [vmem:[%s3935 + $0x8] sm:$0xf]
    %v3939 = vld [vmem:[%s3935 + $0xc] sm:$0xf]
    %v3940 = vld [vmem:[%s3935 + $0x10] sm:$0xf]
    %v3941 = vld [vmem:[%s3935 + $0x14] sm:$0xf]
    %v3942 = vld [vmem:[%s3935 + $0x18] sm:$0xf]
    %v3943 = vld [vmem:[%s3935 + $0x1c] sm:$0xf]
    %v3944 = vld [vmem:[%s3935 + $0x20] sm:$0xf]
    %v3945 = vld [vmem:[%s3935 + $0x24] sm:$0xf]
    %v3956 = vunpack.c.l.b16 %v3936
    %v3957 = vunpack.c.l.b16 %v3937
    %v3958 = vunpack.c.l.b16 %v3938
    %v3959 = vunpack.c.l.b16 %v3939
    %v3960 = vunpack.c.l.b16 %v3940
    %v3961 = vunpack.c.l.b16 %v3941
    %v3962 = vunpack.c.l.b16 %v3942
    %v3963 = vunpack.c.l.b16 %v3943
    %v3964 = vunpack.c.l.b16 %v3944
    %v3965 = vunpack.c.l.b16 %v3945
    %v3966 = vpack.c.b16 %v3957, %v3956
    %v3967 = vpack.c.b16 %v3959, %v3958
    %v3968 = vpack.c.b16 %v3961, %v3960
    %v3969 = vpack.c.b16 %v3963, %v3962
    %v3970 = vpack.c.b16 %v3965, %v3964
    %3976 = vmatprep.subr.bf16.mxu0 0
    %3977 = vmatpush1.bf16.msra.mxu0 %v3966
    %3978 = vmatprep.subr.bf16.mxu0 0
    %3979 = vmatpush1.bf16.msra.mxu0 %v3967
    %3980 = vmatprep.subr.bf16.mxu0 0
    %3981 = vmatpush1.bf16.msra.mxu0 %v3968
    %3982 = vmatprep.subr.bf16.mxu0 0
    %3983 = vmatpush1.bf16.msra.mxu0 %v3969
    %3984 = vmatprep.subr.bf16.mxu0 0
    %3985 = vmatpush1.bf16.msra.mxu0 %v3970
    %3986 = vmatprep.subr.bf16.mxu0 0
    %3987 = vmatpush1.bf16.msra.mxu0 0
    %3988 = vmatprep.subr.bf16.mxu0 0
    %3989 = vmatpush1.bf16.msra.mxu0 0
    %3990 = vmatprep.subr.bf16.mxu0 0
    %3991 = vmatpush1.bf16.msra.mxu0 0
    %3992 = vmatprep.subr.bf16.mxu0 0
    %3993 = vmatpush1.bf16.msra.mxu0 0
    %3994 = vmatprep.subr.bf16.mxu0 0
    %3995 = vmatpush1.bf16.msra.mxu0 0
    %3996 = vmatprep.subr.bf16.mxu0 0
    %3997 = vmatpush1.bf16.msra.mxu0 0
    %3998 = vmatprep.subr.bf16.mxu0 0
    %3999 = vmatpush1.bf16.msra.mxu0 0
    %4000 = vmatprep.subr.bf16.mxu0 0
    %4001 = vmatpush1.bf16.msra.mxu0 0
    %4002 = vmatprep.subr.bf16.mxu0 0
    %4003 = vmatpush1.bf16.msra.mxu0 0
    %4004 = vmatprep.subr.bf16.mxu0 0
    %4005 = vmatpush1.bf16.msra.mxu0 0
    %4006 = vmatprep.subr.bf16.mxu0 0
    %4007 = vmatpush1.bf16.msra.mxu0 0
    %4008 = vmatprep.mubr.bf16.mxu0 0
    %4009 = vmatmul.mubr.bf16.gmra.mrb[0].mxu0 %v3890
    %v4010 = vpop.f32.mrb[0].mxu0
    %v4011 = vadd.f32 0.0, %v4010
    %v4012 = vpop.f32.mrb[0].mxu0
    %v4013 = vpop.f32.mrb[0].mxu0
    %v4014 = vadd.f32 0.0, %v4013
    %v4015 = vpop.f32.mrb[0].mxu0
    %4016 = vdwg.mxu0
    %v4017 = vadd.f32 %v3843, %v4011
    %v4018 = vadd.f32 %v3844, %v4014
    %s4019 = scalar_lea.vmem [#allocation6], 680
    %v4020 = vld [vmem:[%s4019] sm:$0xf]
    %v4021 = vld [vmem:[%s4019 + $0x4] sm:$0xf]
    %v4022 = vld [vmem:[%s4019 + $0x8] sm:$0xf]
    %v4023 = vld [vmem:[%s4019 + $0xc] sm:$0xf]
    %v4024 = vld [vmem:[%s4019 + $0x10] sm:$0xf]
    %v4025 = vld [vmem:[%s4019 + $0x14] sm:$0xf]
    %v4026 = vld [vmem:[%s4019 + $0x18] sm:$0xf]
    %v4027 = vld [vmem:[%s4019 + $0x1c] sm:$0xf]
    %v4028 = vld [vmem:[%s4019 + $0x20] sm:$0xf]
    %v4029 = vld [vmem:[%s4019 + $0x24] sm:$0xf]
    %4030 = vrot.lane.b32.xlu0 %v3673, 108
    %v4031 = vpop.permute.xlu0 %4030
    %v4042 = vunpack.c.l.b16 %v4020
    %v4043 = vunpack.c.l.b16 %v4021
    %v4044 = vunpack.c.l.b16 %v4022
    %v4045 = vunpack.c.l.b16 %v4023
    %v4046 = vunpack.c.l.b16 %v4024
    %v4047 = vunpack.c.l.b16 %v4025
    %v4048 = vunpack.c.l.b16 %v4026
    %v4049 = vunpack.c.l.b16 %v4027
    %v4050 = vunpack.c.l.b16 %v4028
    %v4051 = vunpack.c.l.b16 %v4029
    %v4052 = vpack.c.b16 %v4043, %v4042
    %v4053 = vpack.c.b16 %v4045, %v4044
    %v4054 = vpack.c.b16 %v4047, %v4046
    %v4055 = vpack.c.b16 %v4049, %v4048
    %v4056 = vpack.c.b16 %v4051, %v4050
    %v4063 = vsel %vm1146, %v4031, 0
    %4065 = vmatprep.subr.bf16.mxu0 0
    %4066 = vmatpush1.bf16.msra.mxu0 %v4052
    %4067 = vmatprep.subr.bf16.mxu0 0
    %4068 = vmatpush1.bf16.msra.mxu0 %v4053
    %4069 = vmatprep.subr.bf16.mxu0 0
    %4070 = vmatpush1.bf16.msra.mxu0 %v4054
    %4071 = vmatprep.subr.bf16.mxu0 0
    %4072 = vmatpush1.bf16.msra.mxu0 %v4055
    %4073 = vmatprep.subr.bf16.mxu0 0
    %4074 = vmatpush1.bf16.msra.mxu0 %v4056
    %4075 = vmatprep.subr.bf16.mxu0 0
    %4076 = vmatpush1.bf16.msra.mxu0 0
    %4077 = vmatprep.subr.bf16.mxu0 0
    %4078 = vmatpush1.bf16.msra.mxu0 0
    %4079 = vmatprep.subr.bf16.mxu0 0
    %4080 = vmatpush1.bf16.msra.mxu0 0
    %4081 = vmatprep.subr.bf16.mxu0 0
    %4082 = vmatpush1.bf16.msra.mxu0 0
    %4083 = vmatprep.subr.bf16.mxu0 0
    %4084 = vmatpush1.bf16.msra.mxu0 0
    %4085 = vmatprep.subr.bf16.mxu0 0
    %4086 = vmatpush1.bf16.msra.mxu0 0
    %4087 = vmatprep.subr.bf16.mxu0 0
    %4088 = vmatpush1.bf16.msra.mxu0 0
    %4089 = vmatprep.subr.bf16.mxu0 0
    %4090 = vmatpush1.bf16.msra.mxu0 0
    %4091 = vmatprep.subr.bf16.mxu0 0
    %4092 = vmatpush1.bf16.msra.mxu0 0
    %4093 = vmatprep.subr.bf16.mxu0 0
    %4094 = vmatpush1.bf16.msra.mxu0 0
    %4095 = vmatprep.subr.bf16.mxu0 0
    %4096 = vmatpush1.bf16.msra.mxu0 0
    %4097 = vmatprep.mubr.bf16.mxu0 0
    %4098 = vmatmul.mubr.bf16.gmra.mrb[0].mxu0 %v4063
    %v4099 = vpop.f32.mrb[0].mxu0
    %v4100 = vadd.f32 0.0, %v4099
    %v4101 = vpop.f32.mrb[0].mxu0
    %v4102 = vpop.f32.mrb[0].mxu0
    %v4103 = vadd.f32 0.0, %v4102
    %v4104 = vpop.f32.mrb[0].mxu0
    %4105 = vdwg.mxu0
    %v4106 = vadd.f32 %v3933, %v4100
    %v4107 = vadd.f32 %v3934, %v4103
    %s4108 = scalar_lea.vmem [#allocation9], 680
    %v4109 = vld [vmem:[%s4108] sm:$0xf]
    %v4110 = vld [vmem:[%s4108 + $0x4] sm:$0xf]
    %v4111 = vld [vmem:[%s4108 + $0x8] sm:$0xf]
    %v4112 = vld [vmem:[%s4108 + $0xc] sm:$0xf]
    %v4113 = vld [vmem:[%s4108 + $0x10] sm:$0xf]
    %v4114 = vld [vmem:[%s4108 + $0x14] sm:$0xf]
    %v4115 = vld [vmem:[%s4108 + $0x18] sm:$0xf]
    %v4116 = vld [vmem:[%s4108 + $0x1c] sm:$0xf]
    %v4117 = vld [vmem:[%s4108 + $0x20] sm:$0xf]
    %v4118 = vld [vmem:[%s4108 + $0x24] sm:$0xf]
    %v4129 = vunpack.c.l.b16 %v4109
    %v4130 = vunpack.c.l.b16 %v4110
    %v4131 = vunpack.c.l.b16 %v4111
    %v4132 = vunpack.c.l.b16 %v4112
    %v4133 = vunpack.c.l.b16 %v4113
    %v4134 = vunpack.c.l.b16 %v4114
    %v4135 = vunpack.c.l.b16 %v4115
    %v4136 = vunpack.c.l.b16 %v4116
    %v4137 = vunpack.c.l.b16 %v4117
    %v4138 = vunpack.c.l.b16 %v4118
    %v4139 = vpack.c.b16 %v4130, %v4129
    %v4140 = vpack.c.b16 %v4132, %v4131
    %v4141 = vpack.c.b16 %v4134, %v4133
    %v4142 = vpack.c.b16 %v4136, %v4135
    %v4143 = vpack.c.b16 %v4138, %v4137
    %4149 = vmatprep.subr.bf16.mxu0 0
    %4150 = vmatpush1.bf16.msra.mxu0 %v4139
    %4151 = vmatprep.subr.bf16.mxu0 0
    %4152 = vmatpush1.bf16.msra.mxu0 %v4140
    %4153 = vmatprep.subr.bf16.mxu0 0
    %4154 = vmatpush1.bf16.msra.mxu0 %v4141
    %4155 = vmatprep.subr.bf16.mxu0 0
    %4156 = vmatpush1.bf16.msra.mxu0 %v4142
    %4157 = vmatprep.subr.bf16.mxu0 0
    %4158 = vmatpush1.bf16.msra.mxu0 %v4143
    %4159 = vmatprep.subr.bf16.mxu0 0
    %4160 = vmatpush1.bf16.msra.mxu0 0
    %4161 = vmatprep.subr.bf16.mxu0 0
    %4162 = vmatpush1.bf16.msra.mxu0 0
    %4163 = vmatprep.subr.bf16.mxu0 0
    %4164 = vmatpush1.bf16.msra.mxu0 0
    %4165 = vmatprep.subr.bf16.mxu0 0
    %4166 = vmatpush1.bf16.msra.mxu0 0
    %4167 = vmatprep.subr.bf16.mxu0 0
    %4168 = vmatpush1.bf16.msra.mxu0 0
    %4169 = vmatprep.subr.bf16.mxu0 0
    %4170 = vmatpush1.bf16.msra.mxu0 0
    %4171 = vmatprep.subr.bf16.mxu0 0
    %4172 = vmatpush1.bf16.msra.mxu0 0
    %4173 = vmatprep.subr.bf16.mxu0 0
    %4174 = vmatpush1.bf16.msra.mxu0 0
    %4175 = vmatprep.subr.bf16.mxu0 0
    %4176 = vmatpush1.bf16.msra.mxu0 0
    %4177 = vmatprep.subr.bf16.mxu0 0
    %4178 = vmatpush1.bf16.msra.mxu0 0
    %4179 = vmatprep.subr.bf16.mxu0 0
    %4180 = vmatpush1.bf16.msra.mxu0 0
    %4181 = vmatprep.mubr.bf16.mxu0 0
    %4182 = vmatmul.mubr.bf16.gmra.mrb[0].mxu0 %v4063
    %v4183 = vpop.f32.mrb[0].mxu0
    %v4184 = vadd.f32 0.0, %v4183
    %v4185 = vpop.f32.mrb[0].mxu0
    %v4186 = vpop.f32.mrb[0].mxu0
    %v4187 = vadd.f32 0.0, %v4186
    %v4188 = vpop.f32.mrb[0].mxu0
    %4189 = vdwg.mxu0
    %v4190 = vadd.f32 %v4017, %v4184
    %v4191 = vadd.f32 %v4018, %v4187
    %s4192 = scalar_lea.vmem [#allocation6], 720
    %v4193 = vld [vmem:[%s4192] sm:$0xf]
    %v4194 = vld [vmem:[%s4192 + $0x4] sm:$0xf]
    %v4195 = vld [vmem:[%s4192 + $0x8] sm:$0xf]
    %v4196 = vld [vmem:[%s4192 + $0xc] sm:$0xf]
    %v4197 = vld [vmem:[%s4192 + $0x10] sm:$0xf]
    %v4198 = vld [vmem:[%s4192 + $0x14] sm:$0xf]
    %v4199 = vld [vmem:[%s4192 + $0x18] sm:$0xf]
    %v4200 = vld [vmem:[%s4192 + $0x1c] sm:$0xf]
    %v4201 = vld [vmem:[%s4192 + $0x20] sm:$0xf]
    %v4202 = vld [vmem:[%s4192 + $0x24] sm:$0xf]
    %4203 = vrot.lane.b32.xlu0 %v3673, 98
    %v4204 = vpop.permute.xlu0 %4203
    %v4215 = vunpack.c.l.b16 %v4193
    %v4216 = vunpack.c.l.b16 %v4194
    %v4217 = vunpack.c.l.b16 %v4195
    %v4218 = vunpack.c.l.b16 %v4196
    %v4219 = vunpack.c.l.b16 %v4197
    %v4220 = vunpack.c.l.b16 %v4198
    %v4221 = vunpack.c.l.b16 %v4199
    %v4222 = vunpack.c.l.b16 %v4200
    %v4223 = vunpack.c.l.b16 %v4201
    %v4224 = vunpack.c.l.b16 %v4202
    %v4225 = vpack.c.b16 %v4216, %v4215
    %v4226 = vpack.c.b16 %v4218, %v4217
    %v4227 = vpack.c.b16 %v4220, %v4219
    %v4228 = vpack.c.b16 %v4222, %v4221
    %v4229 = vpack.c.b16 %v4224, %v4223
    %v4236 = vsel %vm1146, %v4204, 0
    %4238 = vmatprep.subr.bf16.mxu0 0
    %4239 = vmatpush1.bf16.msra.mxu0 %v4225
    %4240 = vmatprep.subr.bf16.mxu0 0
    %4241 = vmatpush1.bf16.msra.mxu0 %v4226
    %4242 = vmatprep.subr.bf16.mxu0 0
    %4243 = vmatpush1.bf16.msra.mxu0 %v4227
    %4244 = vmatprep.subr.bf16.mxu0 0
    %4245 = vmatpush1.bf16.msra.mxu0 %v4228
    %4246 = vmatprep.subr.bf16.mxu0 0
    %4247 = vmatpush1.bf16.msra.mxu0 %v4229
    %4248 = vmatprep.subr.bf16.mxu0 0
    %4249 = vmatpush1.bf16.msra.mxu0 0
    %4250 = vmatprep.subr.bf16.mxu0 0
    %4251 = vmatpush1.bf16.msra.mxu0 0
    %4252 = vmatprep.subr.bf16.mxu0 0
    %4253 = vmatpush1.bf16.msra.mxu0 0
    %4254 = vmatprep.subr.bf16.mxu0 0
    %4255 = vmatpush1.bf16.msra.mxu0 0
    %4256 = vmatprep.subr.bf16.mxu0 0
    %4257 = vmatpush1.bf16.msra.mxu0 0
    %4258 = vmatprep.subr.bf16.mxu0 0
    %4259 = vmatpush1.bf16.msra.mxu0 0
    %4260 = vmatprep.subr.bf16.mxu0 0
    %4261 = vmatpush1.bf16.msra.mxu0 0
    %4262 = vmatprep.subr.bf16.mxu0 0
    %4263 = vmatpush1.bf16.msra.mxu0 0
    %4264 = vmatprep.subr.bf16.mxu0 0
    %4265 = vmatpush1.bf16.msra.mxu0 0
    %4266 = vmatprep.subr.bf16.mxu0 0
    %4267 = vmatpush1.bf16.msra.mxu0 0
    %4268 = vmatprep.subr.bf16.mxu0 0
    %4269 = vmatpush1.bf16.msra.mxu0 0
    %4270 = vmatprep.mubr.bf16.mxu0 0
    %4271 = vmatmul.mubr.bf16.gmra.mrb[0].mxu0 %v4236
    %v4272 = vpop.f32.mrb[0].mxu0
    %v4273 = vadd.f32 0.0, %v4272
    %v4274 = vpop.f32.mrb[0].mxu0
    %v4275 = vpop.f32.mrb[0].mxu0
    %v4276 = vadd.f32 0.0, %v4275
    %v4277 = vpop.f32.mrb[0].mxu0
    %4278 = vdwg.mxu0
    %v4279 = vadd.f32 %v4106, %v4273
    %v4280 = vadd.f32 %v4107, %v4276
    %s4281 = scalar_lea.vmem [#allocation9], 720
    %v4282 = vld [vmem:[%s4281] sm:$0xf]
    %v4283 = vld [vmem:[%s4281 + $0x4] sm:$0xf]
    %v4284 = vld [vmem:[%s4281 + $0x8] sm:$0xf]
    %v4285 = vld [vmem:[%s4281 + $0xc] sm:$0xf]
    %v4286 = vld [vmem:[%s4281 + $0x10] sm:$0xf]
    %v4287 = vld [vmem:[%s4281 + $0x14] sm:$0xf]
    %v4288 = vld [vmem:[%s4281 + $0x18] sm:$0xf]
    %v4289 = vld [vmem:[%s4281 + $0x1c] sm:$0xf]
    %v4290 = vld [vmem:[%s4281 + $0x20] sm:$0xf]
    %v4291 = vld [vmem:[%s4281 + $0x24] sm:$0xf]
    %v4302 = vunpack.c.l.b16 %v4282
    %v4303 = vunpack.c.l.b16 %v4283
    %v4304 = vunpack.c.l.b16 %v4284
    %v4305 = vunpack.c.l.b16 %v4285
    %v4306 = vunpack.c.l.b16 %v4286
    %v4307 = vunpack.c.l.b16 %v4287
    %v4308 = vunpack.c.l.b16 %v4288
    %v4309 = vunpack.c.l.b16 %v4289
    %v4310 = vunpack.c.l.b16 %v4290
    %v4311 = vunpack.c.l.b16 %v4291
    %v4312 = vpack.c.b16 %v4303, %v4302
    %v4313 = vpack.c.b16 %v4305, %v4304
    %v4314 = vpack.c.b16 %v4307, %v4306
    %v4315 = vpack.c.b16 %v4309, %v4308
    %v4316 = vpack.c.b16 %v4311, %v4310
    %4322 = vmatprep.subr.bf16.mxu0 0
    %4323 = vmatpush1.bf16.msra.mxu0 %v4312
    %4324 = vmatprep.subr.bf16.mxu0 0
    %4325 = vmatpush1.bf16.msra.mxu0 %v4313
    %4326 = vmatprep.subr.bf16.mxu0 0
    %4327 = vmatpush1.bf16.msra.mxu0 %v4314
    %4328 = vmatprep.subr.bf16.mxu0 0
    %4329 = vmatpush1.bf16.msra.mxu0 %v4315
    %4330 = vmatprep.subr.bf16.mxu0 0
    %4331 = vmatpush1.bf16.msra.mxu0 %v4316
    %4332 = vmatprep.subr.bf16.mxu0 0
    %4333 = vmatpush1.bf16.msra.mxu0 0
    %4334 = vmatprep.subr.bf16.mxu0 0
    %4335 = vmatpush1.bf16.msra.mxu0 0
    %4336 = vmatprep.subr.bf16.mxu0 0
    %4337 = vmatpush1.bf16.msra.mxu0 0
    %4338 = vmatprep.subr.bf16.mxu0 0
    %4339 = vmatpush1.bf16.msra.mxu0 0
    %4340 = vmatprep.subr.bf16.mxu0 0
    %4341 = vmatpush1.bf16.msra.mxu0 0
    %4342 = vmatprep.subr.bf16.mxu0 0
    %4343 = vmatpush1.bf16.msra.mxu0 0
    %4344 = vmatprep.subr.bf16.mxu0 0
    %4345 = vmatpush1.bf16.msra.mxu0 0
    %4346 = vmatprep.subr.bf16.mxu0 0
    %4347 = vmatpush1.bf16.msra.mxu0 0
    %4348 = vmatprep.subr.bf16.mxu0 0
    %4349 = vmatpush1.bf16.msra.mxu0 0
    %4350 = vmatprep.subr.bf16.mxu0 0
    %4351 = vmatpush1.bf16.msra.mxu0 0
    %4352 = vmatprep.subr.bf16.mxu0 0
    %4353 = vmatpush1.bf16.msra.mxu0 0
    %4354 = vmatprep.mubr.bf16.mxu0 0
    %4355 = vmatmul.mubr.bf16.gmra.mrb[0].mxu0 %v4236
    %v4356 = vpop.f32.mrb[0].mxu0
    %v4357 = vadd.f32 0.0, %v4356
    %v4358 = vpop.f32.mrb[0].mxu0
    %v4359 = vpop.f32.mrb[0].mxu0
    %v4360 = vadd.f32 0.0, %v4359
    %v4361 = vpop.f32.mrb[0].mxu0
    %4362 = vdwg.mxu0
    %v4363 = vadd.f32 %v4190, %v4357
    %v4364 = vadd.f32 %v4191, %v4360
    %s4365 = scalar_lea.vmem [#allocation6], 760
    %v4366 = vld [vmem:[%s4365] sm:$0xf]
    %v4367 = vld [vmem:[%s4365 + $0x4] sm:$0xf]
    %v4368 = vld [vmem:[%s4365 + $0x8] sm:$0xf]
    %v4369 = vld [vmem:[%s4365 + $0xc] sm:$0xf]
    %v4370 = vld [vmem:[%s4365 + $0x10] sm:$0xf]
    %v4371 = vld [vmem:[%s4365 + $0x14] sm:$0xf]
    %v4372 = vld [vmem:[%s4365 + $0x18] sm:$0xf]
    %v4373 = vld [vmem:[%s4365 + $0x1c] sm:$0xf]
    %v4374 = vld [vmem:[%s4365 + $0x20] sm:$0xf]
    %v4375 = vld [vmem:[%s4365 + $0x24] sm:$0xf]
    %4376 = vrot.lane.b32.xlu0 %v3673, 88
    %v4377 = vpop.permute.xlu0 %4376
    %v4388 = vunpack.c.l.b16 %v4366
    %v4389 = vunpack.c.l.b16 %v4367
    %v4390 = vunpack.c.l.b16 %v4368
    %v4391 = vunpack.c.l.b16 %v4369
    %v4392 = vunpack.c.l.b16 %v4370
    %v4393 = vunpack.c.l.b16 %v4371
    %v4394 = vunpack.c.l.b16 %v4372
    %v4395 = vunpack.c.l.b16 %v4373
    %v4396 = vunpack.c.l.b16 %v4374
    %v4397 = vunpack.c.l.b16 %v4375
    %v4398 = vpack.c.b16 %v4389, %v4388
    %v4399 = vpack.c.b16 %v4391, %v4390
    %v4400 = vpack.c.b16 %v4393, %v4392
    %v4401 = vpack.c.b16 %v4395, %v4394
    %v4402 = vpack.c.b16 %v4397, %v4396
    %v4409 = vsel %vm1146, %v4377, 0
    %4411 = vmatprep.subr.bf16.mxu0 0
    %4412 = vmatpush1.bf16.msra.mxu0 %v4398
    %4413 = vmatprep.subr.bf16.mxu0 0
    %4414 = vmatpush1.bf16.msra.mxu0 %v4399
    %4415 = vmatprep.subr.bf16.mxu0 0
    %4416 = vmatpush1.bf16.msra.mxu0 %v4400
    %4417 = vmatprep.subr.bf16.mxu0 0
    %4418 = vmatpush1.bf16.msra.mxu0 %v4401
    %4419 = vmatprep.subr.bf16.mxu0 0
    %4420 = vmatpush1.bf16.msra.mxu0 %v4402
    %4421 = vmatprep.subr.bf16.mxu0 0
    %4422 = vmatpush1.bf16.msra.mxu0 0
    %4423 = vmatprep.subr.bf16.mxu0 0
    %4424 = vmatpush1.bf16.msra.mxu0 0
    %4425 = vmatprep.subr.bf16.mxu0 0
    %4426 = vmatpush1.bf16.msra.mxu0 0
    %4427 = vmatprep.subr.bf16.mxu0 0
    %4428 = vmatpush1.bf16.msra.mxu0 0
    %4429 = vmatprep.subr.bf16.mxu0 0
    %4430 = vmatpush1.bf16.msra.mxu0 0
    %4431 = vmatprep.subr.bf16.mxu0 0
    %4432 = vmatpush1.bf16.msra.mxu0 0
    %4433 = vmatprep.subr.bf16.mxu0 0
    %4434 = vmatpush1.bf16.msra.mxu0 0
    %4435 = vmatprep.subr.bf16.mxu0 0
    %4436 = vmatpush1.bf16.msra.mxu0 0
    %4437 = vmatprep.subr.bf16.mxu0 0
    %4438 = vmatpush1.bf16.msra.mxu0 0
    %4439 = vmatprep.subr.bf16.mxu0 0
    %4440 = vmatpush1.bf16.msra.mxu0 0
    %4441 = vmatprep.subr.bf16.mxu0 0
    %4442 = vmatpush1.bf16.msra.mxu0 0
    %4443 = vmatprep.mubr.bf16.mxu0 0
    %4444 = vmatmul.mubr.bf16.gmra.mrb[0].mxu0 %v4409
    %v4445 = vpop.f32.mrb[0].mxu0
    %v4446 = vadd.f32 0.0, %v4445
    %v4447 = vpop.f32.mrb[0].mxu0
    %v4448 = vpop.f32.mrb[0].mxu0
    %v4449 = vadd.f32 0.0, %v4448
    %v4450 = vpop.f32.mrb[0].mxu0
    %4451 = vdwg.mxu0
    %v4452 = vadd.f32 %v4279, %v4446
    %v4453 = vadd.f32 %v4280, %v4449
    %s4454 = scalar_lea.vmem [#allocation9], 760
    %v4455 = vld [vmem:[%s4454] sm:$0xf]
    %v4456 = vld [vmem:[%s4454 + $0x4] sm:$0xf]
    %v4457 = vld [vmem:[%s4454 + $0x8] sm:$0xf]
    %v4458 = vld [vmem:[%s4454 + $0xc] sm:$0xf]
    %v4459 = vld [vmem:[%s4454 + $0x10] sm:$0xf]
    %v4460 = vld [vmem:[%s4454 + $0x14] sm:$0xf]
    %v4461 = vld [vmem:[%s4454 + $0x18] sm:$0xf]
    %v4462 = vld [vmem:[%s4454 + $0x1c] sm:$0xf]
    %v4463 = vld [vmem:[%s4454 + $0x20] sm:$0xf]
    %v4464 = vld [vmem:[%s4454 + $0x24] sm:$0xf]
    %v4475 = vunpack.c.l.b16 %v4455
    %v4476 = vunpack.c.l.b16 %v4456
    %v4477 = vunpack.c.l.b16 %v4457
    %v4478 = vunpack.c.l.b16 %v4458
    %v4479 = vunpack.c.l.b16 %v4459
    %v4480 = vunpack.c.l.b16 %v4460
    %v4481 = vunpack.c.l.b16 %v4461
    %v4482 = vunpack.c.l.b16 %v4462
    %v4483 = vunpack.c.l.b16 %v4463
    %v4484 = vunpack.c.l.b16 %v4464
    %v4485 = vpack.c.b16 %v4476, %v4475
    %v4486 = vpack.c.b16 %v4478, %v4477
    %v4487 = vpack.c.b16 %v4480, %v4479
    %v4488 = vpack.c.b16 %v4482, %v4481
    %v4489 = vpack.c.b16 %v4484, %v4483
    %4495 = vmatprep.subr.bf16.mxu0 0
    %4496 = vmatpush1.bf16.msra.mxu0 %v4485
    %4497 = vmatprep.subr.bf16.mxu0 0
    %4498 = vmatpush1.bf16.msra.mxu0 %v4486
    %4499 = vmatprep.subr.bf16.mxu0 0
    %4500 = vmatpush1.bf16.msra.mxu0 %v4487
    %4501 = vmatprep.subr.bf16.mxu0 0
    %4502 = vmatpush1.bf16.msra.mxu0 %v4488
    %4503 = vmatprep.subr.bf16.mxu0 0
    %4504 = vmatpush1.bf16.msra.mxu0 %v4489
    %4505 = vmatprep.subr.bf16.mxu0 0
    %4506 = vmatpush1.bf16.msra.mxu0 0
    %4507 = vmatprep.subr.bf16.mxu0 0
    %4508 = vmatpush1.bf16.msra.mxu0 0
    %4509 = vmatprep.subr.bf16.mxu0 0
    %4510 = vmatpush1.bf16.msra.mxu0 0
    %4511 = vmatprep.subr.bf16.mxu0 0
    %4512 = vmatpush1.bf16.msra.mxu0 0
    %4513 = vmatprep.subr.bf16.mxu0 0
    %4514 = vmatpush1.bf16.msra.mxu0 0
    %4515 = vmatprep.subr.bf16.mxu0 0
    %4516 = vmatpush1.bf16.msra.mxu0 0
    %4517 = vmatprep.subr.bf16.mxu0 0
    %4518 = vmatpush1.bf16.msra.mxu0 0
    %4519 = vmatprep.subr.bf16.mxu0 0
    %4520 = vmatpush1.bf16.msra.mxu0 0
    %4521 = vmatprep.subr.bf16.mxu0 0
    %4522 = vmatpush1.bf16.msra.mxu0 0
    %4523 = vmatprep.subr.bf16.mxu0 0
    %4524 = vmatpush1.bf16.msra.mxu0 0
    %4525 = vmatprep.subr.bf16.mxu0 0
    %4526 = vmatpush1.bf16.msra.mxu0 0
    %4527 = vmatprep.mubr.bf16.mxu0 0
    %4528 = vmatmul.mubr.bf16.gmra.mrb[0].mxu0 %v4409
    %v4529 = vpop.f32.mrb[0].mxu0
    %v4530 = vadd.f32 0.0, %v4529
    %v4531 = vpop.f32.mrb[0].mxu0
    %v4532 = vpop.f32.mrb[0].mxu0
    %v4533 = vadd.f32 0.0, %v4532
    %v4534 = vpop.f32.mrb[0].mxu0
    %4535 = vdwg.mxu0
    %v4536 = vadd.f32 %v4363, %v4530
    %v4537 = vadd.f32 %v4364, %v4533
    %v4538 = vld [vmem:[#allocation3 + $0x4] sm:$0xff]
    %v4539 = vld [vmem:[#allocation3 + $0x14] sm:$0xff]
    %v4540 = vpack.c.bf16 %v4539, %v4538
    %s4541 = scalar_lea.vmem [#allocation6], 800
    %v4542 = vld [vmem:[%s4541] sm:$0xf]
    %v4543 = vld [vmem:[%s4541 + $0x4] sm:$0xf]
    %v4544 = vld [vmem:[%s4541 + $0x8] sm:$0xf]
    %v4545 = vld [vmem:[%s4541 + $0xc] sm:$0xf]
    %v4546 = vld [vmem:[%s4541 + $0x10] sm:$0xf]
    %v4547 = vld [vmem:[%s4541 + $0x14] sm:$0xf]
    %v4548 = vld [vmem:[%s4541 + $0x18] sm:$0xf]
    %v4549 = vld [vmem:[%s4541 + $0x1c] sm:$0xf]
    %v4550 = vld [vmem:[%s4541 + $0x20] sm:$0xf]
    %v4551 = vld [vmem:[%s4541 + $0x24] sm:$0xf]
    %v4562 = vunpack.c.l.b16 %v4542
    %v4563 = vunpack.c.l.b16 %v4543
    %v4564 = vunpack.c.l.b16 %v4544
    %v4565 = vunpack.c.l.b16 %v4545
    %v4566 = vunpack.c.l.b16 %v4546
    %v4567 = vunpack.c.l.b16 %v4547
    %v4568 = vunpack.c.l.b16 %v4548
    %v4569 = vunpack.c.l.b16 %v4549
    %v4570 = vunpack.c.l.b16 %v4550
    %v4571 = vunpack.c.l.b16 %v4551
    %v4572 = vpack.c.b16 %v4563, %v4562
    %v4573 = vpack.c.b16 %v4565, %v4564
    %v4574 = vpack.c.b16 %v4567, %v4566
    %v4575 = vpack.c.b16 %v4569, %v4568
    %v4576 = vpack.c.b16 %v4571, %v4570
    %v4583 = vsel %vm1146, %v4540, 0
    %4585 = vmatprep.subr.bf16.mxu0 0
    %4586 = vmatpush1.bf16.msra.mxu0 %v4572
    %4587 = vmatprep.subr.bf16.mxu0 0
    %4588 = vmatpush1.bf16.msra.mxu0 %v4573
    %4589 = vmatprep.subr.bf16.mxu0 0
    %4590 = vmatpush1.bf16.msra.mxu0 %v4574
    %4591 = vmatprep.subr.bf16.mxu0 0
    %4592 = vmatpush1.bf16.msra.mxu0 %v4575
    %4593 = vmatprep.subr.bf16.mxu0 0
    %4594 = vmatpush1.bf16.msra.mxu0 %v4576
    %4595 = vmatprep.subr.bf16.mxu0 0
    %4596 = vmatpush1.bf16.msra.mxu0 0
    %4597 = vmatprep.subr.bf16.mxu0 0
    %4598 = vmatpush1.bf16.msra.mxu0 0
    %4599 = vmatprep.subr.bf16.mxu0 0
    %4600 = vmatpush1.bf16.msra.mxu0 0
    %4601 = vmatprep.subr.bf16.mxu0 0
    %4602 = vmatpush1.bf16.msra.mxu0 0
    %4603 = vmatprep.subr.bf16.mxu0 0
    %4604 = vmatpush1.bf16.msra.mxu0 0
    %4605 = vmatprep.subr.bf16.mxu0 0
    %4606 = vmatpush1.bf16.msra.mxu0 0
    %4607 = vmatprep.subr.bf16.mxu0 0
    %4608 = vmatpush1.bf16.msra.mxu0 0
    %4609 = vmatprep.subr.bf16.mxu0 0
    %4610 = vmatpush1.bf16.msra.mxu0 0
    %4611 = vmatprep.subr.bf16.mxu0 0
    %4612 = vmatpush1.bf16.msra.mxu0 0
    %4613 = vmatprep.subr.bf16.mxu0 0
    %4614 = vmatpush1.bf16.msra.mxu0 0
    %4615 = vmatprep.subr.bf16.mxu0 0
    %4616 = vmatpush1.bf16.msra.mxu0 0
    %4617 = vmatprep.mubr.bf16.mxu0 0
    %4618 = vmatmul.mubr.bf16.gmra.mrb[0].mxu0 %v4583
    %v4619 = vpop.f32.mrb[0].mxu0
    %v4620 = vadd.f32 0.0, %v4619
    %v4621 = vpop.f32.mrb[0].mxu0
    %v4622 = vpop.f32.mrb[0].mxu0
    %v4623 = vadd.f32 0.0, %v4622
    %v4624 = vpop.f32.mrb[0].mxu0
    %4625 = vdwg.mxu0
    %v4626 = vadd.f32 %v4452, %v4620
    %v4627 = vadd.f32 %v4453, %v4623
    %s4628 = scalar_lea.vmem [#allocation9], 800
    %v4629 = vld [vmem:[%s4628] sm:$0xf]
    %v4630 = vld [vmem:[%s4628 + $0x4] sm:$0xf]
    %v4631 = vld [vmem:[%s4628 + $0x8] sm:$0xf]
    %v4632 = vld [vmem:[%s4628 + $0xc] sm:$0xf]
    %v4633 = vld [vmem:[%s4628 + $0x10] sm:$0xf]
    %v4634 = vld [vmem:[%s4628 + $0x14] sm:$0xf]
    %v4635 = vld [vmem:[%s4628 + $0x18] sm:$0xf]
    %v4636 = vld [vmem:[%s4628 + $0x1c] sm:$0xf]
    %v4637 = vld [vmem:[%s4628 + $0x20] sm:$0xf]
    %v4638 = vld [vmem:[%s4628 + $0x24] sm:$0xf]
    %v4649 = vunpack.c.l.b16 %v4629
    %v4650 = vunpack.c.l.b16 %v4630
    %v4651 = vunpack.c.l.b16 %v4631
    %v4652 = vunpack.c.l.b16 %v4632
    %v4653 = vunpack.c.l.b16 %v4633
    %v4654 = vunpack.c.l.b16 %v4634
    %v4655 = vunpack.c.l.b16 %v4635
    %v4656 = vunpack.c.l.b16 %v4636
    %v4657 = vunpack.c.l.b16 %v4637
    %v4658 = vunpack.c.l.b16 %v4638
    %v4659 = vpack.c.b16 %v4650, %v4649
    %v4660 = vpack.c.b16 %v4652, %v4651
    %v4661 = vpack.c.b16 %v4654, %v4653
    %v4662 = vpack.c.b16 %v4656, %v4655
    %v4663 = vpack.c.b16 %v4658, %v4657
    %4669 = vmatprep.subr.bf16.mxu0 0
    %4670 = vmatpush1.bf16.msra.mxu0 %v4659
    %4671 = vmatprep.subr.bf16.mxu0 0
    %4672 = vmatpush1.bf16.msra.mxu0 %v4660
    %4673 = vmatprep.subr.bf16.mxu0 0
    %4674 = vmatpush1.bf16.msra.mxu0 %v4661
    %4675 = vmatprep.subr.bf16.mxu0 0
    %4676 = vmatpush1.bf16.msra.mxu0 %v4662
    %4677 = vmatprep.subr.bf16.mxu0 0
    %4678 = vmatpush1.bf16.msra.mxu0 %v4663
    %4679 = vmatprep.subr.bf16.mxu0 0
    %4680 = vmatpush1.bf16.msra.mxu0 0
    %4681 = vmatprep.subr.bf16.mxu0 0
    %4682 = vmatpush1.bf16.msra.mxu0 0
    %4683 = vmatprep.subr.bf16.mxu0 0
    %4684 = vmatpush1.bf16.msra.mxu0 0
    %4685 = vmatprep.subr.bf16.mxu0 0
    %4686 = vmatpush1.bf16.msra.mxu0 0
    %4687 = vmatprep.subr.bf16.mxu0 0
    %4688 = vmatpush1.bf16.msra.mxu0 0
    %4689 = vmatprep.subr.bf16.mxu0 0
    %4690 = vmatpush1.bf16.msra.mxu0 0
    %4691 = vmatprep.subr.bf16.mxu0 0
    %4692 = vmatpush1.bf16.msra.mxu0 0
    %4693 = vmatprep.subr.bf16.mxu0 0
    %4694 = vmatpush1.bf16.msra.mxu0 0
    %4695 = vmatprep.subr.bf16.mxu0 0
    %4696 = vmatpush1.bf16.msra.mxu0 0
    %4697 = vmatprep.subr.bf16.mxu0 0
    %4698 = vmatpush1.bf16.msra.mxu0 0
    %4699 = vmatprep.subr.bf16.mxu0 0
    %4700 = vmatpush1.bf16.msra.mxu0 0
    %4701 = vmatprep.mubr.bf16.mxu0 0
    %4702 = vmatmul.mubr.bf16.gmra.mrb[0].mxu0 %v4583
    %v4703 = vpop.f32.mrb[0].mxu0
    %v4704 = vadd.f32 0.0, %v4703
    %v4705 = vpop.f32.mrb[0].mxu0
    %v4706 = vpop.f32.mrb[0].mxu0
    %v4707 = vadd.f32 0.0, %v4706
    %v4708 = vpop.f32.mrb[0].mxu0
    %4709 = vdwg.mxu0
    %v4710 = vadd.f32 %v4536, %v4704
    %v4711 = vadd.f32 %v4537, %v4707
    %s4712 = scalar_lea.vmem [#allocation6], 840
    %v4713 = vld [vmem:[%s4712] sm:$0xf]
    %v4714 = vld [vmem:[%s4712 + $0x4] sm:$0xf]
    %v4715 = vld [vmem:[%s4712 + $0x8] sm:$0xf]
    %v4716 = vld [vmem:[%s4712 + $0xc] sm:$0xf]
    %v4717 = vld [vmem:[%s4712 + $0x10] sm:$0xf]
    %v4718 = vld [vmem:[%s4712 + $0x14] sm:$0xf]
    %v4719 = vld [vmem:[%s4712 + $0x18] sm:$0xf]
    %v4720 = vld [vmem:[%s4712 + $0x1c] sm:$0xf]
    %v4721 = vld [vmem:[%s4712 + $0x20] sm:$0xf]
    %v4722 = vld [vmem:[%s4712 + $0x24] sm:$0xf]
    %4724 = vrot.lane.b32.xlu0 %v4540, 118
    %v4725 = vpop.permute.xlu0 %4724
    %v4736 = vunpack.c.l.b16 %v4713
    %v4737 = vunpack.c.l.b16 %v4714
    %v4738 = vunpack.c.l.b16 %v4715
    %v4739 = vunpack.c.l.b16 %v4716
    %v4740 = vunpack.c.l.b16 %v4717
    %v4741 = vunpack.c.l.b16 %v4718
    %v4742 = vunpack.c.l.b16 %v4719
    %v4743 = vunpack.c.l.b16 %v4720
    %v4744 = vunpack.c.l.b16 %v4721
    %v4745 = vunpack.c.l.b16 %v4722
    %v4746 = vpack.c.b16 %v4737, %v4736
    %v4747 = vpack.c.b16 %v4739, %v4738
    %v4748 = vpack.c.b16 %v4741, %v4740
    %v4749 = vpack.c.b16 %v4743, %v4742
    %v4750 = vpack.c.b16 %v4745, %v4744
    %v4757 = vsel %vm1146, %v4725, 0
    %4759 = vmatprep.subr.bf16.mxu0 0
    %4760 = vmatpush1.bf16.msra.mxu0 %v4746
    %4761 = vmatprep.subr.bf16.mxu0 0
    %4762 = vmatpush1.bf16.msra.mxu0 %v4747
    %4763 = vmatprep.subr.bf16.mxu0 0
    %4764 = vmatpush1.bf16.msra.mxu0 %v4748
    %4765 = vmatprep.subr.bf16.mxu0 0
    %4766 = vmatpush1.bf16.msra.mxu0 %v4749
    %4767 = vmatprep.subr.bf16.mxu0 0
    %4768 = vmatpush1.bf16.msra.mxu0 %v4750
    %4769 = vmatprep.subr.bf16.mxu0 0
    %4770 = vmatpush1.bf16.msra.mxu0 0
    %4771 = vmatprep.subr.bf16.mxu0 0
    %4772 = vmatpush1.bf16.msra.mxu0 0
    %4773 = vmatprep.subr.bf16.mxu0 0
    %4774 = vmatpush1.bf16.msra.mxu0 0
    %4775 = vmatprep.subr.bf16.mxu0 0
    %4776 = vmatpush1.bf16.msra.mxu0 0
    %4777 = vmatprep.subr.bf16.mxu0 0
    %4778 = vmatpush1.bf16.msra.mxu0 0
    %4779 = vmatprep.subr.bf16.mxu0 0
    %4780 = vmatpush1.bf16.msra.mxu0 0
    %4781 = vmatprep.subr.bf16.mxu0 0
    %4782 = vmatpush1.bf16.msra.mxu0 0
    %4783 = vmatprep.subr.bf16.mxu0 0
    %4784 = vmatpush1.bf16.msra.mxu0 0
    %4785 = vmatprep.subr.bf16.mxu0 0
    %4786 = vmatpush1.bf16.msra.mxu0 0
    %4787 = vmatprep.subr.bf16.mxu0 0
    %4788 = vmatpush1.bf16.msra.mxu0 0
    %4789 = vmatprep.subr.bf16.mxu0 0
    %4790 = vmatpush1.bf16.msra.mxu0 0
    %4791 = vmatprep.mubr.bf16.mxu0 0
    %4792 = vmatmul.mubr.bf16.gmra.mrb[0].mxu0 %v4757
    %v4793 = vpop.f32.mrb[0].mxu0
    %v4794 = vadd.f32 0.0, %v4793
    %v4795 = vpop.f32.mrb[0].mxu0
    %v4796 = vpop.f32.mrb[0].mxu0
    %v4797 = vadd.f32 0.0, %v4796
    %v4798 = vpop.f32.mrb[0].mxu0
    %4799 = vdwg.mxu0
    %v4800 = vadd.f32 %v4626, %v4794
    %v4801 = vadd.f32 %v4627, %v4797
    %s4802 = scalar_lea.vmem [#allocation9], 840
    %v4803 = vld [vmem:[%s4802] sm:$0xf]
    %v4804 = vld [vmem:[%s4802 + $0x4] sm:$0xf]
    %v4805 = vld [vmem:[%s4802 + $0x8] sm:$0xf]
    %v4806 = vld [vmem:[%s4802 + $0xc] sm:$0xf]
    %v4807 = vld [vmem:[%s4802 + $0x10] sm:$0xf]
    %v4808 = vld [vmem:[%s4802 + $0x14] sm:$0xf]
    %v4809 = vld [vmem:[%s4802 + $0x18] sm:$0xf]
    %v4810 = vld [vmem:[%s4802 + $0x1c] sm:$0xf]
    %v4811 = vld [vmem:[%s4802 + $0x20] sm:$0xf]
    %v4812 = vld [vmem:[%s4802 + $0x24] sm:$0xf]
    %v4823 = vunpack.c.l.b16 %v4803
    %v4824 = vunpack.c.l.b16 %v4804
    %v4825 = vunpack.c.l.b16 %v4805
    %v4826 = vunpack.c.l.b16 %v4806
    %v4827 = vunpack.c.l.b16 %v4807
    %v4828 = vunpack.c.l.b16 %v4808
    %v4829 = vunpack.c.l.b16 %v4809
    %v4830 = vunpack.c.l.b16 %v4810
    %v4831 = vunpack.c.l.b16 %v4811
    %v4832 = vunpack.c.l.b16 %v4812
    %v4833 = vpack.c.b16 %v4824, %v4823
    %v4834 = vpack.c.b16 %v4826, %v4825
    %v4835 = vpack.c.b16 %v4828, %v4827
    %v4836 = vpack.c.b16 %v4830, %v4829
    %v4837 = vpack.c.b16 %v4832, %v4831
    %4843 = vmatprep.subr.bf16.mxu0 0
    %4844 = vmatpush1.bf16.msra.mxu0 %v4833
    %4845 = vmatprep.subr.bf16.mxu0 0
    %4846 = vmatpush1.bf16.msra.mxu0 %v4834
    %4847 = vmatprep.subr.bf16.mxu0 0
    %4848 = vmatpush1.bf16.msra.mxu0 %v4835
    %4849 = vmatprep.subr.bf16.mxu0 0
    %4850 = vmatpush1.bf16.msra.mxu0 %v4836
    %4851 = vmatprep.subr.bf16.mxu0 0
    %4852 = vmatpush1.bf16.msra.mxu0 %v4837
    %4853 = vmatprep.subr.bf16.mxu0 0
    %4854 = vmatpush1.bf16.msra.mxu0 0
    %4855 = vmatprep.subr.bf16.mxu0 0
    %4856 = vmatpush1.bf16.msra.mxu0 0
    %4857 = vmatprep.subr.bf16.mxu0 0
    %4858 = vmatpush1.bf16.msra.mxu0 0
    %4859 = vmatprep.subr.bf16.mxu0 0
    %4860 = vmatpush1.bf16.msra.mxu0 0
    %4861 = vmatprep.subr.bf16.mxu0 0
    %4862 = vmatpush1.bf16.msra.mxu0 0
    %4863 = vmatprep.subr.bf16.mxu0 0
    %4864 = vmatpush1.bf16.msra.mxu0 0
    %4865 = vmatprep.subr.bf16.mxu0 0
    %4866 = vmatpush1.bf16.msra.mxu0 0
    %4867 = vmatprep.subr.bf16.mxu0 0
    %4868 = vmatpush1.bf16.msra.mxu0 0
    %4869 = vmatprep.subr.bf16.mxu0 0
    %4870 = vmatpush1.bf16.msra.mxu0 0
    %4871 = vmatprep.subr.bf16.mxu0 0
    %4872 = vmatpush1.bf16.msra.mxu0 0
    %4873 = vmatprep.subr.bf16.mxu0 0
    %4874 = vmatpush1.bf16.msra.mxu0 0
    %4875 = vmatprep.mubr.bf16.mxu0 0
    %4876 = vmatmul.mubr.bf16.gmra.mrb[0].mxu0 %v4757
    %v4877 = vpop.f32.mrb[0].mxu0
    %v4878 = vadd.f32 0.0, %v4877
    %v4879 = vpop.f32.mrb[0].mxu0
    %v4880 = vpop.f32.mrb[0].mxu0
    %v4881 = vadd.f32 0.0, %v4880
    %v4882 = vpop.f32.mrb[0].mxu0
    %4883 = vdwg.mxu0
    %v4884 = vadd.f32 %v4710, %v4878
    %v4885 = vadd.f32 %v4711, %v4881
    %s4886 = scalar_lea.vmem [#allocation6], 880
    %v4887 = vld [vmem:[%s4886] sm:$0xf]
    %v4888 = vld [vmem:[%s4886 + $0x4] sm:$0xf]
    %v4889 = vld [vmem:[%s4886 + $0x8] sm:$0xf]
    %v4890 = vld [vmem:[%s4886 + $0xc] sm:$0xf]
    %v4891 = vld [vmem:[%s4886 + $0x10] sm:$0xf]
    %v4892 = vld [vmem:[%s4886 + $0x14] sm:$0xf]
    %v4893 = vld [vmem:[%s4886 + $0x18] sm:$0xf]
    %v4894 = vld [vmem:[%s4886 + $0x1c] sm:$0xf]
    %v4895 = vld [vmem:[%s4886 + $0x20] sm:$0xf]
    %v4896 = vld [vmem:[%s4886 + $0x24] sm:$0xf]
    %4897 = vrot.lane.b32.xlu0 %v4540, 108
    %v4898 = vpop.permute.xlu0 %4897
    %v4909 = vunpack.c.l.b16 %v4887
    %v4910 = vunpack.c.l.b16 %v4888
    %v4911 = vunpack.c.l.b16 %v4889
    %v4912 = vunpack.c.l.b16 %v4890
    %v4913 = vunpack.c.l.b16 %v4891
    %v4914 = vunpack.c.l.b16 %v4892
    %v4915 = vunpack.c.l.b16 %v4893
    %v4916 = vunpack.c.l.b16 %v4894
    %v4917 = vunpack.c.l.b16 %v4895
    %v4918 = vunpack.c.l.b16 %v4896
    %v4919 = vpack.c.b16 %v4910, %v4909
    %v4920 = vpack.c.b16 %v4912, %v4911
    %v4921 = vpack.c.b16 %v4914, %v4913
    %v4922 = vpack.c.b16 %v4916, %v4915
    %v4923 = vpack.c.b16 %v4918, %v4917
    %v4930 = vsel %vm1146, %v4898, 0
    %4932 = vmatprep.subr.bf16.mxu0 0
    %4933 = vmatpush1.bf16.msra.mxu0 %v4919
    %4934 = vmatprep.subr.bf16.mxu0 0
    %4935 = vmatpush1.bf16.msra.mxu0 %v4920
    %4936 = vmatprep.subr.bf16.mxu0 0
    %4937 = vmatpush1.bf16.msra.mxu0 %v4921
    %4938 = vmatprep.subr.bf16.mxu0 0
    %4939 = vmatpush1.bf16.msra.mxu0 %v4922
    %4940 = vmatprep.subr.bf16.mxu0 0
    %4941 = vmatpush1.bf16.msra.mxu0 %v4923
    %4942 = vmatprep.subr.bf16.mxu0 0
    %4943 = vmatpush1.bf16.msra.mxu0 0
    %4944 = vmatprep.subr.bf16.mxu0 0
    %4945 = vmatpush1.bf16.msra.mxu0 0
    %4946 = vmatprep.subr.bf16.mxu0 0
    %4947 = vmatpush1.bf16.msra.mxu0 0
    %4948 = vmatprep.subr.bf16.mxu0 0
    %4949 = vmatpush1.bf16.msra.mxu0 0
    %4950 = vmatprep.subr.bf16.mxu0 0
    %4951 = vmatpush1.bf16.msra.mxu0 0
    %4952 = vmatprep.subr.bf16.mxu0 0
    %4953 = vmatpush1.bf16.msra.mxu0 0
    %4954 = vmatprep.subr.bf16.mxu0 0
    %4955 = vmatpush1.bf16.msra.mxu0 0
    %4956 = vmatprep.subr.bf16.mxu0 0
    %4957 = vmatpush1.bf16.msra.mxu0 0
    %4958 = vmatprep.subr.bf16.mxu0 0
    %4959 = vmatpush1.bf16.msra.mxu0 0
    %4960 = vmatprep.subr.bf16.mxu0 0
    %4961 = vmatpush1.bf16.msra.mxu0 0
    %4962 = vmatprep.subr.bf16.mxu0 0
    %4963 = vmatpush1.bf16.msra.mxu0 0
    %4964 = vmatprep.mubr.bf16.mxu0 0
    %4965 = vmatmul.mubr.bf16.gmra.mrb[0].mxu0 %v4930
    %v4966 = vpop.f32.mrb[0].mxu0
    %v4967 = vadd.f32 0.0, %v4966
    %v4968 = vpop.f32.mrb[0].mxu0
    %v4969 = vpop.f32.mrb[0].mxu0
    %v4970 = vadd.f32 0.0, %v4969
    %v4971 = vpop.f32.mrb[0].mxu0
    %4972 = vdwg.mxu0
    %v4973 = vadd.f32 %v4800, %v4967
    %v4974 = vadd.f32 %v4801, %v4970
    %s4975 = scalar_lea.vmem [#allocation9], 880
    %v4976 = vld [vmem:[%s4975] sm:$0xf]
    %v4977 = vld [vmem:[%s4975 + $0x4] sm:$0xf]
    %v4978 = vld [vmem:[%s4975 + $0x8] sm:$0xf]
    %v4979 = vld [vmem:[%s4975 + $0xc] sm:$0xf]
    %v4980 = vld [vmem:[%s4975 + $0x10] sm:$0xf]
    %v4981 = vld [vmem:[%s4975 + $0x14] sm:$0xf]
    %v4982 = vld [vmem:[%s4975 + $0x18] sm:$0xf]
    %v4983 = vld [vmem:[%s4975 + $0x1c] sm:$0xf]
    %v4984 = vld [vmem:[%s4975 + $0x20] sm:$0xf]
    %v4985 = vld [vmem:[%s4975 + $0x24] sm:$0xf]
    %v4996 = vunpack.c.l.b16 %v4976
    %v4997 = vunpack.c.l.b16 %v4977
    %v4998 = vunpack.c.l.b16 %v4978
    %v4999 = vunpack.c.l.b16 %v4979
    %v5000 = vunpack.c.l.b16 %v4980
    %v5001 = vunpack.c.l.b16 %v4981
    %v5002 = vunpack.c.l.b16 %v4982
    %v5003 = vunpack.c.l.b16 %v4983
    %v5004 = vunpack.c.l.b16 %v4984
    %v5005 = vunpack.c.l.b16 %v4985
    %v5006 = vpack.c.b16 %v4997, %v4996
    %v5007 = vpack.c.b16 %v4999, %v4998
    %v5008 = vpack.c.b16 %v5001, %v5000
    %v5009 = vpack.c.b16 %v5003, %v5002
    %v5010 = vpack.c.b16 %v5005, %v5004
    %5016 = vmatprep.subr.bf16.mxu0 0
    %5017 = vmatpush1.bf16.msra.mxu0 %v5006
    %5018 = vmatprep.subr.bf16.mxu0 0
    %5019 = vmatpush1.bf16.msra.mxu0 %v5007
    %5020 = vmatprep.subr.bf16.mxu0 0
    %5021 = vmatpush1.bf16.msra.mxu0 %v5008
    %5022 = vmatprep.subr.bf16.mxu0 0
    %5023 = vmatpush1.bf16.msra.mxu0 %v5009
    %5024 = vmatprep.subr.bf16.mxu0 0
    %5025 = vmatpush1.bf16.msra.mxu0 %v5010
    %5026 = vmatprep.subr.bf16.mxu0 0
    %5027 = vmatpush1.bf16.msra.mxu0 0
    %5028 = vmatprep.subr.bf16.mxu0 0
    %5029 = vmatpush1.bf16.msra.mxu0 0
    %5030 = vmatprep.subr.bf16.mxu0 0
    %5031 = vmatpush1.bf16.msra.mxu0 0
    %5032 = vmatprep.subr.bf16.mxu0 0
    %5033 = vmatpush1.bf16.msra.mxu0 0
    %5034 = vmatprep.subr.bf16.mxu0 0
    %5035 = vmatpush1.bf16.msra.mxu0 0
    %5036 = vmatprep.subr.bf16.mxu0 0
    %5037 = vmatpush1.bf16.msra.mxu0 0
    %5038 = vmatprep.subr.bf16.mxu0 0
    %5039 = vmatpush1.bf16.msra.mxu0 0
    %5040 = vmatprep.subr.bf16.mxu0 0
    %5041 = vmatpush1.bf16.msra.mxu0 0
    %5042 = vmatprep.subr.bf16.mxu0 0
    %5043 = vmatpush1.bf16.msra.mxu0 0
    %5044 = vmatprep.subr.bf16.mxu0 0
    %5045 = vmatpush1.bf16.msra.mxu0 0
    %5046 = vmatprep.subr.bf16.mxu0 0
    %5047 = vmatpush1.bf16.msra.mxu0 0
    %5048 = vmatprep.mubr.bf16.mxu0 0
    %5049 = vmatmul.mubr.bf16.gmra.mrb[0].mxu0 %v4930
    %v5050 = vpop.f32.mrb[0].mxu0
    %v5051 = vadd.f32 0.0, %v5050
    %v5052 = vpop.f32.mrb[0].mxu0
    %v5053 = vpop.f32.mrb[0].mxu0
    %v5054 = vadd.f32 0.0, %v5053
    %v5055 = vpop.f32.mrb[0].mxu0
    %5056 = vdwg.mxu0
    %v5057 = vadd.f32 %v4884, %v5051
    %v5058 = vadd.f32 %v4885, %v5054
    %s5059 = scalar_lea.vmem [#allocation6], 920
    %v5060 = vld [vmem:[%s5059] sm:$0xf]
    %v5061 = vld [vmem:[%s5059 + $0x4] sm:$0xf]
    %v5062 = vld [vmem:[%s5059 + $0x8] sm:$0xf]
    %v5063 = vld [vmem:[%s5059 + $0xc] sm:$0xf]
    %v5064 = vld [vmem:[%s5059 + $0x10] sm:$0xf]
    %v5065 = vld [vmem:[%s5059 + $0x14] sm:$0xf]
    %v5066 = vld [vmem:[%s5059 + $0x18] sm:$0xf]
    %v5067 = vld [vmem:[%s5059 + $0x1c] sm:$0xf]
    %v5068 = vld [vmem:[%s5059 + $0x20] sm:$0xf]
    %v5069 = vld [vmem:[%s5059 + $0x24] sm:$0xf]
    %5070 = vrot.lane.b32.xlu0 %v4540, 98
    %v5071 = vpop.permute.xlu0 %5070
    %v5082 = vunpack.c.l.b16 %v5060
    %v5083 = vunpack.c.l.b16 %v5061
    %v5084 = vunpack.c.l.b16 %v5062
    %v5085 = vunpack.c.l.b16 %v5063
    %v5086 = vunpack.c.l.b16 %v5064
    %v5087 = vunpack.c.l.b16 %v5065
    %v5088 = vunpack.c.l.b16 %v5066
    %v5089 = vunpack.c.l.b16 %v5067
    %v5090 = vunpack.c.l.b16 %v5068
    %v5091 = vunpack.c.l.b16 %v5069
    %v5092 = vpack.c.b16 %v5083, %v5082
    %v5093 = vpack.c.b16 %v5085, %v5084
    %v5094 = vpack.c.b16 %v5087, %v5086
    %v5095 = vpack.c.b16 %v5089, %v5088
    %v5096 = vpack.c.b16 %v5091, %v5090
    %v5103 = vsel %vm1146, %v5071, 0
    %5105 = vmatprep.subr.bf16.mxu0 0
    %5106 = vmatpush1.bf16.msra.mxu0 %v5092
    %5107 = vmatprep.subr.bf16.mxu0 0
    %5108 = vmatpush1.bf16.msra.mxu0 %v5093
    %5109 = vmatprep.subr.bf16.mxu0 0
    %5110 = vmatpush1.bf16.msra.mxu0 %v5094
    %5111 = vmatprep.subr.bf16.mxu0 0
    %5112 = vmatpush1.bf16.msra.mxu0 %v5095
    %5113 = vmatprep.subr.bf16.mxu0 0
    %5114 = vmatpush1.bf16.msra.mxu0 %v5096
    %5115 = vmatprep.subr.bf16.mxu0 0
    %5116 = vmatpush1.bf16.msra.mxu0 0
    %5117 = vmatprep.subr.bf16.mxu0 0
    %5118 = vmatpush1.bf16.msra.mxu0 0
    %5119 = vmatprep.subr.bf16.mxu0 0
    %5120 = vmatpush1.bf16.msra.mxu0 0
    %5121 = vmatprep.subr.bf16.mxu0 0
    %5122 = vmatpush1.bf16.msra.mxu0 0
    %5123 = vmatprep.subr.bf16.mxu0 0
    %5124 = vmatpush1.bf16.msra.mxu0 0
    %5125 = vmatprep.subr.bf16.mxu0 0
    %5126 = vmatpush1.bf16.msra.mxu0 0
    %5127 = vmatprep.subr.bf16.mxu0 0
    %5128 = vmatpush1.bf16.msra.mxu0 0
    %5129 = vmatprep.subr.bf16.mxu0 0
    %5130 = vmatpush1.bf16.msra.mxu0 0
    %5131 = vmatprep.subr.bf16.mxu0 0
    %5132 = vmatpush1.bf16.msra.mxu0 0
    %5133 = vmatprep.subr.bf16.mxu0 0
    %5134 = vmatpush1.bf16.msra.mxu0 0
    %5135 = vmatprep.subr.bf16.mxu0 0
    %5136 = vmatpush1.bf16.msra.mxu0 0
    %5137 = vmatprep.mubr.bf16.mxu0 0
    %5138 = vmatmul.mubr.bf16.gmra.mrb[0].mxu0 %v5103
    %v5139 = vpop.f32.mrb[0].mxu0
    %v5140 = vadd.f32 0.0, %v5139
    %v5141 = vpop.f32.mrb[0].mxu0
    %v5142 = vpop.f32.mrb[0].mxu0
    %v5143 = vadd.f32 0.0, %v5142
    %v5144 = vpop.f32.mrb[0].mxu0
    %5145 = vdwg.mxu0
    %v5146 = vadd.f32 %v4973, %v5140
    %v5147 = vadd.f32 %v4974, %v5143
    %s5148 = scalar_lea.vmem [#allocation9], 920
    %v5149 = vld [vmem:[%s5148] sm:$0xf]
    %v5150 = vld [vmem:[%s5148 + $0x4] sm:$0xf]
    %v5151 = vld [vmem:[%s5148 + $0x8] sm:$0xf]
    %v5152 = vld [vmem:[%s5148 + $0xc] sm:$0xf]
    %v5153 = vld [vmem:[%s5148 + $0x10] sm:$0xf]
    %v5154 = vld [vmem:[%s5148 + $0x14] sm:$0xf]
    %v5155 = vld [vmem:[%s5148 + $0x18] sm:$0xf]
    %v5156 = vld [vmem:[%s5148 + $0x1c] sm:$0xf]
    %v5157 = vld [vmem:[%s5148 + $0x20] sm:$0xf]
    %v5158 = vld [vmem:[%s5148 + $0x24] sm:$0xf]
    %v5169 = vunpack.c.l.b16 %v5149
    %v5170 = vunpack.c.l.b16 %v5150
    %v5171 = vunpack.c.l.b16 %v5151
    %v5172 = vunpack.c.l.b16 %v5152
    %v5173 = vunpack.c.l.b16 %v5153
    %v5174 = vunpack.c.l.b16 %v5154
    %v5175 = vunpack.c.l.b16 %v5155
    %v5176 = vunpack.c.l.b16 %v5156
    %v5177 = vunpack.c.l.b16 %v5157
    %v5178 = vunpack.c.l.b16 %v5158
    %v5179 = vpack.c.b16 %v5170, %v5169
    %v5180 = vpack.c.b16 %v5172, %v5171
    %v5181 = vpack.c.b16 %v5174, %v5173
    %v5182 = vpack.c.b16 %v5176, %v5175
    %v5183 = vpack.c.b16 %v5178, %v5177
    %5189 = vmatprep.subr.bf16.mxu0 0
    %5190 = vmatpush1.bf16.msra.mxu0 %v5179
    %5191 = vmatprep.subr.bf16.mxu0 0
    %5192 = vmatpush1.bf16.msra.mxu0 %v5180
    %5193 = vmatprep.subr.bf16.mxu0 0
    %5194 = vmatpush1.bf16.msra.mxu0 %v5181
    %5195 = vmatprep.subr.bf16.mxu0 0
    %5196 = vmatpush1.bf16.msra.mxu0 %v5182
    %5197 = vmatprep.subr.bf16.mxu0 0
    %5198 = vmatpush1.bf16.msra.mxu0 %v5183
    %5199 = vmatprep.subr.bf16.mxu0 0
    %5200 = vmatpush1.bf16.msra.mxu0 0
    %5201 = vmatprep.subr.bf16.mxu0 0
    %5202 = vmatpush1.bf16.msra.mxu0 0
    %5203 = vmatprep.subr.bf16.mxu0 0
    %5204 = vmatpush1.bf16.msra.mxu0 0
    %5205 = vmatprep.subr.bf16.mxu0 0
    %5206 = vmatpush1.bf16.msra.mxu0 0
    %5207 = vmatprep.subr.bf16.mxu0 0
    %5208 = vmatpush1.bf16.msra.mxu0 0
    %5209 = vmatprep.subr.bf16.mxu0 0
    %5210 = vmatpush1.bf16.msra.mxu0 0
    %5211 = vmatprep.subr.bf16.mxu0 0
    %5212 = vmatpush1.bf16.msra.mxu0 0
    %5213 = vmatprep.subr.bf16.mxu0 0
    %5214 = vmatpush1.bf16.msra.mxu0 0
    %5215 = vmatprep.subr.bf16.mxu0 0
    %5216 = vmatpush1.bf16.msra.mxu0 0
    %5217 = vmatprep.subr.bf16.mxu0 0
    %5218 = vmatpush1.bf16.msra.mxu0 0
    %5219 = vmatprep.subr.bf16.mxu0 0
    %5220 = vmatpush1.bf16.msra.mxu0 0
    %5221 = vmatprep.mubr.bf16.mxu0 0
    %5222 = vmatmul.mubr.bf16.gmra.mrb[0].mxu0 %v5103
    %v5223 = vpop.f32.mrb[0].mxu0
    %v5224 = vadd.f32 0.0, %v5223
    %v5225 = vpop.f32.mrb[0].mxu0
    %v5226 = vpop.f32.mrb[0].mxu0
    %v5227 = vadd.f32 0.0, %v5226
    %v5228 = vpop.f32.mrb[0].mxu0
    %5229 = vdwg.mxu0
    %v5230 = vadd.f32 %v5057, %v5224
    %v5231 = vadd.f32 %v5058, %v5227
    %s5232 = scalar_lea.vmem [#allocation6], 960
    %v5233 = vld [vmem:[%s5232] sm:$0xf]
    %v5234 = vld [vmem:[%s5232 + $0x4] sm:$0xf]
    %v5235 = vld [vmem:[%s5232 + $0x8] sm:$0xf]
    %v5236 = vld [vmem:[%s5232 + $0xc] sm:$0xf]
    %v5237 = vld [vmem:[%s5232 + $0x10] sm:$0xf]
    %v5238 = vld [vmem:[%s5232 + $0x14] sm:$0xf]
    %v5239 = vld [vmem:[%s5232 + $0x18] sm:$0xf]
    %v5240 = vld [vmem:[%s5232 + $0x1c] sm:$0xf]
    %v5241 = vld [vmem:[%s5232 + $0x20] sm:$0xf]
    %v5242 = vld [vmem:[%s5232 + $0x24] sm:$0xf]
    %5243 = vrot.lane.b32.xlu0 %v4540, 88
    %v5244 = vpop.permute.xlu0 %5243
    %v5255 = vunpack.c.l.b16 %v5233
    %v5256 = vunpack.c.l.b16 %v5234
    %v5257 = vunpack.c.l.b16 %v5235
    %v5258 = vunpack.c.l.b16 %v5236
    %v5259 = vunpack.c.l.b16 %v5237
    %v5260 = vunpack.c.l.b16 %v5238
    %v5261 = vunpack.c.l.b16 %v5239
    %v5262 = vunpack.c.l.b16 %v5240
    %v5263 = vunpack.c.l.b16 %v5241
    %v5264 = vunpack.c.l.b16 %v5242
    %v5265 = vpack.c.b16 %v5256, %v5255
    %v5266 = vpack.c.b16 %v5258, %v5257
    %v5267 = vpack.c.b16 %v5260, %v5259
    %v5268 = vpack.c.b16 %v5262, %v5261
    %v5269 = vpack.c.b16 %v5264, %v5263
    %v5276 = vsel %vm1146, %v5244, 0
    %5278 = vmatprep.subr.bf16.mxu0 0
    %5279 = vmatpush1.bf16.msra.mxu0 %v5265
    %5280 = vmatprep.subr.bf16.mxu0 0
    %5281 = vmatpush1.bf16.msra.mxu0 %v5266
    %5282 = vmatprep.subr.bf16.mxu0 0
    %5283 = vmatpush1.bf16.msra.mxu0 %v5267
    %5284 = vmatprep.subr.bf16.mxu0 0
    %5285 = vmatpush1.bf16.msra.mxu0 %v5268
    %5286 = vmatprep.subr.bf16.mxu0 0
    %5287 = vmatpush1.bf16.msra.mxu0 %v5269
    %5288 = vmatprep.subr.bf16.mxu0 0
    %5289 = vmatpush1.bf16.msra.mxu0 0
    %5290 = vmatprep.subr.bf16.mxu0 0
    %5291 = vmatpush1.bf16.msra.mxu0 0
    %5292 = vmatprep.subr.bf16.mxu0 0
    %5293 = vmatpush1.bf16.msra.mxu0 0
    %5294 = vmatprep.subr.bf16.mxu0 0
    %5295 = vmatpush1.bf16.msra.mxu0 0
    %5296 = vmatprep.subr.bf16.mxu0 0
    %5297 = vmatpush1.bf16.msra.mxu0 0
    %5298 = vmatprep.subr.bf16.mxu0 0
    %5299 = vmatpush1.bf16.msra.mxu0 0
    %5300 = vmatprep.subr.bf16.mxu0 0
    %5301 = vmatpush1.bf16.msra.mxu0 0
    %5302 = vmatprep.subr.bf16.mxu0 0
    %5303 = vmatpush1.bf16.msra.mxu0 0
    %5304 = vmatprep.subr.bf16.mxu0 0
    %5305 = vmatpush1.bf16.msra.mxu0 0
    %5306 = vmatprep.subr.bf16.mxu0 0
    %5307 = vmatpush1.bf16.msra.mxu0 0
    %5308 = vmatprep.subr.bf16.mxu0 0
    %5309 = vmatpush1.bf16.msra.mxu0 0
    %5310 = vmatprep.mubr.bf16.mxu0 0
    %5311 = vmatmul.mubr.bf16.gmra.mrb[0].mxu0 %v5276
    %v5312 = vpop.f32.mrb[0].mxu0
    %v5313 = vadd.f32 0.0, %v5312
    %v5314 = vpop.f32.mrb[0].mxu0
    %v5315 = vpop.f32.mrb[0].mxu0
    %v5316 = vadd.f32 0.0, %v5315
    %v5317 = vpop.f32.mrb[0].mxu0
    %5318 = vdwg.mxu0
    %v5319 = vadd.f32 %v5146, %v5313
    %v5320 = vadd.f32 %v5147, %v5316
    %s5321 = scalar_lea.vmem [#allocation9], 960
    %v5322 = vld [vmem:[%s5321] sm:$0xf]
    %v5323 = vld [vmem:[%s5321 + $0x4] sm:$0xf]
    %v5324 = vld [vmem:[%s5321 + $0x8] sm:$0xf]
    %v5325 = vld [vmem:[%s5321 + $0xc] sm:$0xf]
    %v5326 = vld [vmem:[%s5321 + $0x10] sm:$0xf]
    %v5327 = vld [vmem:[%s5321 + $0x14] sm:$0xf]
    %v5328 = vld [vmem:[%s5321 + $0x18] sm:$0xf]
    %v5329 = vld [vmem:[%s5321 + $0x1c] sm:$0xf]
    %v5330 = vld [vmem:[%s5321 + $0x20] sm:$0xf]
    %v5331 = vld [vmem:[%s5321 + $0x24] sm:$0xf]
    %v5342 = vunpack.c.l.b16 %v5322
    %v5343 = vunpack.c.l.b16 %v5323
    %v5344 = vunpack.c.l.b16 %v5324
    %v5345 = vunpack.c.l.b16 %v5325
    %v5346 = vunpack.c.l.b16 %v5326
    %v5347 = vunpack.c.l.b16 %v5327
    %v5348 = vunpack.c.l.b16 %v5328
    %v5349 = vunpack.c.l.b16 %v5329
    %v5350 = vunpack.c.l.b16 %v5330
    %v5351 = vunpack.c.l.b16 %v5331
    %v5352 = vpack.c.b16 %v5343, %v5342
    %v5353 = vpack.c.b16 %v5345, %v5344
    %v5354 = vpack.c.b16 %v5347, %v5346
    %v5355 = vpack.c.b16 %v5349, %v5348
    %v5356 = vpack.c.b16 %v5351, %v5350
    %5362 = vmatprep.subr.bf16.mxu0 0
    %5363 = vmatpush1.bf16.msra.mxu0 %v5352
    %5364 = vmatprep.subr.bf16.mxu0 0
    %5365 = vmatpush1.bf16.msra.mxu0 %v5353
    %5366 = vmatprep.subr.bf16.mxu0 0
    %5367 = vmatpush1.bf16.msra.mxu0 %v5354
    %5368 = vmatprep.subr.bf16.mxu0 0
    %5369 = vmatpush1.bf16.msra.mxu0 %v5355
    %5370 = vmatprep.subr.bf16.mxu0 0
    %5371 = vmatpush1.bf16.msra.mxu0 %v5356
    %5372 = vmatprep.subr.bf16.mxu0 0
    %5373 = vmatpush1.bf16.msra.mxu0 0
    %5374 = vmatprep.subr.bf16.mxu0 0
    %5375 = vmatpush1.bf16.msra.mxu0 0
    %5376 = vmatprep.subr.bf16.mxu0 0
    %5377 = vmatpush1.bf16.msra.mxu0 0
    %5378 = vmatprep.subr.bf16.mxu0 0
    %5379 = vmatpush1.bf16.msra.mxu0 0
    %5380 = vmatprep.subr.bf16.mxu0 0
    %5381 = vmatpush1.bf16.msra.mxu0 0
    %5382 = vmatprep.subr.bf16.mxu0 0
    %5383 = vmatpush1.bf16.msra.mxu0 0
    %5384 = vmatprep.subr.bf16.mxu0 0
    %5385 = vmatpush1.bf16.msra.mxu0 0
    %5386 = vmatprep.subr.bf16.mxu0 0
    %5387 = vmatpush1.bf16.msra.mxu0 0
    %5388 = vmatprep.subr.bf16.mxu0 0
    %5389 = vmatpush1.bf16.msra.mxu0 0
    %5390 = vmatprep.subr.bf16.mxu0 0
    %5391 = vmatpush1.bf16.msra.mxu0 0
    %5392 = vmatprep.subr.bf16.mxu0 0
    %5393 = vmatpush1.bf16.msra.mxu0 0
    %5394 = vmatprep.mubr.bf16.mxu0 0
    %5395 = vmatmul.mubr.bf16.gmra.mrb[0].mxu0 %v5276
    %v5396 = vpop.f32.mrb[0].mxu0
    %v5397 = vadd.f32 0.0, %v5396
    %v5398 = vpop.f32.mrb[0].mxu0
    %v5399 = vpop.f32.mrb[0].mxu0
    %v5400 = vadd.f32 0.0, %v5399
    %v5401 = vpop.f32.mrb[0].mxu0
    %5402 = vdwg.mxu0
    %v5403 = vadd.f32 %v5230, %v5397
    %v5404 = vadd.f32 %v5231, %v5400
    %v5405 = vmax.f32 %v5319, %v5403
    %v5406 = vmax.f32 %v5320, %v5404
    %v5407 = vld [vmem:[%s6] sm:$0x1]
    %v5409 = vlaneseq
    %v5410 = vshrl.u32 %v5409, 7
    %v5411 = vsub.s32 0, %v5410
    %v5412 = vrot.slane %v5407, %v5411
    %v5414 = vadd.f32 %v5405, %v5412
    %v5415 = vadd.f32 %v5406, %v5412
    %v5416 = vmax.f32 %v5414, 0.0
    %v5417 = vmax.f32 %v5415, 0.0
    %5418 = vst.msk [vmem:[#allocation4] sm:$0xff] %vm1146, %v5416
    %5419 = vst.msk [vmem:[#allocation4 + $0x8] sm:$0xff] %vm1146, %v5417
    %v5420 = vld [vmem:[#allocation4] ss:$2 sm:$0xff]
    %s5421 = scalar_lea.vmem [#allocation4], 1
    %v5422 = vld [vmem:[%s5421] ss:$2 sm:$0xff]
    %v5423 = vmax.f32 %v5420, %v5422
    %5424 = vst.msk [vmem:[#allocation5] sm:$0xff] %vm1146, %v5423
    %v5425 = vld [vmem:[#allocation5] ss:$4 sm:$0x3]
    %v5426 = vpack.c.bf16 %v5425, %v5425
    %v5427 = vld [vmem:[%s7] sm:$0xf]
    %v5428 = vld [vmem:[%s7 + $0x4] sm:$0xf]
    %v5429 = vld [vmem:[%s7 + $0x8] sm:$0xf]
    %v5430 = vld [vmem:[%s7 + $0xc] sm:$0xf]
    %v5431 = vld [vmem:[%s7 + $0x10] sm:$0xf]
    %v5432 = vld [vmem:[%s7 + $0x14] sm:$0xf]
    %v5433 = vld [vmem:[%s7 + $0x18] sm:$0xf]
    %v5434 = vld [vmem:[%s7 + $0x1c] sm:$0xf]
    %v5435 = vld [vmem:[%s7 + $0x20] sm:$0xf]
    %v5436 = vld [vmem:[%s7 + $0x24] sm:$0xf]
    %s5437 = scalar_lea.vmem [#allocation5], 1
    %v5438 = vld [vmem:[%s5437] ss:$4 sm:$0x3]
    %v5439 = vpack.c.bf16 %v5438, %v5438
    %s5440 = scalar_lea.vmem %s7, 40
    %v5441 = vld [vmem:[%s5440] sm:$0xf]
    %v5442 = vld [vmem:[%s5440 + $0x4] sm:$0xf]
    %v5443 = vld [vmem:[%s5440 + $0x8] sm:$0xf]
    %v5444 = vld [vmem:[%s5440 + $0xc] sm:$0xf]
    %v5445 = vld [vmem:[%s5440 + $0x10] sm:$0xf]
    %v5446 = vld [vmem:[%s5440 + $0x14] sm:$0xf]
    %v5447 = vld [vmem:[%s5440 + $0x18] sm:$0xf]
    %v5448 = vld [vmem:[%s5440 + $0x1c] sm:$0xf]
    %v5449 = vld [vmem:[%s5440 + $0x20] sm:$0xf]
    %v5450 = vld [vmem:[%s5440 + $0x24] sm:$0xf]
    %v5461 = vunpack.c.l.b16 %v5441
    %v5462 = vunpack.c.l.b16 %v5442
    %v5463 = vunpack.c.l.b16 %v5443
    %v5464 = vunpack.c.l.b16 %v5444
    %v5465 = vunpack.c.l.b16 %v5445
    %v5466 = vunpack.c.l.b16 %v5446
    %v5467 = vunpack.c.l.b16 %v5447
    %v5468 = vunpack.c.l.b16 %v5448
    %v5469 = vunpack.c.l.b16 %v5449
    %v5470 = vunpack.c.l.b16 %v5450
    %v5471 = vpack.c.b16 %v5462, %v5461
    %v5472 = vpack.c.b16 %v5464, %v5463
    %v5473 = vpack.c.b16 %v5466, %v5465
    %v5474 = vpack.c.b16 %v5468, %v5467
    %v5475 = vpack.c.b16 %v5470, %v5469
    %v5482 = vsel %vm1146, %v5439, 0
    %5484 = vmatprep.subr.bf16.mxu0 0
    %5485 = vmatpush1.bf16.msra.mxu0 %v5471
    %5486 = vmatprep.subr.bf16.mxu0 0
    %5487 = vmatpush1.bf16.msra.mxu0 %v5472
    %5488 = vmatprep.subr.bf16.mxu0 0
    %5489 = vmatpush1.bf16.msra.mxu0 %v5473
    %5490 = vmatprep.subr.bf16.mxu0 0
    %5491 = vmatpush1.bf16.msra.mxu0 %v5474
    %5492 = vmatprep.subr.bf16.mxu0 0
    %5493 = vmatpush1.bf16.msra.mxu0 %v5475
    %5494 = vmatprep.subr.bf16.mxu0 0
    %5495 = vmatpush1.bf16.msra.mxu0 0
    %5496 = vmatprep.subr.bf16.mxu0 0
    %5497 = vmatpush1.bf16.msra.mxu0 0
    %5498 = vmatprep.subr.bf16.mxu0 0
    %5499 = vmatpush1.bf16.msra.mxu0 0
    %5500 = vmatprep.subr.bf16.mxu0 0
    %5501 = vmatpush1.bf16.msra.mxu0 0
    %5502 = vmatprep.subr.bf16.mxu0 0
    %5503 = vmatpush1.bf16.msra.mxu0 0
    %5504 = vmatprep.subr.bf16.mxu0 0
    %5505 = vmatpush1.bf16.msra.mxu0 0
    %5506 = vmatprep.subr.bf16.mxu0 0
    %5507 = vmatpush1.bf16.msra.mxu0 0
    %5508 = vmatprep.subr.bf16.mxu0 0
    %5509 = vmatpush1.bf16.msra.mxu0 0
    %5510 = vmatprep.subr.bf16.mxu0 0
    %5511 = vmatpush1.bf16.msra.mxu0 0
    %5512 = vmatprep.subr.bf16.mxu0 0
    %5513 = vmatpush1.bf16.msra.mxu0 0
    %5514 = vmatprep.subr.bf16.mxu0 0
    %5515 = vmatpush1.bf16.msra.mxu0 0
    %5516 = vmatprep.mubr.bf16.mxu0 0
    %5517 = vmatmul.mubr.bf16.gmra.mrb[0].mxu0 %v5482
    %v5518 = vpop.f32.mrb[0].mxu0
    %v5519 = vadd.f32 0.0, %v5518
    %v5520 = vpop.f32.mrb[0].mxu0
    %v5521 = vpop.f32.mrb[0].mxu0
    %v5522 = vpop.f32.mrb[0].mxu0
    %5523 = vdwg.mxu0
    %v5534 = vunpack.c.l.b16 %v5427
    %v5535 = vunpack.c.l.b16 %v5428
    %v5536 = vunpack.c.l.b16 %v5429
    %v5537 = vunpack.c.l.b16 %v5430
    %v5538 = vunpack.c.l.b16 %v5431
    %v5539 = vunpack.c.l.b16 %v5432
    %v5540 = vunpack.c.l.b16 %v5433
    %v5541 = vunpack.c.l.b16 %v5434
    %v5542 = vunpack.c.l.b16 %v5435
    %v5543 = vunpack.c.l.b16 %v5436
    %v5544 = vpack.c.b16 %v5535, %v5534
    %v5545 = vpack.c.b16 %v5537, %v5536
    %v5546 = vpack.c.b16 %v5539, %v5538
    %v5547 = vpack.c.b16 %v5541, %v5540
    %v5548 = vpack.c.b16 %v5543, %v5542
    %v5555 = vsel %vm1146, %v5426, 0
    %5557 = vmatprep.subr.bf16.mxu0 0
    %5558 = vmatpush1.bf16.msra.mxu0 %v5544
    %5559 = vmatprep.subr.bf16.mxu0 0
    %5560 = vmatpush1.bf16.msra.mxu0 %v5545
    %5561 = vmatprep.subr.bf16.mxu0 0
    %5562 = vmatpush1.bf16.msra.mxu0 %v5546
    %5563 = vmatprep.subr.bf16.mxu0 0
    %5564 = vmatpush1.bf16.msra.mxu0 %v5547
    %5565 = vmatprep.subr.bf16.mxu0 0
    %5566 = vmatpush1.bf16.msra.mxu0 %v5548
    %5567 = vmatprep.subr.bf16.mxu0 0
    %5568 = vmatpush1.bf16.msra.mxu0 0
    %5569 = vmatprep.subr.bf16.mxu0 0
    %5570 = vmatpush1.bf16.msra.mxu0 0
    %5571 = vmatprep.subr.bf16.mxu0 0
    %5572 = vmatpush1.bf16.msra.mxu0 0
    %5573 = vmatprep.subr.bf16.mxu0 0
    %5574 = vmatpush1.bf16.msra.mxu0 0
    %5575 = vmatprep.subr.bf16.mxu0 0
    %5576 = vmatpush1.bf16.msra.mxu0 0
    %5577 = vmatprep.subr.bf16.mxu0 0
    %5578 = vmatpush1.bf16.msra.mxu0 0
    %5579 = vmatprep.subr.bf16.mxu0 0
    %5580 = vmatpush1.bf16.msra.mxu0 0
    %5581 = vmatprep.subr.bf16.mxu0 0
    %5582 = vmatpush1.bf16.msra.mxu0 0
    %5583 = vmatprep.subr.bf16.mxu0 0
    %5584 = vmatpush1.bf16.msra.mxu0 0
    %5585 = vmatprep.subr.bf16.mxu0 0
    %5586 = vmatpush1.bf16.msra.mxu0 0
    %5587 = vmatprep.subr.bf16.mxu0 0
    %5588 = vmatpush1.bf16.msra.mxu0 0
    %5589 = vmatprep.mubr.bf16.mxu0 0
    %5590 = vmatmul.mubr.bf16.gmra.mrb[0].mxu0 %v5555
    %v5591 = vpop.f32.mrb[0].mxu0
    %v5592 = vadd.f32 %v5519, %v5591
    %v5593 = vpop.f32.mrb[0].mxu0
    %v5594 = vpop.f32.mrb[0].mxu0
    %v5595 = vpop.f32.mrb[0].mxu0
    %5596 = vdwg.mxu0
    %s5597 = scalar_lea.vmem [#allocation5], 2
    %v5598 = vld [vmem:[%s5597] ss:$4 sm:$0x3]
    %v5599 = vpack.c.bf16 %v5598, %v5598
    %s5600 = scalar_lea.vmem %s7, 80
    %v5601 = vld [vmem:[%s5600] sm:$0xf]
    %v5602 = vld [vmem:[%s5600 + $0x4] sm:$0xf]
    %v5603 = vld [vmem:[%s5600 + $0x8] sm:$0xf]
    %v5604 = vld [vmem:[%s5600 + $0xc] sm:$0xf]
    %v5605 = vld [vmem:[%s5600 + $0x10] sm:$0xf]
    %v5606 = vld [vmem:[%s5600 + $0x14] sm:$0xf]
    %v5607 = vld [vmem:[%s5600 + $0x18] sm:$0xf]
    %v5608 = vld [vmem:[%s5600 + $0x1c] sm:$0xf]
    %v5609 = vld [vmem:[%s5600 + $0x20] sm:$0xf]
    %v5610 = vld [vmem:[%s5600 + $0x24] sm:$0xf]
    %v5621 = vunpack.c.l.b16 %v5601
    %v5622 = vunpack.c.l.b16 %v5602
    %v5623 = vunpack.c.l.b16 %v5603
    %v5624 = vunpack.c.l.b16 %v5604
    %v5625 = vunpack.c.l.b16 %v5605
    %v5626 = vunpack.c.l.b16 %v5606
    %v5627 = vunpack.c.l.b16 %v5607
    %v5628 = vunpack.c.l.b16 %v5608
    %v5629 = vunpack.c.l.b16 %v5609
    %v5630 = vunpack.c.l.b16 %v5610
    %v5631 = vpack.c.b16 %v5622, %v5621
    %v5632 = vpack.c.b16 %v5624, %v5623
    %v5633 = vpack.c.b16 %v5626, %v5625
    %v5634 = vpack.c.b16 %v5628, %v5627
    %v5635 = vpack.c.b16 %v5630, %v5629
    %v5642 = vsel %vm1146, %v5599, 0
    %5644 = vmatprep.subr.bf16.mxu0 0
    %5645 = vmatpush1.bf16.msra.mxu0 %v5631
    %5646 = vmatprep.subr.bf16.mxu0 0
    %5647 = vmatpush1.bf16.msra.mxu0 %v5632
    %5648 = vmatprep.subr.bf16.mxu0 0
    %5649 = vmatpush1.bf16.msra.mxu0 %v5633
    %5650 = vmatprep.subr.bf16.mxu0 0
    %5651 = vmatpush1.bf16.msra.mxu0 %v5634
    %5652 = vmatprep.subr.bf16.mxu0 0
    %5653 = vmatpush1.bf16.msra.mxu0 %v5635
    %5654 = vmatprep.subr.bf16.mxu0 0
    %5655 = vmatpush1.bf16.msra.mxu0 0
    %5656 = vmatprep.subr.bf16.mxu0 0
    %5657 = vmatpush1.bf16.msra.mxu0 0
    %5658 = vmatprep.subr.bf16.mxu0 0
    %5659 = vmatpush1.bf16.msra.mxu0 0
    %5660 = vmatprep.subr.bf16.mxu0 0
    %5661 = vmatpush1.bf16.msra.mxu0 0
    %5662 = vmatprep.subr.bf16.mxu0 0
    %5663 = vmatpush1.bf16.msra.mxu0 0
    %5664 = vmatprep.subr.bf16.mxu0 0
    %5665 = vmatpush1.bf16.msra.mxu0 0
    %5666 = vmatprep.subr.bf16.mxu0 0
    %5667 = vmatpush1.bf16.msra.mxu0 0
    %5668 = vmatprep.subr.bf16.mxu0 0
    %5669 = vmatpush1.bf16.msra.mxu0 0
    %5670 = vmatprep.subr.bf16.mxu0 0
    %5671 = vmatpush1.bf16.msra.mxu0 0
    %5672 = vmatprep.subr.bf16.mxu0 0
    %5673 = vmatpush1.bf16.msra.mxu0 0
    %5674 = vmatprep.subr.bf16.mxu0 0
    %5675 = vmatpush1.bf16.msra.mxu0 0
    %5676 = vmatprep.mubr.bf16.mxu0 0
    %5677 = vmatmul.mubr.bf16.gmra.mrb[0].mxu0 %v5642
    %v5678 = vpop.f32.mrb[0].mxu0
    %v5679 = vadd.f32 0.0, %v5678
    %v5680 = vpop.f32.mrb[0].mxu0
    %v5681 = vpop.f32.mrb[0].mxu0
    %v5682 = vpop.f32.mrb[0].mxu0
    %5683 = vdwg.mxu0
    %v5684 = vadd.f32 %v5592, %v5679
    %s5685 = scalar_lea.vmem [#allocation5], 3
    %v5686 = vld [vmem:[%s5685] ss:$4 sm:$0x3]
    %v5687 = vpack.c.bf16 %v5686, %v5686
    %s5688 = scalar_lea.vmem %s7, 120
    %v5689 = vld [vmem:[%s5688] sm:$0xf]
    %v5690 = vld [vmem:[%s5688 + $0x4] sm:$0xf]
    %v5691 = vld [vmem:[%s5688 + $0x8] sm:$0xf]
    %v5692 = vld [vmem:[%s5688 + $0xc] sm:$0xf]
    %v5693 = vld [vmem:[%s5688 + $0x10] sm:$0xf]
    %v5694 = vld [vmem:[%s5688 + $0x14] sm:$0xf]
    %v5695 = vld [vmem:[%s5688 + $0x18] sm:$0xf]
    %v5696 = vld [vmem:[%s5688 + $0x1c] sm:$0xf]
    %v5697 = vld [vmem:[%s5688 + $0x20] sm:$0xf]
    %v5698 = vld [vmem:[%s5688 + $0x24] sm:$0xf]
    %v5709 = vunpack.c.l.b16 %v5689
    %v5710 = vunpack.c.l.b16 %v5690
    %v5711 = vunpack.c.l.b16 %v5691
    %v5712 = vunpack.c.l.b16 %v5692
    %v5713 = vunpack.c.l.b16 %v5693
    %v5714 = vunpack.c.l.b16 %v5694
    %v5715 = vunpack.c.l.b16 %v5695
    %v5716 = vunpack.c.l.b16 %v5696
    %v5717 = vunpack.c.l.b16 %v5697
    %v5718 = vunpack.c.l.b16 %v5698
    %v5719 = vpack.c.b16 %v5710, %v5709
    %v5720 = vpack.c.b16 %v5712, %v5711
    %v5721 = vpack.c.b16 %v5714, %v5713
    %v5722 = vpack.c.b16 %v5716, %v5715
    %v5723 = vpack.c.b16 %v5718, %v5717
    %v5730 = vsel %vm1146, %v5687, 0
    %5732 = vmatprep.subr.bf16.mxu0 0
    %5733 = vmatpush1.bf16.msra.mxu0 %v5719
    %5734 = vmatprep.subr.bf16.mxu0 0
    %5735 = vmatpush1.bf16.msra.mxu0 %v5720
    %5736 = vmatprep.subr.bf16.mxu0 0
    %5737 = vmatpush1.bf16.msra.mxu0 %v5721
    %5738 = vmatprep.subr.bf16.mxu0 0
    %5739 = vmatpush1.bf16.msra.mxu0 %v5722
    %5740 = vmatprep.subr.bf16.mxu0 0
    %5741 = vmatpush1.bf16.msra.mxu0 %v5723
    %5742 = vmatprep.subr.bf16.mxu0 0
    %5743 = vmatpush1.bf16.msra.mxu0 0
    %5744 = vmatprep.subr.bf16.mxu0 0
    %5745 = vmatpush1.bf16.msra.mxu0 0
    %5746 = vmatprep.subr.bf16.mxu0 0
    %5747 = vmatpush1.bf16.msra.mxu0 0
    %5748 = vmatprep.subr.bf16.mxu0 0
    %5749 = vmatpush1.bf16.msra.mxu0 0
    %5750 = vmatprep.subr.bf16.mxu0 0
    %5751 = vmatpush1.bf16.msra.mxu0 0
    %5752 = vmatprep.subr.bf16.mxu0 0
    %5753 = vmatpush1.bf16.msra.mxu0 0
    %5754 = vmatprep.subr.bf16.mxu0 0
    %5755 = vmatpush1.bf16.msra.mxu0 0
    %5756 = vmatprep.subr.bf16.mxu0 0
    %5757 = vmatpush1.bf16.msra.mxu0 0
    %5758 = vmatprep.subr.bf16.mxu0 0
    %5759 = vmatpush1.bf16.msra.mxu0 0
    %5760 = vmatprep.subr.bf16.mxu0 0
    %5761 = vmatpush1.bf16.msra.mxu0 0
    %5762 = vmatprep.subr.bf16.mxu0 0
    %5763 = vmatpush1.bf16.msra.mxu0 0
    %5764 = vmatprep.mubr.bf16.mxu0 0
    %5765 = vmatmul.mubr.bf16.gmra.mrb[0].mxu0 %v5730
    %v5766 = vpop.f32.mrb[0].mxu0
    %v5767 = vadd.f32 0.0, %v5766
    %v5768 = vpop.f32.mrb[0].mxu0
    %v5769 = vpop.f32.mrb[0].mxu0
    %v5770 = vpop.f32.mrb[0].mxu0
    %5771 = vdwg.mxu0
    %v5772 = vadd.f32 %v5684, %v5767
    %v5773 = vld [vmem:[%s8] sm:$0x1]
    %v5775 = vlaneseq
    %v5776 = vshrl.u32 %v5775, 7
    %v5777 = vsub.s32 0, %v5776
    %v5778 = vrot.slane %v5773, %v5777
    %v5780 = vadd.f32 %v5772, %v5778
    %v5781 = vmax.f32 %v5780, 0.0
    %v5782 = vpack.c.bf16 %v5781, %v5781
    %v5783 = vld [vmem:[%s9] sm:$0xf]
    %v5784 = vld [vmem:[%s9 + $0x4] sm:$0xf]
    %v5785 = vld [vmem:[%s9 + $0x8] sm:$0xf]
    %v5786 = vld [vmem:[%s9 + $0xc] sm:$0xf]
    %v5787 = vld [vmem:[%s9 + $0x10] sm:$0xf]
    %v5788 = vld [vmem:[%s9 + $0x14] sm:$0xf]
    %v5789 = vld [vmem:[%s9 + $0x18] sm:$0x1]
    %v5790 = vld [vmem:[%s10] sm:$0x1]
    %v5792 = vlaneseq
    %v5793 = vshrl.u32 %v5792, 7
    %v5794 = vsub.s32 0, %v5793
    %v5795 = vrot.slane %v5790, %v5794
    %v5804 = vunpack.c.l.b16 %v5783
    %v5805 = vunpack.c.l.b16 %v5784
    %v5806 = vunpack.c.l.b16 %v5785
    %v5807 = vunpack.c.l.b16 %v5786
    %v5808 = vunpack.c.l.b16 %v5787
    %v5809 = vunpack.c.l.b16 %v5788
    %v5810 = vunpack.c.l.b16 %v5789
    %v5811 = vpack.c.b16 %v5805, %v5804
    %v5812 = vpack.c.b16 %v5807, %v5806
    %v5813 = vpack.c.b16 %v5809, %v5808
    %v5814 = vpack.c.b16 %v5810, %v5810
    %vm5818 = vcmask 408576
    %v5820 = vsel %vm5818, %v5782, 0
    %vm5822 = vcmask 1040384
    %v5824 = vsel %vm5822, %v5814, 0
    %5826 = vmatprep.subr.bf16.mxu0 0
    %5827 = vmatpush1.bf16.msra.mxu0 %v5811
    %5828 = vmatprep.subr.bf16.mxu0 0
    %5829 = vmatpush1.bf16.msra.mxu0 %v5812
    %5830 = vmatprep.subr.bf16.mxu0 0
    %5831 = vmatpush1.bf16.msra.mxu0 %v5813
    %5832 = vmatprep.subr.bf16.mxu0 0
    %5833 = vmatpush1.bf16.msra.mxu0 %v5824
    %5834 = vmatprep.subr.bf16.mxu0 0
    %5835 = vmatpush1.bf16.msra.mxu0 0
    %5836 = vmatprep.subr.bf16.mxu0 0
    %5837 = vmatpush1.bf16.msra.mxu0 0
    %5838 = vmatprep.subr.bf16.mxu0 0
    %5839 = vmatpush1.bf16.msra.mxu0 0
    %5840 = vmatprep.subr.bf16.mxu0 0
    %5841 = vmatpush1.bf16.msra.mxu0 0
    %5842 = vmatprep.subr.bf16.mxu0 0
    %5843 = vmatpush1.bf16.msra.mxu0 0
    %5844 = vmatprep.subr.bf16.mxu0 0
    %5845 = vmatpush1.bf16.msra.mxu0 0
    %5846 = vmatprep.subr.bf16.mxu0 0
    %5847 = vmatpush1.bf16.msra.mxu0 0
    %5848 = vmatprep.subr.bf16.mxu0 0
    %5849 = vmatpush1.bf16.msra.mxu0 0
    %5850 = vmatprep.subr.bf16.mxu0 0
    %5851 = vmatpush1.bf16.msra.mxu0 0
    %5852 = vmatprep.subr.bf16.mxu0 0
    %5853 = vmatpush1.bf16.msra.mxu0 0
    %5854 = vmatprep.subr.bf16.mxu0 0
    %5855 = vmatpush1.bf16.msra.mxu0 0
    %5856 = vmatprep.subr.bf16.mxu0 0
    %5857 = vmatpush1.bf16.msra.mxu0 0
    %5858 = vmatprep.mubr.bf16.mxu0 0
    %5859 = vmatmul.mubr.bf16.gmra.mrb[0].mxu0 %v5820
    %v5860 = vpop.f32.mrb[0].mxu0
    %v5861 = vadd.f32 %v5795, %v5860
    %v5862 = vpop.f32.mrb[0].mxu0
    %v5863 = vpop.f32.mrb[0].mxu0
    %v5864 = vpop.f32.mrb[0].mxu0
    %5865 = vdwg.mxu0
    %5866 = vst [vmem:[#allocation11] sm:$0x3] %v5861
    // Predicated region
    $region54: #{cnn_forward.1} parent=1 // pred_check
      _
    $region55: #{cnn_forward.1} parent=1 // pred_check_branch
      %5868 = sbr.rel (0) target = $region57
    $region56: #{cnn_forward.1} parent=1 // pred_region
      %s5870 = ssub.s32 32, 32
      %5871 = vsyncadd [#allocation8], %s5870
      %s5873 = sshll.u32 [#allocation11], 4
      %s5874 = int_to_ptr.vmem [resolvable:$true] %s5873
      %5876 = dma.vmem_to_hbm [thread:$0]  %s5874, 32, %s11, [#allocation8]
    $region57: #{cnn_forward.1} parent=1 // pred_fallthru
      _
    // Predicated region
    $region58: #{cnn_forward.1} parent=1 // pred_check
      _
    $region59: #{cnn_forward.1} parent=1 // pred_check_branch
      %5878 = sbr.rel (0) target = $region61
    $region60: #{cnn_forward.1} parent=1 // pred_region
      %5879 = dma.done [#allocation8], 32
    $region61: #{cnn_forward.1} parent=1 // pred_fallthru
      _
    %5880 = vsyncpa [#allocation7], 1
    %5881 = vsyncpa [#allocation10], 1
    %5882 = vsyncpa [#allocation8], 1

</llo_original>
